<compile_context>
chip_gen: v7x
topology: tpu7x:2x2x1
jax: 0.10.0
libtpu: 0.0.40
codegen_flags: <defaults>
</compile_context>

<pallas_src>
import functools

import jax
import jax.numpy as jnp
from jax.experimental import pallas as pl
from jax.experimental.pallas import tpu as pltpu

# ---- model config (hidden must be 384 to match Linear(384, C)) ----
HIDDEN = 384
NUM_HEADS = 6
HEAD_DIM = HIDDEN // NUM_HEADS          # 64
INTERMEDIATE = 768
NUM_LAYERS = 2
VOCAB = 128
TYPE_VOCAB = 2
MAX_POS = 64
NUM_LABELS = 3
HEAD_PAD = 128                          # lane-dense head output width
LN_EPS = 1e-12
ATTN_SCALE = 1.0 / (HEAD_DIM ** 0.5)

# ---- packed-parameter layout ----
VEC_W = 3 * HIDDEN                                  # 1152: widest bias row
W_IN_W = 3 * HIDDEN + HIDDEN + INTERMEDIATE         # 2304: Wqkv | Wo | Wffn1
ROW_EMB_G, ROW_EMB_B = 0, 1
R_BQKV, R_BO, R_LN1G, R_LN1B, R_B1, R_B2, R_LN2G, R_LN2B = range(8)
ROW_OUT_B = 2 + NUM_LAYERS * 8
NROWS = ROW_OUT_B + 1


def _row(layer, r):
    return 2 + layer * 8 + r


# ----------------------------- in-kernel helpers ------------------------------
def _layer_norm(x, g, b):
    # f32 LayerNorm over the hidden (lane) axis.
    mu = jnp.mean(x, axis=-1, keepdims=True)
    var = jnp.mean((x - mu) ** 2, axis=-1, keepdims=True)
    return (x - mu) * jax.lax.rsqrt(var + LN_EPS) * g + b


def _mm(x_f32, w_bf16):
    # MXU matmul: bf16 operands, f32 accumulation.
    return jnp.dot(x_f32.astype(jnp.bfloat16), w_bf16,
                   preferred_element_type=jnp.float32)


def _vec(vec_ref, row, width):
    # [1, width] f32 slice of the packed LN/bias slab (static indices).
    return vec_ref[row:row + 1, 0:width]


# ----------------------------- fused kernel -----------------------------------
def _fused_bert_kernel(S,
                       x_ref, mask_ref, vec_ref, w_in_ref, w2_ref, w_out_ref,
                       o_ref, ctx_scr):
    # One grid step == one batch element (batch tile = 1).
    x = _layer_norm(x_ref[0],
                    _vec(vec_ref, ROW_EMB_G, HIDDEN),
                    _vec(vec_ref, ROW_EMB_B, HIDDEN))            # [S, H] f32
    mask_bias = mask_ref[0]                                      # [1, S] additive

    for l in range(NUM_LAYERS):
        w_qkv = w_in_ref[l, :, 0:3 * HIDDEN]                     # [H, 3H] bf16
        w_o = w_in_ref[l, :, 3 * HIDDEN:4 * HIDDEN]              # [H, H]
        w_1 = w_in_ref[l, :, 4 * HIDDEN:4 * HIDDEN + INTERMEDIATE]

        # Fused QKV projection, one MXU pass; single bf16 cast per layer.
        qkv = _mm(x, w_qkv) + _vec(vec_ref, _row(l, R_BQKV), 3 * HIDDEN)
        qkv = qkv.astype(jnp.bfloat16)                           # [S, 3H]

        # All heads batched along a single leading (batch) dim -> two einsums
        # per layer instead of 12 tiny per-head ones.
        q = jnp.stack([qkv[:, h * HEAD_DIM:(h + 1) * HEAD_DIM]
                       for h in range(NUM_HEADS)], axis=0)       # [Hh, S, Dh]
        k = jnp.stack([qkv[:, HIDDEN + h * HEAD_DIM:
                           HIDDEN + (h + 1) * HEAD_DIM]
                       for h in range(NUM_HEADS)], axis=0)
        v = jnp.stack([qkv[:, 2 * HIDDEN + h * HEAD_DIM:
                           2 * HIDDEN + (h + 1) * HEAD_DIM]
                       for h in range(NUM_HEADS)], axis=0)

        s = jnp.einsum("hqd,hkd->hqk", q, k,
                       preferred_element_type=jnp.float32)       # [Hh, S, S]
        s = s * ATTN_SCALE + mask_bias                           # one bias add
        m = jnp.max(s, axis=-1, keepdims=True)
        p = jnp.exp(s - m)
        p = p * pl.reciprocal(jnp.sum(p, axis=-1, keepdims=True), approx=True)
        ctx = jnp.einsum("hqk,hkd->hqd", p.astype(jnp.bfloat16), v,
                         preferred_element_type=jnp.float32)     # [Hh, S, Dh]

        # Head merge via VMEM scratch stores (no lane-dim concatenation).
        for h in range(NUM_HEADS):
            ctx_scr[:, h * HEAD_DIM:(h + 1) * HEAD_DIM] = ctx[h]

        attn = _mm(ctx_scr[...], w_o) + _vec(vec_ref, _row(l, R_BO), HIDDEN)
        x = _layer_norm(attn + x,
                        _vec(vec_ref, _row(l, R_LN1G), HIDDEN),
                        _vec(vec_ref, _row(l, R_LN1B), HIDDEN))

        h1 = _mm(x, w_1) + _vec(vec_ref, _row(l, R_B1), INTERMEDIATE)
        h1 = jax.nn.gelu(h1, approximate=True)
        ffn = _mm(h1, w2_ref[l]) + _vec(vec_ref, _row(l, R_B2), HIDDEN)
        x = _layer_norm(ffn + x,
                        _vec(vec_ref, _row(l, R_LN2G), HIDDEN),
                        _vec(vec_ref, _row(l, R_LN2B), HIDDEN))

    # Classification head on the CLS token (row 0 of this sequence).
    cls = x[0:1, :]                                              # [1, H]
    logits = _mm(cls, w_out_ref[...]) + _vec(vec_ref, ROW_OUT_B, HEAD_PAD)
    # Padded columns land at sigmoid(0)=0.5; sliced away outside the kernel.
    o_ref[...] = jnp.clip(jax.nn.sigmoid(logits),
                          1e-7, 1.0 - 1e-7).reshape(1, 1, HEAD_PAD)


# ----------------------------- wrapper -----------------------------------------
def linear_bert_pallas(params, input_ids, attention_mask, token_type_ids):
    B, S = input_ids.shape
    # Embedding gathers stay in plain JAX (glue).
    x = (params["word_emb"][input_ids]
         + params["pos_emb"][jnp.arange(S)][None, :, :]
         + params["type_emb"][token_type_ids]).astype(jnp.float32)   # [B, S, H]
    # Additive mask bias folded into the wrapper (one fewer in-kernel VPU op).
    mask_bias = ((attention_mask.astype(jnp.float32) - 1.0) * 1e9)[:, None, :]

    kernel = functools.partial(_fused_bert_kernel, S)
    out_pad = pl.pallas_call(
        kernel,
        out_shape=jax.ShapeDtypeStruct((B, 1, HEAD_PAD), jnp.float32),
        grid_spec=pltpu.PrefetchScalarGridSpec(
            num_scalar_prefetch=0,
            grid=(B,),                                   # batch tile = 1
            in_specs=[
                pl.BlockSpec((1, S, HIDDEN), lambda i: (i, 0, 0)),   # x
                pl.BlockSpec((1, 1, S), lambda i: (i, 0, 0)),        # mask bias
                # Constant index maps -> params stay VMEM-resident across steps.
                pl.BlockSpec((NROWS, VEC_W), lambda i: (0, 0)),
                pl.BlockSpec((NUM_LAYERS, HIDDEN, W_IN_W), lambda i: (0, 0, 0)),
                pl.BlockSpec((NUM_LAYERS, INTERMEDIATE, HIDDEN),
                             lambda i: (0, 0, 0)),
                pl.BlockSpec((HIDDEN, HEAD_PAD), lambda i: (0, 0)),
            ],
            out_specs=pl.BlockSpec((1, 1, HEAD_PAD), lambda i: (i, 0, 0)),
            scratch_shapes=[pltpu.VMEM((S, HIDDEN), jnp.float32)],
        ),
        compiler_params=pltpu.CompilerParams(
            dimension_semantics=("parallel",),           # v7x: 2nd TC gets work
            vmem_limit_bytes=32 * 1024 * 1024),          # safe incl. v7x 64 MiB
    )(x, mask_bias,
      params["vec"], params["w_in"], params["w2"], params["w_out"])
    return out_pad[:, 0, :NUM_LABELS]


linear_bert_forward = jax.jit(linear_bert_pallas)


# ----------------------------- parameters --------------------------------------
def init_params(key):
    keys = iter(jax.random.split(key, 64))

    def nrm(shape):
        return jax.random.normal(next(keys), shape, jnp.float32) * 0.02

    # Packed f32 slab: LN gammas/betas + all matmul biases (one small DMA).
    vec = jnp.zeros((NROWS, VEC_W), jnp.float32)
    vec = vec.at[ROW_EMB_G, :HIDDEN].set(1.0)          # embedding LN gamma
    w_in_layers, w2_layers = [], []
    for l in range(NUM_LAYERS):
        wqkv = jnp.concatenate([nrm((HIDDEN, HIDDEN)) for _ in range(3)], axis=1)
        wo = nrm((HIDDEN, HIDDEN))
        w1 = nrm((HIDDEN, INTERMEDIATE))
        w2 = nrm((INTERMEDIATE, HIDDEN))
        w_in_layers.append(jnp.concatenate([wqkv, wo, w1], axis=1))  # [H, 2304]
        w2_layers.append(w2)
        vec = vec.at[_row(l, R_LN1G), :HIDDEN].set(1.0)
        vec = vec.at[_row(l, R_LN2G), :HIDDEN].set(1.0)
        # all biases stay zero (rows R_BQKV, R_BO, R_B1, R_B2, LN betas)

    out_w = nrm((HIDDEN, NUM_LABELS))
    w_out_pad = jnp.zeros((HIDDEN, HEAD_PAD), jnp.float32).at[:, :NUM_LABELS].set(out_w)
    # out-bias row (ROW_OUT_B) stays zero

    return {
        "word_emb": nrm((VOCAB, HIDDEN)),
        "pos_emb": nrm((MAX_POS, HIDDEN)),
        "type_emb": nrm((TYPE_VOCAB, HIDDEN)),
        "vec": vec,                                     # f32 [19, 1152]
        "w_in": jnp.stack(w_in_layers).astype(jnp.bfloat16),   # [L, 384, 2304]
        "w2": jnp.stack(w2_layers).astype(jnp.bfloat16),       # [L, 768, 384]
        "w_out": w_out_pad.astype(jnp.bfloat16),               # [384, 128]
    }


# ----------------------------- main ---------------------------------------------
if __name__ == "__main__":
    key = jax.random.PRNGKey(0)
    k_param, k_ids = jax.random.split(key, 2)

    B, S = 2, 8
    params = init_params(k_param)
    input_ids = jax.random.randint(k_ids, (B, S), 0, VOCAB, dtype=jnp.int32)
    # deterministic mask: first batch fully attended, second batch last 2 padded
    attention_mask = jnp.concatenate(
        [jnp.ones((1, S), jnp.int32),
         jnp.concatenate([jnp.ones((1, S - 2), jnp.int32),
                          jnp.zeros((1, 2), jnp.int32)], axis=1)],
        axis=0,
    )
    token_type_ids = jnp.zeros((B, S), jnp.int32)

    out = linear_bert_forward(params, input_ids, attention_mask, token_type_ids)
    out = jax.block_until_ready(out)

    assert out.shape == (B, NUM_LABELS)
    assert bool(jnp.all(out >= 1e-7)) and bool(jnp.all(out <= 1.0 - 1e-7))
    print("KERNEL_OK")
</pallas_src>

<mosaic_0001>
module attributes {stable_mosaic.version = 11 : i64} {
  func.func @_fused_bert_kernel(%arg0: i32, %arg1: memref<1x8x384xf32, #tpu.memory_space<vmem>>, %arg2: memref<1x1x8xf32, #tpu.memory_space<vmem>>, %arg3: memref<19x1152xf32, #tpu.memory_space<vmem>>, %arg4: memref<2x384x2304xbf16, #tpu.memory_space<vmem>>, %arg5: memref<2x768x384xbf16, #tpu.memory_space<vmem>>, %arg6: memref<384x128xbf16, #tpu.memory_space<vmem>>, %arg7: memref<1x1x128xf32, #tpu.memory_space<vmem>>, %arg8: memref<8x384xf32, #tpu.memory_space<vmem>>) attributes {dimension_semantics = [#tpu.dimension_semantics<parallel>], iteration_bounds = array<i64: 2>, scalar_prefetch = 0 : i64, scratch_operands = 1 : i64, tpu.core_type = #tpu.core_type<tc>, window_params = [{transform_indices = @transform_0, window_bounds = array<i64: 1, 8, 384>}, {transform_indices = @transform_1, window_bounds = array<i64: 1, 1, 8>}, {pipeline_mode = #tpu.pipeline_mode<synchronous>, transform_indices = @transform_2, window_bounds = array<i64: 19, 1152>}, {pipeline_mode = #tpu.pipeline_mode<synchronous>, transform_indices = @transform_3, window_bounds = array<i64: 2, 384, 2304>}, {pipeline_mode = #tpu.pipeline_mode<synchronous>, transform_indices = @transform_4, window_bounds = array<i64: 2, 768, 384>}, {pipeline_mode = #tpu.pipeline_mode<synchronous>, transform_indices = @transform_5, window_bounds = array<i64: 384, 128>}, {transform_indices = @transform_6, window_bounds = array<i64: 1, 1, 128>}]} {
    %c0 = arith.constant 0 : index
    %c0_0 = arith.constant 0 : index
    %c0_1 = arith.constant 0 : index
    %0 = vector.load %arg1[%c0, %c0_0, %c0_1] : memref<1x8x384xf32, #tpu.memory_space<vmem>>, vector<1x8x384xf32>
    %1 = vector.shape_cast %0 : vector<1x8x384xf32> to vector<8x384xf32>
    %c0_2 = arith.constant 0 : index
    %c0_3 = arith.constant 0 : index
    %2 = vector.load %arg3[%c0_2, %c0_3] : memref<19x1152xf32, #tpu.memory_space<vmem>>, vector<1x384xf32>
    %c1 = arith.constant 1 : index
    %c0_4 = arith.constant 0 : index
    %3 = vector.load %arg3[%c1, %c0_4] : memref<19x1152xf32, #tpu.memory_space<vmem>>, vector<1x384xf32>
    %cst = arith.constant dense<0.000000e+00> : vector<8xf32>
    %4 = vector.multi_reduction <add>, %1, %cst [1] : vector<8x384xf32> to vector<8xf32>
    %5 = vector.shape_cast %4 : vector<8xf32> to vector<8x1xf32>
    %cst_5 = arith.constant 3.840000e+02 : f32
    %6 = vector.broadcast %cst_5 : f32 to vector<8x1xf32>
    %7 = arith.divf %5, %6 : vector<8x1xf32>
    %8 = vector.broadcast %7 : vector<8x1xf32> to vector<8x384xf32>
    %9 = arith.subf %1, %8 : vector<8x384xf32>
    %10 = arith.mulf %9, %9 : vector<8x384xf32>
    %cst_6 = arith.constant dense<0.000000e+00> : vector<8xf32>
    %11 = vector.multi_reduction <add>, %10, %cst_6 [1] : vector<8x384xf32> to vector<8xf32>
    %12 = vector.shape_cast %11 : vector<8xf32> to vector<8x1xf32>
    %cst_7 = arith.constant 3.840000e+02 : f32
    %13 = vector.broadcast %cst_7 : f32 to vector<8x1xf32>
    %14 = arith.divf %12, %13 : vector<8x1xf32>
    %15 = vector.broadcast %7 : vector<8x1xf32> to vector<8x384xf32>
    %16 = arith.subf %1, %15 : vector<8x384xf32>
    %cst_8 = arith.constant 9.99999996E-13 : f32
    %17 = vector.broadcast %cst_8 : f32 to vector<8x1xf32>
    %18 = arith.addf %14, %17 : vector<8x1xf32>
    %19 = math.rsqrt %18 : vector<8x1xf32>
    %20 = vector.broadcast %19 : vector<8x1xf32> to vector<8x384xf32>
    %21 = arith.mulf %16, %20 : vector<8x384xf32>
    %22 = vector.broadcast %2 : vector<1x384xf32> to vector<8x384xf32>
    %23 = arith.mulf %21, %22 : vector<8x384xf32>
    %24 = vector.broadcast %3 : vector<1x384xf32> to vector<8x384xf32>
    %25 = arith.addf %23, %24 : vector<8x384xf32>
    %c0_9 = arith.constant 0 : index
    %c0_10 = arith.constant 0 : index
    %c0_11 = arith.constant 0 : index
    %26 = vector.load %arg2[%c0_9, %c0_10, %c0_11] : memref<1x1x8xf32, #tpu.memory_space<vmem>>, vector<1x1x8xf32>
    %27 = vector.shape_cast %26 : vector<1x1x8xf32> to vector<1x8xf32>
    %c0_12 = arith.constant 0 : index
    %c0_13 = arith.constant 0 : index
    %c0_14 = arith.constant 0 : index
    %28 = vector.load %arg4[%c0_12, %c0_13, %c0_14] : memref<2x384x2304xbf16, #tpu.memory_space<vmem>>, vector<1x384x1152xbf16>
    %29 = vector.shape_cast %28 : vector<1x384x1152xbf16> to vector<384x1152xbf16>
    %c0_15 = arith.constant 0 : index
    %c0_16 = arith.constant 0 : index
    %c1152 = arith.constant 1152 : index
    %30 = vector.load %arg4[%c0_15, %c0_16, %c1152] : memref<2x384x2304xbf16, #tpu.memory_space<vmem>>, vector<1x384x384xbf16>
    %31 = vector.shape_cast %30 : vector<1x384x384xbf16> to vector<384x384xbf16>
    %c0_17 = arith.constant 0 : index
    %c0_18 = arith.constant 0 : index
    %c1536 = arith.constant 1536 : index
    %32 = vector.load %arg4[%c0_17, %c0_18, %c1536] : memref<2x384x2304xbf16, #tpu.memory_space<vmem>>, vector<1x384x768xbf16>
    %33 = vector.shape_cast %32 : vector<1x384x768xbf16> to vector<384x768xbf16>
    %34 = arith.truncf %25 : vector<8x384xf32> to vector<8x384xbf16>
    %cst_19 = arith.constant dense<0.000000e+00> : vector<8x1152xf32>
    %35 = tpu.matmul %34, %29, %cst_19 {dimension_numbers = #tpu.dot_dimension_numbers<[1], [0], [0], [1], [0, 0, 1, 1], [], []>} : vector<8x384xbf16>, vector<384x1152xbf16>, vector<8x1152xf32> -> vector<8x1152xf32>
    %c2 = arith.constant 2 : index
    %c0_20 = arith.constant 0 : index
    %36 = vector.load %arg3[%c2, %c0_20] : memref<19x1152xf32, #tpu.memory_space<vmem>>, vector<1x1152xf32>
    %37 = vector.broadcast %36 : vector<1x1152xf32> to vector<8x1152xf32>
    %38 = arith.addf %35, %37 : vector<8x1152xf32>
    %39 = arith.truncf %38 : vector<8x1152xf32> to vector<8x1152xbf16>
    %40 = vector.extract_strided_slice %39 {offsets = [0, 0], sizes = [8, 64], strides = [1, 1]} : vector<8x1152xbf16> to vector<8x64xbf16>
    %41 = vector.extract_strided_slice %39 {offsets = [0, 64], sizes = [8, 64], strides = [1, 1]} : vector<8x1152xbf16> to vector<8x64xbf16>
    %42 = vector.extract_strided_slice %39 {offsets = [0, 128], sizes = [8, 64], strides = [1, 1]} : vector<8x1152xbf16> to vector<8x64xbf16>
    %43 = vector.extract_strided_slice %39 {offsets = [0, 192], sizes = [8, 64], strides = [1, 1]} : vector<8x1152xbf16> to vector<8x64xbf16>
    %44 = vector.extract_strided_slice %39 {offsets = [0, 256], sizes = [8, 64], strides = [1, 1]} : vector<8x1152xbf16> to vector<8x64xbf16>
    %45 = vector.extract_strided_slice %39 {offsets = [0, 320], sizes = [8, 64], strides = [1, 1]} : vector<8x1152xbf16> to vector<8x64xbf16>
    %46 = vector.shape_cast %40 : vector<8x64xbf16> to vector<1x8x64xbf16>
    %47 = vector.shape_cast %41 : vector<8x64xbf16> to vector<1x8x64xbf16>
    %48 = vector.shape_cast %42 : vector<8x64xbf16> to vector<1x8x64xbf16>
    %49 = vector.shape_cast %43 : vector<8x64xbf16> to vector<1x8x64xbf16>
    %50 = vector.shape_cast %44 : vector<8x64xbf16> to vector<1x8x64xbf16>
    %51 = vector.shape_cast %45 : vector<8x64xbf16> to vector<1x8x64xbf16>
    %52 = tpu.concatenate %46, %47, %48, %49, %50, %51 in 0 : vector<1x8x64xbf16>, vector<1x8x64xbf16>, vector<1x8x64xbf16>, vector<1x8x64xbf16>, vector<1x8x64xbf16>, vector<1x8x64xbf16> -> vector<6x8x64xbf16>
    %53 = vector.extract_strided_slice %39 {offsets = [0, 384], sizes = [8, 64], strides = [1, 1]} : vector<8x1152xbf16> to vector<8x64xbf16>
    %54 = vector.extract_strided_slice %39 {offsets = [0, 448], sizes = [8, 64], strides = [1, 1]} : vector<8x1152xbf16> to vector<8x64xbf16>
    %55 = vector.extract_strided_slice %39 {offsets = [0, 512], sizes = [8, 64], strides = [1, 1]} : vector<8x1152xbf16> to vector<8x64xbf16>
    %56 = vector.extract_strided_slice %39 {offsets = [0, 576], sizes = [8, 64], strides = [1, 1]} : vector<8x1152xbf16> to vector<8x64xbf16>
    %57 = vector.extract_strided_slice %39 {offsets = [0, 640], sizes = [8, 64], strides = [1, 1]} : vector<8x1152xbf16> to vector<8x64xbf16>
    %58 = vector.extract_strided_slice %39 {offsets = [0, 704], sizes = [8, 64], strides = [1, 1]} : vector<8x1152xbf16> to vector<8x64xbf16>
    %59 = vector.shape_cast %53 : vector<8x64xbf16> to vector<1x8x64xbf16>
    %60 = vector.shape_cast %54 : vector<8x64xbf16> to vector<1x8x64xbf16>
    %61 = vector.shape_cast %55 : vector<8x64xbf16> to vector<1x8x64xbf16>
    %62 = vector.shape_cast %56 : vector<8x64xbf16> to vector<1x8x64xbf16>
    %63 = vector.shape_cast %57 : vector<8x64xbf16> to vector<1x8x64xbf16>
    %64 = vector.shape_cast %58 : vector<8x64xbf16> to vector<1x8x64xbf16>
    %65 = tpu.concatenate %59, %60, %61, %62, %63, %64 in 0 : vector<1x8x64xbf16>, vector<1x8x64xbf16>, vector<1x8x64xbf16>, vector<1x8x64xbf16>, vector<1x8x64xbf16>, vector<1x8x64xbf16> -> vector<6x8x64xbf16>
    %66 = vector.extract_strided_slice %39 {offsets = [0, 768], sizes = [8, 64], strides = [1, 1]} : vector<8x1152xbf16> to vector<8x64xbf16>
    %67 = vector.extract_strided_slice %39 {offsets = [0, 832], sizes = [8, 64], strides = [1, 1]} : vector<8x1152xbf16> to vector<8x64xbf16>
    %68 = vector.extract_strided_slice %39 {offsets = [0, 896], sizes = [8, 64], strides = [1, 1]} : vector<8x1152xbf16> to vector<8x64xbf16>
    %69 = vector.extract_strided_slice %39 {offsets = [0, 960], sizes = [8, 64], strides = [1, 1]} : vector<8x1152xbf16> to vector<8x64xbf16>
    %70 = vector.extract_strided_slice %39 {offsets = [0, 1024], sizes = [8, 64], strides = [1, 1]} : vector<8x1152xbf16> to vector<8x64xbf16>
    %71 = vector.extract_strided_slice %39 {offsets = [0, 1088], sizes = [8, 64], strides = [1, 1]} : vector<8x1152xbf16> to vector<8x64xbf16>
    %72 = vector.shape_cast %66 : vector<8x64xbf16> to vector<1x8x64xbf16>
    %73 = vector.shape_cast %67 : vector<8x64xbf16> to vector<1x8x64xbf16>
    %74 = vector.shape_cast %68 : vector<8x64xbf16> to vector<1x8x64xbf16>
    %75 = vector.shape_cast %69 : vector<8x64xbf16> to vector<1x8x64xbf16>
    %76 = vector.shape_cast %70 : vector<8x64xbf16> to vector<1x8x64xbf16>
    %77 = vector.shape_cast %71 : vector<8x64xbf16> to vector<1x8x64xbf16>
    %78 = tpu.concatenate %72, %73, %74, %75, %76, %77 in 0 : vector<1x8x64xbf16>, vector<1x8x64xbf16>, vector<1x8x64xbf16>, vector<1x8x64xbf16>, vector<1x8x64xbf16>, vector<1x8x64xbf16> -> vector<6x8x64xbf16>
    "tpu.trace_start"() <{level = 10 : i32, message = "hqd,hkd->hqk"}> : () -> ()
    %cst_21 = arith.constant dense<0.000000e+00> : vector<6x8x8xf32>
    %79 = tpu.matmul %52, %65, %cst_21 {dimension_numbers = #tpu.dot_dimension_numbers<[2], [2], [1], [1], [0, 0, 0, 1, 1, 1], [0], [0]>} : vector<6x8x64xbf16>, vector<6x8x64xbf16>, vector<6x8x8xf32> -> vector<6x8x8xf32>
    "tpu.trace_stop"() : () -> ()
    %cst_22 = arith.constant 1.250000e-01 : f32
    %80 = vector.broadcast %cst_22 : f32 to vector<6x8x8xf32>
    %81 = arith.mulf %79, %80 : vector<6x8x8xf32>
    %82 = vector.shape_cast %27 : vector<1x8xf32> to vector<1x1x8xf32>
    %83 = vector.broadcast %82 : vector<1x1x8xf32> to vector<6x8x8xf32>
    %84 = arith.addf %81, %83 : vector<6x8x8xf32>
    %cst_23 = arith.constant dense<0xFF800000> : vector<6x8xf32>
    %85 = vector.multi_reduction <maximumf>, %84, %cst_23 [2] : vector<6x8x8xf32> to vector<6x8xf32>
    %86 = vector.shape_cast %85 : vector<6x8xf32> to vector<6x8x1xf32>
    %87 = vector.broadcast %86 : vector<6x8x1xf32> to vector<6x8x8xf32>
    %88 = arith.subf %84, %87 : vector<6x8x8xf32>
    %89 = math.exp %88 : vector<6x8x8xf32>
    %cst_24 = arith.constant dense<0.000000e+00> : vector<6x8xf32>
    %90 = vector.multi_reduction <add>, %89, %cst_24 [2] : vector<6x8x8xf32> to vector<6x8xf32>
    %91 = vector.shape_cast %90 : vector<6x8xf32> to vector<6x8x1xf32>
    %92 = tpu.reciprocal %91 {approx = true} : vector<6x8x1xf32> -> vector<6x8x1xf32>
    %93 = vector.broadcast %92 : vector<6x8x1xf32> to vector<6x8x8xf32>
    %94 = arith.mulf %89, %93 : vector<6x8x8xf32>
    %95 = arith.truncf %94 : vector<6x8x8xf32> to vector<6x8x8xbf16>
    "tpu.trace_start"() <{level = 10 : i32, message = "hqk,hkd->hqd"}> : () -> ()
    %cst_25 = arith.constant dense<0.000000e+00> : vector<6x8x64xf32>
    %96 = tpu.matmul %95, %78, %cst_25 {dimension_numbers = #tpu.dot_dimension_numbers<[2], [1], [1], [2], [0, 0, 0, 1, 1, 2], [0], [0]>} : vector<6x8x8xbf16>, vector<6x8x64xbf16>, vector<6x8x64xf32> -> vector<6x8x64xf32>
    "tpu.trace_stop"() : () -> ()
    %97 = vector.extract_strided_slice %96 {offsets = [0, 0, 0], sizes = [1, 8, 64], strides = [1, 1, 1]} : vector<6x8x64xf32> to vector<1x8x64xf32>
    %98 = vector.shape_cast %97 : vector<1x8x64xf32> to vector<8x64xf32>
    %c0_26 = arith.constant 0 : index
    %c0_27 = arith.constant 0 : index
    %99 = vector.load %arg8[%c0_26, %c0_27] : memref<8x384xf32, #tpu.memory_space<vmem>>, vector<8x64xf32>
    tpu.vector_store %arg8[%c0_26, %c0_27], %98 {strides = array<i32>} : memref<8x384xf32, #tpu.memory_space<vmem>>, vector<8x64xf32>,
    %100 = vector.extract_strided_slice %96 {offsets = [1, 0, 0], sizes = [1, 8, 64], strides = [1, 1, 1]} : vector<6x8x64xf32> to vector<1x8x64xf32>
    %101 = vector.shape_cast %100 : vector<1x8x64xf32> to vector<8x64xf32>
    %c0_28 = arith.constant 0 : index
    %c64 = arith.constant 64 : index
    %102 = vector.load %arg8[%c0_28, %c64] : memref<8x384xf32, #tpu.memory_space<vmem>>, vector<8x64xf32>
    tpu.vector_store %arg8[%c0_28, %c64], %101 {strides = array<i32>} : memref<8x384xf32, #tpu.memory_space<vmem>>, vector<8x64xf32>,
    %103 = vector.extract_strided_slice %96 {offsets = [2, 0, 0], sizes = [1, 8, 64], strides = [1, 1, 1]} : vector<6x8x64xf32> to vector<1x8x64xf32>
    %104 = vector.shape_cast %103 : vector<1x8x64xf32> to vector<8x64xf32>
    %c0_29 = arith.constant 0 : index
    %c128 = arith.constant 128 : index
    %105 = vector.load %arg8[%c0_29, %c128] : memref<8x384xf32, #tpu.memory_space<vmem>>, vector<8x64xf32>
    tpu.vector_store %arg8[%c0_29, %c128], %104 {strides = array<i32>} : memref<8x384xf32, #tpu.memory_space<vmem>>, vector<8x64xf32>,
    %106 = vector.extract_strided_slice %96 {offsets = [3, 0, 0], sizes = [1, 8, 64], strides = [1, 1, 1]} : vector<6x8x64xf32> to vector<1x8x64xf32>
    %107 = vector.shape_cast %106 : vector<1x8x64xf32> to vector<8x64xf32>
    %c0_30 = arith.constant 0 : index
    %c192 = arith.constant 192 : index
    %108 = vector.load %arg8[%c0_30, %c192] : memref<8x384xf32, #tpu.memory_space<vmem>>, vector<8x64xf32>
    tpu.vector_store %arg8[%c0_30, %c192], %107 {strides = array<i32>} : memref<8x384xf32, #tpu.memory_space<vmem>>, vector<8x64xf32>,
    %109 = vector.extract_strided_slice %96 {offsets = [4, 0, 0], sizes = [1, 8, 64], strides = [1, 1, 1]} : vector<6x8x64xf32> to vector<1x8x64xf32>
    %110 = vector.shape_cast %109 : vector<1x8x64xf32> to vector<8x64xf32>
    %c0_31 = arith.constant 0 : index
    %c256 = arith.constant 256 : index
    %111 = vector.load %arg8[%c0_31, %c256] : memref<8x384xf32, #tpu.memory_space<vmem>>, vector<8x64xf32>
    tpu.vector_store %arg8[%c0_31, %c256], %110 {strides = array<i32>} : memref<8x384xf32, #tpu.memory_space<vmem>>, vector<8x64xf32>,
    %112 = vector.extract_strided_slice %96 {offsets = [5, 0, 0], sizes = [1, 8, 64], strides = [1, 1, 1]} : vector<6x8x64xf32> to vector<1x8x64xf32>
    %113 = vector.shape_cast %112 : vector<1x8x64xf32> to vector<8x64xf32>
    %c0_32 = arith.constant 0 : index
    %c320 = arith.constant 320 : index
    %114 = vector.load %arg8[%c0_32, %c320] : memref<8x384xf32, #tpu.memory_space<vmem>>, vector<8x64xf32>
    tpu.vector_store %arg8[%c0_32, %c320], %113 {strides = array<i32>} : memref<8x384xf32, #tpu.memory_space<vmem>>, vector<8x64xf32>,
    %c0_33 = arith.constant 0 : index
    %c0_34 = arith.constant 0 : index
    %115 = vector.load %arg8[%c0_33, %c0_34] : memref<8x384xf32, #tpu.memory_space<vmem>>, vector<8x384xf32>
    %116 = arith.truncf %115 : vector<8x384xf32> to vector<8x384xbf16>
    %cst_35 = arith.constant dense<0.000000e+00> : vector<8x384xf32>
    %117 = tpu.matmul %116, %31, %cst_35 {dimension_numbers = #tpu.dot_dimension_numbers<[1], [0], [0], [1], [0, 0, 1, 1], [], []>} : vector<8x384xbf16>, vector<384x384xbf16>, vector<8x384xf32> -> vector<8x384xf32>
    %c3 = arith.constant 3 : index
    %c0_36 = arith.constant 0 : index
    %118 = vector.load %arg3[%c3, %c0_36] : memref<19x1152xf32, #tpu.memory_space<vmem>>, vector<1x384xf32>
    %119 = vector.broadcast %118 : vector<1x384xf32> to vector<8x384xf32>
    %120 = arith.addf %117, %119 : vector<8x384xf32>
    %121 = arith.addf %120, %25 : vector<8x384xf32>
    %c4 = arith.constant 4 : index
    %c0_37 = arith.constant 0 : index
    %122 = vector.load %arg3[%c4, %c0_37] : memref<19x1152xf32, #tpu.memory_space<vmem>>, vector<1x384xf32>
    %c5 = arith.constant 5 : index
    %c0_38 = arith.constant 0 : index
    %123 = vector.load %arg3[%c5, %c0_38] : memref<19x1152xf32, #tpu.memory_space<vmem>>, vector<1x384xf32>
    %cst_39 = arith.constant dense<0.000000e+00> : vector<8xf32>
    %124 = vector.multi_reduction <add>, %121, %cst_39 [1] : vector<8x384xf32> to vector<8xf32>
    %125 = vector.shape_cast %124 : vector<8xf32> to vector<8x1xf32>
    %cst_40 = arith.constant 3.840000e+02 : f32
    %126 = vector.broadcast %cst_40 : f32 to vector<8x1xf32>
    %127 = arith.divf %125, %126 : vector<8x1xf32>
    %128 = vector.broadcast %127 : vector<8x1xf32> to vector<8x384xf32>
    %129 = arith.subf %121, %128 : vector<8x384xf32>
    %130 = arith.mulf %129, %129 : vector<8x384xf32>
    %cst_41 = arith.constant dense<0.000000e+00> : vector<8xf32>
    %131 = vector.multi_reduction <add>, %130, %cst_41 [1] : vector<8x384xf32> to vector<8xf32>
    %132 = vector.shape_cast %131 : vector<8xf32> to vector<8x1xf32>
    %cst_42 = arith.constant 3.840000e+02 : f32
    %133 = vector.broadcast %cst_42 : f32 to vector<8x1xf32>
    %134 = arith.divf %132, %133 : vector<8x1xf32>
    %135 = vector.broadcast %127 : vector<8x1xf32> to vector<8x384xf32>
    %136 = arith.subf %121, %135 : vector<8x384xf32>
    %cst_43 = arith.constant 9.99999996E-13 : f32
    %137 = vector.broadcast %cst_43 : f32 to vector<8x1xf32>
    %138 = arith.addf %134, %137 : vector<8x1xf32>
    %139 = math.rsqrt %138 : vector<8x1xf32>
    %140 = vector.broadcast %139 : vector<8x1xf32> to vector<8x384xf32>
    %141 = arith.mulf %136, %140 : vector<8x384xf32>
    %142 = vector.broadcast %122 : vector<1x384xf32> to vector<8x384xf32>
    %143 = arith.mulf %141, %142 : vector<8x384xf32>
    %144 = vector.broadcast %123 : vector<1x384xf32> to vector<8x384xf32>
    %145 = arith.addf %143, %144 : vector<8x384xf32>
    %146 = arith.truncf %145 : vector<8x384xf32> to vector<8x384xbf16>
    %cst_44 = arith.constant dense<0.000000e+00> : vector<8x768xf32>
    %147 = tpu.matmul %146, %33, %cst_44 {dimension_numbers = #tpu.dot_dimension_numbers<[1], [0], [0], [1], [0, 0, 1, 1], [], []>} : vector<8x384xbf16>, vector<384x768xbf16>, vector<8x768xf32> -> vector<8x768xf32>
    %c6 = arith.constant 6 : index
    %c0_45 = arith.constant 0 : index
    %148 = vector.load %arg3[%c6, %c0_45] : memref<19x1152xf32, #tpu.memory_space<vmem>>, vector<1x768xf32>
    %149 = vector.broadcast %148 : vector<1x768xf32> to vector<8x768xf32>
    %150 = arith.addf %147, %149 : vector<8x768xf32>
    %151 = arith.mulf %150, %150 : vector<8x768xf32>
    %152 = arith.mulf %150, %151 : vector<8x768xf32>
    %cst_46 = arith.constant 4.471500e-02 : f32
    %153 = vector.broadcast %cst_46 : f32 to vector<8x768xf32>
    %154 = arith.mulf %153, %152 : vector<8x768xf32>
    %155 = arith.addf %150, %154 : vector<8x768xf32>
    %cst_47 = arith.constant 0.797884583 : f32
    %156 = vector.broadcast %cst_47 : f32 to vector<8x768xf32>
    %157 = arith.mulf %156, %155 : vector<8x768xf32>
    %158 = math.tanh %157 : vector<8x768xf32>
    %cst_48 = arith.constant 1.000000e+00 : f32
    %159 = vector.broadcast %cst_48 : f32 to vector<8x768xf32>
    %160 = arith.addf %159, %158 : vector<8x768xf32>
    %cst_49 = arith.constant 5.000000e-01 : f32
    %161 = vector.broadcast %cst_49 : f32 to vector<8x768xf32>
    %162 = arith.mulf %161, %160 : vector<8x768xf32>
    %163 = arith.mulf %150, %162 : vector<8x768xf32>
    %c0_50 = arith.constant 0 : index
    %c0_51 = arith.constant 0 : index
    %c0_52 = arith.constant 0 : index
    %164 = vector.load %arg5[%c0_50, %c0_51, %c0_52] : memref<2x768x384xbf16, #tpu.memory_space<vmem>>, vector<1x768x384xbf16>
    %165 = vector.shape_cast %164 : vector<1x768x384xbf16> to vector<768x384xbf16>
    %166 = arith.truncf %163 : vector<8x768xf32> to vector<8x768xbf16>
    %cst_53 = arith.constant dense<0.000000e+00> : vector<8x384xf32>
    %167 = tpu.matmul %166, %165, %cst_53 {dimension_numbers = #tpu.dot_dimension_numbers<[1], [0], [0], [1], [0, 0, 1, 1], [], []>} : vector<8x768xbf16>, vector<768x384xbf16>, vector<8x384xf32> -> vector<8x384xf32>
    %c7 = arith.constant 7 : index
    %c0_54 = arith.constant 0 : index
    %168 = vector.load %arg3[%c7, %c0_54] : memref<19x1152xf32, #tpu.memory_space<vmem>>, vector<1x384xf32>
    %169 = vector.broadcast %168 : vector<1x384xf32> to vector<8x384xf32>
    %170 = arith.addf %167, %169 : vector<8x384xf32>
    %171 = arith.addf %170, %145 : vector<8x384xf32>
    %c8 = arith.constant 8 : index
    %c0_55 = arith.constant 0 : index
    %172 = vector.load %arg3[%c8, %c0_55] : memref<19x1152xf32, #tpu.memory_space<vmem>>, vector<1x384xf32>
    %c9 = arith.constant 9 : index
    %c0_56 = arith.constant 0 : index
    %173 = vector.load %arg3[%c9, %c0_56] : memref<19x1152xf32, #tpu.memory_space<vmem>>, vector<1x384xf32>
    %cst_57 = arith.constant dense<0.000000e+00> : vector<8xf32>
    %174 = vector.multi_reduction <add>, %171, %cst_57 [1] : vector<8x384xf32> to vector<8xf32>
    %175 = vector.shape_cast %174 : vector<8xf32> to vector<8x1xf32>
    %cst_58 = arith.constant 3.840000e+02 : f32
    %176 = vector.broadcast %cst_58 : f32 to vector<8x1xf32>
    %177 = arith.divf %175, %176 : vector<8x1xf32>
    %178 = vector.broadcast %177 : vector<8x1xf32> to vector<8x384xf32>
    %179 = arith.subf %171, %178 : vector<8x384xf32>
    %180 = arith.mulf %179, %179 : vector<8x384xf32>
    %cst_59 = arith.constant dense<0.000000e+00> : vector<8xf32>
    %181 = vector.multi_reduction <add>, %180, %cst_59 [1] : vector<8x384xf32> to vector<8xf32>
    %182 = vector.shape_cast %181 : vector<8xf32> to vector<8x1xf32>
    %cst_60 = arith.constant 3.840000e+02 : f32
    %183 = vector.broadcast %cst_60 : f32 to vector<8x1xf32>
    %184 = arith.divf %182, %183 : vector<8x1xf32>
    %185 = vector.broadcast %177 : vector<8x1xf32> to vector<8x384xf32>
    %186 = arith.subf %171, %185 : vector<8x384xf32>
    %cst_61 = arith.constant 9.99999996E-13 : f32
    %187 = vector.broadcast %cst_61 : f32 to vector<8x1xf32>
    %188 = arith.addf %184, %187 : vector<8x1xf32>
    %189 = math.rsqrt %188 : vector<8x1xf32>
    %190 = vector.broadcast %189 : vector<8x1xf32> to vector<8x384xf32>
    %191 = arith.mulf %186, %190 : vector<8x384xf32>
    %192 = vector.broadcast %172 : vector<1x384xf32> to vector<8x384xf32>
    %193 = arith.mulf %191, %192 : vector<8x384xf32>
    %194 = vector.broadcast %173 : vector<1x384xf32> to vector<8x384xf32>
    %195 = arith.addf %193, %194 : vector<8x384xf32>
    %c1_62 = arith.constant 1 : index
    %c0_63 = arith.constant 0 : index
    %c0_64 = arith.constant 0 : index
    %196 = vector.load %arg4[%c1_62, %c0_63, %c0_64] : memref<2x384x2304xbf16, #tpu.memory_space<vmem>>, vector<1x384x1152xbf16>
    %197 = vector.shape_cast %196 : vector<1x384x1152xbf16> to vector<384x1152xbf16>
    %c1_65 = arith.constant 1 : index
    %c0_66 = arith.constant 0 : index
    %c1152_67 = arith.constant 1152 : index
    %198 = vector.load %arg4[%c1_65, %c0_66, %c1152_67] : memref<2x384x2304xbf16, #tpu.memory_space<vmem>>, vector<1x384x384xbf16>
    %199 = vector.shape_cast %198 : vector<1x384x384xbf16> to vector<384x384xbf16>
    %c1_68 = arith.constant 1 : index
    %c0_69 = arith.constant 0 : index
    %c1536_70 = arith.constant 1536 : index
    %200 = vector.load %arg4[%c1_68, %c0_69, %c1536_70] : memref<2x384x2304xbf16, #tpu.memory_space<vmem>>, vector<1x384x768xbf16>
    %201 = vector.shape_cast %200 : vector<1x384x768xbf16> to vector<384x768xbf16>
    %202 = arith.truncf %195 : vector<8x384xf32> to vector<8x384xbf16>
    %cst_71 = arith.constant dense<0.000000e+00> : vector<8x1152xf32>
    %203 = tpu.matmul %202, %197, %cst_71 {dimension_numbers = #tpu.dot_dimension_numbers<[1], [0], [0], [1], [0, 0, 1, 1], [], []>} : vector<8x384xbf16>, vector<384x1152xbf16>, vector<8x1152xf32> -> vector<8x1152xf32>
    %c10 = arith.constant 10 : index
    %c0_72 = arith.constant 0 : index
    %204 = vector.load %arg3[%c10, %c0_72] : memref<19x1152xf32, #tpu.memory_space<vmem>>, vector<1x1152xf32>
    %205 = vector.broadcast %204 : vector<1x1152xf32> to vector<8x1152xf32>
    %206 = arith.addf %203, %205 : vector<8x1152xf32>
    %207 = arith.truncf %206 : vector<8x1152xf32> to vector<8x1152xbf16>
    %208 = vector.extract_strided_slice %207 {offsets = [0, 0], sizes = [8, 64], strides = [1, 1]} : vector<8x1152xbf16> to vector<8x64xbf16>
    %209 = vector.extract_strided_slice %207 {offsets = [0, 64], sizes = [8, 64], strides = [1, 1]} : vector<8x1152xbf16> to vector<8x64xbf16>
    %210 = vector.extract_strided_slice %207 {offsets = [0, 128], sizes = [8, 64], strides = [1, 1]} : vector<8x1152xbf16> to vector<8x64xbf16>
    %211 = vector.extract_strided_slice %207 {offsets = [0, 192], sizes = [8, 64], strides = [1, 1]} : vector<8x1152xbf16> to vector<8x64xbf16>
    %212 = vector.extract_strided_slice %207 {offsets = [0, 256], sizes = [8, 64], strides = [1, 1]} : vector<8x1152xbf16> to vector<8x64xbf16>
    %213 = vector.extract_strided_slice %207 {offsets = [0, 320], sizes = [8, 64], strides = [1, 1]} : vector<8x1152xbf16> to vector<8x64xbf16>
    %214 = vector.shape_cast %208 : vector<8x64xbf16> to vector<1x8x64xbf16>
    %215 = vector.shape_cast %209 : vector<8x64xbf16> to vector<1x8x64xbf16>
    %216 = vector.shape_cast %210 : vector<8x64xbf16> to vector<1x8x64xbf16>
    %217 = vector.shape_cast %211 : vector<8x64xbf16> to vector<1x8x64xbf16>
    %218 = vector.shape_cast %212 : vector<8x64xbf16> to vector<1x8x64xbf16>
    %219 = vector.shape_cast %213 : vector<8x64xbf16> to vector<1x8x64xbf16>
    %220 = tpu.concatenate %214, %215, %216, %217, %218, %219 in 0 : vector<1x8x64xbf16>, vector<1x8x64xbf16>, vector<1x8x64xbf16>, vector<1x8x64xbf16>, vector<1x8x64xbf16>, vector<1x8x64xbf16> -> vector<6x8x64xbf16>
    %221 = vector.extract_strided_slice %207 {offsets = [0, 384], sizes = [8, 64], strides = [1, 1]} : vector<8x1152xbf16> to vector<8x64xbf16>
    %222 = vector.extract_strided_slice %207 {offsets = [0, 448], sizes = [8, 64], strides = [1, 1]} : vector<8x1152xbf16> to vector<8x64xbf16>
    %223 = vector.extract_strided_slice %207 {offsets = [0, 512], sizes = [8, 64], strides = [1, 1]} : vector<8x1152xbf16> to vector<8x64xbf16>
    %224 = vector.extract_strided_slice %207 {offsets = [0, 576], sizes = [8, 64], strides = [1, 1]} : vector<8x1152xbf16> to vector<8x64xbf16>
    %225 = vector.extract_strided_slice %207 {offsets = [0, 640], sizes = [8, 64], strides = [1, 1]} : vector<8x1152xbf16> to vector<8x64xbf16>
    %226 = vector.extract_strided_slice %207 {offsets = [0, 704], sizes = [8, 64], strides = [1, 1]} : vector<8x1152xbf16> to vector<8x64xbf16>
    %227 = vector.shape_cast %221 : vector<8x64xbf16> to vector<1x8x64xbf16>
    %228 = vector.shape_cast %222 : vector<8x64xbf16> to vector<1x8x64xbf16>
    %229 = vector.shape_cast %223 : vector<8x64xbf16> to vector<1x8x64xbf16>
    %230 = vector.shape_cast %224 : vector<8x64xbf16> to vector<1x8x64xbf16>
    %231 = vector.shape_cast %225 : vector<8x64xbf16> to vector<1x8x64xbf16>
    %232 = vector.shape_cast %226 : vector<8x64xbf16> to vector<1x8x64xbf16>
    %233 = tpu.concatenate %227, %228, %229, %230, %231, %232 in 0 : vector<1x8x64xbf16>, vector<1x8x64xbf16>, vector<1x8x64xbf16>, vector<1x8x64xbf16>, vector<1x8x64xbf16>, vector<1x8x64xbf16> -> vector<6x8x64xbf16>
    %234 = vector.extract_strided_slice %207 {offsets = [0, 768], sizes = [8, 64], strides = [1, 1]} : vector<8x1152xbf16> to vector<8x64xbf16>
    %235 = vector.extract_strided_slice %207 {offsets = [0, 832], sizes = [8, 64], strides = [1, 1]} : vector<8x1152xbf16> to vector<8x64xbf16>
    %236 = vector.extract_strided_slice %207 {offsets = [0, 896], sizes = [8, 64], strides = [1, 1]} : vector<8x1152xbf16> to vector<8x64xbf16>
    %237 = vector.extract_strided_slice %207 {offsets = [0, 960], sizes = [8, 64], strides = [1, 1]} : vector<8x1152xbf16> to vector<8x64xbf16>
    %238 = vector.extract_strided_slice %207 {offsets = [0, 1024], sizes = [8, 64], strides = [1, 1]} : vector<8x1152xbf16> to vector<8x64xbf16>
    %239 = vector.extract_strided_slice %207 {offsets = [0, 1088], sizes = [8, 64], strides = [1, 1]} : vector<8x1152xbf16> to vector<8x64xbf16>
    %240 = vector.shape_cast %234 : vector<8x64xbf16> to vector<1x8x64xbf16>
    %241 = vector.shape_cast %235 : vector<8x64xbf16> to vector<1x8x64xbf16>
    %242 = vector.shape_cast %236 : vector<8x64xbf16> to vector<1x8x64xbf16>
    %243 = vector.shape_cast %237 : vector<8x64xbf16> to vector<1x8x64xbf16>
    %244 = vector.shape_cast %238 : vector<8x64xbf16> to vector<1x8x64xbf16>
    %245 = vector.shape_cast %239 : vector<8x64xbf16> to vector<1x8x64xbf16>
    %246 = tpu.concatenate %240, %241, %242, %243, %244, %245 in 0 : vector<1x8x64xbf16>, vector<1x8x64xbf16>, vector<1x8x64xbf16>, vector<1x8x64xbf16>, vector<1x8x64xbf16>, vector<1x8x64xbf16> -> vector<6x8x64xbf16>
    "tpu.trace_start"() <{level = 10 : i32, message = "hqd,hkd->hqk"}> : () -> ()
    %cst_73 = arith.constant dense<0.000000e+00> : vector<6x8x8xf32>
    %247 = tpu.matmul %220, %233, %cst_73 {dimension_numbers = #tpu.dot_dimension_numbers<[2], [2], [1], [1], [0, 0, 0, 1, 1, 1], [0], [0]>} : vector<6x8x64xbf16>, vector<6x8x64xbf16>, vector<6x8x8xf32> -> vector<6x8x8xf32>
    "tpu.trace_stop"() : () -> ()
    %cst_74 = arith.constant 1.250000e-01 : f32
    %248 = vector.broadcast %cst_74 : f32 to vector<6x8x8xf32>
    %249 = arith.mulf %247, %248 : vector<6x8x8xf32>
    %250 = vector.shape_cast %27 : vector<1x8xf32> to vector<1x1x8xf32>
    %251 = vector.broadcast %250 : vector<1x1x8xf32> to vector<6x8x8xf32>
    %252 = arith.addf %249, %251 : vector<6x8x8xf32>
    %cst_75 = arith.constant dense<0xFF800000> : vector<6x8xf32>
    %253 = vector.multi_reduction <maximumf>, %252, %cst_75 [2] : vector<6x8x8xf32> to vector<6x8xf32>
    %254 = vector.shape_cast %253 : vector<6x8xf32> to vector<6x8x1xf32>
    %255 = vector.broadcast %254 : vector<6x8x1xf32> to vector<6x8x8xf32>
    %256 = arith.subf %252, %255 : vector<6x8x8xf32>
    %257 = math.exp %256 : vector<6x8x8xf32>
    %cst_76 = arith.constant dense<0.000000e+00> : vector<6x8xf32>
    %258 = vector.multi_reduction <add>, %257, %cst_76 [2] : vector<6x8x8xf32> to vector<6x8xf32>
    %259 = vector.shape_cast %258 : vector<6x8xf32> to vector<6x8x1xf32>
    %260 = tpu.reciprocal %259 {approx = true} : vector<6x8x1xf32> -> vector<6x8x1xf32>
    %261 = vector.broadcast %260 : vector<6x8x1xf32> to vector<6x8x8xf32>
    %262 = arith.mulf %257, %261 : vector<6x8x8xf32>
    %263 = arith.truncf %262 : vector<6x8x8xf32> to vector<6x8x8xbf16>
    "tpu.trace_start"() <{level = 10 : i32, message = "hqk,hkd->hqd"}> : () -> ()
    %cst_77 = arith.constant dense<0.000000e+00> : vector<6x8x64xf32>
    %264 = tpu.matmul %263, %246, %cst_77 {dimension_numbers = #tpu.dot_dimension_numbers<[2], [1], [1], [2], [0, 0, 0, 1, 1, 2], [0], [0]>} : vector<6x8x8xbf16>, vector<6x8x64xbf16>, vector<6x8x64xf32> -> vector<6x8x64xf32>
    "tpu.trace_stop"() : () -> ()
    %265 = vector.extract_strided_slice %264 {offsets = [0, 0, 0], sizes = [1, 8, 64], strides = [1, 1, 1]} : vector<6x8x64xf32> to vector<1x8x64xf32>
    %266 = vector.shape_cast %265 : vector<1x8x64xf32> to vector<8x64xf32>
    %c0_78 = arith.constant 0 : index
    %c0_79 = arith.constant 0 : index
    %267 = vector.load %arg8[%c0_78, %c0_79] : memref<8x384xf32, #tpu.memory_space<vmem>>, vector<8x64xf32>
    tpu.vector_store %arg8[%c0_78, %c0_79], %266 {strides = array<i32>} : memref<8x384xf32, #tpu.memory_space<vmem>>, vector<8x64xf32>,
    %268 = vector.extract_strided_slice %264 {offsets = [1, 0, 0], sizes = [1, 8, 64], strides = [1, 1, 1]} : vector<6x8x64xf32> to vector<1x8x64xf32>
    %269 = vector.shape_cast %268 : vector<1x8x64xf32> to vector<8x64xf32>
    %c0_80 = arith.constant 0 : index
    %c64_81 = arith.constant 64 : index
    %270 = vector.load %arg8[%c0_80, %c64_81] : memref<8x384xf32, #tpu.memory_space<vmem>>, vector<8x64xf32>
    tpu.vector_store %arg8[%c0_80, %c64_81], %269 {strides = array<i32>} : memref<8x384xf32, #tpu.memory_space<vmem>>, vector<8x64xf32>,
    %271 = vector.extract_strided_slice %264 {offsets = [2, 0, 0], sizes = [1, 8, 64], strides = [1, 1, 1]} : vector<6x8x64xf32> to vector<1x8x64xf32>
    %272 = vector.shape_cast %271 : vector<1x8x64xf32> to vector<8x64xf32>
    %c0_82 = arith.constant 0 : index
    %c128_83 = arith.constant 128 : index
    %273 = vector.load %arg8[%c0_82, %c128_83] : memref<8x384xf32, #tpu.memory_space<vmem>>, vector<8x64xf32>
    tpu.vector_store %arg8[%c0_82, %c128_83], %272 {strides = array<i32>} : memref<8x384xf32, #tpu.memory_space<vmem>>, vector<8x64xf32>,
    %274 = vector.extract_strided_slice %264 {offsets = [3, 0, 0], sizes = [1, 8, 64], strides = [1, 1, 1]} : vector<6x8x64xf32> to vector<1x8x64xf32>
    %275 = vector.shape_cast %274 : vector<1x8x64xf32> to vector<8x64xf32>
    %c0_84 = arith.constant 0 : index
    %c192_85 = arith.constant 192 : index
    %276 = vector.load %arg8[%c0_84, %c192_85] : memref<8x384xf32, #tpu.memory_space<vmem>>, vector<8x64xf32>
    tpu.vector_store %arg8[%c0_84, %c192_85], %275 {strides = array<i32>} : memref<8x384xf32, #tpu.memory_space<vmem>>, vector<8x64xf32>,
    %277 = vector.extract_strided_slice %264 {offsets = [4, 0, 0], sizes = [1, 8, 64], strides = [1, 1, 1]} : vector<6x8x64xf32> to vector<1x8x64xf32>
    %278 = vector.shape_cast %277 : vector<1x8x64xf32> to vector<8x64xf32>
    %c0_86 = arith.constant 0 : index
    %c256_87 = arith.constant 256 : index
    %279 = vector.load %arg8[%c0_86, %c256_87] : memref<8x384xf32, #tpu.memory_space<vmem>>, vector<8x64xf32>
    tpu.vector_store %arg8[%c0_86, %c256_87], %278 {strides = array<i32>} : memref<8x384xf32, #tpu.memory_space<vmem>>, vector<8x64xf32>,
    %280 = vector.extract_strided_slice %264 {offsets = [5, 0, 0], sizes = [1, 8, 64], strides = [1, 1, 1]} : vector<6x8x64xf32> to vector<1x8x64xf32>
    %281 = vector.shape_cast %280 : vector<1x8x64xf32> to vector<8x64xf32>
    %c0_88 = arith.constant 0 : index
    %c320_89 = arith.constant 320 : index
    %282 = vector.load %arg8[%c0_88, %c320_89] : memref<8x384xf32, #tpu.memory_space<vmem>>, vector<8x64xf32>
    tpu.vector_store %arg8[%c0_88, %c320_89], %281 {strides = array<i32>} : memref<8x384xf32, #tpu.memory_space<vmem>>, vector<8x64xf32>,
    %c0_90 = arith.constant 0 : index
    %c0_91 = arith.constant 0 : index
    %283 = vector.load %arg8[%c0_90, %c0_91] : memref<8x384xf32, #tpu.memory_space<vmem>>, vector<8x384xf32>
    %284 = arith.truncf %283 : vector<8x384xf32> to vector<8x384xbf16>
    %cst_92 = arith.constant dense<0.000000e+00> : vector<8x384xf32>
    %285 = tpu.matmul %284, %199, %cst_92 {dimension_numbers = #tpu.dot_dimension_numbers<[1], [0], [0], [1], [0, 0, 1, 1], [], []>} : vector<8x384xbf16>, vector<384x384xbf16>, vector<8x384xf32> -> vector<8x384xf32>
    %c11 = arith.constant 11 : index
    %c0_93 = arith.constant 0 : index
    %286 = vector.load %arg3[%c11, %c0_93] : memref<19x1152xf32, #tpu.memory_space<vmem>>, vector<1x384xf32>
    %287 = vector.broadcast %286 : vector<1x384xf32> to vector<8x384xf32>
    %288 = arith.addf %285, %287 : vector<8x384xf32>
    %289 = arith.addf %288, %195 : vector<8x384xf32>
    %c12 = arith.constant 12 : index
    %c0_94 = arith.constant 0 : index
    %290 = vector.load %arg3[%c12, %c0_94] : memref<19x1152xf32, #tpu.memory_space<vmem>>, vector<1x384xf32>
    %c13 = arith.constant 13 : index
    %c0_95 = arith.constant 0 : index
    %291 = vector.load %arg3[%c13, %c0_95] : memref<19x1152xf32, #tpu.memory_space<vmem>>, vector<1x384xf32>
    %cst_96 = arith.constant dense<0.000000e+00> : vector<8xf32>
    %292 = vector.multi_reduction <add>, %289, %cst_96 [1] : vector<8x384xf32> to vector<8xf32>
    %293 = vector.shape_cast %292 : vector<8xf32> to vector<8x1xf32>
    %cst_97 = arith.constant 3.840000e+02 : f32
    %294 = vector.broadcast %cst_97 : f32 to vector<8x1xf32>
    %295 = arith.divf %293, %294 : vector<8x1xf32>
    %296 = vector.broadcast %295 : vector<8x1xf32> to vector<8x384xf32>
    %297 = arith.subf %289, %296 : vector<8x384xf32>
    %298 = arith.mulf %297, %297 : vector<8x384xf32>
    %cst_98 = arith.constant dense<0.000000e+00> : vector<8xf32>
    %299 = vector.multi_reduction <add>, %298, %cst_98 [1] : vector<8x384xf32> to vector<8xf32>
    %300 = vector.shape_cast %299 : vector<8xf32> to vector<8x1xf32>
    %cst_99 = arith.constant 3.840000e+02 : f32
    %301 = vector.broadcast %cst_99 : f32 to vector<8x1xf32>
    %302 = arith.divf %300, %301 : vector<8x1xf32>
    %303 = vector.broadcast %295 : vector<8x1xf32> to vector<8x384xf32>
    %304 = arith.subf %289, %303 : vector<8x384xf32>
    %cst_100 = arith.constant 9.99999996E-13 : f32
    %305 = vector.broadcast %cst_100 : f32 to vector<8x1xf32>
    %306 = arith.addf %302, %305 : vector<8x1xf32>
    %307 = math.rsqrt %306 : vector<8x1xf32>
    %308 = vector.broadcast %307 : vector<8x1xf32> to vector<8x384xf32>
    %309 = arith.mulf %304, %308 : vector<8x384xf32>
    %310 = vector.broadcast %290 : vector<1x384xf32> to vector<8x384xf32>
    %311 = arith.mulf %309, %310 : vector<8x384xf32>
    %312 = vector.broadcast %291 : vector<1x384xf32> to vector<8x384xf32>
    %313 = arith.addf %311, %312 : vector<8x384xf32>
    %314 = arith.truncf %313 : vector<8x384xf32> to vector<8x384xbf16>
    %cst_101 = arith.constant dense<0.000000e+00> : vector<8x768xf32>
    %315 = tpu.matmul %314, %201, %cst_101 {dimension_numbers = #tpu.dot_dimension_numbers<[1], [0], [0], [1], [0, 0, 1, 1], [], []>} : vector<8x384xbf16>, vector<384x768xbf16>, vector<8x768xf32> -> vector<8x768xf32>
    %c14 = arith.constant 14 : index
    %c0_102 = arith.constant 0 : index
    %316 = vector.load %arg3[%c14, %c0_102] : memref<19x1152xf32, #tpu.memory_space<vmem>>, vector<1x768xf32>
    %317 = vector.broadcast %316 : vector<1x768xf32> to vector<8x768xf32>
    %318 = arith.addf %315, %317 : vector<8x768xf32>
    %319 = arith.mulf %318, %318 : vector<8x768xf32>
    %320 = arith.mulf %318, %319 : vector<8x768xf32>
    %cst_103 = arith.constant 4.471500e-02 : f32
    %321 = vector.broadcast %cst_103 : f32 to vector<8x768xf32>
    %322 = arith.mulf %321, %320 : vector<8x768xf32>
    %323 = arith.addf %318, %322 : vector<8x768xf32>
    %cst_104 = arith.constant 0.797884583 : f32
    %324 = vector.broadcast %cst_104 : f32 to vector<8x768xf32>
    %325 = arith.mulf %324, %323 : vector<8x768xf32>
    %326 = math.tanh %325 : vector<8x768xf32>
    %cst_105 = arith.constant 1.000000e+00 : f32
    %327 = vector.broadcast %cst_105 : f32 to vector<8x768xf32>
    %328 = arith.addf %327, %326 : vector<8x768xf32>
    %cst_106 = arith.constant 5.000000e-01 : f32
    %329 = vector.broadcast %cst_106 : f32 to vector<8x768xf32>
    %330 = arith.mulf %329, %328 : vector<8x768xf32>
    %331 = arith.mulf %318, %330 : vector<8x768xf32>
    %c1_107 = arith.constant 1 : index
    %c0_108 = arith.constant 0 : index
    %c0_109 = arith.constant 0 : index
    %332 = vector.load %arg5[%c1_107, %c0_108, %c0_109] : memref<2x768x384xbf16, #tpu.memory_space<vmem>>, vector<1x768x384xbf16>
    %333 = vector.shape_cast %332 : vector<1x768x384xbf16> to vector<768x384xbf16>
    %334 = arith.truncf %331 : vector<8x768xf32> to vector<8x768xbf16>
    %cst_110 = arith.constant dense<0.000000e+00> : vector<8x384xf32>
    %335 = tpu.matmul %334, %333, %cst_110 {dimension_numbers = #tpu.dot_dimension_numbers<[1], [0], [0], [1], [0, 0, 1, 1], [], []>} : vector<8x768xbf16>, vector<768x384xbf16>, vector<8x384xf32> -> vector<8x384xf32>
    %c15 = arith.constant 15 : index
    %c0_111 = arith.constant 0 : index
    %336 = vector.load %arg3[%c15, %c0_111] : memref<19x1152xf32, #tpu.memory_space<vmem>>, vector<1x384xf32>
    %337 = vector.broadcast %336 : vector<1x384xf32> to vector<8x384xf32>
    %338 = arith.addf %335, %337 : vector<8x384xf32>
    %339 = arith.addf %338, %313 : vector<8x384xf32>
    %c16 = arith.constant 16 : index
    %c0_112 = arith.constant 0 : index
    %340 = vector.load %arg3[%c16, %c0_112] : memref<19x1152xf32, #tpu.memory_space<vmem>>, vector<1x384xf32>
    %c17 = arith.constant 17 : index
    %c0_113 = arith.constant 0 : index
    %341 = vector.load %arg3[%c17, %c0_113] : memref<19x1152xf32, #tpu.memory_space<vmem>>, vector<1x384xf32>
    %cst_114 = arith.constant dense<0.000000e+00> : vector<8xf32>
    %342 = vector.multi_reduction <add>, %339, %cst_114 [1] : vector<8x384xf32> to vector<8xf32>
    %343 = vector.shape_cast %342 : vector<8xf32> to vector<8x1xf32>
    %cst_115 = arith.constant 3.840000e+02 : f32
    %344 = vector.broadcast %cst_115 : f32 to vector<8x1xf32>
    %345 = arith.divf %343, %344 : vector<8x1xf32>
    %346 = vector.broadcast %345 : vector<8x1xf32> to vector<8x384xf32>
    %347 = arith.subf %339, %346 : vector<8x384xf32>
    %348 = arith.mulf %347, %347 : vector<8x384xf32>
    %cst_116 = arith.constant dense<0.000000e+00> : vector<8xf32>
    %349 = vector.multi_reduction <add>, %348, %cst_116 [1] : vector<8x384xf32> to vector<8xf32>
    %350 = vector.shape_cast %349 : vector<8xf32> to vector<8x1xf32>
    %cst_117 = arith.constant 3.840000e+02 : f32
    %351 = vector.broadcast %cst_117 : f32 to vector<8x1xf32>
    %352 = arith.divf %350, %351 : vector<8x1xf32>
    %353 = vector.broadcast %345 : vector<8x1xf32> to vector<8x384xf32>
    %354 = arith.subf %339, %353 : vector<8x384xf32>
    %cst_118 = arith.constant 9.99999996E-13 : f32
    %355 = vector.broadcast %cst_118 : f32 to vector<8x1xf32>
    %356 = arith.addf %352, %355 : vector<8x1xf32>
    %357 = math.rsqrt %356 : vector<8x1xf32>
    %358 = vector.broadcast %357 : vector<8x1xf32> to vector<8x384xf32>
    %359 = arith.mulf %354, %358 : vector<8x384xf32>
    %360 = vector.broadcast %340 : vector<1x384xf32> to vector<8x384xf32>
    %361 = arith.mulf %359, %360 : vector<8x384xf32>
    %362 = vector.broadcast %341 : vector<1x384xf32> to vector<8x384xf32>
    %363 = arith.addf %361, %362 : vector<8x384xf32>
    %364 = vector.extract_strided_slice %363 {offsets = [0, 0], sizes = [1, 384], strides = [1, 1]} : vector<8x384xf32> to vector<1x384xf32>
    %c0_119 = arith.constant 0 : index
    %c0_120 = arith.constant 0 : index
    %365 = vector.load %arg6[%c0_119, %c0_120] : memref<384x128xbf16, #tpu.memory_space<vmem>>, vector<384x128xbf16>
    %366 = arith.truncf %364 : vector<1x384xf32> to vector<1x384xbf16>
    %cst_121 = arith.constant dense<0.000000e+00> : vector<1x128xf32>
    %367 = tpu.matmul %366, %365, %cst_121 {dimension_numbers = #tpu.dot_dimension_numbers<[1], [0], [0], [1], [0, 0, 1, 1], [], []>} : vector<1x384xbf16>, vector<384x128xbf16>, vector<1x128xf32> -> vector<1x128xf32>
    %c18 = arith.constant 18 : index
    %c0_122 = arith.constant 0 : index
    %368 = vector.load %arg3[%c18, %c0_122] : memref<19x1152xf32, #tpu.memory_space<vmem>>, vector<1x128xf32>
    %369 = arith.addf %367, %368 : vector<1x128xf32>
    %370 = arith.negf %369 : vector<1x128xf32>
    %371 = math.exp %370 : vector<1x128xf32>
    %cst_123 = arith.constant 1.000000e+00 : f32
    %372 = vector.broadcast %cst_123 : f32 to vector<1x128xf32>
    %373 = arith.addf %372, %371 : vector<1x128xf32>
    %374 = arith.divf %372, %373 : vector<1x128xf32>
    %cst_124 = arith.constant 1.000000e-07 : f32
    %cst_125 = arith.constant 0.99999988 : f32
    %375 = vector.broadcast %cst_124 : f32 to vector<1x128xf32>
    %376 = arith.maximumf %375, %374 : vector<1x128xf32>
    %377 = vector.broadcast %cst_125 : f32 to vector<1x128xf32>
    %378 = arith.minimumf %377, %376 : vector<1x128xf32>
    %379 = vector.shape_cast %378 : vector<1x128xf32> to vector<1x1x128xf32>
    %c0_126 = arith.constant 0 : index
    %c0_127 = arith.constant 0 : index
    %c0_128 = arith.constant 0 : index
    %380 = vector.load %arg7[%c0_126, %c0_127, %c0_128] : memref<1x1x128xf32, #tpu.memory_space<vmem>>, vector<1x1x128xf32>
    tpu.vector_store %arg7[%c0_126, %c0_127, %c0_128], %379 {strides = array<i32>} : memref<1x1x128xf32, #tpu.memory_space<vmem>>, vector<1x1x128xf32>,
    return
  }
  func.func @transform_0(%arg0: i32) -> (i32, i32, i32) {
    %c0_i32 = arith.constant 0 : i32
    %c0_i32_0 = arith.constant 0 : i32
    %c0_i32_1 = arith.constant 0 : i32
    return %arg0, %c0_i32, %c0_i32_0 : i32, i32, i32
  }
  func.func @transform_1(%arg0: i32) -> (i32, i32, i32) {
    %c0_i32 = arith.constant 0 : i32
    %c0_i32_0 = arith.constant 0 : i32
    %c0_i32_1 = arith.constant 0 : i32
    return %arg0, %c0_i32, %c0_i32_0 : i32, i32, i32
  }
  func.func @transform_2(%arg0: i32) -> (i32, i32) {
    %c0_i32 = arith.constant 0 : i32
    %c0_i32_0 = arith.constant 0 : i32
    %c0_i32_1 = arith.constant 0 : i32
    return %c0_i32, %c0_i32_0 : i32, i32
  }
  func.func @transform_3(%arg0: i32) -> (i32, i32, i32) {
    %c0_i32 = arith.constant 0 : i32
    %c0_i32_0 = arith.constant 0 : i32
    %c0_i32_1 = arith.constant 0 : i32
    %c0_i32_2 = arith.constant 0 : i32
    return %c0_i32, %c0_i32_0, %c0_i32_1 : i32, i32, i32
  }
  func.func @transform_4(%arg0: i32) -> (i32, i32, i32) {
    %c0_i32 = arith.constant 0 : i32
    %c0_i32_0 = arith.constant 0 : i32
    %c0_i32_1 = arith.constant 0 : i32
    %c0_i32_2 = arith.constant 0 : i32
    return %c0_i32, %c0_i32_0, %c0_i32_1 : i32, i32, i32
  }
  func.func @transform_5(%arg0: i32) -> (i32, i32) {
    %c0_i32 = arith.constant 0 : i32
    %c0_i32_0 = arith.constant 0 : i32
    %c0_i32_1 = arith.constant 0 : i32
    return %c0_i32, %c0_i32_0 : i32, i32
  }
  func.func @transform_6(%arg0: i32) -> (i32, i32, i32) {
    %c0_i32 = arith.constant 0 : i32
    %c0_i32_0 = arith.constant 0 : i32
    %c0_i32_1 = arith.constant 0 : i32
    return %arg0, %c0_i32, %c0_i32_0 : i32, i32, i32
  }
}

</mosaic_0001>

<llo_original>
// kernel: linear_bert_pallas.1
$region0: #{linear_bert_pallas.1}
  #allocation0 [shape = 'u32[]', space=smem, size = 0x4, offset = 0x4, fixed_abs, tag = 'smem constant byte address 0x4 - core index']
  #allocation1 [shape = 'u32[144,128]{1,0:T(1,128)}', space=vmem, size = 0x12000, scoped, tag = 'internal scratch']
  #allocation2 [shape = 'f32[8,384]{1,0:T(8,128)}', space=vmem, size = 0x3000, scoped, tag = 'scratch operand']
  %s0 = inlined_call_operand.vmem [shape: f32[2,8,384], index: 0, kind: input, shape index: {}]
  %s1 = inlined_call_operand.vmem [shape: f32[2,1,8], index: 1, kind: input, shape index: {}]
  %s2 = inlined_call_operand.hbm [shape: f32[19,1152], index: 2, kind: input, shape index: {}]
  %s3 = inlined_call_operand.hbm [shape: bf16[2,384,2304], index: 3, kind: input, shape index: {}]
  %s4 = inlined_call_operand.hbm [shape: bf16[2,768,384], index: 4, kind: input, shape index: {}]
  %s5 = inlined_call_operand.hbm [shape: bf16[384,128], index: 5, kind: input, shape index: {}]
  %s6 = inlined_call_operand.hbm [shape: f32[2,1,128], index: 6, kind: output, shape index: {}]
  %s7 = sld [smem:[#allocation0]]
  $region73: #{linear_bert_pallas.1} parent=0
    _
  %s9 = ssub.s32 1, %s7
  %s10 = scalar_select 0, %s9, %s7
  $region1: #{linear_bert_pallas.1} parent=0
    #allocation3 [shape = 'u8[110592]{0}', space=vmem, size = 0x1b000, scoped, tag = 'input window, operand 2, single buffered']
    #allocation4 [shape = 's32[2]{0}', space=sflag, size = 0x8, scoped, tag = 'scoped memory for linear_bert_pallas.1']
    #allocation5 [shape = 's32[2]{0}', space=sflag, size = 0x8, scoped, tag = 'scoped memory for linear_bert_pallas.1']
    #allocation6 [shape = 'u8[3538944]{0}', space=vmem, size = 0x360000, scoped, tag = 'input window, operand 3, single buffered']
    #allocation7 [shape = 's32[1]{0}', space=sflag, size = 0x4, scoped, tag = 'scoped memory for linear_bert_pallas.1']
    #allocation8 [shape = 'u8[1179648]{0}', space=vmem, size = 0x120000, scoped, tag = 'input window, operand 4, single buffered']
    #allocation9 [shape = 'u8[98304]{0}', space=vmem, size = 0x18000, scoped, tag = 'input window, operand 5, single buffered']
    #allocation10 [shape = 's32[1]{0}', space=sflag, size = 0x4, scoped, tag = 'scoped memory for linear_bert_pallas.1']
    #allocation11 [shape = 'u8[1024]{0}', space=vmem, size = 0x400, scoped, tag = 'output window, operand 0']
    %11 = vsyncpa [#allocation4], 0
    %12 = vsyncpa [#allocation7], 0
    %13 = vsyncpa [#allocation10], 0
    %14 = vsyncpa [#allocation5], 0
    %s15 = scalar_lea.sflag [#allocation5], 1
    %16 = vsyncpa %s15, 0
    loop: start=0, step=1, limit=4
    $region2: #{linear_bert_pallas.1} parent=1 // loop_pre_header
      _
    $region3: #{linear_bert_pallas.1} parent=1 // loop_header
      %s18 = sphi 0, %s22
      %p19 = scmp.ge.s32.totalorder %s18, 4
      %s28 = sphi 0, %s30
      %s31 = sphi 0, %s28
      %s32 = sphi 0, %s31
      %s48 = sphi 0, %s32
      %s54 = sphi 0, %s56
      %s57 = sphi 0, %s54
      %s58 = sphi 0, %s57
      %s74 = sphi 0, %s58
      %s78 = sphi 0, %s78
      %s80 = sphi 0, %s78
      %s81 = sphi 0, %s80
      %s95 = sphi 0, %s81
      %s99 = sphi 0, %s99
      %s101 = sphi 0, %s99
      %s102 = sphi 0, %s101
      %s116 = sphi 0, %s102
      %s120 = sphi 0, %s120
      %s122 = sphi 0, %s120
      %s123 = sphi 0, %s122
      %s137 = sphi 0, %s123
      %s141 = sphi 0, %s141
      %s143 = sphi 0, %s141
      %s144 = sphi 0, %s143
      %s158 = sphi 0, %s144
      %s164 = sphi 0, %s166
      %s167 = sphi 0, %s164
      %s168 = sphi 0, %s167
      %s184 = sphi 0, %s168
    $region4: #{linear_bert_pallas.1} parent=1 // loop_header_branch
      %21 = sbr.rel (%p19) target = $region8
    $region5: #{linear_bert_pallas.1} parent=1 // loop_body
      %s23 = ssub.s32 %s18, 1
      %s24 = ssub.s32 %s18, 2
      %s25 = sadd.s32 %s18, 1
      %s26 = ssub.s32 %s18, %s25
      %p27 = scmp.eq.s32.totalorder %s26, 0
      %s29 = sadd.s32 %s28, 1
      %s30 = scalar_select %p27, %s28, %s29
      %p33 = pneg %p27
      %p34 = scmp.eq.s32.totalorder %s18, 1
      %p35 = por %p33, %p34
      %p36 = scmp.ne.s32.totalorder %s28, %s31
      %p37 = scmp.eq.s32.totalorder %s18, 0
      %p38 = por %p36, %p37
      %p39 = scmp.ne.s32.totalorder %s28, %s31
      %p40 = scmp.eq.s32.totalorder %s23, 1
      %p41 = por %p39, %p40
      %p42 = scmp.ne.s32.totalorder %s31, %s32
      %p43 = scmp.eq.s32.totalorder %s23, 0
      %p44 = por %p42, %p43
      %p45 = scmp.ne.s32.totalorder %s31, %s32
      %p46 = scmp.eq.s32.totalorder %s24, 1
      %p47 = por %p45, %p46
      %p49 = scmp.ne.s32.totalorder %s32, %s48
      %p50 = scmp.eq.s32.totalorder %s24, 0
      %p51 = por %p49, %p50
      %s52 = ssub.s32 %s18, %s25
      %p53 = scmp.eq.s32.totalorder %s52, 0
      %s55 = sadd.s32 %s54, 1
      %s56 = scalar_select %p53, %s54, %s55
      %p59 = pneg %p53
      %p60 = scmp.eq.s32.totalorder %s18, 1
      %p61 = por %p59, %p60
      %p62 = scmp.ne.s32.totalorder %s54, %s57
      %p63 = scmp.eq.s32.totalorder %s18, 0
      %p64 = por %p62, %p63
      %p65 = scmp.ne.s32.totalorder %s54, %s57
      %p66 = scmp.eq.s32.totalorder %s23, 1
      %p67 = por %p65, %p66
      %p68 = scmp.ne.s32.totalorder %s57, %s58
      %p69 = scmp.eq.s32.totalorder %s23, 0
      %p70 = por %p68, %p69
      %p71 = scmp.ne.s32.totalorder %s57, %s58
      %p72 = scmp.eq.s32.totalorder %s24, 1
      %p73 = por %p71, %p72
      %p75 = scmp.ne.s32.totalorder %s58, %s74
      %p76 = scmp.eq.s32.totalorder %s24, 0
      %p77 = por %p75, %p76
      %s79 = sadd.s32 %s78, 1
      %p82 = scmp.eq.s32.totalorder %s18, 1
      %p83 = scmp.ne.s32.totalorder %s78, %s80
      %p84 = scmp.eq.s32.totalorder %s18, 0
      %p85 = por %p83, %p84
      %p86 = scmp.ne.s32.totalorder %s78, %s80
      %p87 = scmp.eq.s32.totalorder %s23, 1
      %p88 = por %p86, %p87
      %p89 = scmp.ne.s32.totalorder %s80, %s81
      %p90 = scmp.eq.s32.totalorder %s23, 0
      %p91 = por %p89, %p90
      %p92 = scmp.ne.s32.totalorder %s80, %s81
      %p93 = scmp.eq.s32.totalorder %s24, 1
      %p94 = por %p92, %p93
      %p96 = scmp.ne.s32.totalorder %s81, %s95
      %p97 = scmp.eq.s32.totalorder %s24, 0
      %p98 = por %p96, %p97
      %s100 = sadd.s32 %s99, 1
      %p103 = scmp.eq.s32.totalorder %s18, 1
      %p104 = scmp.ne.s32.totalorder %s99, %s101
      %p105 = scmp.eq.s32.totalorder %s18, 0
      %p106 = por %p104, %p105
      %p107 = scmp.ne.s32.totalorder %s99, %s101
      %p108 = scmp.eq.s32.totalorder %s23, 1
      %p109 = por %p107, %p108
      %p110 = scmp.ne.s32.totalorder %s101, %s102
      %p111 = scmp.eq.s32.totalorder %s23, 0
      %p112 = por %p110, %p111
      %p113 = scmp.ne.s32.totalorder %s101, %s102
      %p114 = scmp.eq.s32.totalorder %s24, 1
      %p115 = por %p113, %p114
      %p117 = scmp.ne.s32.totalorder %s102, %s116
      %p118 = scmp.eq.s32.totalorder %s24, 0
      %p119 = por %p117, %p118
      %s121 = sadd.s32 %s120, 1
      %p124 = scmp.eq.s32.totalorder %s18, 1
      %p125 = scmp.ne.s32.totalorder %s120, %s122
      %p126 = scmp.eq.s32.totalorder %s18, 0
      %p127 = por %p125, %p126
      %p128 = scmp.ne.s32.totalorder %s120, %s122
      %p129 = scmp.eq.s32.totalorder %s23, 1
      %p130 = por %p128, %p129
      %p131 = scmp.ne.s32.totalorder %s122, %s123
      %p132 = scmp.eq.s32.totalorder %s23, 0
      %p133 = por %p131, %p132
      %p134 = scmp.ne.s32.totalorder %s122, %s123
      %p135 = scmp.eq.s32.totalorder %s24, 1
      %p136 = por %p134, %p135
      %p138 = scmp.ne.s32.totalorder %s123, %s137
      %p139 = scmp.eq.s32.totalorder %s24, 0
      %p140 = por %p138, %p139
      %s142 = sadd.s32 %s141, 1
      %p145 = scmp.eq.s32.totalorder %s18, 1
      %p146 = scmp.ne.s32.totalorder %s141, %s143
      %p147 = scmp.eq.s32.totalorder %s18, 0
      %p148 = por %p146, %p147
      %p149 = scmp.ne.s32.totalorder %s141, %s143
      %p150 = scmp.eq.s32.totalorder %s23, 1
      %p151 = por %p149, %p150
      %p152 = scmp.ne.s32.totalorder %s143, %s144
      %p153 = scmp.eq.s32.totalorder %s23, 0
      %p154 = por %p152, %p153
      %p155 = scmp.ne.s32.totalorder %s143, %s144
      %p156 = scmp.eq.s32.totalorder %s24, 1
      %p157 = por %p155, %p156
      %p159 = scmp.ne.s32.totalorder %s144, %s158
      %p160 = scmp.eq.s32.totalorder %s24, 0
      %p161 = por %p159, %p160
      %s162 = ssub.s32 %s18, %s25
      %p163 = scmp.eq.s32.totalorder %s162, 0
      %s165 = sadd.s32 %s164, 1
      %s166 = scalar_select %p163, %s164, %s165
      %p169 = pneg %p163
      %p170 = scmp.eq.s32.totalorder %s18, 1
      %p171 = por %p169, %p170
      %p172 = scmp.ne.s32.totalorder %s164, %s167
      %p173 = scmp.eq.s32.totalorder %s18, 0
      %p174 = por %p172, %p173
      %p175 = scmp.ne.s32.totalorder %s164, %s167
      %p176 = scmp.eq.s32.totalorder %s23, 1
      %p177 = por %p175, %p176
      %p178 = scmp.ne.s32.totalorder %s167, %s168
      %p179 = scmp.eq.s32.totalorder %s23, 0
      %p180 = por %p178, %p179
      %p181 = scmp.ne.s32.totalorder %s167, %s168
      %p182 = scmp.eq.s32.totalorder %s24, 1
      %p183 = por %p181, %p182
      %p185 = scmp.ne.s32.totalorder %s168, %s184
      %p186 = scmp.eq.s32.totalorder %s24, 0
      %p187 = por %p185, %p186
      %p188 = scmp.le.s32.totalorder 1, %s18
      %p189 = scmp.lt.s32.totalorder %s18, 3
      %p190 = pnand %p188, %p189
      %p191 = pneg %p190
      // Predicated region
      $region9: #{linear_bert_pallas.1} parent=5 // pred_check
        _
      $region10: #{linear_bert_pallas.1} parent=5 // pred_check_branch
        %193 = sbr.rel (%p190) target = $region12
      $region11: #{linear_bert_pallas.1} parent=5 // pred_region
        %s194 = ssub.s32 %s18, 1
        // Predicated region
        $region13: #{linear_bert_pallas.1} parent=11 // pred_check
          %p195 = pneg %p91
        $region14: #{linear_bert_pallas.1} parent=11 // pred_check_branch
          %197 = sbr.rel (%p195) target = $region16
        $region15: #{linear_bert_pallas.1} parent=11 // pred_region
          %s199 = ssub.s32 3456, 3456
          %200 = vsyncadd [#allocation4], %s199
          %s201 = sshll.u32 [#allocation3], 4
          %s202 = int_to_ptr.vmem [resolvable:$true] %s201
          %207 = dma.hbm_to_vmem [thread:$0]  %s2, 3456, %s202, [#allocation4], 1152, 1152, 72
        $region16: #{linear_bert_pallas.1} parent=11 // pred_fallthru
          _
        // Predicated region
        $region17: #{linear_bert_pallas.1} parent=11 // pred_check
          %p208 = pneg %p112
        $region18: #{linear_bert_pallas.1} parent=11 // pred_check_branch
          %210 = sbr.rel (%p208) target = $region20
        $region19: #{linear_bert_pallas.1} parent=11 // pred_region
          %s212 = ssub.s32 110592, 110592
          %213 = vsyncadd [#allocation7], %s212
          %s214 = sshll.u32 [#allocation6], 4
          %s215 = int_to_ptr.vmem [resolvable:$true] %s214
          %220 = dma.hbm_to_vmem [thread:$0]  %s3, 110592, %s215, [#allocation7], 1152, 1152, 72
        $region20: #{linear_bert_pallas.1} parent=11 // pred_fallthru
          _
        // Predicated region
        $region21: #{linear_bert_pallas.1} parent=11 // pred_check
          %p221 = pneg %p133
        $region22: #{linear_bert_pallas.1} parent=11 // pred_check_branch
          %223 = sbr.rel (%p221) target = $region24
        $region23: #{linear_bert_pallas.1} parent=11 // pred_region
          %s225 = ssub.s32 36864, 36864
          %226 = vsyncadd [#allocation7], %s225
          %s227 = sshll.u32 [#allocation8], 4
          %s228 = int_to_ptr.vmem [resolvable:$true] %s227
          %233 = dma.hbm_to_vmem [thread:$0]  %s4, 36864, %s228, [#allocation7], 192, 192, 12
        $region24: #{linear_bert_pallas.1} parent=11 // pred_fallthru
          _
        // Predicated region
        $region25: #{linear_bert_pallas.1} parent=11 // pred_check
          %p234 = pneg %p154
        $region26: #{linear_bert_pallas.1} parent=11 // pred_check_branch
          %236 = sbr.rel (%p234) target = $region28
        $region27: #{linear_bert_pallas.1} parent=11 // pred_region
          %s238 = ssub.s32 3072, 3072
          %239 = vsyncadd [#allocation10], %s238
          %s240 = sshll.u32 [#allocation9], 4
          %s241 = int_to_ptr.vmem [resolvable:$true] %s240
          %246 = dma.hbm_to_vmem [thread:$0]  %s5, 3072, %s241, [#allocation10], 64, 64, 4
        $region28: #{linear_bert_pallas.1} parent=11 // pred_fallthru
          _
      $region12: #{linear_bert_pallas.1} parent=5 // pred_fallthru
        _
      %p247 = scmp.lt.s32.totalorder %s18, 2
      // Predicated region
      $region29: #{linear_bert_pallas.1} parent=5 // pred_check
        %p248 = pneg %p247
      $region30: #{linear_bert_pallas.1} parent=5 // pred_check_branch
        %250 = sbr.rel (%p248) target = $region32
      $region31: #{linear_bert_pallas.1} parent=5 // pred_region
        // Predicated region
        $region33: #{linear_bert_pallas.1} parent=31 // pred_check
          %p251 = pneg %p38
        $region34: #{linear_bert_pallas.1} parent=31 // pred_check_branch
          %253 = sbr.rel (%p251) target = $region36
        $region35: #{linear_bert_pallas.1} parent=31 // pred_region
          %p254 = scmp.lt.s32.totalorder %s18, 1
          %s255 = scalar_select %p254, %s18, 1
          %s256 = smul.addr %s255, 3
          %s257 = smul.addr %s256, 8
          %s258 = scalar_lea.vmem %s0, %s257
        $region36: #{linear_bert_pallas.1} parent=31 // pred_fallthru
          _
        // Predicated region
        $region37: #{linear_bert_pallas.1} parent=31 // pred_check
          %p259 = pneg %p64
        $region38: #{linear_bert_pallas.1} parent=31 // pred_check_branch
          %261 = sbr.rel (%p259) target = $region40
        $region39: #{linear_bert_pallas.1} parent=31 // pred_region
          %p262 = scmp.lt.s32.totalorder %s18, 1
          %s263 = scalar_select %p262, %s18, 1
          %s264 = scalar_lea.vmem %s1, %s263
        $region40: #{linear_bert_pallas.1} parent=31 // pred_fallthru
          _
      $region32: #{linear_bert_pallas.1} parent=5 // pred_fallthru
        _
      %p265 = scmp.le.s32.totalorder 1, %s18
      %p266 = scmp.lt.s32.totalorder %s18, 3
      %p267 = pnand %p265, %p266
      %p268 = pneg %p267
      // Predicated region
      $region41: #{linear_bert_pallas.1} parent=5 // pred_check
        _
      $region42: #{linear_bert_pallas.1} parent=5 // pred_check_branch
        %270 = sbr.rel (%p267) target = $region44
      $region43: #{linear_bert_pallas.1} parent=5 // pred_region
        %s271 = ssub.s32 %s18, 1
        // Predicated region
        $region45: #{linear_bert_pallas.1} parent=43 // pred_check
          %p272 = pneg %p91
        $region46: #{linear_bert_pallas.1} parent=43 // pred_check_branch
          %274 = sbr.rel (%p272) target = $region48
        $region47: #{linear_bert_pallas.1} parent=43 // pred_region
          %275 = dma.done [#allocation4], 3456
        $region48: #{linear_bert_pallas.1} parent=43 // pred_fallthru
          _
        // Predicated region
        $region49: #{linear_bert_pallas.1} parent=43 // pred_check
          %p276 = pneg %p112
        $region50: #{linear_bert_pallas.1} parent=43 // pred_check_branch
          %278 = sbr.rel (%p276) target = $region52
        $region51: #{linear_bert_pallas.1} parent=43 // pred_region
          %279 = dma.done [#allocation7], 110592
        $region52: #{linear_bert_pallas.1} parent=43 // pred_fallthru
          _
        // Predicated region
        $region53: #{linear_bert_pallas.1} parent=43 // pred_check
          %p280 = pneg %p133
        $region54: #{linear_bert_pallas.1} parent=43 // pred_check_branch
          %282 = sbr.rel (%p280) target = $region56
        $region55: #{linear_bert_pallas.1} parent=43 // pred_region
          %283 = dma.done [#allocation7], 36864
        $region56: #{linear_bert_pallas.1} parent=43 // pred_fallthru
          _
        // Predicated region
        $region57: #{linear_bert_pallas.1} parent=43 // pred_check
          %p284 = pneg %p154
        $region58: #{linear_bert_pallas.1} parent=43 // pred_check_branch
          %286 = sbr.rel (%p284) target = $region60
        $region59: #{linear_bert_pallas.1} parent=43 // pred_region
          %287 = dma.done [#allocation10], 3072
        $region60: #{linear_bert_pallas.1} parent=43 // pred_fallthru
          _
        %p288 = scmp.lt.s32.totalorder %s23, 1
        %s289 = scalar_select %p288, %s23, 1
        %s290 = smul.addr %s289, 3
        %s291 = smul.addr %s290, 8
        %s292 = scalar_lea.vmem %s0, %s291
        %p293 = pneg %p44
        %p294 = pneg %p41
        %p295 = scmp.lt.s32.totalorder %s23, 1
        %s296 = scalar_select %p295, %s23, 1
        %s297 = scalar_lea.vmem %s1, %s296
        %p298 = pneg %p70
        %p299 = pneg %p67
        %p300 = pneg %p91
        %p301 = pneg %p88
        %p302 = pneg %p112
        %p303 = pneg %p109
        %p304 = pneg %p133
        %p305 = pneg %p130
        %p306 = pneg %p154
        %p307 = pneg %p151
        %p308 = pneg %p180
        %p309 = pneg %p177
        %s310 = sand.u32 %s167, 1
        %s311 = scalar_lea.sflag [#allocation5], %s310
        %s312 = sand.u32 %s167, 1
        %s313 = scalar_lea.vmem [#allocation11], %s312
        %p314 = scmp.lt.s32.totalorder %s23, 1
        %s315 = scalar_select %p314, %s23, 1
        %s316 = smul.addr %s315, 3
        %s317 = smul.addr %s316, 8
        %s318 = scalar_lea.vmem %s0, %s317
        %p319 = scmp.lt.s32.totalorder %s23, 1
        %s320 = scalar_select %p319, %s23, 1
        %s321 = scalar_lea.vmem %s1, %s320
        %v323 = vld [vmem:[%s318] sm:$0xff]
        %v324 = vld [vmem:[%s318 + $0x8] sm:$0xff]
        %v325 = vld [vmem:[%s318 + $0x10] sm:$0xff]
        %v326 = vld [vmem:[#allocation3] ss:$8 sm:$0x7]
        %s327 = scalar_lea.vmem [#allocation3], 1
        %v328 = vld [vmem:[%s327] ss:$8 sm:$0x7]
        %v329 = vadd.f32 %v323, %v324
        %v330 = vadd.f32 %v329, %v325
        %331 = vadd.xlane.f32.xlu0 %v330
        %v332 = vpop.xlane.xlu0 %331
        %v333 = vrcp.pop 384.0
        %v334 = vmul.f32 %v332, %v333
        %v335 = vsub.f32 %v323, %v334
        %v336 = vsub.f32 %v324, %v334
        %v337 = vsub.f32 %v325, %v334
        %v338 = vmul.f32 %v335, %v335
        %v339 = vmul.f32 %v336, %v336
        %v340 = vmul.f32 %v337, %v337
        %v341 = vadd.f32 %v338, %v339
        %v342 = vadd.f32 %v341, %v340
        %343 = vadd.xlane.f32.xlu0 %v342
        %v344 = vpop.xlane.xlu0 %343
        %v345 = vmul.f32 %v344, %v333
        %v346 = vadd.f32 %v345, 1e-12
        %v347 = vrsqrt.pop %v346
        %v348 = vmul.f32 %v335, %v347
        %v349 = vmul.f32 %v336, %v347
        %v350 = vmul.f32 %v337, %v347
        %v352 = vlaneseq
        %v353 = vshrl.u32 %v352, 7
        %v354 = vsub.s32 0, %v353
        %v355 = vrot.slane %v326, %v354
        %v356 = vlaneseq
        %v357 = vshrl.u32 %v356, 7
        %v358 = vsub.s32 1, %v357
        %v359 = vrot.slane %v326, %v358
        %v360 = vlaneseq
        %v361 = vshrl.u32 %v360, 7
        %v362 = vsub.s32 2, %v361
        %v363 = vrot.slane %v326, %v362
        %v367 = vmul.f32 %v348, %v355
        %v368 = vmul.f32 %v349, %v359
        %v369 = vmul.f32 %v350, %v363
        %v371 = vlaneseq
        %v372 = vshrl.u32 %v371, 7
        %v373 = vsub.s32 0, %v372
        %v374 = vrot.slane %v328, %v373
        %v375 = vlaneseq
        %v376 = vshrl.u32 %v375, 7
        %v377 = vsub.s32 1, %v376
        %v378 = vrot.slane %v328, %v377
        %v379 = vlaneseq
        %v380 = vshrl.u32 %v379, 7
        %v381 = vsub.s32 2, %v380
        %v382 = vrot.slane %v328, %v381
        %v386 = vadd.f32 %v367, %v374
        %v387 = vadd.f32 %v368, %v378
        %v388 = vadd.f32 %v369, %v382
        %v389 = vld [vmem:[%s321] sm:$0x1]
        %v390 = vld [vmem:[#allocation6] sm:$0xff]
        %v391 = vld [vmem:[#allocation6 + $0x8] sm:$0xff]
        %v392 = vld [vmem:[#allocation6 + $0x10] sm:$0xff]
        %v393 = vld [vmem:[#allocation6 + $0x18] sm:$0xff]
        %v394 = vld [vmem:[#allocation6 + $0x20] sm:$0xf]
        %v395 = vld [vmem:[#allocation6 + $0x48] sm:$0xff]
        %v396 = vld [vmem:[#allocation6 + $0x50] sm:$0xff]
        %v397 = vld [vmem:[#allocation6 + $0x58] sm:$0xff]
        %v398 = vld [vmem:[#allocation6 + $0x60] sm:$0xff]
        %v399 = vld [vmem:[#allocation6 + $0x68] sm:$0xf]
        %v400 = vld [vmem:[#allocation6 + $0x90] sm:$0xff]
        %v401 = vld [vmem:[#allocation6 + $0x98] sm:$0xff]
        %v402 = vld [vmem:[#allocation6 + $0xa0] sm:$0xff]
        %v403 = vld [vmem:[#allocation6 + $0xa8] sm:$0xff]
        %v404 = vld [vmem:[#allocation6 + $0xb0] sm:$0xf]
        %v405 = vld [vmem:[#allocation6 + $0xd8] sm:$0xff]
        %v406 = vld [vmem:[#allocation6 + $0xe0] sm:$0xff]
        %v407 = vld [vmem:[#allocation6 + $0xe8] sm:$0xff]
        %v408 = vld [vmem:[#allocation6 + $0xf0] sm:$0xff]
        %v409 = vld [vmem:[#allocation6 + $0xf8] sm:$0xf]
        %v410 = vld [vmem:[#allocation6 + $0x120] sm:$0xff]
        %v411 = vld [vmem:[#allocation6 + $0x128] sm:$0xff]
        %v412 = vld [vmem:[#allocation6 + $0x130] sm:$0xff]
        %v413 = vld [vmem:[#allocation6 + $0x138] sm:$0xff]
        %v414 = vld [vmem:[#allocation6 + $0x140] sm:$0xf]
        %v415 = vld [vmem:[#allocation6 + $0x168] sm:$0xff]
        %v416 = vld [vmem:[#allocation6 + $0x170] sm:$0xff]
        %v417 = vld [vmem:[#allocation6 + $0x178] sm:$0xff]
        %v418 = vld [vmem:[#allocation6 + $0x180] sm:$0xff]
        %v419 = vld [vmem:[#allocation6 + $0x188] sm:$0xf]
        %v420 = vld [vmem:[#allocation6 + $0x1b0] sm:$0xff]
        %v421 = vld [vmem:[#allocation6 + $0x1b8] sm:$0xff]
        %v422 = vld [vmem:[#allocation6 + $0x1c0] sm:$0xff]
        %v423 = vld [vmem:[#allocation6 + $0x1c8] sm:$0xff]
        %v424 = vld [vmem:[#allocation6 + $0x1d0] sm:$0xf]
        %v425 = vld [vmem:[#allocation6 + $0x1f8] sm:$0xff]
        %v426 = vld [vmem:[#allocation6 + $0x200] sm:$0xff]
        %v427 = vld [vmem:[#allocation6 + $0x208] sm:$0xff]
        %v428 = vld [vmem:[#allocation6 + $0x210] sm:$0xff]
        %v429 = vld [vmem:[#allocation6 + $0x218] sm:$0xf]
        %v430 = vld [vmem:[#allocation6 + $0x240] sm:$0xff]
        %v431 = vld [vmem:[#allocation6 + $0x248] sm:$0xff]
        %v432 = vld [vmem:[#allocation6 + $0x250] sm:$0xff]
        %v433 = vld [vmem:[#allocation6 + $0x258] sm:$0xff]
        %v434 = vld [vmem:[#allocation6 + $0x260] sm:$0xf]
        %v435 = vld [vmem:[#allocation6 + $0x288] sm:$0xff]
        %v436 = vld [vmem:[#allocation6 + $0x290] sm:$0xff]
        %v437 = vld [vmem:[#allocation6 + $0x298] sm:$0xff]
        %v438 = vld [vmem:[#allocation6 + $0x2a0] sm:$0xff]
        %v439 = vld [vmem:[#allocation6 + $0x2a8] sm:$0xf]
        %v440 = vld [vmem:[#allocation6 + $0x2d0] sm:$0xff]
        %v441 = vld [vmem:[#allocation6 + $0x2d8] sm:$0xff]
        %v442 = vld [vmem:[#allocation6 + $0x2e0] sm:$0xff]
        %v443 = vld [vmem:[#allocation6 + $0x2e8] sm:$0xff]
        %v444 = vld [vmem:[#allocation6 + $0x2f0] sm:$0xf]
        %v445 = vld [vmem:[#allocation6 + $0x318] sm:$0xff]
        %v446 = vld [vmem:[#allocation6 + $0x320] sm:$0xff]
        %v447 = vld [vmem:[#allocation6 + $0x328] sm:$0xff]
        %v448 = vld [vmem:[#allocation6 + $0x330] sm:$0xff]
        %v449 = vld [vmem:[#allocation6 + $0x338] sm:$0xf]
        %v450 = vld [vmem:[#allocation6 + $0x360] sm:$0xff]
        %v451 = vld [vmem:[#allocation6 + $0x368] sm:$0xff]
        %v452 = vld [vmem:[#allocation6 + $0x370] sm:$0xff]
        %v453 = vld [vmem:[#allocation6 + $0x378] sm:$0xff]
        %v454 = vld [vmem:[#allocation6 + $0x380] sm:$0xf]
        %v455 = vld [vmem:[#allocation6 + $0x3a8] sm:$0xff]
        %v456 = vld [vmem:[#allocation6 + $0x3b0] sm:$0xff]
        %v457 = vld [vmem:[#allocation6 + $0x3b8] sm:$0xff]
        %v458 = vld [vmem:[#allocation6 + $0x3c0] sm:$0xff]
        %v459 = vld [vmem:[#allocation6 + $0x3c8] sm:$0xf]
        %v460 = vld [vmem:[#allocation6 + $0x3f0] sm:$0xff]
        %v461 = vld [vmem:[#allocation6 + $0x3f8] sm:$0xff]
        %v462 = vld [vmem:[#allocation6 + $0x400] sm:$0xff]
        %v463 = vld [vmem:[#allocation6 + $0x408] sm:$0xff]
        %v464 = vld [vmem:[#allocation6 + $0x410] sm:$0xf]
        %v465 = vld [vmem:[#allocation6 + $0x438] sm:$0xff]
        %v466 = vld [vmem:[#allocation6 + $0x440] sm:$0xff]
        %v467 = vld [vmem:[#allocation6 + $0x448] sm:$0xff]
        %v468 = vld [vmem:[#allocation6 + $0x450] sm:$0xff]
        %v469 = vld [vmem:[#allocation6 + $0x458] sm:$0xf]
        %v470 = vld [vmem:[#allocation6 + $0x480] sm:$0xff]
        %v471 = vld [vmem:[#allocation6 + $0x488] sm:$0xff]
        %v472 = vld [vmem:[#allocation6 + $0x490] sm:$0xff]
        %v473 = vld [vmem:[#allocation6 + $0x498] sm:$0xff]
        %v474 = vld [vmem:[#allocation6 + $0x4a0] sm:$0xf]
        %v475 = vld [vmem:[#allocation6 + $0x4c8] sm:$0xff]
        %v476 = vld [vmem:[#allocation6 + $0x4d0] sm:$0xff]
        %v477 = vld [vmem:[#allocation6 + $0x4d8] sm:$0xff]
        %v478 = vld [vmem:[#allocation6 + $0x4e0] sm:$0xff]
        %v479 = vld [vmem:[#allocation6 + $0x4e8] sm:$0xf]
        %v480 = vld [vmem:[#allocation6 + $0x510] sm:$0xff]
        %v481 = vld [vmem:[#allocation6 + $0x518] sm:$0xff]
        %v482 = vld [vmem:[#allocation6 + $0x520] sm:$0xff]
        %v483 = vld [vmem:[#allocation6 + $0x528] sm:$0xff]
        %v484 = vld [vmem:[#allocation6 + $0x530] sm:$0xf]
        %v485 = vld [vmem:[#allocation6 + $0x558] sm:$0xff]
        %v486 = vld [vmem:[#allocation6 + $0x560] sm:$0xff]
        %v487 = vld [vmem:[#allocation6 + $0x568] sm:$0xff]
        %v488 = vld [vmem:[#allocation6 + $0x570] sm:$0xff]
        %v489 = vld [vmem:[#allocation6 + $0x578] sm:$0xf]
        %v490 = vld [vmem:[#allocation6 + $0x5a0] sm:$0xff]
        %v491 = vld [vmem:[#allocation6 + $0x5a8] sm:$0xff]
        %v492 = vld [vmem:[#allocation6 + $0x5b0] sm:$0xff]
        %v493 = vld [vmem:[#allocation6 + $0x5b8] sm:$0xff]
        %v494 = vld [vmem:[#allocation6 + $0x5c0] sm:$0xf]
        %v495 = vld [vmem:[#allocation6 + $0x5e8] sm:$0xff]
        %v496 = vld [vmem:[#allocation6 + $0x5f0] sm:$0xff]
        %v497 = vld [vmem:[#allocation6 + $0x5f8] sm:$0xff]
        %v498 = vld [vmem:[#allocation6 + $0x600] sm:$0xff]
        %v499 = vld [vmem:[#allocation6 + $0x608] sm:$0xf]
        %v500 = vld [vmem:[#allocation6 + $0x630] sm:$0xff]
        %v501 = vld [vmem:[#allocation6 + $0x638] sm:$0xff]
        %v502 = vld [vmem:[#allocation6 + $0x640] sm:$0xff]
        %v503 = vld [vmem:[#allocation6 + $0x648] sm:$0xff]
        %v504 = vld [vmem:[#allocation6 + $0x650] sm:$0xf]
        %v505 = vld [vmem:[#allocation6 + $0x678] sm:$0xff]
        %v506 = vld [vmem:[#allocation6 + $0x680] sm:$0xff]
        %v507 = vld [vmem:[#allocation6 + $0x688] sm:$0xff]
        %v508 = vld [vmem:[#allocation6 + $0x690] sm:$0xff]
        %v509 = vld [vmem:[#allocation6 + $0x698] sm:$0xf]
        %v510 = vld [vmem:[#allocation6 + $0x6c0] sm:$0xff]
        %v511 = vld [vmem:[#allocation6 + $0x6c8] sm:$0xff]
        %v512 = vld [vmem:[#allocation6 + $0x6d0] sm:$0xff]
        %v513 = vld [vmem:[#allocation6 + $0x6d8] sm:$0xff]
        %v514 = vld [vmem:[#allocation6 + $0x6e0] sm:$0xf]
        %v515 = vld [vmem:[#allocation6 + $0x708] sm:$0xff]
        %v516 = vld [vmem:[#allocation6 + $0x710] sm:$0xff]
        %v517 = vld [vmem:[#allocation6 + $0x718] sm:$0xff]
        %v518 = vld [vmem:[#allocation6 + $0x720] sm:$0xff]
        %v519 = vld [vmem:[#allocation6 + $0x728] sm:$0xf]
        %v520 = vld [vmem:[#allocation6 + $0x750] sm:$0xff]
        %v521 = vld [vmem:[#allocation6 + $0x758] sm:$0xff]
        %v522 = vld [vmem:[#allocation6 + $0x760] sm:$0xff]
        %v523 = vld [vmem:[#allocation6 + $0x768] sm:$0xff]
        %v524 = vld [vmem:[#allocation6 + $0x770] sm:$0xf]
        %v525 = vld [vmem:[#allocation6 + $0x798] sm:$0xff]
        %v526 = vld [vmem:[#allocation6 + $0x7a0] sm:$0xff]
        %v527 = vld [vmem:[#allocation6 + $0x7a8] sm:$0xff]
        %v528 = vld [vmem:[#allocation6 + $0x7b0] sm:$0xff]
        %v529 = vld [vmem:[#allocation6 + $0x7b8] sm:$0xf]
        %v530 = vld [vmem:[#allocation6 + $0x7e0] sm:$0xff]
        %v531 = vld [vmem:[#allocation6 + $0x7e8] sm:$0xff]
        %v532 = vld [vmem:[#allocation6 + $0x7f0] sm:$0xff]
        %v533 = vld [vmem:[#allocation6 + $0x7f8] sm:$0xff]
        %v534 = vld [vmem:[#allocation6 + $0x800] sm:$0xf]
        %v535 = vld [vmem:[#allocation6 + $0x828] sm:$0xff]
        %v536 = vld [vmem:[#allocation6 + $0x830] sm:$0xff]
        %v537 = vld [vmem:[#allocation6 + $0x838] sm:$0xff]
        %v538 = vld [vmem:[#allocation6 + $0x840] sm:$0xff]
        %v539 = vld [vmem:[#allocation6 + $0x848] sm:$0xf]
        %v540 = vld [vmem:[#allocation6 + $0x870] sm:$0xff]
        %v541 = vld [vmem:[#allocation6 + $0x878] sm:$0xff]
        %v542 = vld [vmem:[#allocation6 + $0x880] sm:$0xff]
        %v543 = vld [vmem:[#allocation6 + $0x888] sm:$0xff]
        %v544 = vld [vmem:[#allocation6 + $0x890] sm:$0xf]
        %v545 = vld [vmem:[#allocation6 + $0x8b8] sm:$0xff]
        %v546 = vld [vmem:[#allocation6 + $0x8c0] sm:$0xff]
        %v547 = vld [vmem:[#allocation6 + $0x8c8] sm:$0xff]
        %v548 = vld [vmem:[#allocation6 + $0x8d0] sm:$0xff]
        %v549 = vld [vmem:[#allocation6 + $0x8d8] sm:$0xf]
        %v550 = vld [vmem:[#allocation6 + $0x900] sm:$0xff]
        %v551 = vld [vmem:[#allocation6 + $0x908] sm:$0xff]
        %v552 = vld [vmem:[#allocation6 + $0x910] sm:$0xff]
        %v553 = vld [vmem:[#allocation6 + $0x918] sm:$0xff]
        %v554 = vld [vmem:[#allocation6 + $0x920] sm:$0xf]
        %v555 = vld [vmem:[#allocation6 + $0x948] sm:$0xff]
        %v556 = vld [vmem:[#allocation6 + $0x950] sm:$0xff]
        %v557 = vld [vmem:[#allocation6 + $0x958] sm:$0xff]
        %v558 = vld [vmem:[#allocation6 + $0x960] sm:$0xff]
        %v559 = vld [vmem:[#allocation6 + $0x968] sm:$0xf]
        %v560 = vld [vmem:[#allocation6 + $0x990] sm:$0xff]
        %v561 = vld [vmem:[#allocation6 + $0x998] sm:$0xff]
        %v562 = vld [vmem:[#allocation6 + $0x9a0] sm:$0xff]
        %v563 = vld [vmem:[#allocation6 + $0x9a8] sm:$0xff]
        %v564 = vld [vmem:[#allocation6 + $0x9b0] sm:$0xf]
        %v565 = vld [vmem:[#allocation6 + $0x9d8] sm:$0xff]
        %v566 = vld [vmem:[#allocation6 + $0x9e0] sm:$0xff]
        %v567 = vld [vmem:[#allocation6 + $0x9e8] sm:$0xff]
        %v568 = vld [vmem:[#allocation6 + $0x9f0] sm:$0xff]
        %v569 = vld [vmem:[#allocation6 + $0x9f8] sm:$0xf]
        %v570 = vld [vmem:[#allocation6 + $0xa20] sm:$0xff]
        %v571 = vld [vmem:[#allocation6 + $0xa28] sm:$0xff]
        %v572 = vld [vmem:[#allocation6 + $0xa30] sm:$0xff]
        %v573 = vld [vmem:[#allocation6 + $0xa38] sm:$0xff]
        %v574 = vld [vmem:[#allocation6 + $0xa40] sm:$0xf]
        %v575 = vld [vmem:[#allocation6 + $0xa68] sm:$0xff]
        %v576 = vld [vmem:[#allocation6 + $0xa70] sm:$0xff]
        %v577 = vld [vmem:[#allocation6 + $0xa78] sm:$0xff]
        %v578 = vld [vmem:[#allocation6 + $0xa80] sm:$0xff]
        %v579 = vld [vmem:[#allocation6 + $0xa88] sm:$0xf]
        %v580 = vld [vmem:[#allocation6 + $0xab0] sm:$0xff]
        %v581 = vld [vmem:[#allocation6 + $0xab8] sm:$0xff]
        %v582 = vld [vmem:[#allocation6 + $0xac0] sm:$0xff]
        %v583 = vld [vmem:[#allocation6 + $0xac8] sm:$0xff]
        %v584 = vld [vmem:[#allocation6 + $0xad0] sm:$0xf]
        %v585 = vld [vmem:[#allocation6 + $0xaf8] sm:$0xff]
        %v586 = vld [vmem:[#allocation6 + $0xb00] sm:$0xff]
        %v587 = vld [vmem:[#allocation6 + $0xb08] sm:$0xff]
        %v588 = vld [vmem:[#allocation6 + $0xb10] sm:$0xff]
        %v589 = vld [vmem:[#allocation6 + $0xb18] sm:$0xf]
        %v590 = vld [vmem:[#allocation6 + $0xb40] sm:$0xff]
        %v591 = vld [vmem:[#allocation6 + $0xb48] sm:$0xff]
        %v592 = vld [vmem:[#allocation6 + $0xb50] sm:$0xff]
        %v593 = vld [vmem:[#allocation6 + $0xb58] sm:$0xff]
        %v594 = vld [vmem:[#allocation6 + $0xb60] sm:$0xf]
        %v595 = vld [vmem:[#allocation6 + $0xb88] sm:$0xff]
        %v596 = vld [vmem:[#allocation6 + $0xb90] sm:$0xff]
        %v597 = vld [vmem:[#allocation6 + $0xb98] sm:$0xff]
        %v598 = vld [vmem:[#allocation6 + $0xba0] sm:$0xff]
        %v599 = vld [vmem:[#allocation6 + $0xba8] sm:$0xf]
        %v600 = vld [vmem:[#allocation6 + $0xbd0] sm:$0xff]
        %v601 = vld [vmem:[#allocation6 + $0xbd8] sm:$0xff]
        %v602 = vld [vmem:[#allocation6 + $0xbe0] sm:$0xff]
        %v603 = vld [vmem:[#allocation6 + $0xbe8] sm:$0xff]
        %v604 = vld [vmem:[#allocation6 + $0xbf0] sm:$0xf]
        %v605 = vld [vmem:[#allocation6 + $0xc18] sm:$0xff]
        %v606 = vld [vmem:[#allocation6 + $0xc20] sm:$0xff]
        %v607 = vld [vmem:[#allocation6 + $0xc28] sm:$0xff]
        %v608 = vld [vmem:[#allocation6 + $0xc30] sm:$0xff]
        %v609 = vld [vmem:[#allocation6 + $0xc38] sm:$0xf]
        %v610 = vld [vmem:[#allocation6 + $0xc60] sm:$0xff]
        %v611 = vld [vmem:[#allocation6 + $0xc68] sm:$0xff]
        %v612 = vld [vmem:[#allocation6 + $0xc70] sm:$0xff]
        %v613 = vld [vmem:[#allocation6 + $0xc78] sm:$0xff]
        %v614 = vld [vmem:[#allocation6 + $0xc80] sm:$0xf]
        %v615 = vld [vmem:[#allocation6 + $0xca8] sm:$0xff]
        %v616 = vld [vmem:[#allocation6 + $0xcb0] sm:$0xff]
        %v617 = vld [vmem:[#allocation6 + $0xcb8] sm:$0xff]
        %v618 = vld [vmem:[#allocation6 + $0xcc0] sm:$0xff]
        %v619 = vld [vmem:[#allocation6 + $0xcc8] sm:$0xf]
        %v620 = vld [vmem:[#allocation6 + $0xcf0] sm:$0xff]
        %v621 = vld [vmem:[#allocation6 + $0xcf8] sm:$0xff]
        %v622 = vld [vmem:[#allocation6 + $0xd00] sm:$0xff]
        %v623 = vld [vmem:[#allocation6 + $0xd08] sm:$0xff]
        %v624 = vld [vmem:[#allocation6 + $0xd10] sm:$0xf]
        %v625 = vld [vmem:[#allocation6 + $0xd38] sm:$0xff]
        %v626 = vld [vmem:[#allocation6 + $0xd40] sm:$0xff]
        %v627 = vld [vmem:[#allocation6 + $0xd48] sm:$0xff]
        %v628 = vld [vmem:[#allocation6 + $0xd50] sm:$0xff]
        %v629 = vld [vmem:[#allocation6 + $0xd58] sm:$0xf]
        %v630 = vld [vmem:[#allocation6 + $0x24] sm:$0xff]
        %v631 = vld [vmem:[#allocation6 + $0x2c] sm:$0xf]
        %v632 = vld [vmem:[#allocation6 + $0x6c] sm:$0xff]
        %v633 = vld [vmem:[#allocation6 + $0x74] sm:$0xf]
        %v634 = vld [vmem:[#allocation6 + $0xb4] sm:$0xff]
        %v635 = vld [vmem:[#allocation6 + $0xbc] sm:$0xf]
        %v636 = vld [vmem:[#allocation6 + $0xfc] sm:$0xff]
        %v637 = vld [vmem:[#allocation6 + $0x104] sm:$0xf]
        %v638 = vld [vmem:[#allocation6 + $0x144] sm:$0xff]
        %v639 = vld [vmem:[#allocation6 + $0x14c] sm:$0xf]
        %v640 = vld [vmem:[#allocation6 + $0x18c] sm:$0xff]
        %v641 = vld [vmem:[#allocation6 + $0x194] sm:$0xf]
        %v642 = vld [vmem:[#allocation6 + $0x1d4] sm:$0xff]
        %v643 = vld [vmem:[#allocation6 + $0x1dc] sm:$0xf]
        %v644 = vld [vmem:[#allocation6 + $0x21c] sm:$0xff]
        %v645 = vld [vmem:[#allocation6 + $0x224] sm:$0xf]
        %v646 = vld [vmem:[#allocation6 + $0x264] sm:$0xff]
        %v647 = vld [vmem:[#allocation6 + $0x26c] sm:$0xf]
        %v648 = vld [vmem:[#allocation6 + $0x2ac] sm:$0xff]
        %v649 = vld [vmem:[#allocation6 + $0x2b4] sm:$0xf]
        %v650 = vld [vmem:[#allocation6 + $0x2f4] sm:$0xff]
        %v651 = vld [vmem:[#allocation6 + $0x2fc] sm:$0xf]
        %v652 = vld [vmem:[#allocation6 + $0x33c] sm:$0xff]
        %v653 = vld [vmem:[#allocation6 + $0x344] sm:$0xf]
        %v654 = vld [vmem:[#allocation6 + $0x384] sm:$0xff]
        %v655 = vld [vmem:[#allocation6 + $0x38c] sm:$0xf]
        %v656 = vld [vmem:[#allocation6 + $0x3cc] sm:$0xff]
        %v657 = vld [vmem:[#allocation6 + $0x3d4] sm:$0xf]
        %v658 = vld [vmem:[#allocation6 + $0x414] sm:$0xff]
        %v659 = vld [vmem:[#allocation6 + $0x41c] sm:$0xf]
        %v660 = vld [vmem:[#allocation6 + $0x45c] sm:$0xff]
        %v661 = vld [vmem:[#allocation6 + $0x464] sm:$0xf]
        %v662 = vld [vmem:[#allocation6 + $0x4a4] sm:$0xff]
        %v663 = vld [vmem:[#allocation6 + $0x4ac] sm:$0xf]
        %v664 = vld [vmem:[#allocation6 + $0x4ec] sm:$0xff]
        %v665 = vld [vmem:[#allocation6 + $0x4f4] sm:$0xf]
        %v666 = vld [vmem:[#allocation6 + $0x534] sm:$0xff]
        %v667 = vld [vmem:[#allocation6 + $0x53c] sm:$0xf]
        %v668 = vld [vmem:[#allocation6 + $0x57c] sm:$0xff]
        %v669 = vld [vmem:[#allocation6 + $0x584] sm:$0xf]
        %v670 = vld [vmem:[#allocation6 + $0x5c4] sm:$0xff]
        %v671 = vld [vmem:[#allocation6 + $0x5cc] sm:$0xf]
        %v672 = vld [vmem:[#allocation6 + $0x60c] sm:$0xff]
        %v673 = vld [vmem:[#allocation6 + $0x614] sm:$0xf]
        %v674 = vld [vmem:[#allocation6 + $0x654] sm:$0xff]
        %v675 = vld [vmem:[#allocation6 + $0x65c] sm:$0xf]
        %v676 = vld [vmem:[#allocation6 + $0x69c] sm:$0xff]
        %v677 = vld [vmem:[#allocation6 + $0x6a4] sm:$0xf]
        %v678 = vld [vmem:[#allocation6 + $0x6e4] sm:$0xff]
        %v679 = vld [vmem:[#allocation6 + $0x6ec] sm:$0xf]
        %v680 = vld [vmem:[#allocation6 + $0x72c] sm:$0xff]
        %v681 = vld [vmem:[#allocation6 + $0x734] sm:$0xf]
        %v682 = vld [vmem:[#allocation6 + $0x774] sm:$0xff]
        %v683 = vld [vmem:[#allocation6 + $0x77c] sm:$0xf]
        %v684 = vld [vmem:[#allocation6 + $0x7bc] sm:$0xff]
        %v685 = vld [vmem:[#allocation6 + $0x7c4] sm:$0xf]
        %v686 = vld [vmem:[#allocation6 + $0x804] sm:$0xff]
        %v687 = vld [vmem:[#allocation6 + $0x80c] sm:$0xf]
        %v688 = vld [vmem:[#allocation6 + $0x84c] sm:$0xff]
        %v689 = vld [vmem:[#allocation6 + $0x854] sm:$0xf]
        %v690 = vld [vmem:[#allocation6 + $0x894] sm:$0xff]
        %v691 = vld [vmem:[#allocation6 + $0x89c] sm:$0xf]
        %v692 = vld [vmem:[#allocation6 + $0x8dc] sm:$0xff]
        %v693 = vld [vmem:[#allocation6 + $0x8e4] sm:$0xf]
        %v694 = vld [vmem:[#allocation6 + $0x924] sm:$0xff]
        %v695 = vld [vmem:[#allocation6 + $0x92c] sm:$0xf]
        %v696 = vld [vmem:[#allocation6 + $0x96c] sm:$0xff]
        %v697 = vld [vmem:[#allocation6 + $0x974] sm:$0xf]
        %v698 = vld [vmem:[#allocation6 + $0x9b4] sm:$0xff]
        %v699 = vld [vmem:[#allocation6 + $0x9bc] sm:$0xf]
        %v700 = vld [vmem:[#allocation6 + $0x9fc] sm:$0xff]
        %v701 = vld [vmem:[#allocation6 + $0xa04] sm:$0xf]
        %v702 = vld [vmem:[#allocation6 + $0xa44] sm:$0xff]
        %v703 = vld [vmem:[#allocation6 + $0xa4c] sm:$0xf]
        %v704 = vld [vmem:[#allocation6 + $0xa8c] sm:$0xff]
        %v705 = vld [vmem:[#allocation6 + $0xa94] sm:$0xf]
        %v706 = vld [vmem:[#allocation6 + $0xad4] sm:$0xff]
        %v707 = vld [vmem:[#allocation6 + $0xadc] sm:$0xf]
        %v708 = vld [vmem:[#allocation6 + $0xb1c] sm:$0xff]
        %v709 = vld [vmem:[#allocation6 + $0xb24] sm:$0xf]
        %v710 = vld [vmem:[#allocation6 + $0xb64] sm:$0xff]
        %v711 = vld [vmem:[#allocation6 + $0xb6c] sm:$0xf]
        %v712 = vld [vmem:[#allocation6 + $0xbac] sm:$0xff]
        %v713 = vld [vmem:[#allocation6 + $0xbb4] sm:$0xf]
        %v714 = vld [vmem:[#allocation6 + $0xbf4] sm:$0xff]
        %v715 = vld [vmem:[#allocation6 + $0xbfc] sm:$0xf]
        %v716 = vld [vmem:[#allocation6 + $0xc3c] sm:$0xff]
        %v717 = vld [vmem:[#allocation6 + $0xc44] sm:$0xf]
        %v718 = vld [vmem:[#allocation6 + $0xc84] sm:$0xff]
        %v719 = vld [vmem:[#allocation6 + $0xc8c] sm:$0xf]
        %v720 = vld [vmem:[#allocation6 + $0xccc] sm:$0xff]
        %v721 = vld [vmem:[#allocation6 + $0xcd4] sm:$0xf]
        %v722 = vld [vmem:[#allocation6 + $0xd14] sm:$0xff]
        %v723 = vld [vmem:[#allocation6 + $0xd1c] sm:$0xf]
        %v724 = vld [vmem:[#allocation6 + $0xd5c] sm:$0xff]
        %v725 = vld [vmem:[#allocation6 + $0xd64] sm:$0xf]
        %v726 = vld [vmem:[#allocation6 + $0x30] sm:$0xff]
        %v727 = vld [vmem:[#allocation6 + $0x38] sm:$0xff]
        %v728 = vld [vmem:[#allocation6 + $0x40] sm:$0xff]
        %v729 = vld [vmem:[#allocation6 + $0x78] sm:$0xff]
        %v730 = vld [vmem:[#allocation6 + $0x80] sm:$0xff]
        %v731 = vld [vmem:[#allocation6 + $0x88] sm:$0xff]
        %v732 = vld [vmem:[#allocation6 + $0xc0] sm:$0xff]
        %v733 = vld [vmem:[#allocation6 + $0xc8] sm:$0xff]
        %v734 = vld [vmem:[#allocation6 + $0xd0] sm:$0xff]
        %v735 = vld [vmem:[#allocation6 + $0x108] sm:$0xff]
        %v736 = vld [vmem:[#allocation6 + $0x110] sm:$0xff]
        %v737 = vld [vmem:[#allocation6 + $0x118] sm:$0xff]
        %v738 = vld [vmem:[#allocation6 + $0x150] sm:$0xff]
        %v739 = vld [vmem:[#allocation6 + $0x158] sm:$0xff]
        %v740 = vld [vmem:[#allocation6 + $0x160] sm:$0xff]
        %v741 = vld [vmem:[#allocation6 + $0x198] sm:$0xff]
        %v742 = vld [vmem:[#allocation6 + $0x1a0] sm:$0xff]
        %v743 = vld [vmem:[#allocation6 + $0x1a8] sm:$0xff]
        %v744 = vld [vmem:[#allocation6 + $0x1e0] sm:$0xff]
        %v745 = vld [vmem:[#allocation6 + $0x1e8] sm:$0xff]
        %v746 = vld [vmem:[#allocation6 + $0x1f0] sm:$0xff]
        %v747 = vld [vmem:[#allocation6 + $0x228] sm:$0xff]
        %v748 = vld [vmem:[#allocation6 + $0x230] sm:$0xff]
        %v749 = vld [vmem:[#allocation6 + $0x238] sm:$0xff]
        %v750 = vld [vmem:[#allocation6 + $0x270] sm:$0xff]
        %v751 = vld [vmem:[#allocation6 + $0x278] sm:$0xff]
        %v752 = vld [vmem:[#allocation6 + $0x280] sm:$0xff]
        %v753 = vld [vmem:[#allocation6 + $0x2b8] sm:$0xff]
        %v754 = vld [vmem:[#allocation6 + $0x2c0] sm:$0xff]
        %v755 = vld [vmem:[#allocation6 + $0x2c8] sm:$0xff]
        %v756 = vld [vmem:[#allocation6 + $0x300] sm:$0xff]
        %v757 = vld [vmem:[#allocation6 + $0x308] sm:$0xff]
        %v758 = vld [vmem:[#allocation6 + $0x310] sm:$0xff]
        %v759 = vld [vmem:[#allocation6 + $0x348] sm:$0xff]
        %v760 = vld [vmem:[#allocation6 + $0x350] sm:$0xff]
        %v761 = vld [vmem:[#allocation6 + $0x358] sm:$0xff]
        %v762 = vld [vmem:[#allocation6 + $0x390] sm:$0xff]
        %v763 = vld [vmem:[#allocation6 + $0x398] sm:$0xff]
        %v764 = vld [vmem:[#allocation6 + $0x3a0] sm:$0xff]
        %v765 = vld [vmem:[#allocation6 + $0x3d8] sm:$0xff]
        %v766 = vld [vmem:[#allocation6 + $0x3e0] sm:$0xff]
        %v767 = vld [vmem:[#allocation6 + $0x3e8] sm:$0xff]
        %v768 = vld [vmem:[#allocation6 + $0x420] sm:$0xff]
        %v769 = vld [vmem:[#allocation6 + $0x428] sm:$0xff]
        %v770 = vld [vmem:[#allocation6 + $0x430] sm:$0xff]
        %v771 = vld [vmem:[#allocation6 + $0x468] sm:$0xff]
        %v772 = vld [vmem:[#allocation6 + $0x470] sm:$0xff]
        %v773 = vld [vmem:[#allocation6 + $0x478] sm:$0xff]
        %v774 = vld [vmem:[#allocation6 + $0x4b0] sm:$0xff]
        %v775 = vld [vmem:[#allocation6 + $0x4b8] sm:$0xff]
        %v776 = vld [vmem:[#allocation6 + $0x4c0] sm:$0xff]
        %v777 = vld [vmem:[#allocation6 + $0x4f8] sm:$0xff]
        %v778 = vld [vmem:[#allocation6 + $0x500] sm:$0xff]
        %v779 = vld [vmem:[#allocation6 + $0x508] sm:$0xff]
        %v780 = vld [vmem:[#allocation6 + $0x540] sm:$0xff]
        %v781 = vld [vmem:[#allocation6 + $0x548] sm:$0xff]
        %v782 = vld [vmem:[#allocation6 + $0x550] sm:$0xff]
        %v783 = vld [vmem:[#allocation6 + $0x588] sm:$0xff]
        %v784 = vld [vmem:[#allocation6 + $0x590] sm:$0xff]
        %v785 = vld [vmem:[#allocation6 + $0x598] sm:$0xff]
        %v786 = vld [vmem:[#allocation6 + $0x5d0] sm:$0xff]
        %v787 = vld [vmem:[#allocation6 + $0x5d8] sm:$0xff]
        %v788 = vld [vmem:[#allocation6 + $0x5e0] sm:$0xff]
        %v789 = vld [vmem:[#allocation6 + $0x618] sm:$0xff]
        %v790 = vld [vmem:[#allocation6 + $0x620] sm:$0xff]
        %v791 = vld [vmem:[#allocation6 + $0x628] sm:$0xff]
        %v792 = vld [vmem:[#allocation6 + $0x660] sm:$0xff]
        %v793 = vld [vmem:[#allocation6 + $0x668] sm:$0xff]
        %v794 = vld [vmem:[#allocation6 + $0x670] sm:$0xff]
        %v795 = vld [vmem:[#allocation6 + $0x6a8] sm:$0xff]
        %v796 = vld [vmem:[#allocation6 + $0x6b0] sm:$0xff]
        %v797 = vld [vmem:[#allocation6 + $0x6b8] sm:$0xff]
        %v798 = vld [vmem:[#allocation6 + $0x6f0] sm:$0xff]
        %v799 = vld [vmem:[#allocation6 + $0x6f8] sm:$0xff]
        %v800 = vld [vmem:[#allocation6 + $0x700] sm:$0xff]
        %v801 = vld [vmem:[#allocation6 + $0x738] sm:$0xff]
        %v802 = vld [vmem:[#allocation6 + $0x740] sm:$0xff]
        %v803 = vld [vmem:[#allocation6 + $0x748] sm:$0xff]
        %v804 = vld [vmem:[#allocation6 + $0x780] sm:$0xff]
        %v805 = vld [vmem:[#allocation6 + $0x788] sm:$0xff]
        %v806 = vld [vmem:[#allocation6 + $0x790] sm:$0xff]
        %v807 = vld [vmem:[#allocation6 + $0x7c8] sm:$0xff]
        %v808 = vld [vmem:[#allocation6 + $0x7d0] sm:$0xff]
        %v809 = vld [vmem:[#allocation6 + $0x7d8] sm:$0xff]
        %v810 = vld [vmem:[#allocation6 + $0x810] sm:$0xff]
        %v811 = vld [vmem:[#allocation6 + $0x818] sm:$0xff]
        %v812 = vld [vmem:[#allocation6 + $0x820] sm:$0xff]
        %v813 = vld [vmem:[#allocation6 + $0x858] sm:$0xff]
        %v814 = vld [vmem:[#allocation6 + $0x860] sm:$0xff]
        %v815 = vld [vmem:[#allocation6 + $0x868] sm:$0xff]
        %v816 = vld [vmem:[#allocation6 + $0x8a0] sm:$0xff]
        %v817 = vld [vmem:[#allocation6 + $0x8a8] sm:$0xff]
        %v818 = vld [vmem:[#allocation6 + $0x8b0] sm:$0xff]
        %v819 = vld [vmem:[#allocation6 + $0x8e8] sm:$0xff]
        %v820 = vld [vmem:[#allocation6 + $0x8f0] sm:$0xff]
        %v821 = vld [vmem:[#allocation6 + $0x8f8] sm:$0xff]
        %v822 = vld [vmem:[#allocation6 + $0x930] sm:$0xff]
        %v823 = vld [vmem:[#allocation6 + $0x938] sm:$0xff]
        %v824 = vld [vmem:[#allocation6 + $0x940] sm:$0xff]
        %v825 = vld [vmem:[#allocation6 + $0x978] sm:$0xff]
        %v826 = vld [vmem:[#allocation6 + $0x980] sm:$0xff]
        %v827 = vld [vmem:[#allocation6 + $0x988] sm:$0xff]
        %v828 = vld [vmem:[#allocation6 + $0x9c0] sm:$0xff]
        %v829 = vld [vmem:[#allocation6 + $0x9c8] sm:$0xff]
        %v830 = vld [vmem:[#allocation6 + $0x9d0] sm:$0xff]
        %v831 = vld [vmem:[#allocation6 + $0xa08] sm:$0xff]
        %v832 = vld [vmem:[#allocation6 + $0xa10] sm:$0xff]
        %v833 = vld [vmem:[#allocation6 + $0xa18] sm:$0xff]
        %v834 = vld [vmem:[#allocation6 + $0xa50] sm:$0xff]
        %v835 = vld [vmem:[#allocation6 + $0xa58] sm:$0xff]
        %v836 = vld [vmem:[#allocation6 + $0xa60] sm:$0xff]
        %v837 = vld [vmem:[#allocation6 + $0xa98] sm:$0xff]
        %v838 = vld [vmem:[#allocation6 + $0xaa0] sm:$0xff]
        %v839 = vld [vmem:[#allocation6 + $0xaa8] sm:$0xff]
        %v840 = vld [vmem:[#allocation6 + $0xae0] sm:$0xff]
        %v841 = vld [vmem:[#allocation6 + $0xae8] sm:$0xff]
        %v842 = vld [vmem:[#allocation6 + $0xaf0] sm:$0xff]
        %v843 = vld [vmem:[#allocation6 + $0xb28] sm:$0xff]
        %v844 = vld [vmem:[#allocation6 + $0xb30] sm:$0xff]
        %v845 = vld [vmem:[#allocation6 + $0xb38] sm:$0xff]
        %v846 = vld [vmem:[#allocation6 + $0xb70] sm:$0xff]
        %v847 = vld [vmem:[#allocation6 + $0xb78] sm:$0xff]
        %v848 = vld [vmem:[#allocation6 + $0xb80] sm:$0xff]
        %v849 = vld [vmem:[#allocation6 + $0xbb8] sm:$0xff]
        %v850 = vld [vmem:[#allocation6 + $0xbc0] sm:$0xff]
        %v851 = vld [vmem:[#allocation6 + $0xbc8] sm:$0xff]
        %v852 = vld [vmem:[#allocation6 + $0xc00] sm:$0xff]
        %v853 = vld [vmem:[#allocation6 + $0xc08] sm:$0xff]
        %v854 = vld [vmem:[#allocation6 + $0xc10] sm:$0xff]
        %v855 = vld [vmem:[#allocation6 + $0xc48] sm:$0xff]
        %v856 = vld [vmem:[#allocation6 + $0xc50] sm:$0xff]
        %v857 = vld [vmem:[#allocation6 + $0xc58] sm:$0xff]
        %v858 = vld [vmem:[#allocation6 + $0xc90] sm:$0xff]
        %v859 = vld [vmem:[#allocation6 + $0xc98] sm:$0xff]
        %v860 = vld [vmem:[#allocation6 + $0xca0] sm:$0xff]
        %v861 = vld [vmem:[#allocation6 + $0xcd8] sm:$0xff]
        %v862 = vld [vmem:[#allocation6 + $0xce0] sm:$0xff]
        %v863 = vld [vmem:[#allocation6 + $0xce8] sm:$0xff]
        %v864 = vld [vmem:[#allocation6 + $0xd20] sm:$0xff]
        %v865 = vld [vmem:[#allocation6 + $0xd28] sm:$0xff]
        %v866 = vld [vmem:[#allocation6 + $0xd30] sm:$0xff]
        %v867 = vld [vmem:[#allocation6 + $0xd68] sm:$0xff]
        %v868 = vld [vmem:[#allocation6 + $0xd70] sm:$0xff]
        %v869 = vld [vmem:[#allocation6 + $0xd78] sm:$0xff]
        %v870 = vpack.c.bf16 %v386, %v386
        %v871 = vpack.c.bf16 %v387, %v387
        %v872 = vpack.c.bf16 %v388, %v388
        %s873 = scalar_lea.vmem [#allocation3], 2
        %v874 = vld [vmem:[%s873] ss:$8 sm:$0xf]
        %v875 = vld [vmem:[%s873] ss:$8 sm:$0xf0]
        %v876 = vor.u32 %v874, %v875
        %s877 = scalar_lea.vmem [#allocation3], 66
        %v878 = vld [vmem:[%s877] ss:$8 sm:$0x1]
        %v881 = vlaneseq
        %v882 = vshrl.u32 %v881, 7
        %v883 = vsub.s32 0, %v882
        %v884 = vrot.slane %v876, %v883
        %v885 = vlaneseq
        %v886 = vshrl.u32 %v885, 7
        %v887 = vsub.s32 1, %v886
        %v888 = vrot.slane %v876, %v887
        %v889 = vlaneseq
        %v890 = vshrl.u32 %v889, 7
        %v891 = vsub.s32 2, %v890
        %v892 = vrot.slane %v876, %v891
        %v893 = vlaneseq
        %v894 = vshrl.u32 %v893, 7
        %v895 = vsub.s32 3, %v894
        %v896 = vrot.slane %v876, %v895
        %v897 = vlaneseq
        %v898 = vshrl.u32 %v897, 7
        %v899 = vsub.s32 4, %v898
        %v900 = vrot.slane %v876, %v899
        %v901 = vlaneseq
        %v902 = vshrl.u32 %v901, 7
        %v903 = vsub.s32 5, %v902
        %v904 = vrot.slane %v876, %v903
        %v905 = vlaneseq
        %v906 = vshrl.u32 %v905, 7
        %v907 = vsub.s32 6, %v906
        %v908 = vrot.slane %v876, %v907
        %v909 = vlaneseq
        %v910 = vshrl.u32 %v909, 7
        %v911 = vsub.s32 7, %v910
        %v912 = vrot.slane %v876, %v911
        %v913 = vlaneseq
        %v914 = vshrl.u32 %v913, 7
        %v915 = vsub.s32 0, %v914
        %v916 = vrot.slane %v878, %v915
        %v1166 = vunpack.c.l.b16 %v390
        %v1167 = vunpack.c.h.b16 %v390
        %v1168 = vunpack.c.l.b16 %v391
        %v1169 = vunpack.c.h.b16 %v391
        %v1170 = vunpack.c.l.b16 %v392
        %v1171 = vunpack.c.h.b16 %v392
        %v1172 = vunpack.c.l.b16 %v393
        %v1173 = vunpack.c.h.b16 %v393
        %v1174 = vunpack.c.l.b16 %v394
        %v1175 = vunpack.c.l.b16 %v395
        %v1176 = vunpack.c.h.b16 %v395
        %v1177 = vunpack.c.l.b16 %v396
        %v1178 = vunpack.c.h.b16 %v396
        %v1179 = vunpack.c.l.b16 %v397
        %v1180 = vunpack.c.h.b16 %v397
        %v1181 = vunpack.c.l.b16 %v398
        %v1182 = vunpack.c.h.b16 %v398
        %v1183 = vunpack.c.l.b16 %v399
        %v1184 = vunpack.c.l.b16 %v400
        %v1185 = vunpack.c.h.b16 %v400
        %v1186 = vunpack.c.l.b16 %v401
        %v1187 = vunpack.c.h.b16 %v401
        %v1188 = vunpack.c.l.b16 %v402
        %v1189 = vunpack.c.h.b16 %v402
        %v1190 = vunpack.c.l.b16 %v403
        %v1191 = vunpack.c.h.b16 %v403
        %v1192 = vunpack.c.l.b16 %v404
        %v1193 = vunpack.c.l.b16 %v405
        %v1194 = vunpack.c.h.b16 %v405
        %v1195 = vunpack.c.l.b16 %v406
        %v1196 = vunpack.c.h.b16 %v406
        %v1197 = vunpack.c.l.b16 %v407
        %v1198 = vunpack.c.h.b16 %v407
        %v1199 = vunpack.c.l.b16 %v408
        %v1200 = vunpack.c.h.b16 %v408
        %v1201 = vunpack.c.l.b16 %v409
        %v1202 = vunpack.c.l.b16 %v410
        %v1203 = vunpack.c.h.b16 %v410
        %v1204 = vunpack.c.l.b16 %v411
        %v1205 = vunpack.c.h.b16 %v411
        %v1206 = vunpack.c.l.b16 %v412
        %v1207 = vunpack.c.h.b16 %v412
        %v1208 = vunpack.c.l.b16 %v413
        %v1209 = vunpack.c.h.b16 %v413
        %v1210 = vunpack.c.l.b16 %v414
        %v1211 = vunpack.c.l.b16 %v415
        %v1212 = vunpack.c.h.b16 %v415
        %v1213 = vunpack.c.l.b16 %v416
        %v1214 = vunpack.c.h.b16 %v416
        %v1215 = vunpack.c.l.b16 %v417
        %v1216 = vunpack.c.h.b16 %v417
        %v1217 = vunpack.c.l.b16 %v418
        %v1218 = vunpack.c.h.b16 %v418
        %v1219 = vunpack.c.l.b16 %v419
        %v1220 = vunpack.c.l.b16 %v420
        %v1221 = vunpack.c.h.b16 %v420
        %v1222 = vunpack.c.l.b16 %v421
        %v1223 = vunpack.c.h.b16 %v421
        %v1224 = vunpack.c.l.b16 %v422
        %v1225 = vunpack.c.h.b16 %v422
        %v1226 = vunpack.c.l.b16 %v423
        %v1227 = vunpack.c.h.b16 %v423
        %v1228 = vunpack.c.l.b16 %v424
        %v1229 = vunpack.c.l.b16 %v425
        %v1230 = vunpack.c.h.b16 %v425
        %v1231 = vunpack.c.l.b16 %v426
        %v1232 = vunpack.c.h.b16 %v426
        %v1233 = vunpack.c.l.b16 %v427
        %v1234 = vunpack.c.h.b16 %v427
        %v1235 = vunpack.c.l.b16 %v428
        %v1236 = vunpack.c.h.b16 %v428
        %v1237 = vunpack.c.l.b16 %v429
        %v1238 = vunpack.c.l.b16 %v430
        %v1239 = vunpack.c.h.b16 %v430
        %v1240 = vunpack.c.l.b16 %v431
        %v1241 = vunpack.c.h.b16 %v431
        %v1242 = vunpack.c.l.b16 %v432
        %v1243 = vunpack.c.h.b16 %v432
        %v1244 = vunpack.c.l.b16 %v433
        %v1245 = vunpack.c.h.b16 %v433
        %v1246 = vunpack.c.l.b16 %v434
        %v1247 = vunpack.c.l.b16 %v435
        %v1248 = vunpack.c.h.b16 %v435
        %v1249 = vunpack.c.l.b16 %v436
        %v1250 = vunpack.c.h.b16 %v436
        %v1251 = vunpack.c.l.b16 %v437
        %v1252 = vunpack.c.h.b16 %v437
        %v1253 = vunpack.c.l.b16 %v438
        %v1254 = vunpack.c.h.b16 %v438
        %v1255 = vunpack.c.l.b16 %v439
        %v1256 = vunpack.c.l.b16 %v440
        %v1257 = vunpack.c.h.b16 %v440
        %v1258 = vunpack.c.l.b16 %v441
        %v1259 = vunpack.c.h.b16 %v441
        %v1260 = vunpack.c.l.b16 %v442
        %v1261 = vunpack.c.h.b16 %v442
        %v1262 = vunpack.c.l.b16 %v443
        %v1263 = vunpack.c.h.b16 %v443
        %v1264 = vunpack.c.l.b16 %v444
        %v1265 = vunpack.c.l.b16 %v445
        %v1266 = vunpack.c.h.b16 %v445
        %v1267 = vunpack.c.l.b16 %v446
        %v1268 = vunpack.c.h.b16 %v446
        %v1269 = vunpack.c.l.b16 %v447
        %v1270 = vunpack.c.h.b16 %v447
        %v1271 = vunpack.c.l.b16 %v448
        %v1272 = vunpack.c.h.b16 %v448
        %v1273 = vunpack.c.l.b16 %v449
        %v1274 = vunpack.c.l.b16 %v450
        %v1275 = vunpack.c.h.b16 %v450
        %v1276 = vunpack.c.l.b16 %v451
        %v1277 = vunpack.c.h.b16 %v451
        %v1278 = vunpack.c.l.b16 %v452
        %v1279 = vunpack.c.h.b16 %v452
        %v1280 = vunpack.c.l.b16 %v453
        %v1281 = vunpack.c.h.b16 %v453
        %v1282 = vunpack.c.l.b16 %v454
        %v1283 = vunpack.c.l.b16 %v455
        %v1284 = vunpack.c.h.b16 %v455
        %v1285 = vunpack.c.l.b16 %v456
        %v1286 = vunpack.c.h.b16 %v456
        %v1287 = vunpack.c.l.b16 %v457
        %v1288 = vunpack.c.h.b16 %v457
        %v1289 = vunpack.c.l.b16 %v458
        %v1290 = vunpack.c.h.b16 %v458
        %v1291 = vunpack.c.l.b16 %v459
        %v1292 = vunpack.c.l.b16 %v460
        %v1293 = vunpack.c.h.b16 %v460
        %v1294 = vunpack.c.l.b16 %v461
        %v1295 = vunpack.c.h.b16 %v461
        %v1296 = vunpack.c.l.b16 %v462
        %v1297 = vunpack.c.h.b16 %v462
        %v1298 = vunpack.c.l.b16 %v463
        %v1299 = vunpack.c.h.b16 %v463
        %v1300 = vunpack.c.l.b16 %v464
        %v1301 = vunpack.c.l.b16 %v465
        %v1302 = vunpack.c.h.b16 %v465
        %v1303 = vunpack.c.l.b16 %v466
        %v1304 = vunpack.c.h.b16 %v466
        %v1305 = vunpack.c.l.b16 %v467
        %v1306 = vunpack.c.h.b16 %v467
        %v1307 = vunpack.c.l.b16 %v468
        %v1308 = vunpack.c.h.b16 %v468
        %v1309 = vunpack.c.l.b16 %v469
        %v1310 = vunpack.c.l.b16 %v470
        %v1311 = vunpack.c.h.b16 %v470
        %v1312 = vunpack.c.l.b16 %v471
        %v1313 = vunpack.c.h.b16 %v471
        %v1314 = vunpack.c.l.b16 %v472
        %v1315 = vunpack.c.h.b16 %v472
        %v1316 = vunpack.c.l.b16 %v473
        %v1317 = vunpack.c.h.b16 %v473
        %v1318 = vunpack.c.l.b16 %v474
        %v1319 = vunpack.c.l.b16 %v475
        %v1320 = vunpack.c.h.b16 %v475
        %v1321 = vunpack.c.l.b16 %v476
        %v1322 = vunpack.c.h.b16 %v476
        %v1323 = vunpack.c.l.b16 %v477
        %v1324 = vunpack.c.h.b16 %v477
        %v1325 = vunpack.c.l.b16 %v478
        %v1326 = vunpack.c.h.b16 %v478
        %v1327 = vunpack.c.l.b16 %v479
        %v1328 = vunpack.c.l.b16 %v480
        %v1329 = vunpack.c.h.b16 %v480
        %v1330 = vunpack.c.l.b16 %v481
        %v1331 = vunpack.c.h.b16 %v481
        %v1332 = vunpack.c.l.b16 %v482
        %v1333 = vunpack.c.h.b16 %v482
        %v1334 = vunpack.c.l.b16 %v483
        %v1335 = vunpack.c.h.b16 %v483
        %v1336 = vunpack.c.l.b16 %v484
        %v1337 = vunpack.c.l.b16 %v485
        %v1338 = vunpack.c.h.b16 %v485
        %v1339 = vunpack.c.l.b16 %v486
        %v1340 = vunpack.c.h.b16 %v486
        %v1341 = vunpack.c.l.b16 %v487
        %v1342 = vunpack.c.h.b16 %v487
        %v1343 = vunpack.c.l.b16 %v488
        %v1344 = vunpack.c.h.b16 %v488
        %v1345 = vunpack.c.l.b16 %v489
        %v1346 = vunpack.c.l.b16 %v490
        %v1347 = vunpack.c.h.b16 %v490
        %v1348 = vunpack.c.l.b16 %v491
        %v1349 = vunpack.c.h.b16 %v491
        %v1350 = vunpack.c.l.b16 %v492
        %v1351 = vunpack.c.h.b16 %v492
        %v1352 = vunpack.c.l.b16 %v493
        %v1353 = vunpack.c.h.b16 %v493
        %v1354 = vunpack.c.l.b16 %v494
        %v1355 = vunpack.c.l.b16 %v495
        %v1356 = vunpack.c.h.b16 %v495
        %v1357 = vunpack.c.l.b16 %v496
        %v1358 = vunpack.c.h.b16 %v496
        %v1359 = vunpack.c.l.b16 %v497
        %v1360 = vunpack.c.h.b16 %v497
        %v1361 = vunpack.c.l.b16 %v498
        %v1362 = vunpack.c.h.b16 %v498
        %v1363 = vunpack.c.l.b16 %v499
        %v1364 = vunpack.c.l.b16 %v500
        %v1365 = vunpack.c.h.b16 %v500
        %v1366 = vunpack.c.l.b16 %v501
        %v1367 = vunpack.c.h.b16 %v501
        %v1368 = vunpack.c.l.b16 %v502
        %v1369 = vunpack.c.h.b16 %v502
        %v1370 = vunpack.c.l.b16 %v503
        %v1371 = vunpack.c.h.b16 %v503
        %v1372 = vunpack.c.l.b16 %v504
        %v1373 = vunpack.c.l.b16 %v505
        %v1374 = vunpack.c.h.b16 %v505
        %v1375 = vunpack.c.l.b16 %v506
        %v1376 = vunpack.c.h.b16 %v506
        %v1377 = vunpack.c.l.b16 %v507
        %v1378 = vunpack.c.h.b16 %v507
        %v1379 = vunpack.c.l.b16 %v508
        %v1380 = vunpack.c.h.b16 %v508
        %v1381 = vunpack.c.l.b16 %v509
        %v1382 = vunpack.c.l.b16 %v510
        %v1383 = vunpack.c.h.b16 %v510
        %v1384 = vunpack.c.l.b16 %v511
        %v1385 = vunpack.c.h.b16 %v511
        %v1386 = vunpack.c.l.b16 %v512
        %v1387 = vunpack.c.h.b16 %v512
        %v1388 = vunpack.c.l.b16 %v513
        %v1389 = vunpack.c.h.b16 %v513
        %v1390 = vunpack.c.l.b16 %v514
        %v1391 = vunpack.c.l.b16 %v515
        %v1392 = vunpack.c.h.b16 %v515
        %v1393 = vunpack.c.l.b16 %v516
        %v1394 = vunpack.c.h.b16 %v516
        %v1395 = vunpack.c.l.b16 %v517
        %v1396 = vunpack.c.h.b16 %v517
        %v1397 = vunpack.c.l.b16 %v518
        %v1398 = vunpack.c.h.b16 %v518
        %v1399 = vunpack.c.l.b16 %v519
        %v1400 = vunpack.c.l.b16 %v520
        %v1401 = vunpack.c.h.b16 %v520
        %v1402 = vunpack.c.l.b16 %v521
        %v1403 = vunpack.c.h.b16 %v521
        %v1404 = vunpack.c.l.b16 %v522
        %v1405 = vunpack.c.h.b16 %v522
        %v1406 = vunpack.c.l.b16 %v523
        %v1407 = vunpack.c.h.b16 %v523
        %v1408 = vunpack.c.l.b16 %v524
        %v1409 = vunpack.c.l.b16 %v525
        %v1410 = vunpack.c.h.b16 %v525
        %v1411 = vunpack.c.l.b16 %v526
        %v1412 = vunpack.c.h.b16 %v526
        %v1413 = vunpack.c.l.b16 %v527
        %v1414 = vunpack.c.h.b16 %v527
        %v1415 = vunpack.c.l.b16 %v528
        %v1416 = vunpack.c.h.b16 %v528
        %v1417 = vunpack.c.l.b16 %v529
        %v1418 = vunpack.c.l.b16 %v530
        %v1419 = vunpack.c.h.b16 %v530
        %v1420 = vunpack.c.l.b16 %v531
        %v1421 = vunpack.c.h.b16 %v531
        %v1422 = vunpack.c.l.b16 %v532
        %v1423 = vunpack.c.h.b16 %v532
        %v1424 = vunpack.c.l.b16 %v533
        %v1425 = vunpack.c.h.b16 %v533
        %v1426 = vunpack.c.l.b16 %v534
        %v1427 = vunpack.c.l.b16 %v535
        %v1428 = vunpack.c.h.b16 %v535
        %v1429 = vunpack.c.l.b16 %v536
        %v1430 = vunpack.c.h.b16 %v536
        %v1431 = vunpack.c.l.b16 %v537
        %v1432 = vunpack.c.h.b16 %v537
        %v1433 = vunpack.c.l.b16 %v538
        %v1434 = vunpack.c.h.b16 %v538
        %v1435 = vunpack.c.l.b16 %v539
        %v1436 = vunpack.c.l.b16 %v540
        %v1437 = vunpack.c.h.b16 %v540
        %v1438 = vunpack.c.l.b16 %v541
        %v1439 = vunpack.c.h.b16 %v541
        %v1440 = vunpack.c.l.b16 %v542
        %v1441 = vunpack.c.h.b16 %v542
        %v1442 = vunpack.c.l.b16 %v543
        %v1443 = vunpack.c.h.b16 %v543
        %v1444 = vunpack.c.l.b16 %v544
        %v1445 = vunpack.c.l.b16 %v545
        %v1446 = vunpack.c.h.b16 %v545
        %v1447 = vunpack.c.l.b16 %v546
        %v1448 = vunpack.c.h.b16 %v546
        %v1449 = vunpack.c.l.b16 %v547
        %v1450 = vunpack.c.h.b16 %v547
        %v1451 = vunpack.c.l.b16 %v548
        %v1452 = vunpack.c.h.b16 %v548
        %v1453 = vunpack.c.l.b16 %v549
        %v1454 = vunpack.c.l.b16 %v550
        %v1455 = vunpack.c.h.b16 %v550
        %v1456 = vunpack.c.l.b16 %v551
        %v1457 = vunpack.c.h.b16 %v551
        %v1458 = vunpack.c.l.b16 %v552
        %v1459 = vunpack.c.h.b16 %v552
        %v1460 = vunpack.c.l.b16 %v553
        %v1461 = vunpack.c.h.b16 %v553
        %v1462 = vunpack.c.l.b16 %v554
        %v1463 = vunpack.c.l.b16 %v555
        %v1464 = vunpack.c.h.b16 %v555
        %v1465 = vunpack.c.l.b16 %v556
        %v1466 = vunpack.c.h.b16 %v556
        %v1467 = vunpack.c.l.b16 %v557
        %v1468 = vunpack.c.h.b16 %v557
        %v1469 = vunpack.c.l.b16 %v558
        %v1470 = vunpack.c.h.b16 %v558
        %v1471 = vunpack.c.l.b16 %v559
        %v1472 = vunpack.c.l.b16 %v560
        %v1473 = vunpack.c.h.b16 %v560
        %v1474 = vunpack.c.l.b16 %v561
        %v1475 = vunpack.c.h.b16 %v561
        %v1476 = vunpack.c.l.b16 %v562
        %v1477 = vunpack.c.h.b16 %v562
        %v1478 = vunpack.c.l.b16 %v563
        %v1479 = vunpack.c.h.b16 %v563
        %v1480 = vunpack.c.l.b16 %v564
        %v1481 = vunpack.c.l.b16 %v565
        %v1482 = vunpack.c.h.b16 %v565
        %v1483 = vunpack.c.l.b16 %v566
        %v1484 = vunpack.c.h.b16 %v566
        %v1485 = vunpack.c.l.b16 %v567
        %v1486 = vunpack.c.h.b16 %v567
        %v1487 = vunpack.c.l.b16 %v568
        %v1488 = vunpack.c.h.b16 %v568
        %v1489 = vunpack.c.l.b16 %v569
        %v1490 = vunpack.c.l.b16 %v570
        %v1491 = vunpack.c.h.b16 %v570
        %v1492 = vunpack.c.l.b16 %v571
        %v1493 = vunpack.c.h.b16 %v571
        %v1494 = vunpack.c.l.b16 %v572
        %v1495 = vunpack.c.h.b16 %v572
        %v1496 = vunpack.c.l.b16 %v573
        %v1497 = vunpack.c.h.b16 %v573
        %v1498 = vunpack.c.l.b16 %v574
        %v1499 = vunpack.c.l.b16 %v575
        %v1500 = vunpack.c.h.b16 %v575
        %v1501 = vunpack.c.l.b16 %v576
        %v1502 = vunpack.c.h.b16 %v576
        %v1503 = vunpack.c.l.b16 %v577
        %v1504 = vunpack.c.h.b16 %v577
        %v1505 = vunpack.c.l.b16 %v578
        %v1506 = vunpack.c.h.b16 %v578
        %v1507 = vunpack.c.l.b16 %v579
        %v1508 = vunpack.c.l.b16 %v580
        %v1509 = vunpack.c.h.b16 %v580
        %v1510 = vunpack.c.l.b16 %v581
        %v1511 = vunpack.c.h.b16 %v581
        %v1512 = vunpack.c.l.b16 %v582
        %v1513 = vunpack.c.h.b16 %v582
        %v1514 = vunpack.c.l.b16 %v583
        %v1515 = vunpack.c.h.b16 %v583
        %v1516 = vunpack.c.l.b16 %v584
        %v1517 = vunpack.c.l.b16 %v585
        %v1518 = vunpack.c.h.b16 %v585
        %v1519 = vunpack.c.l.b16 %v586
        %v1520 = vunpack.c.h.b16 %v586
        %v1521 = vunpack.c.l.b16 %v587
        %v1522 = vunpack.c.h.b16 %v587
        %v1523 = vunpack.c.l.b16 %v588
        %v1524 = vunpack.c.h.b16 %v588
        %v1525 = vunpack.c.l.b16 %v589
        %v1526 = vunpack.c.l.b16 %v590
        %v1527 = vunpack.c.h.b16 %v590
        %v1528 = vunpack.c.l.b16 %v591
        %v1529 = vunpack.c.h.b16 %v591
        %v1530 = vunpack.c.l.b16 %v592
        %v1531 = vunpack.c.h.b16 %v592
        %v1532 = vunpack.c.l.b16 %v593
        %v1533 = vunpack.c.h.b16 %v593
        %v1534 = vunpack.c.l.b16 %v594
        %v1535 = vunpack.c.l.b16 %v595
        %v1536 = vunpack.c.h.b16 %v595
        %v1537 = vunpack.c.l.b16 %v596
        %v1538 = vunpack.c.h.b16 %v596
        %v1539 = vunpack.c.l.b16 %v597
        %v1540 = vunpack.c.h.b16 %v597
        %v1541 = vunpack.c.l.b16 %v598
        %v1542 = vunpack.c.h.b16 %v598
        %v1543 = vunpack.c.l.b16 %v599
        %v1544 = vunpack.c.l.b16 %v600
        %v1545 = vunpack.c.h.b16 %v600
        %v1546 = vunpack.c.l.b16 %v601
        %v1547 = vunpack.c.h.b16 %v601
        %v1548 = vunpack.c.l.b16 %v602
        %v1549 = vunpack.c.h.b16 %v602
        %v1550 = vunpack.c.l.b16 %v603
        %v1551 = vunpack.c.h.b16 %v603
        %v1552 = vunpack.c.l.b16 %v604
        %v1553 = vunpack.c.l.b16 %v605
        %v1554 = vunpack.c.h.b16 %v605
        %v1555 = vunpack.c.l.b16 %v606
        %v1556 = vunpack.c.h.b16 %v606
        %v1557 = vunpack.c.l.b16 %v607
        %v1558 = vunpack.c.h.b16 %v607
        %v1559 = vunpack.c.l.b16 %v608
        %v1560 = vunpack.c.h.b16 %v608
        %v1561 = vunpack.c.l.b16 %v609
        %v1562 = vunpack.c.l.b16 %v610
        %v1563 = vunpack.c.h.b16 %v610
        %v1564 = vunpack.c.l.b16 %v611
        %v1565 = vunpack.c.h.b16 %v611
        %v1566 = vunpack.c.l.b16 %v612
        %v1567 = vunpack.c.h.b16 %v612
        %v1568 = vunpack.c.l.b16 %v613
        %v1569 = vunpack.c.h.b16 %v613
        %v1570 = vunpack.c.l.b16 %v614
        %v1571 = vunpack.c.l.b16 %v615
        %v1572 = vunpack.c.h.b16 %v615
        %v1573 = vunpack.c.l.b16 %v616
        %v1574 = vunpack.c.h.b16 %v616
        %v1575 = vunpack.c.l.b16 %v617
        %v1576 = vunpack.c.h.b16 %v617
        %v1577 = vunpack.c.l.b16 %v618
        %v1578 = vunpack.c.h.b16 %v618
        %v1579 = vunpack.c.l.b16 %v619
        %v1580 = vunpack.c.l.b16 %v620
        %v1581 = vunpack.c.h.b16 %v620
        %v1582 = vunpack.c.l.b16 %v621
        %v1583 = vunpack.c.h.b16 %v621
        %v1584 = vunpack.c.l.b16 %v622
        %v1585 = vunpack.c.h.b16 %v622
        %v1586 = vunpack.c.l.b16 %v623
        %v1587 = vunpack.c.h.b16 %v623
        %v1588 = vunpack.c.l.b16 %v624
        %v1589 = vunpack.c.l.b16 %v625
        %v1590 = vunpack.c.h.b16 %v625
        %v1591 = vunpack.c.l.b16 %v626
        %v1592 = vunpack.c.h.b16 %v626
        %v1593 = vunpack.c.l.b16 %v627
        %v1594 = vunpack.c.h.b16 %v627
        %v1595 = vunpack.c.l.b16 %v628
        %v1596 = vunpack.c.h.b16 %v628
        %v1597 = vunpack.c.l.b16 %v629
        %v1598 = vpack.c.b16 %v1175, %v1166
        %v1599 = vpack.c.b16 %v1176, %v1167
        %v1600 = vpack.c.b16 %v1177, %v1168
        %v1601 = vpack.c.b16 %v1178, %v1169
        %v1602 = vpack.c.b16 %v1179, %v1170
        %v1603 = vpack.c.b16 %v1180, %v1171
        %v1604 = vpack.c.b16 %v1181, %v1172
        %v1605 = vpack.c.b16 %v1182, %v1173
        %v1606 = vpack.c.b16 %v1183, %v1174
        %v1607 = vpack.c.b16 %v1193, %v1184
        %v1608 = vpack.c.b16 %v1194, %v1185
        %v1609 = vpack.c.b16 %v1195, %v1186
        %v1610 = vpack.c.b16 %v1196, %v1187
        %v1611 = vpack.c.b16 %v1197, %v1188
        %v1612 = vpack.c.b16 %v1198, %v1189
        %v1613 = vpack.c.b16 %v1199, %v1190
        %v1614 = vpack.c.b16 %v1200, %v1191
        %v1615 = vpack.c.b16 %v1201, %v1192
        %v1616 = vpack.c.b16 %v1211, %v1202
        %v1617 = vpack.c.b16 %v1212, %v1203
        %v1618 = vpack.c.b16 %v1213, %v1204
        %v1619 = vpack.c.b16 %v1214, %v1205
        %v1620 = vpack.c.b16 %v1215, %v1206
        %v1621 = vpack.c.b16 %v1216, %v1207
        %v1622 = vpack.c.b16 %v1217, %v1208
        %v1623 = vpack.c.b16 %v1218, %v1209
        %v1624 = vpack.c.b16 %v1219, %v1210
        %v1625 = vpack.c.b16 %v1229, %v1220
        %v1626 = vpack.c.b16 %v1230, %v1221
        %v1627 = vpack.c.b16 %v1231, %v1222
        %v1628 = vpack.c.b16 %v1232, %v1223
        %v1629 = vpack.c.b16 %v1233, %v1224
        %v1630 = vpack.c.b16 %v1234, %v1225
        %v1631 = vpack.c.b16 %v1235, %v1226
        %v1632 = vpack.c.b16 %v1236, %v1227
        %v1633 = vpack.c.b16 %v1237, %v1228
        %v1634 = vpack.c.b16 %v1247, %v1238
        %v1635 = vpack.c.b16 %v1248, %v1239
        %v1636 = vpack.c.b16 %v1249, %v1240
        %v1637 = vpack.c.b16 %v1250, %v1241
        %v1638 = vpack.c.b16 %v1251, %v1242
        %v1639 = vpack.c.b16 %v1252, %v1243
        %v1640 = vpack.c.b16 %v1253, %v1244
        %v1641 = vpack.c.b16 %v1254, %v1245
        %v1642 = vpack.c.b16 %v1255, %v1246
        %v1643 = vpack.c.b16 %v1265, %v1256
        %v1644 = vpack.c.b16 %v1266, %v1257
        %v1645 = vpack.c.b16 %v1267, %v1258
        %v1646 = vpack.c.b16 %v1268, %v1259
        %v1647 = vpack.c.b16 %v1269, %v1260
        %v1648 = vpack.c.b16 %v1270, %v1261
        %v1649 = vpack.c.b16 %v1271, %v1262
        %v1650 = vpack.c.b16 %v1272, %v1263
        %v1651 = vpack.c.b16 %v1273, %v1264
        %v1652 = vpack.c.b16 %v1283, %v1274
        %v1653 = vpack.c.b16 %v1284, %v1275
        %v1654 = vpack.c.b16 %v1285, %v1276
        %v1655 = vpack.c.b16 %v1286, %v1277
        %v1656 = vpack.c.b16 %v1287, %v1278
        %v1657 = vpack.c.b16 %v1288, %v1279
        %v1658 = vpack.c.b16 %v1289, %v1280
        %v1659 = vpack.c.b16 %v1290, %v1281
        %v1660 = vpack.c.b16 %v1291, %v1282
        %v1661 = vpack.c.b16 %v1301, %v1292
        %v1662 = vpack.c.b16 %v1302, %v1293
        %v1663 = vpack.c.b16 %v1303, %v1294
        %v1664 = vpack.c.b16 %v1304, %v1295
        %v1665 = vpack.c.b16 %v1305, %v1296
        %v1666 = vpack.c.b16 %v1306, %v1297
        %v1667 = vpack.c.b16 %v1307, %v1298
        %v1668 = vpack.c.b16 %v1308, %v1299
        %v1669 = vpack.c.b16 %v1309, %v1300
        %v1670 = vpack.c.b16 %v1319, %v1310
        %v1671 = vpack.c.b16 %v1320, %v1311
        %v1672 = vpack.c.b16 %v1321, %v1312
        %v1673 = vpack.c.b16 %v1322, %v1313
        %v1674 = vpack.c.b16 %v1323, %v1314
        %v1675 = vpack.c.b16 %v1324, %v1315
        %v1676 = vpack.c.b16 %v1325, %v1316
        %v1677 = vpack.c.b16 %v1326, %v1317
        %v1678 = vpack.c.b16 %v1327, %v1318
        %v1679 = vpack.c.b16 %v1337, %v1328
        %v1680 = vpack.c.b16 %v1338, %v1329
        %v1681 = vpack.c.b16 %v1339, %v1330
        %v1682 = vpack.c.b16 %v1340, %v1331
        %v1683 = vpack.c.b16 %v1341, %v1332
        %v1684 = vpack.c.b16 %v1342, %v1333
        %v1685 = vpack.c.b16 %v1343, %v1334
        %v1686 = vpack.c.b16 %v1344, %v1335
        %v1687 = vpack.c.b16 %v1345, %v1336
        %v1688 = vpack.c.b16 %v1355, %v1346
        %v1689 = vpack.c.b16 %v1356, %v1347
        %v1690 = vpack.c.b16 %v1357, %v1348
        %v1691 = vpack.c.b16 %v1358, %v1349
        %v1692 = vpack.c.b16 %v1359, %v1350
        %v1693 = vpack.c.b16 %v1360, %v1351
        %v1694 = vpack.c.b16 %v1361, %v1352
        %v1695 = vpack.c.b16 %v1362, %v1353
        %v1696 = vpack.c.b16 %v1363, %v1354
        %v1697 = vpack.c.b16 %v1373, %v1364
        %v1698 = vpack.c.b16 %v1374, %v1365
        %v1699 = vpack.c.b16 %v1375, %v1366
        %v1700 = vpack.c.b16 %v1376, %v1367
        %v1701 = vpack.c.b16 %v1377, %v1368
        %v1702 = vpack.c.b16 %v1378, %v1369
        %v1703 = vpack.c.b16 %v1379, %v1370
        %v1704 = vpack.c.b16 %v1380, %v1371
        %v1705 = vpack.c.b16 %v1381, %v1372
        %v1706 = vpack.c.b16 %v1391, %v1382
        %v1707 = vpack.c.b16 %v1392, %v1383
        %v1708 = vpack.c.b16 %v1393, %v1384
        %v1709 = vpack.c.b16 %v1394, %v1385
        %v1710 = vpack.c.b16 %v1395, %v1386
        %v1711 = vpack.c.b16 %v1396, %v1387
        %v1712 = vpack.c.b16 %v1397, %v1388
        %v1713 = vpack.c.b16 %v1398, %v1389
        %v1714 = vpack.c.b16 %v1399, %v1390
        %v1715 = vpack.c.b16 %v1409, %v1400
        %v1716 = vpack.c.b16 %v1410, %v1401
        %v1717 = vpack.c.b16 %v1411, %v1402
        %v1718 = vpack.c.b16 %v1412, %v1403
        %v1719 = vpack.c.b16 %v1413, %v1404
        %v1720 = vpack.c.b16 %v1414, %v1405
        %v1721 = vpack.c.b16 %v1415, %v1406
        %v1722 = vpack.c.b16 %v1416, %v1407
        %v1723 = vpack.c.b16 %v1417, %v1408
        %v1724 = vpack.c.b16 %v1427, %v1418
        %v1725 = vpack.c.b16 %v1428, %v1419
        %v1726 = vpack.c.b16 %v1429, %v1420
        %v1727 = vpack.c.b16 %v1430, %v1421
        %v1728 = vpack.c.b16 %v1431, %v1422
        %v1729 = vpack.c.b16 %v1432, %v1423
        %v1730 = vpack.c.b16 %v1433, %v1424
        %v1731 = vpack.c.b16 %v1434, %v1425
        %v1732 = vpack.c.b16 %v1435, %v1426
        %v1733 = vpack.c.b16 %v1445, %v1436
        %v1734 = vpack.c.b16 %v1446, %v1437
        %v1735 = vpack.c.b16 %v1447, %v1438
        %v1736 = vpack.c.b16 %v1448, %v1439
        %v1737 = vpack.c.b16 %v1449, %v1440
        %v1738 = vpack.c.b16 %v1450, %v1441
        %v1739 = vpack.c.b16 %v1451, %v1442
        %v1740 = vpack.c.b16 %v1452, %v1443
        %v1741 = vpack.c.b16 %v1453, %v1444
        %v1742 = vpack.c.b16 %v1463, %v1454
        %v1743 = vpack.c.b16 %v1464, %v1455
        %v1744 = vpack.c.b16 %v1465, %v1456
        %v1745 = vpack.c.b16 %v1466, %v1457
        %v1746 = vpack.c.b16 %v1467, %v1458
        %v1747 = vpack.c.b16 %v1468, %v1459
        %v1748 = vpack.c.b16 %v1469, %v1460
        %v1749 = vpack.c.b16 %v1470, %v1461
        %v1750 = vpack.c.b16 %v1471, %v1462
        %v1751 = vpack.c.b16 %v1481, %v1472
        %v1752 = vpack.c.b16 %v1482, %v1473
        %v1753 = vpack.c.b16 %v1483, %v1474
        %v1754 = vpack.c.b16 %v1484, %v1475
        %v1755 = vpack.c.b16 %v1485, %v1476
        %v1756 = vpack.c.b16 %v1486, %v1477
        %v1757 = vpack.c.b16 %v1487, %v1478
        %v1758 = vpack.c.b16 %v1488, %v1479
        %v1759 = vpack.c.b16 %v1489, %v1480
        %v1760 = vpack.c.b16 %v1499, %v1490
        %v1761 = vpack.c.b16 %v1500, %v1491
        %v1762 = vpack.c.b16 %v1501, %v1492
        %v1763 = vpack.c.b16 %v1502, %v1493
        %v1764 = vpack.c.b16 %v1503, %v1494
        %v1765 = vpack.c.b16 %v1504, %v1495
        %v1766 = vpack.c.b16 %v1505, %v1496
        %v1767 = vpack.c.b16 %v1506, %v1497
        %v1768 = vpack.c.b16 %v1507, %v1498
        %v1769 = vpack.c.b16 %v1517, %v1508
        %v1770 = vpack.c.b16 %v1518, %v1509
        %v1771 = vpack.c.b16 %v1519, %v1510
        %v1772 = vpack.c.b16 %v1520, %v1511
        %v1773 = vpack.c.b16 %v1521, %v1512
        %v1774 = vpack.c.b16 %v1522, %v1513
        %v1775 = vpack.c.b16 %v1523, %v1514
        %v1776 = vpack.c.b16 %v1524, %v1515
        %v1777 = vpack.c.b16 %v1525, %v1516
        %v1778 = vpack.c.b16 %v1535, %v1526
        %v1779 = vpack.c.b16 %v1536, %v1527
        %v1780 = vpack.c.b16 %v1537, %v1528
        %v1781 = vpack.c.b16 %v1538, %v1529
        %v1782 = vpack.c.b16 %v1539, %v1530
        %v1783 = vpack.c.b16 %v1540, %v1531
        %v1784 = vpack.c.b16 %v1541, %v1532
        %v1785 = vpack.c.b16 %v1542, %v1533
        %v1786 = vpack.c.b16 %v1543, %v1534
        %v1787 = vpack.c.b16 %v1553, %v1544
        %v1788 = vpack.c.b16 %v1554, %v1545
        %v1789 = vpack.c.b16 %v1555, %v1546
        %v1790 = vpack.c.b16 %v1556, %v1547
        %v1791 = vpack.c.b16 %v1557, %v1548
        %v1792 = vpack.c.b16 %v1558, %v1549
        %v1793 = vpack.c.b16 %v1559, %v1550
        %v1794 = vpack.c.b16 %v1560, %v1551
        %v1795 = vpack.c.b16 %v1561, %v1552
        %v1796 = vpack.c.b16 %v1571, %v1562
        %v1797 = vpack.c.b16 %v1572, %v1563
        %v1798 = vpack.c.b16 %v1573, %v1564
        %v1799 = vpack.c.b16 %v1574, %v1565
        %v1800 = vpack.c.b16 %v1575, %v1566
        %v1801 = vpack.c.b16 %v1576, %v1567
        %v1802 = vpack.c.b16 %v1577, %v1568
        %v1803 = vpack.c.b16 %v1578, %v1569
        %v1804 = vpack.c.b16 %v1579, %v1570
        %v1805 = vpack.c.b16 %v1589, %v1580
        %v1806 = vpack.c.b16 %v1590, %v1581
        %v1807 = vpack.c.b16 %v1591, %v1582
        %v1808 = vpack.c.b16 %v1592, %v1583
        %v1809 = vpack.c.b16 %v1593, %v1584
        %v1810 = vpack.c.b16 %v1594, %v1585
        %v1811 = vpack.c.b16 %v1595, %v1586
        %v1812 = vpack.c.b16 %v1596, %v1587
        %v1813 = vpack.c.b16 %v1597, %v1588
        %2030 = vmatprep.subr.bf16.mxu0 %v1599
        %2031 = vmatpush1.bf16.msra.mxu0 %v1598
        %2032 = vmatprep.subr.bf16.mxu0 %v1608
        %2033 = vmatpush1.bf16.msra.mxu0 %v1607
        %2034 = vmatprep.subr.bf16.mxu0 %v1617
        %2035 = vmatpush1.bf16.msra.mxu0 %v1616
        %2036 = vmatprep.subr.bf16.mxu0 %v1626
        %2037 = vmatpush1.bf16.msra.mxu0 %v1625
        %2038 = vmatprep.subr.bf16.mxu0 %v1635
        %2039 = vmatpush1.bf16.msra.mxu0 %v1634
        %2040 = vmatprep.subr.bf16.mxu0 %v1644
        %2041 = vmatpush1.bf16.msra.mxu0 %v1643
        %2042 = vmatprep.subr.bf16.mxu0 %v1653
        %2043 = vmatpush1.bf16.msra.mxu0 %v1652
        %2044 = vmatprep.subr.bf16.mxu0 %v1662
        %2045 = vmatpush1.bf16.msra.mxu0 %v1661
        %2046 = vmatprep.subr.bf16.mxu0 %v1671
        %2047 = vmatpush1.bf16.msra.mxu0 %v1670
        %2048 = vmatprep.subr.bf16.mxu0 %v1680
        %2049 = vmatpush1.bf16.msra.mxu0 %v1679
        %2050 = vmatprep.subr.bf16.mxu0 %v1689
        %2051 = vmatpush1.bf16.msra.mxu0 %v1688
        %2052 = vmatprep.subr.bf16.mxu0 %v1698
        %2053 = vmatpush1.bf16.msra.mxu0 %v1697
        %2054 = vmatprep.subr.bf16.mxu0 %v1707
        %2055 = vmatpush1.bf16.msra.mxu0 %v1706
        %2056 = vmatprep.subr.bf16.mxu0 %v1716
        %2057 = vmatpush1.bf16.msra.mxu0 %v1715
        %2058 = vmatprep.subr.bf16.mxu0 %v1725
        %2059 = vmatpush1.bf16.msra.mxu0 %v1724
        %2060 = vmatprep.subr.bf16.mxu0 %v1734
        %2061 = vmatpush1.bf16.msra.mxu0 %v1733
        %2062 = vmatprep.mubr.bf16.mxu0 %v871
        %2063 = vmatmul.mubr.bf16.gmra.mrb[0].mxu0 %v870
        %v2064 = vpop.f32.mrb[0].mxu0
        %v2065 = vadd.f32 %v884, %v2064
        %v2066 = vpop.f32.mrb[0].mxu0
        %v2067 = vadd.f32 %v888, %v2066
        %v2068 = vpop.f32.mrb[0].mxu0
        %v2069 = vpop.f32.mrb[0].mxu0
        %2070 = vdwg.mxu0
        %2071 = vmatprep.subr.bf16.mxu0 %v1743
        %2072 = vmatpush1.bf16.msra.mxu0 %v1742
        %2073 = vmatprep.subr.bf16.mxu0 %v1752
        %2074 = vmatpush1.bf16.msra.mxu0 %v1751
        %2075 = vmatprep.subr.bf16.mxu0 %v1761
        %2076 = vmatpush1.bf16.msra.mxu0 %v1760
        %2077 = vmatprep.subr.bf16.mxu0 %v1770
        %2078 = vmatpush1.bf16.msra.mxu0 %v1769
        %2079 = vmatprep.subr.bf16.mxu0 %v1779
        %2080 = vmatpush1.bf16.msra.mxu0 %v1778
        %2081 = vmatprep.subr.bf16.mxu0 %v1788
        %2082 = vmatpush1.bf16.msra.mxu0 %v1787
        %2083 = vmatprep.subr.bf16.mxu0 %v1797
        %2084 = vmatpush1.bf16.msra.mxu0 %v1796
        %2085 = vmatprep.subr.bf16.mxu0 %v1806
        %2086 = vmatpush1.bf16.msra.mxu0 %v1805
        %2087 = vmatprep.subr.bf16.mxu0 0
        %2088 = vmatpush1.bf16.msra.mxu0 0
        %2089 = vmatprep.subr.bf16.mxu0 0
        %2090 = vmatpush1.bf16.msra.mxu0 0
        %2091 = vmatprep.subr.bf16.mxu0 0
        %2092 = vmatpush1.bf16.msra.mxu0 0
        %2093 = vmatprep.subr.bf16.mxu0 0
        %2094 = vmatpush1.bf16.msra.mxu0 0
        %2095 = vmatprep.subr.bf16.mxu0 0
        %2096 = vmatpush1.bf16.msra.mxu0 0
        %2097 = vmatprep.subr.bf16.mxu0 0
        %2098 = vmatpush1.bf16.msra.mxu0 0
        %2099 = vmatprep.subr.bf16.mxu0 0
        %2100 = vmatpush1.bf16.msra.mxu0 0
        %2101 = vmatprep.subr.bf16.mxu0 0
        %2102 = vmatpush1.bf16.msra.mxu0 0
        %2103 = vmatprep.mubr.bf16.mxu0 0
        %2104 = vmatmul.mubr.bf16.gmra.mrb[0].mxu0 %v872
        %v2105 = vpop.f32.mrb[0].mxu0
        %v2106 = vadd.f32 %v2065, %v2105
        %v2107 = vpop.f32.mrb[0].mxu0
        %v2108 = vadd.f32 %v2067, %v2107
        %v2109 = vpop.f32.mrb[0].mxu0
        %v2110 = vpop.f32.mrb[0].mxu0
        %2111 = vdwg.mxu0
        %2112 = vmatprep.subr.bf16.mxu0 %v1601
        %2113 = vmatpush1.bf16.msra.mxu0 %v1600
        %2114 = vmatprep.subr.bf16.mxu0 %v1610
        %2115 = vmatpush1.bf16.msra.mxu0 %v1609
        %2116 = vmatprep.subr.bf16.mxu0 %v1619
        %2117 = vmatpush1.bf16.msra.mxu0 %v1618
        %2118 = vmatprep.subr.bf16.mxu0 %v1628
        %2119 = vmatpush1.bf16.msra.mxu0 %v1627
        %2120 = vmatprep.subr.bf16.mxu0 %v1637
        %2121 = vmatpush1.bf16.msra.mxu0 %v1636
        %2122 = vmatprep.subr.bf16.mxu0 %v1646
        %2123 = vmatpush1.bf16.msra.mxu0 %v1645
        %2124 = vmatprep.subr.bf16.mxu0 %v1655
        %2125 = vmatpush1.bf16.msra.mxu0 %v1654
        %2126 = vmatprep.subr.bf16.mxu0 %v1664
        %2127 = vmatpush1.bf16.msra.mxu0 %v1663
        %2128 = vmatprep.subr.bf16.mxu0 %v1673
        %2129 = vmatpush1.bf16.msra.mxu0 %v1672
        %2130 = vmatprep.subr.bf16.mxu0 %v1682
        %2131 = vmatpush1.bf16.msra.mxu0 %v1681
        %2132 = vmatprep.subr.bf16.mxu0 %v1691
        %2133 = vmatpush1.bf16.msra.mxu0 %v1690
        %2134 = vmatprep.subr.bf16.mxu0 %v1700
        %2135 = vmatpush1.bf16.msra.mxu0 %v1699
        %2136 = vmatprep.subr.bf16.mxu0 %v1709
        %2137 = vmatpush1.bf16.msra.mxu0 %v1708
        %2138 = vmatprep.subr.bf16.mxu0 %v1718
        %2139 = vmatpush1.bf16.msra.mxu0 %v1717
        %2140 = vmatprep.subr.bf16.mxu0 %v1727
        %2141 = vmatpush1.bf16.msra.mxu0 %v1726
        %2142 = vmatprep.subr.bf16.mxu0 %v1736
        %2143 = vmatpush1.bf16.msra.mxu0 %v1735
        %2144 = vmatprep.mubr.bf16.mxu0 %v871
        %2145 = vmatmul.mubr.bf16.gmra.mrb[0].mxu0 %v870
        %v2146 = vpop.f32.mrb[0].mxu0
        %v2147 = vadd.f32 %v892, %v2146
        %v2148 = vpop.f32.mrb[0].mxu0
        %v2149 = vadd.f32 %v896, %v2148
        %v2150 = vpop.f32.mrb[0].mxu0
        %v2151 = vpop.f32.mrb[0].mxu0
        %2152 = vdwg.mxu0
        %2153 = vmatprep.subr.bf16.mxu0 %v1745
        %2154 = vmatpush1.bf16.msra.mxu0 %v1744
        %2155 = vmatprep.subr.bf16.mxu0 %v1754
        %2156 = vmatpush1.bf16.msra.mxu0 %v1753
        %2157 = vmatprep.subr.bf16.mxu0 %v1763
        %2158 = vmatpush1.bf16.msra.mxu0 %v1762
        %2159 = vmatprep.subr.bf16.mxu0 %v1772
        %2160 = vmatpush1.bf16.msra.mxu0 %v1771
        %2161 = vmatprep.subr.bf16.mxu0 %v1781
        %2162 = vmatpush1.bf16.msra.mxu0 %v1780
        %2163 = vmatprep.subr.bf16.mxu0 %v1790
        %2164 = vmatpush1.bf16.msra.mxu0 %v1789
        %2165 = vmatprep.subr.bf16.mxu0 %v1799
        %2166 = vmatpush1.bf16.msra.mxu0 %v1798
        %2167 = vmatprep.subr.bf16.mxu0 %v1808
        %2168 = vmatpush1.bf16.msra.mxu0 %v1807
        %2169 = vmatprep.subr.bf16.mxu0 0
        %2170 = vmatpush1.bf16.msra.mxu0 0
        %2171 = vmatprep.subr.bf16.mxu0 0
        %2172 = vmatpush1.bf16.msra.mxu0 0
        %2173 = vmatprep.subr.bf16.mxu0 0
        %2174 = vmatpush1.bf16.msra.mxu0 0
        %2175 = vmatprep.subr.bf16.mxu0 0
        %2176 = vmatpush1.bf16.msra.mxu0 0
        %2177 = vmatprep.subr.bf16.mxu0 0
        %2178 = vmatpush1.bf16.msra.mxu0 0
        %2179 = vmatprep.subr.bf16.mxu0 0
        %2180 = vmatpush1.bf16.msra.mxu0 0
        %2181 = vmatprep.subr.bf16.mxu0 0
        %2182 = vmatpush1.bf16.msra.mxu0 0
        %2183 = vmatprep.subr.bf16.mxu0 0
        %2184 = vmatpush1.bf16.msra.mxu0 0
        %2185 = vmatprep.mubr.bf16.mxu0 0
        %2186 = vmatmul.mubr.bf16.gmra.mrb[0].mxu0 %v872
        %v2187 = vpop.f32.mrb[0].mxu0
        %v2188 = vadd.f32 %v2147, %v2187
        %v2189 = vpop.f32.mrb[0].mxu0
        %v2190 = vadd.f32 %v2149, %v2189
        %v2191 = vpop.f32.mrb[0].mxu0
        %v2192 = vpop.f32.mrb[0].mxu0
        %2193 = vdwg.mxu0
        %2194 = vmatprep.subr.bf16.mxu0 %v1603
        %2195 = vmatpush1.bf16.msra.mxu0 %v1602
        %2196 = vmatprep.subr.bf16.mxu0 %v1612
        %2197 = vmatpush1.bf16.msra.mxu0 %v1611
        %2198 = vmatprep.subr.bf16.mxu0 %v1621
        %2199 = vmatpush1.bf16.msra.mxu0 %v1620
        %2200 = vmatprep.subr.bf16.mxu0 %v1630
        %2201 = vmatpush1.bf16.msra.mxu0 %v1629
        %2202 = vmatprep.subr.bf16.mxu0 %v1639
        %2203 = vmatpush1.bf16.msra.mxu0 %v1638
        %2204 = vmatprep.subr.bf16.mxu0 %v1648
        %2205 = vmatpush1.bf16.msra.mxu0 %v1647
        %2206 = vmatprep.subr.bf16.mxu0 %v1657
        %2207 = vmatpush1.bf16.msra.mxu0 %v1656
        %2208 = vmatprep.subr.bf16.mxu0 %v1666
        %2209 = vmatpush1.bf16.msra.mxu0 %v1665
        %2210 = vmatprep.subr.bf16.mxu0 %v1675
        %2211 = vmatpush1.bf16.msra.mxu0 %v1674
        %2212 = vmatprep.subr.bf16.mxu0 %v1684
        %2213 = vmatpush1.bf16.msra.mxu0 %v1683
        %2214 = vmatprep.subr.bf16.mxu0 %v1693
        %2215 = vmatpush1.bf16.msra.mxu0 %v1692
        %2216 = vmatprep.subr.bf16.mxu0 %v1702
        %2217 = vmatpush1.bf16.msra.mxu0 %v1701
        %2218 = vmatprep.subr.bf16.mxu0 %v1711
        %2219 = vmatpush1.bf16.msra.mxu0 %v1710
        %2220 = vmatprep.subr.bf16.mxu0 %v1720
        %2221 = vmatpush1.bf16.msra.mxu0 %v1719
        %2222 = vmatprep.subr.bf16.mxu0 %v1729
        %2223 = vmatpush1.bf16.msra.mxu0 %v1728
        %2224 = vmatprep.subr.bf16.mxu0 %v1738
        %2225 = vmatpush1.bf16.msra.mxu0 %v1737
        %2226 = vmatprep.mubr.bf16.mxu0 %v871
        %2227 = vmatmul.mubr.bf16.gmra.mrb[0].mxu0 %v870
        %v2228 = vpop.f32.mrb[0].mxu0
        %v2229 = vadd.f32 %v900, %v2228
        %v2230 = vpop.f32.mrb[0].mxu0
        %v2231 = vadd.f32 %v904, %v2230
        %v2232 = vpop.f32.mrb[0].mxu0
        %v2233 = vpop.f32.mrb[0].mxu0
        %2234 = vdwg.mxu0
        %2235 = vmatprep.subr.bf16.mxu0 %v1747
        %2236 = vmatpush1.bf16.msra.mxu0 %v1746
        %2237 = vmatprep.subr.bf16.mxu0 %v1756
        %2238 = vmatpush1.bf16.msra.mxu0 %v1755
        %2239 = vmatprep.subr.bf16.mxu0 %v1765
        %2240 = vmatpush1.bf16.msra.mxu0 %v1764
        %2241 = vmatprep.subr.bf16.mxu0 %v1774
        %2242 = vmatpush1.bf16.msra.mxu0 %v1773
        %2243 = vmatprep.subr.bf16.mxu0 %v1783
        %2244 = vmatpush1.bf16.msra.mxu0 %v1782
        %2245 = vmatprep.subr.bf16.mxu0 %v1792
        %2246 = vmatpush1.bf16.msra.mxu0 %v1791
        %2247 = vmatprep.subr.bf16.mxu0 %v1801
        %2248 = vmatpush1.bf16.msra.mxu0 %v1800
        %2249 = vmatprep.subr.bf16.mxu0 %v1810
        %2250 = vmatpush1.bf16.msra.mxu0 %v1809
        %2251 = vmatprep.subr.bf16.mxu0 0
        %2252 = vmatpush1.bf16.msra.mxu0 0
        %2253 = vmatprep.subr.bf16.mxu0 0
        %2254 = vmatpush1.bf16.msra.mxu0 0
        %2255 = vmatprep.subr.bf16.mxu0 0
        %2256 = vmatpush1.bf16.msra.mxu0 0
        %2257 = vmatprep.subr.bf16.mxu0 0
        %2258 = vmatpush1.bf16.msra.mxu0 0
        %2259 = vmatprep.subr.bf16.mxu0 0
        %2260 = vmatpush1.bf16.msra.mxu0 0
        %2261 = vmatprep.subr.bf16.mxu0 0
        %2262 = vmatpush1.bf16.msra.mxu0 0
        %2263 = vmatprep.subr.bf16.mxu0 0
        %2264 = vmatpush1.bf16.msra.mxu0 0
        %2265 = vmatprep.subr.bf16.mxu0 0
        %2266 = vmatpush1.bf16.msra.mxu0 0
        %2267 = vmatprep.mubr.bf16.mxu0 0
        %2268 = vmatmul.mubr.bf16.gmra.mrb[0].mxu0 %v872
        %v2269 = vpop.f32.mrb[0].mxu0
        %v2270 = vadd.f32 %v2229, %v2269
        %v2271 = vpop.f32.mrb[0].mxu0
        %v2272 = vadd.f32 %v2231, %v2271
        %v2273 = vpop.f32.mrb[0].mxu0
        %v2274 = vpop.f32.mrb[0].mxu0
        %2275 = vdwg.mxu0
        %2276 = vmatprep.subr.bf16.mxu0 %v1605
        %2277 = vmatpush1.bf16.msra.mxu0 %v1604
        %2278 = vmatprep.subr.bf16.mxu0 %v1614
        %2279 = vmatpush1.bf16.msra.mxu0 %v1613
        %2280 = vmatprep.subr.bf16.mxu0 %v1623
        %2281 = vmatpush1.bf16.msra.mxu0 %v1622
        %2282 = vmatprep.subr.bf16.mxu0 %v1632
        %2283 = vmatpush1.bf16.msra.mxu0 %v1631
        %2284 = vmatprep.subr.bf16.mxu0 %v1641
        %2285 = vmatpush1.bf16.msra.mxu0 %v1640
        %2286 = vmatprep.subr.bf16.mxu0 %v1650
        %2287 = vmatpush1.bf16.msra.mxu0 %v1649
        %2288 = vmatprep.subr.bf16.mxu0 %v1659
        %2289 = vmatpush1.bf16.msra.mxu0 %v1658
        %2290 = vmatprep.subr.bf16.mxu0 %v1668
        %2291 = vmatpush1.bf16.msra.mxu0 %v1667
        %2292 = vmatprep.subr.bf16.mxu0 %v1677
        %2293 = vmatpush1.bf16.msra.mxu0 %v1676
        %2294 = vmatprep.subr.bf16.mxu0 %v1686
        %2295 = vmatpush1.bf16.msra.mxu0 %v1685
        %2296 = vmatprep.subr.bf16.mxu0 %v1695
        %2297 = vmatpush1.bf16.msra.mxu0 %v1694
        %2298 = vmatprep.subr.bf16.mxu0 %v1704
        %2299 = vmatpush1.bf16.msra.mxu0 %v1703
        %2300 = vmatprep.subr.bf16.mxu0 %v1713
        %2301 = vmatpush1.bf16.msra.mxu0 %v1712
        %2302 = vmatprep.subr.bf16.mxu0 %v1722
        %2303 = vmatpush1.bf16.msra.mxu0 %v1721
        %2304 = vmatprep.subr.bf16.mxu0 %v1731
        %2305 = vmatpush1.bf16.msra.mxu0 %v1730
        %2306 = vmatprep.subr.bf16.mxu0 %v1740
        %2307 = vmatpush1.bf16.msra.mxu0 %v1739
        %2308 = vmatprep.mubr.bf16.mxu0 %v871
        %2309 = vmatmul.mubr.bf16.gmra.mrb[0].mxu0 %v870
        %v2310 = vpop.f32.mrb[0].mxu0
        %v2311 = vadd.f32 %v908, %v2310
        %v2312 = vpop.f32.mrb[0].mxu0
        %v2313 = vadd.f32 %v912, %v2312
        %v2314 = vpop.f32.mrb[0].mxu0
        %v2315 = vpop.f32.mrb[0].mxu0
        %2316 = vdwg.mxu0
        %2317 = vmatprep.subr.bf16.mxu0 %v1749
        %2318 = vmatpush1.bf16.msra.mxu0 %v1748
        %2319 = vmatprep.subr.bf16.mxu0 %v1758
        %2320 = vmatpush1.bf16.msra.mxu0 %v1757
        %2321 = vmatprep.subr.bf16.mxu0 %v1767
        %2322 = vmatpush1.bf16.msra.mxu0 %v1766
        %2323 = vmatprep.subr.bf16.mxu0 %v1776
        %2324 = vmatpush1.bf16.msra.mxu0 %v1775
        %2325 = vmatprep.subr.bf16.mxu0 %v1785
        %2326 = vmatpush1.bf16.msra.mxu0 %v1784
        %2327 = vmatprep.subr.bf16.mxu0 %v1794
        %2328 = vmatpush1.bf16.msra.mxu0 %v1793
        %2329 = vmatprep.subr.bf16.mxu0 %v1803
        %2330 = vmatpush1.bf16.msra.mxu0 %v1802
        %2331 = vmatprep.subr.bf16.mxu0 %v1812
        %2332 = vmatpush1.bf16.msra.mxu0 %v1811
        %2333 = vmatprep.subr.bf16.mxu0 0
        %2334 = vmatpush1.bf16.msra.mxu0 0
        %2335 = vmatprep.subr.bf16.mxu0 0
        %2336 = vmatpush1.bf16.msra.mxu0 0
        %2337 = vmatprep.subr.bf16.mxu0 0
        %2338 = vmatpush1.bf16.msra.mxu0 0
        %2339 = vmatprep.subr.bf16.mxu0 0
        %2340 = vmatpush1.bf16.msra.mxu0 0
        %2341 = vmatprep.subr.bf16.mxu0 0
        %2342 = vmatpush1.bf16.msra.mxu0 0
        %2343 = vmatprep.subr.bf16.mxu0 0
        %2344 = vmatpush1.bf16.msra.mxu0 0
        %2345 = vmatprep.subr.bf16.mxu0 0
        %2346 = vmatpush1.bf16.msra.mxu0 0
        %2347 = vmatprep.subr.bf16.mxu0 0
        %2348 = vmatpush1.bf16.msra.mxu0 0
        %2349 = vmatprep.mubr.bf16.mxu0 0
        %2350 = vmatmul.mubr.bf16.gmra.mrb[0].mxu0 %v872
        %v2351 = vpop.f32.mrb[0].mxu0
        %v2352 = vadd.f32 %v2311, %v2351
        %v2353 = vpop.f32.mrb[0].mxu0
        %v2354 = vadd.f32 %v2313, %v2353
        %v2355 = vpop.f32.mrb[0].mxu0
        %v2356 = vpop.f32.mrb[0].mxu0
        %2357 = vdwg.mxu0
        %2358 = vmatprep.subr.bf16.mxu0 0
        %2359 = vmatpush1.bf16.msra.mxu0 %v1606
        %2360 = vmatprep.subr.bf16.mxu0 0
        %2361 = vmatpush1.bf16.msra.mxu0 %v1615
        %2362 = vmatprep.subr.bf16.mxu0 0
        %2363 = vmatpush1.bf16.msra.mxu0 %v1624
        %2364 = vmatprep.subr.bf16.mxu0 0
        %2365 = vmatpush1.bf16.msra.mxu0 %v1633
        %2366 = vmatprep.subr.bf16.mxu0 0
        %2367 = vmatpush1.bf16.msra.mxu0 %v1642
        %2368 = vmatprep.subr.bf16.mxu0 0
        %2369 = vmatpush1.bf16.msra.mxu0 %v1651
        %2370 = vmatprep.subr.bf16.mxu0 0
        %2371 = vmatpush1.bf16.msra.mxu0 %v1660
        %2372 = vmatprep.subr.bf16.mxu0 0
        %2373 = vmatpush1.bf16.msra.mxu0 %v1669
        %2374 = vmatprep.subr.bf16.mxu0 0
        %2375 = vmatpush1.bf16.msra.mxu0 %v1678
        %2376 = vmatprep.subr.bf16.mxu0 0
        %2377 = vmatpush1.bf16.msra.mxu0 %v1687
        %2378 = vmatprep.subr.bf16.mxu0 0
        %2379 = vmatpush1.bf16.msra.mxu0 %v1696
        %2380 = vmatprep.subr.bf16.mxu0 0
        %2381 = vmatpush1.bf16.msra.mxu0 %v1705
        %2382 = vmatprep.subr.bf16.mxu0 0
        %2383 = vmatpush1.bf16.msra.mxu0 %v1714
        %2384 = vmatprep.subr.bf16.mxu0 0
        %2385 = vmatpush1.bf16.msra.mxu0 %v1723
        %2386 = vmatprep.subr.bf16.mxu0 0
        %2387 = vmatpush1.bf16.msra.mxu0 %v1732
        %2388 = vmatprep.subr.bf16.mxu0 0
        %2389 = vmatpush1.bf16.msra.mxu0 %v1741
        %2390 = vmatprep.mubr.bf16.mxu0 %v871
        %2391 = vmatmul.mubr.bf16.gmra.mrb[0].mxu0 %v870
        %v2392 = vpop.f32.mrb[0].mxu0
        %v2393 = vadd.f32 %v916, %v2392
        %v2394 = vpop.f32.mrb[0].mxu0
        %v2395 = vpop.f32.mrb[0].mxu0
        %v2396 = vpop.f32.mrb[0].mxu0
        %2397 = vdwg.mxu0
        %2398 = vmatprep.subr.bf16.mxu0 0
        %2399 = vmatpush1.bf16.msra.mxu0 %v1750
        %2400 = vmatprep.subr.bf16.mxu0 0
        %2401 = vmatpush1.bf16.msra.mxu0 %v1759
        %2402 = vmatprep.subr.bf16.mxu0 0
        %2403 = vmatpush1.bf16.msra.mxu0 %v1768
        %2404 = vmatprep.subr.bf16.mxu0 0
        %2405 = vmatpush1.bf16.msra.mxu0 %v1777
        %2406 = vmatprep.subr.bf16.mxu0 0
        %2407 = vmatpush1.bf16.msra.mxu0 %v1786
        %2408 = vmatprep.subr.bf16.mxu0 0
        %2409 = vmatpush1.bf16.msra.mxu0 %v1795
        %2410 = vmatprep.subr.bf16.mxu0 0
        %2411 = vmatpush1.bf16.msra.mxu0 %v1804
        %2412 = vmatprep.subr.bf16.mxu0 0
        %2413 = vmatpush1.bf16.msra.mxu0 %v1813
        %2414 = vmatprep.subr.bf16.mxu0 0
        %2415 = vmatpush1.bf16.msra.mxu0 0
        %2416 = vmatprep.subr.bf16.mxu0 0
        %2417 = vmatpush1.bf16.msra.mxu0 0
        %2418 = vmatprep.subr.bf16.mxu0 0
        %2419 = vmatpush1.bf16.msra.mxu0 0
        %2420 = vmatprep.subr.bf16.mxu0 0
        %2421 = vmatpush1.bf16.msra.mxu0 0
        %2422 = vmatprep.subr.bf16.mxu0 0
        %2423 = vmatpush1.bf16.msra.mxu0 0
        %2424 = vmatprep.subr.bf16.mxu0 0
        %2425 = vmatpush1.bf16.msra.mxu0 0
        %2426 = vmatprep.subr.bf16.mxu0 0
        %2427 = vmatpush1.bf16.msra.mxu0 0
        %2428 = vmatprep.subr.bf16.mxu0 0
        %2429 = vmatpush1.bf16.msra.mxu0 0
        %2430 = vmatprep.mubr.bf16.mxu0 0
        %2431 = vmatmul.mubr.bf16.gmra.mrb[0].mxu0 %v872
        %v2432 = vpop.f32.mrb[0].mxu0
        %v2433 = vadd.f32 %v2393, %v2432
        %v2434 = vpop.f32.mrb[0].mxu0
        %v2435 = vpop.f32.mrb[0].mxu0
        %v2436 = vpop.f32.mrb[0].mxu0
        %2437 = vdwg.mxu0
        %v2438 = vpack.c.bf16 %v2106, %v2106
        %v2439 = vpack.c.bf16 %v2108, %v2108
        %v2440 = vpack.c.bf16 %v2188, %v2188
        %v2441 = vpack.c.bf16 %v2190, %v2190
        %v2442 = vpack.c.bf16 %v2270, %v2270
        %v2443 = vpack.c.bf16 %v2272, %v2272
        %v2444 = vpack.c.bf16 %v2352, %v2352
        %v2445 = vpack.c.bf16 %v2354, %v2354
        %v2446 = vpack.c.bf16 %v2433, %v2433
        %2448 = vrot.lane.b32.xlu0 %v2438, 64
        %v2449 = vpop.permute.xlu0 %2448
        %2451 = vrot.lane.b32.xlu0 %v2439, 64
        %v2452 = vpop.permute.xlu0 %2451
        %2454 = vrot.lane.b32.xlu0 %v2440, 64
        %v2455 = vpop.permute.xlu0 %2454
        %2457 = vrot.lane.b32.xlu0 %v2441, 64
        %v2458 = vpop.permute.xlu0 %2457
        %2460 = vrot.lane.b32.xlu0 %v2442, 64
        %v2461 = vpop.permute.xlu0 %2460
        %2463 = vrot.lane.b32.xlu0 %v2443, 64
        %v2464 = vpop.permute.xlu0 %2463
        %2466 = vrot.lane.b32.xlu0 %v2444, 64
        %v2467 = vpop.permute.xlu0 %2466
        %2469 = vrot.lane.b32.xlu0 %v2445, 64
        %v2470 = vpop.permute.xlu0 %2469
        %2472 = vrot.lane.b32.xlu0 %v2446, 64
        %v2473 = vpop.permute.xlu0 %2472
        %vm2474 = vcmask 523264
        %v2476 = vsel %vm2474, %v2438, 0
        %v2479 = vsel %vm2474, %v2441, 0
        %2481 = vmatprep.subr.bf16.mxu0 0
        %2482 = vmatpush1.bf16.xpose.msra.mxu0 %v2479
        %2483 = vmatprep.subr.bf16.mxu0 0
        %2484 = vmatpush1.bf16.xpose.msra.mxu0 0
        %2485 = vmatprep.subr.bf16.mxu0 0
        %2486 = vmatpush1.bf16.xpose.msra.mxu0 0
        %2487 = vmatprep.subr.bf16.mxu0 0
        %2488 = vmatpush1.bf16.xpose.msra.mxu0 0
        %2489 = vmatprep.subr.bf16.mxu0 0
        %2490 = vmatpush1.bf16.xpose.msra.mxu0 0
        %2491 = vmatprep.subr.bf16.mxu0 0
        %2492 = vmatpush1.bf16.xpose.msra.mxu0 0
        %2493 = vmatprep.subr.bf16.mxu0 0
        %2494 = vmatpush1.bf16.xpose.msra.mxu0 0
        %2495 = vmatprep.subr.bf16.mxu0 0
        %2496 = vmatpush1.bf16.xpose.msra.mxu0 0
        %2497 = vmatprep.subr.bf16.mxu0 0
        %2498 = vmatpush1.bf16.xpose.msra.mxu0 0
        %2499 = vmatprep.subr.bf16.mxu0 0
        %2500 = vmatpush1.bf16.xpose.msra.mxu0 0
        %2501 = vmatprep.subr.bf16.mxu0 0
        %2502 = vmatpush1.bf16.xpose.msra.mxu0 0
        %2503 = vmatprep.subr.bf16.mxu0 0
        %2504 = vmatpush1.bf16.xpose.msra.mxu0 0
        %2505 = vmatprep.subr.bf16.mxu0 0
        %2506 = vmatpush1.bf16.xpose.msra.mxu0 0
        %2507 = vmatprep.subr.bf16.mxu0 0
        %2508 = vmatpush1.bf16.xpose.msra.mxu0 0
        %2509 = vmatprep.subr.bf16.mxu0 0
        %2510 = vmatpush1.bf16.xpose.msra.mxu0 0
        %2511 = vmatprep.subr.bf16.mxu0 0
        %2512 = vmatpush1.bf16.xpose.msra.mxu0 0
        %2513 = vmatprep.mubr.bf16.mxu0 0
        %2514 = vmatmul.mubr.bf16.gmra.mrb[0].mxu0 %v2476
        %v2515 = vpop.f32.mrb[0].mxu0
        %v2516 = vadd.f32 0.0, %v2515
        %v2517 = vpop.f32.mrb[0].mxu0
        %v2518 = vpop.f32.mrb[0].mxu0
        %v2519 = vpop.f32.mrb[0].mxu0
        %2520 = vdwg.mxu0
        %v2522 = vsel %vm2474, %v2449, 0
        %v2525 = vsel %vm2474, %v2458, 0
        %2527 = vmatprep.subr.bf16.mxu0 0
        %2528 = vmatpush1.bf16.xpose.msra.mxu0 %v2525
        %2529 = vmatprep.subr.bf16.mxu0 0
        %2530 = vmatpush1.bf16.xpose.msra.mxu0 0
        %2531 = vmatprep.subr.bf16.mxu0 0
        %2532 = vmatpush1.bf16.xpose.msra.mxu0 0
        %2533 = vmatprep.subr.bf16.mxu0 0
        %2534 = vmatpush1.bf16.xpose.msra.mxu0 0
        %2535 = vmatprep.subr.bf16.mxu0 0
        %2536 = vmatpush1.bf16.xpose.msra.mxu0 0
        %2537 = vmatprep.subr.bf16.mxu0 0
        %2538 = vmatpush1.bf16.xpose.msra.mxu0 0
        %2539 = vmatprep.subr.bf16.mxu0 0
        %2540 = vmatpush1.bf16.xpose.msra.mxu0 0
        %2541 = vmatprep.subr.bf16.mxu0 0
        %2542 = vmatpush1.bf16.xpose.msra.mxu0 0
        %2543 = vmatprep.subr.bf16.mxu0 0
        %2544 = vmatpush1.bf16.xpose.msra.mxu0 0
        %2545 = vmatprep.subr.bf16.mxu0 0
        %2546 = vmatpush1.bf16.xpose.msra.mxu0 0
        %2547 = vmatprep.subr.bf16.mxu0 0
        %2548 = vmatpush1.bf16.xpose.msra.mxu0 0
        %2549 = vmatprep.subr.bf16.mxu0 0
        %2550 = vmatpush1.bf16.xpose.msra.mxu0 0
        %2551 = vmatprep.subr.bf16.mxu0 0
        %2552 = vmatpush1.bf16.xpose.msra.mxu0 0
        %2553 = vmatprep.subr.bf16.mxu0 0
        %2554 = vmatpush1.bf16.xpose.msra.mxu0 0
        %2555 = vmatprep.subr.bf16.mxu0 0
        %2556 = vmatpush1.bf16.xpose.msra.mxu0 0
        %2557 = vmatprep.subr.bf16.mxu0 0
        %2558 = vmatpush1.bf16.xpose.msra.mxu0 0
        %2559 = vmatprep.mubr.bf16.mxu0 0
        %2560 = vmatmul.mubr.bf16.gmra.mrb[0].mxu0 %v2522
        %v2561 = vpop.f32.mrb[0].mxu0
        %v2562 = vadd.f32 0.0, %v2561
        %v2563 = vpop.f32.mrb[0].mxu0
        %v2564 = vpop.f32.mrb[0].mxu0
        %v2565 = vpop.f32.mrb[0].mxu0
        %2566 = vdwg.mxu0
        %v2568 = vsel %vm2474, %v2439, 0
        %v2571 = vsel %vm2474, %v2442, 0
        %2573 = vmatprep.subr.bf16.mxu0 0
        %2574 = vmatpush1.bf16.xpose.msra.mxu0 %v2571
        %2575 = vmatprep.subr.bf16.mxu0 0
        %2576 = vmatpush1.bf16.xpose.msra.mxu0 0
        %2577 = vmatprep.subr.bf16.mxu0 0
        %2578 = vmatpush1.bf16.xpose.msra.mxu0 0
        %2579 = vmatprep.subr.bf16.mxu0 0
        %2580 = vmatpush1.bf16.xpose.msra.mxu0 0
        %2581 = vmatprep.subr.bf16.mxu0 0
        %2582 = vmatpush1.bf16.xpose.msra.mxu0 0
        %2583 = vmatprep.subr.bf16.mxu0 0
        %2584 = vmatpush1.bf16.xpose.msra.mxu0 0
        %2585 = vmatprep.subr.bf16.mxu0 0
        %2586 = vmatpush1.bf16.xpose.msra.mxu0 0
        %2587 = vmatprep.subr.bf16.mxu0 0
        %2588 = vmatpush1.bf16.xpose.msra.mxu0 0
        %2589 = vmatprep.subr.bf16.mxu0 0
        %2590 = vmatpush1.bf16.xpose.msra.mxu0 0
        %2591 = vmatprep.subr.bf16.mxu0 0
        %2592 = vmatpush1.bf16.xpose.msra.mxu0 0
        %2593 = vmatprep.subr.bf16.mxu0 0
        %2594 = vmatpush1.bf16.xpose.msra.mxu0 0
        %2595 = vmatprep.subr.bf16.mxu0 0
        %2596 = vmatpush1.bf16.xpose.msra.mxu0 0
        %2597 = vmatprep.subr.bf16.mxu0 0
        %2598 = vmatpush1.bf16.xpose.msra.mxu0 0
        %2599 = vmatprep.subr.bf16.mxu0 0
        %2600 = vmatpush1.bf16.xpose.msra.mxu0 0
        %2601 = vmatprep.subr.bf16.mxu0 0
        %2602 = vmatpush1.bf16.xpose.msra.mxu0 0
        %2603 = vmatprep.subr.bf16.mxu0 0
        %2604 = vmatpush1.bf16.xpose.msra.mxu0 0
        %2605 = vmatprep.mubr.bf16.mxu0 0
        %2606 = vmatmul.mubr.bf16.gmra.mrb[0].mxu0 %v2568
        %v2607 = vpop.f32.mrb[0].mxu0
        %v2608 = vadd.f32 0.0, %v2607
        %v2609 = vpop.f32.mrb[0].mxu0
        %v2610 = vpop.f32.mrb[0].mxu0
        %v2611 = vpop.f32.mrb[0].mxu0
        %2612 = vdwg.mxu0
        %v2614 = vsel %vm2474, %v2452, 0
        %v2617 = vsel %vm2474, %v2461, 0
        %2619 = vmatprep.subr.bf16.mxu0 0
        %2620 = vmatpush1.bf16.xpose.msra.mxu0 %v2617
        %2621 = vmatprep.subr.bf16.mxu0 0
        %2622 = vmatpush1.bf16.xpose.msra.mxu0 0
        %2623 = vmatprep.subr.bf16.mxu0 0
        %2624 = vmatpush1.bf16.xpose.msra.mxu0 0
        %2625 = vmatprep.subr.bf16.mxu0 0
        %2626 = vmatpush1.bf16.xpose.msra.mxu0 0
        %2627 = vmatprep.subr.bf16.mxu0 0
        %2628 = vmatpush1.bf16.xpose.msra.mxu0 0
        %2629 = vmatprep.subr.bf16.mxu0 0
        %2630 = vmatpush1.bf16.xpose.msra.mxu0 0
        %2631 = vmatprep.subr.bf16.mxu0 0
        %2632 = vmatpush1.bf16.xpose.msra.mxu0 0
        %2633 = vmatprep.subr.bf16.mxu0 0
        %2634 = vmatpush1.bf16.xpose.msra.mxu0 0
        %2635 = vmatprep.subr.bf16.mxu0 0
        %2636 = vmatpush1.bf16.xpose.msra.mxu0 0
        %2637 = vmatprep.subr.bf16.mxu0 0
        %2638 = vmatpush1.bf16.xpose.msra.mxu0 0
        %2639 = vmatprep.subr.bf16.mxu0 0
        %2640 = vmatpush1.bf16.xpose.msra.mxu0 0
        %2641 = vmatprep.subr.bf16.mxu0 0
        %2642 = vmatpush1.bf16.xpose.msra.mxu0 0
        %2643 = vmatprep.subr.bf16.mxu0 0
        %2644 = vmatpush1.bf16.xpose.msra.mxu0 0
        %2645 = vmatprep.subr.bf16.mxu0 0
        %2646 = vmatpush1.bf16.xpose.msra.mxu0 0
        %2647 = vmatprep.subr.bf16.mxu0 0
        %2648 = vmatpush1.bf16.xpose.msra.mxu0 0
        %2649 = vmatprep.subr.bf16.mxu0 0
        %2650 = vmatpush1.bf16.xpose.msra.mxu0 0
        %2651 = vmatprep.mubr.bf16.mxu0 0
        %2652 = vmatmul.mubr.bf16.gmra.mrb[0].mxu0 %v2614
        %v2653 = vpop.f32.mrb[0].mxu0
        %v2654 = vadd.f32 0.0, %v2653
        %v2655 = vpop.f32.mrb[0].mxu0
        %v2656 = vpop.f32.mrb[0].mxu0
        %v2657 = vpop.f32.mrb[0].mxu0
        %2658 = vdwg.mxu0
        %v2660 = vsel %vm2474, %v2440, 0
        %v2663 = vsel %vm2474, %v2443, 0
        %2665 = vmatprep.subr.bf16.mxu0 0
        %2666 = vmatpush1.bf16.xpose.msra.mxu0 %v2663
        %2667 = vmatprep.subr.bf16.mxu0 0
        %2668 = vmatpush1.bf16.xpose.msra.mxu0 0
        %2669 = vmatprep.subr.bf16.mxu0 0
        %2670 = vmatpush1.bf16.xpose.msra.mxu0 0
        %2671 = vmatprep.subr.bf16.mxu0 0
        %2672 = vmatpush1.bf16.xpose.msra.mxu0 0
        %2673 = vmatprep.subr.bf16.mxu0 0
        %2674 = vmatpush1.bf16.xpose.msra.mxu0 0
        %2675 = vmatprep.subr.bf16.mxu0 0
        %2676 = vmatpush1.bf16.xpose.msra.mxu0 0
        %2677 = vmatprep.subr.bf16.mxu0 0
        %2678 = vmatpush1.bf16.xpose.msra.mxu0 0
        %2679 = vmatprep.subr.bf16.mxu0 0
        %2680 = vmatpush1.bf16.xpose.msra.mxu0 0
        %2681 = vmatprep.subr.bf16.mxu0 0
        %2682 = vmatpush1.bf16.xpose.msra.mxu0 0
        %2683 = vmatprep.subr.bf16.mxu0 0
        %2684 = vmatpush1.bf16.xpose.msra.mxu0 0
        %2685 = vmatprep.subr.bf16.mxu0 0
        %2686 = vmatpush1.bf16.xpose.msra.mxu0 0
        %2687 = vmatprep.subr.bf16.mxu0 0
        %2688 = vmatpush1.bf16.xpose.msra.mxu0 0
        %2689 = vmatprep.subr.bf16.mxu0 0
        %2690 = vmatpush1.bf16.xpose.msra.mxu0 0
        %2691 = vmatprep.subr.bf16.mxu0 0
        %2692 = vmatpush1.bf16.xpose.msra.mxu0 0
        %2693 = vmatprep.subr.bf16.mxu0 0
        %2694 = vmatpush1.bf16.xpose.msra.mxu0 0
        %2695 = vmatprep.subr.bf16.mxu0 0
        %2696 = vmatpush1.bf16.xpose.msra.mxu0 0
        %2697 = vmatprep.mubr.bf16.mxu0 0
        %2698 = vmatmul.mubr.bf16.gmra.mrb[0].mxu0 %v2660
        %v2699 = vpop.f32.mrb[0].mxu0
        %v2700 = vadd.f32 0.0, %v2699
        %v2701 = vpop.f32.mrb[0].mxu0
        %v2702 = vpop.f32.mrb[0].mxu0
        %v2703 = vpop.f32.mrb[0].mxu0
        %2704 = vdwg.mxu0
        %v2706 = vsel %vm2474, %v2455, 0
        %v2709 = vsel %vm2474, %v2464, 0
        %2711 = vmatprep.subr.bf16.mxu0 0
        %2712 = vmatpush1.bf16.xpose.msra.mxu0 %v2709
        %2713 = vmatprep.subr.bf16.mxu0 0
        %2714 = vmatpush1.bf16.xpose.msra.mxu0 0
        %2715 = vmatprep.subr.bf16.mxu0 0
        %2716 = vmatpush1.bf16.xpose.msra.mxu0 0
        %2717 = vmatprep.subr.bf16.mxu0 0
        %2718 = vmatpush1.bf16.xpose.msra.mxu0 0
        %2719 = vmatprep.subr.bf16.mxu0 0
        %2720 = vmatpush1.bf16.xpose.msra.mxu0 0
        %2721 = vmatprep.subr.bf16.mxu0 0
        %2722 = vmatpush1.bf16.xpose.msra.mxu0 0
        %2723 = vmatprep.subr.bf16.mxu0 0
        %2724 = vmatpush1.bf16.xpose.msra.mxu0 0
        %2725 = vmatprep.subr.bf16.mxu0 0
        %2726 = vmatpush1.bf16.xpose.msra.mxu0 0
        %2727 = vmatprep.subr.bf16.mxu0 0
        %2728 = vmatpush1.bf16.xpose.msra.mxu0 0
        %2729 = vmatprep.subr.bf16.mxu0 0
        %2730 = vmatpush1.bf16.xpose.msra.mxu0 0
        %2731 = vmatprep.subr.bf16.mxu0 0
        %2732 = vmatpush1.bf16.xpose.msra.mxu0 0
        %2733 = vmatprep.subr.bf16.mxu0 0
        %2734 = vmatpush1.bf16.xpose.msra.mxu0 0
        %2735 = vmatprep.subr.bf16.mxu0 0
        %2736 = vmatpush1.bf16.xpose.msra.mxu0 0
        %2737 = vmatprep.subr.bf16.mxu0 0
        %2738 = vmatpush1.bf16.xpose.msra.mxu0 0
        %2739 = vmatprep.subr.bf16.mxu0 0
        %2740 = vmatpush1.bf16.xpose.msra.mxu0 0
        %2741 = vmatprep.subr.bf16.mxu0 0
        %2742 = vmatpush1.bf16.xpose.msra.mxu0 0
        %2743 = vmatprep.mubr.bf16.mxu0 0
        %2744 = vmatmul.mubr.bf16.gmra.mrb[0].mxu0 %v2706
        %v2745 = vpop.f32.mrb[0].mxu0
        %v2746 = vadd.f32 0.0, %v2745
        %v2747 = vpop.f32.mrb[0].mxu0
        %v2748 = vpop.f32.mrb[0].mxu0
        %v2749 = vpop.f32.mrb[0].mxu0
        %2750 = vdwg.mxu0
        %v2751 = vmul.f32 %v2516, 0.125
        %v2752 = vmul.f32 %v2562, 0.125
        %v2753 = vmul.f32 %v2608, 0.125
        %v2754 = vmul.f32 %v2654, 0.125
        %v2755 = vmul.f32 %v2700, 0.125
        %v2756 = vmul.f32 %v2746, 0.125
        %v2758 = vlaneseq
        %v2759 = vshrl.u32 %v2758, 7
        %v2760 = vsub.s32 0, %v2759
        %v2761 = vrot.slane %v389, %v2760
        %v2763 = vadd.f32 %v2751, %v2761
        %v2764 = vadd.f32 %v2752, %v2761
        %v2765 = vadd.f32 %v2753, %v2761
        %v2766 = vadd.f32 %v2754, %v2761
        %v2767 = vadd.f32 %v2755, %v2761
        %v2768 = vadd.f32 %v2756, %v2761
        %vm2769 = vcmask 64512
        %v2770 = vsel %vm2769, %v2763, -inf
        %2771 = vmax.xlane.f32.xlu0 %v2770
        %v2772 = vpop.xlane.xlu0 %2771
        %v2773 = vsel %vm2769, %v2764, -inf
        %2774 = vmax.xlane.f32.xlu0 %v2773
        %v2775 = vpop.xlane.xlu0 %2774
        %v2776 = vsel %vm2769, %v2765, -inf
        %2777 = vmax.xlane.f32.xlu0 %v2776
        %v2778 = vpop.xlane.xlu0 %2777
        %v2779 = vsel %vm2769, %v2766, -inf
        %2780 = vmax.xlane.f32.xlu0 %v2779
        %v2781 = vpop.xlane.xlu0 %2780
        %v2782 = vsel %vm2769, %v2767, -inf
        %2783 = vmax.xlane.f32.xlu0 %v2782
        %v2784 = vpop.xlane.xlu0 %2783
        %v2785 = vsel %vm2769, %v2768, -inf
        %2786 = vmax.xlane.f32.xlu0 %v2785
        %v2787 = vpop.xlane.xlu0 %2786
        %v2788 = vsub.f32 %v2763, %v2772
        %v2789 = vsub.f32 %v2764, %v2775
        %v2790 = vsub.f32 %v2765, %v2778
        %v2791 = vsub.f32 %v2766, %v2781
        %v2792 = vsub.f32 %v2767, %v2784
        %v2793 = vsub.f32 %v2768, %v2787
        %v2794 = vmul.f32 %v2788, 1.442695
        %v2795 = vpow.pop %v2794
        %v2796 = vmul.f32 %v2789, 1.442695
        %v2797 = vpow.pop %v2796
        %v2798 = vmul.f32 %v2790, 1.442695
        %v2799 = vpow.pop %v2798
        %v2800 = vmul.f32 %v2791, 1.442695
        %v2801 = vpow.pop %v2800
        %v2802 = vmul.f32 %v2792, 1.442695
        %v2803 = vpow.pop %v2802
        %v2804 = vmul.f32 %v2793, 1.442695
        %v2805 = vpow.pop %v2804
        %v2806 = vsel %vm2769, %v2795, 0.0
        %2807 = vadd.xlane.f32.xlu0 %v2806
        %v2808 = vpop.xlane.xlu0 %2807
        %v2809 = vsel %vm2769, %v2797, 0.0
        %2810 = vadd.xlane.f32.xlu0 %v2809
        %v2811 = vpop.xlane.xlu0 %2810
        %v2812 = vsel %vm2769, %v2799, 0.0
        %2813 = vadd.xlane.f32.xlu0 %v2812
        %v2814 = vpop.xlane.xlu0 %2813
        %v2815 = vsel %vm2769, %v2801, 0.0
        %2816 = vadd.xlane.f32.xlu0 %v2815
        %v2817 = vpop.xlane.xlu0 %2816
        %v2818 = vsel %vm2769, %v2803, 0.0
        %2819 = vadd.xlane.f32.xlu0 %v2818
        %v2820 = vpop.xlane.xlu0 %2819
        %v2821 = vsel %vm2769, %v2805, 0.0
        %2822 = vadd.xlane.f32.xlu0 %v2821
        %v2823 = vpop.xlane.xlu0 %2822
        %v2824 = vrcp.pop %v2808
        %v2825 = vrcp.pop %v2811
        %v2826 = vrcp.pop %v2814
        %v2827 = vrcp.pop %v2817
        %v2828 = vrcp.pop %v2820
        %v2829 = vrcp.pop %v2823
        %v2830 = vmul.f32 %v2795, %v2824
        %v2831 = vmul.f32 %v2797, %v2825
        %v2832 = vmul.f32 %v2799, %v2826
        %v2833 = vmul.f32 %v2801, %v2827
        %v2834 = vmul.f32 %v2803, %v2828
        %v2835 = vmul.f32 %v2805, %v2829
        %v2836 = vpack.c.bf16 %v2830, %v2830
        %v2837 = vpack.c.bf16 %v2831, %v2831
        %v2838 = vpack.c.bf16 %v2832, %v2832
        %v2839 = vpack.c.bf16 %v2833, %v2833
        %v2840 = vpack.c.bf16 %v2834, %v2834
        %v2841 = vpack.c.bf16 %v2835, %v2835
        %v2843 = vsel %vm2769, %v2836, 0
        %vm2845 = vcmask 1043456
        %v2847 = vsel %vm2845, %v2444, 0
        %2849 = vmatprep.subr.bf16.mxu0 0
        %2850 = vmatpush1.bf16.msra.mxu0 %v2847
        %2851 = vmatprep.subr.bf16.mxu0 0
        %2852 = vmatpush1.bf16.msra.mxu0 0
        %2853 = vmatprep.subr.bf16.mxu0 0
        %2854 = vmatpush1.bf16.msra.mxu0 0
        %2855 = vmatprep.subr.bf16.mxu0 0
        %2856 = vmatpush1.bf16.msra.mxu0 0
        %2857 = vmatprep.subr.bf16.mxu0 0
        %2858 = vmatpush1.bf16.msra.mxu0 0
        %2859 = vmatprep.subr.bf16.mxu0 0
        %2860 = vmatpush1.bf16.msra.mxu0 0
        %2861 = vmatprep.subr.bf16.mxu0 0
        %2862 = vmatpush1.bf16.msra.mxu0 0
        %2863 = vmatprep.subr.bf16.mxu0 0
        %2864 = vmatpush1.bf16.msra.mxu0 0
        %2865 = vmatprep.subr.bf16.mxu0 0
        %2866 = vmatpush1.bf16.msra.mxu0 0
        %2867 = vmatprep.subr.bf16.mxu0 0
        %2868 = vmatpush1.bf16.msra.mxu0 0
        %2869 = vmatprep.subr.bf16.mxu0 0
        %2870 = vmatpush1.bf16.msra.mxu0 0
        %2871 = vmatprep.subr.bf16.mxu0 0
        %2872 = vmatpush1.bf16.msra.mxu0 0
        %2873 = vmatprep.subr.bf16.mxu0 0
        %2874 = vmatpush1.bf16.msra.mxu0 0
        %2875 = vmatprep.subr.bf16.mxu0 0
        %2876 = vmatpush1.bf16.msra.mxu0 0
        %2877 = vmatprep.subr.bf16.mxu0 0
        %2878 = vmatpush1.bf16.msra.mxu0 0
        %2879 = vmatprep.subr.bf16.mxu0 0
        %2880 = vmatpush1.bf16.msra.mxu0 0
        %2881 = vmatprep.mubr.bf16.mxu0 0
        %2882 = vmatmul.mubr.bf16.gmra.mrb[0].mxu0 %v2843
        %v2883 = vpop.f32.mrb[0].mxu0
        %v2884 = vadd.f32 0.0, %v2883
        %v2885 = vpop.f32.mrb[0].mxu0
        %v2886 = vpop.f32.mrb[0].mxu0
        %v2887 = vpop.f32.mrb[0].mxu0
        %2888 = vdwg.mxu0
        %v2890 = vsel %vm2769, %v2837, 0
        %v2893 = vsel %vm2845, %v2467, 0
        %2895 = vmatprep.subr.bf16.mxu0 0
        %2896 = vmatpush1.bf16.msra.mxu0 %v2893
        %2897 = vmatprep.subr.bf16.mxu0 0
        %2898 = vmatpush1.bf16.msra.mxu0 0
        %2899 = vmatprep.subr.bf16.mxu0 0
        %2900 = vmatpush1.bf16.msra.mxu0 0
        %2901 = vmatprep.subr.bf16.mxu0 0
        %2902 = vmatpush1.bf16.msra.mxu0 0
        %2903 = vmatprep.subr.bf16.mxu0 0
        %2904 = vmatpush1.bf16.msra.mxu0 0
        %2905 = vmatprep.subr.bf16.mxu0 0
        %2906 = vmatpush1.bf16.msra.mxu0 0
        %2907 = vmatprep.subr.bf16.mxu0 0
        %2908 = vmatpush1.bf16.msra.mxu0 0
        %2909 = vmatprep.subr.bf16.mxu0 0
        %2910 = vmatpush1.bf16.msra.mxu0 0
        %2911 = vmatprep.subr.bf16.mxu0 0
        %2912 = vmatpush1.bf16.msra.mxu0 0
        %2913 = vmatprep.subr.bf16.mxu0 0
        %2914 = vmatpush1.bf16.msra.mxu0 0
        %2915 = vmatprep.subr.bf16.mxu0 0
        %2916 = vmatpush1.bf16.msra.mxu0 0
        %2917 = vmatprep.subr.bf16.mxu0 0
        %2918 = vmatpush1.bf16.msra.mxu0 0
        %2919 = vmatprep.subr.bf16.mxu0 0
        %2920 = vmatpush1.bf16.msra.mxu0 0
        %2921 = vmatprep.subr.bf16.mxu0 0
        %2922 = vmatpush1.bf16.msra.mxu0 0
        %2923 = vmatprep.subr.bf16.mxu0 0
        %2924 = vmatpush1.bf16.msra.mxu0 0
        %2925 = vmatprep.subr.bf16.mxu0 0
        %2926 = vmatpush1.bf16.msra.mxu0 0
        %2927 = vmatprep.mubr.bf16.mxu0 0
        %2928 = vmatmul.mubr.bf16.gmra.mrb[0].mxu0 %v2890
        %v2929 = vpop.f32.mrb[0].mxu0
        %v2930 = vadd.f32 0.0, %v2929
        %v2931 = vpop.f32.mrb[0].mxu0
        %v2932 = vpop.f32.mrb[0].mxu0
        %v2933 = vpop.f32.mrb[0].mxu0
        %2934 = vdwg.mxu0
        %v2936 = vsel %vm2769, %v2838, 0
        %v2939 = vsel %vm2845, %v2445, 0
        %2941 = vmatprep.subr.bf16.mxu0 0
        %2942 = vmatpush1.bf16.msra.mxu0 %v2939
        %2943 = vmatprep.subr.bf16.mxu0 0
        %2944 = vmatpush1.bf16.msra.mxu0 0
        %2945 = vmatprep.subr.bf16.mxu0 0
        %2946 = vmatpush1.bf16.msra.mxu0 0
        %2947 = vmatprep.subr.bf16.mxu0 0
        %2948 = vmatpush1.bf16.msra.mxu0 0
        %2949 = vmatprep.subr.bf16.mxu0 0
        %2950 = vmatpush1.bf16.msra.mxu0 0
        %2951 = vmatprep.subr.bf16.mxu0 0
        %2952 = vmatpush1.bf16.msra.mxu0 0
        %2953 = vmatprep.subr.bf16.mxu0 0
        %2954 = vmatpush1.bf16.msra.mxu0 0
        %2955 = vmatprep.subr.bf16.mxu0 0
        %2956 = vmatpush1.bf16.msra.mxu0 0
        %2957 = vmatprep.subr.bf16.mxu0 0
        %2958 = vmatpush1.bf16.msra.mxu0 0
        %2959 = vmatprep.subr.bf16.mxu0 0
        %2960 = vmatpush1.bf16.msra.mxu0 0
        %2961 = vmatprep.subr.bf16.mxu0 0
        %2962 = vmatpush1.bf16.msra.mxu0 0
        %2963 = vmatprep.subr.bf16.mxu0 0
        %2964 = vmatpush1.bf16.msra.mxu0 0
        %2965 = vmatprep.subr.bf16.mxu0 0
        %2966 = vmatpush1.bf16.msra.mxu0 0
        %2967 = vmatprep.subr.bf16.mxu0 0
        %2968 = vmatpush1.bf16.msra.mxu0 0
        %2969 = vmatprep.subr.bf16.mxu0 0
        %2970 = vmatpush1.bf16.msra.mxu0 0
        %2971 = vmatprep.subr.bf16.mxu0 0
        %2972 = vmatpush1.bf16.msra.mxu0 0
        %2973 = vmatprep.mubr.bf16.mxu0 0
        %2974 = vmatmul.mubr.bf16.gmra.mrb[0].mxu0 %v2936
        %v2975 = vpop.f32.mrb[0].mxu0
        %v2976 = vadd.f32 0.0, %v2975
        %v2977 = vpop.f32.mrb[0].mxu0
        %v2978 = vpop.f32.mrb[0].mxu0
        %v2979 = vpop.f32.mrb[0].mxu0
        %2980 = vdwg.mxu0
        %v2982 = vsel %vm2769, %v2839, 0
        %v2985 = vsel %vm2845, %v2470, 0
        %2987 = vmatprep.subr.bf16.mxu0 0
        %2988 = vmatpush1.bf16.msra.mxu0 %v2985
        %2989 = vmatprep.subr.bf16.mxu0 0
        %2990 = vmatpush1.bf16.msra.mxu0 0
        %2991 = vmatprep.subr.bf16.mxu0 0
        %2992 = vmatpush1.bf16.msra.mxu0 0
        %2993 = vmatprep.subr.bf16.mxu0 0
        %2994 = vmatpush1.bf16.msra.mxu0 0
        %2995 = vmatprep.subr.bf16.mxu0 0
        %2996 = vmatpush1.bf16.msra.mxu0 0
        %2997 = vmatprep.subr.bf16.mxu0 0
        %2998 = vmatpush1.bf16.msra.mxu0 0
        %2999 = vmatprep.subr.bf16.mxu0 0
        %3000 = vmatpush1.bf16.msra.mxu0 0
        %3001 = vmatprep.subr.bf16.mxu0 0
        %3002 = vmatpush1.bf16.msra.mxu0 0
        %3003 = vmatprep.subr.bf16.mxu0 0
        %3004 = vmatpush1.bf16.msra.mxu0 0
        %3005 = vmatprep.subr.bf16.mxu0 0
        %3006 = vmatpush1.bf16.msra.mxu0 0
        %3007 = vmatprep.subr.bf16.mxu0 0
        %3008 = vmatpush1.bf16.msra.mxu0 0
        %3009 = vmatprep.subr.bf16.mxu0 0
        %3010 = vmatpush1.bf16.msra.mxu0 0
        %3011 = vmatprep.subr.bf16.mxu0 0
        %3012 = vmatpush1.bf16.msra.mxu0 0
        %3013 = vmatprep.subr.bf16.mxu0 0
        %3014 = vmatpush1.bf16.msra.mxu0 0
        %3015 = vmatprep.subr.bf16.mxu0 0
        %3016 = vmatpush1.bf16.msra.mxu0 0
        %3017 = vmatprep.subr.bf16.mxu0 0
        %3018 = vmatpush1.bf16.msra.mxu0 0
        %3019 = vmatprep.mubr.bf16.mxu0 0
        %3020 = vmatmul.mubr.bf16.gmra.mrb[0].mxu0 %v2982
        %v3021 = vpop.f32.mrb[0].mxu0
        %v3022 = vadd.f32 0.0, %v3021
        %v3023 = vpop.f32.mrb[0].mxu0
        %v3024 = vpop.f32.mrb[0].mxu0
        %v3025 = vpop.f32.mrb[0].mxu0
        %3026 = vdwg.mxu0
        %v3028 = vsel %vm2769, %v2840, 0
        %v3031 = vsel %vm2845, %v2446, 0
        %3033 = vmatprep.subr.bf16.mxu0 0
        %3034 = vmatpush1.bf16.msra.mxu0 %v3031
        %3035 = vmatprep.subr.bf16.mxu0 0
        %3036 = vmatpush1.bf16.msra.mxu0 0
        %3037 = vmatprep.subr.bf16.mxu0 0
        %3038 = vmatpush1.bf16.msra.mxu0 0
        %3039 = vmatprep.subr.bf16.mxu0 0
        %3040 = vmatpush1.bf16.msra.mxu0 0
        %3041 = vmatprep.subr.bf16.mxu0 0
        %3042 = vmatpush1.bf16.msra.mxu0 0
        %3043 = vmatprep.subr.bf16.mxu0 0
        %3044 = vmatpush1.bf16.msra.mxu0 0
        %3045 = vmatprep.subr.bf16.mxu0 0
        %3046 = vmatpush1.bf16.msra.mxu0 0
        %3047 = vmatprep.subr.bf16.mxu0 0
        %3048 = vmatpush1.bf16.msra.mxu0 0
        %3049 = vmatprep.subr.bf16.mxu0 0
        %3050 = vmatpush1.bf16.msra.mxu0 0
        %3051 = vmatprep.subr.bf16.mxu0 0
        %3052 = vmatpush1.bf16.msra.mxu0 0
        %3053 = vmatprep.subr.bf16.mxu0 0
        %3054 = vmatpush1.bf16.msra.mxu0 0
        %3055 = vmatprep.subr.bf16.mxu0 0
        %3056 = vmatpush1.bf16.msra.mxu0 0
        %3057 = vmatprep.subr.bf16.mxu0 0
        %3058 = vmatpush1.bf16.msra.mxu0 0
        %3059 = vmatprep.subr.bf16.mxu0 0
        %3060 = vmatpush1.bf16.msra.mxu0 0
        %3061 = vmatprep.subr.bf16.mxu0 0
        %3062 = vmatpush1.bf16.msra.mxu0 0
        %3063 = vmatprep.subr.bf16.mxu0 0
        %3064 = vmatpush1.bf16.msra.mxu0 0
        %3065 = vmatprep.mubr.bf16.mxu0 0
        %3066 = vmatmul.mubr.bf16.gmra.mrb[0].mxu0 %v3028
        %v3067 = vpop.f32.mrb[0].mxu0
        %v3068 = vadd.f32 0.0, %v3067
        %v3069 = vpop.f32.mrb[0].mxu0
        %v3070 = vpop.f32.mrb[0].mxu0
        %v3071 = vpop.f32.mrb[0].mxu0
        %3072 = vdwg.mxu0
        %v3074 = vsel %vm2769, %v2841, 0
        %v3077 = vsel %vm2845, %v2473, 0
        %3079 = vmatprep.subr.bf16.mxu0 0
        %3080 = vmatpush1.bf16.msra.mxu0 %v3077
        %3081 = vmatprep.subr.bf16.mxu0 0
        %3082 = vmatpush1.bf16.msra.mxu0 0
        %3083 = vmatprep.subr.bf16.mxu0 0
        %3084 = vmatpush1.bf16.msra.mxu0 0
        %3085 = vmatprep.subr.bf16.mxu0 0
        %3086 = vmatpush1.bf16.msra.mxu0 0
        %3087 = vmatprep.subr.bf16.mxu0 0
        %3088 = vmatpush1.bf16.msra.mxu0 0
        %3089 = vmatprep.subr.bf16.mxu0 0
        %3090 = vmatpush1.bf16.msra.mxu0 0
        %3091 = vmatprep.subr.bf16.mxu0 0
        %3092 = vmatpush1.bf16.msra.mxu0 0
        %3093 = vmatprep.subr.bf16.mxu0 0
        %3094 = vmatpush1.bf16.msra.mxu0 0
        %3095 = vmatprep.subr.bf16.mxu0 0
        %3096 = vmatpush1.bf16.msra.mxu0 0
        %3097 = vmatprep.subr.bf16.mxu0 0
        %3098 = vmatpush1.bf16.msra.mxu0 0
        %3099 = vmatprep.subr.bf16.mxu0 0
        %3100 = vmatpush1.bf16.msra.mxu0 0
        %3101 = vmatprep.subr.bf16.mxu0 0
        %3102 = vmatpush1.bf16.msra.mxu0 0
        %3103 = vmatprep.subr.bf16.mxu0 0
        %3104 = vmatpush1.bf16.msra.mxu0 0
        %3105 = vmatprep.subr.bf16.mxu0 0
        %3106 = vmatpush1.bf16.msra.mxu0 0
        %3107 = vmatprep.subr.bf16.mxu0 0
        %3108 = vmatpush1.bf16.msra.mxu0 0
        %3109 = vmatprep.subr.bf16.mxu0 0
        %3110 = vmatpush1.bf16.msra.mxu0 0
        %3111 = vmatprep.mubr.bf16.mxu0 0
        %3112 = vmatmul.mubr.bf16.gmra.mrb[0].mxu0 %v3074
        %v3113 = vpop.f32.mrb[0].mxu0
        %v3114 = vadd.f32 0.0, %v3113
        %v3115 = vpop.f32.mrb[0].mxu0
        %v3116 = vpop.f32.mrb[0].mxu0
        %v3117 = vpop.f32.mrb[0].mxu0
        %3118 = vdwg.mxu0
        %3119 = vst.msk [vmem:[#allocation2] sm:$0xff] %vm2474, %v2884
        %3121 = vrot.lane.b32.xlu0 %v2930, 64
        %v3122 = vpop.permute.xlu0 %3121
        %vm3124 = vcmask 1048064
        %3125 = vst.msk [vmem:[#allocation2] sm:$0xff] %vm3124, %v3122
        %3126 = vst.msk [vmem:[#allocation2 + $0x8] sm:$0xff] %vm2474, %v2976
        %3128 = vrot.lane.b32.xlu0 %v3022, 64
        %v3129 = vpop.permute.xlu0 %3128
        %3131 = vst.msk [vmem:[#allocation2 + $0x8] sm:$0xff] %vm3124, %v3129
        %3132 = vst.msk [vmem:[#allocation2 + $0x10] sm:$0xff] %vm2474, %v3068
        %3134 = vrot.lane.b32.xlu0 %v3114, 64
        %v3135 = vpop.permute.xlu0 %3134
        %3137 = vst.msk [vmem:[#allocation2 + $0x10] sm:$0xff] %vm3124, %v3135
        %v3138 = vld [vmem:[#allocation2] sm:$0xff]
        %v3139 = vld [vmem:[#allocation2 + $0x8] sm:$0xff]
        %v3140 = vld [vmem:[#allocation2 + $0x10] sm:$0xff]
        %v3141 = vpack.c.bf16 %v3138, %v3138
        %v3142 = vpack.c.bf16 %v3139, %v3139
        %v3143 = vpack.c.bf16 %v3140, %v3140
        %s3144 = scalar_lea.vmem [#allocation3], 3
        %v3145 = vld [vmem:[%s3144] ss:$8 sm:$0x7]
        %v3147 = vlaneseq
        %v3148 = vshrl.u32 %v3147, 7
        %v3149 = vsub.s32 0, %v3148
        %v3150 = vrot.slane %v3145, %v3149
        %v3151 = vlaneseq
        %v3152 = vshrl.u32 %v3151, 7
        %v3153 = vsub.s32 1, %v3152
        %v3154 = vrot.slane %v3145, %v3153
        %v3155 = vlaneseq
        %v3156 = vshrl.u32 %v3155, 7
        %v3157 = vsub.s32 2, %v3156
        %v3158 = vrot.slane %v3145, %v3157
        %v3258 = vunpack.c.l.b16 %v630
        %v3259 = vunpack.c.h.b16 %v630
        %v3260 = vunpack.c.l.b16 %v631
        %v3261 = vunpack.c.l.b16 %v632
        %v3262 = vunpack.c.h.b16 %v632
        %v3263 = vunpack.c.l.b16 %v633
        %v3264 = vunpack.c.l.b16 %v634
        %v3265 = vunpack.c.h.b16 %v634
        %v3266 = vunpack.c.l.b16 %v635
        %v3267 = vunpack.c.l.b16 %v636
        %v3268 = vunpack.c.h.b16 %v636
        %v3269 = vunpack.c.l.b16 %v637
        %v3270 = vunpack.c.l.b16 %v638
        %v3271 = vunpack.c.h.b16 %v638
        %v3272 = vunpack.c.l.b16 %v639
        %v3273 = vunpack.c.l.b16 %v640
        %v3274 = vunpack.c.h.b16 %v640
        %v3275 = vunpack.c.l.b16 %v641
        %v3276 = vunpack.c.l.b16 %v642
        %v3277 = vunpack.c.h.b16 %v642
        %v3278 = vunpack.c.l.b16 %v643
        %v3279 = vunpack.c.l.b16 %v644
        %v3280 = vunpack.c.h.b16 %v644
        %v3281 = vunpack.c.l.b16 %v645
        %v3282 = vunpack.c.l.b16 %v646
        %v3283 = vunpack.c.h.b16 %v646
        %v3284 = vunpack.c.l.b16 %v647
        %v3285 = vunpack.c.l.b16 %v648
        %v3286 = vunpack.c.h.b16 %v648
        %v3287 = vunpack.c.l.b16 %v649
        %v3288 = vunpack.c.l.b16 %v650
        %v3289 = vunpack.c.h.b16 %v650
        %v3290 = vunpack.c.l.b16 %v651
        %v3291 = vunpack.c.l.b16 %v652
        %v3292 = vunpack.c.h.b16 %v652
        %v3293 = vunpack.c.l.b16 %v653
        %v3294 = vunpack.c.l.b16 %v654
        %v3295 = vunpack.c.h.b16 %v654
        %v3296 = vunpack.c.l.b16 %v655
        %v3297 = vunpack.c.l.b16 %v656
        %v3298 = vunpack.c.h.b16 %v656
        %v3299 = vunpack.c.l.b16 %v657
        %v3300 = vunpack.c.l.b16 %v658
        %v3301 = vunpack.c.h.b16 %v658
        %v3302 = vunpack.c.l.b16 %v659
        %v3303 = vunpack.c.l.b16 %v660
        %v3304 = vunpack.c.h.b16 %v660
        %v3305 = vunpack.c.l.b16 %v661
        %v3306 = vunpack.c.l.b16 %v662
        %v3307 = vunpack.c.h.b16 %v662
        %v3308 = vunpack.c.l.b16 %v663
        %v3309 = vunpack.c.l.b16 %v664
        %v3310 = vunpack.c.h.b16 %v664
        %v3311 = vunpack.c.l.b16 %v665
        %v3312 = vunpack.c.l.b16 %v666
        %v3313 = vunpack.c.h.b16 %v666
        %v3314 = vunpack.c.l.b16 %v667
        %v3315 = vunpack.c.l.b16 %v668
        %v3316 = vunpack.c.h.b16 %v668
        %v3317 = vunpack.c.l.b16 %v669
        %v3318 = vunpack.c.l.b16 %v670
        %v3319 = vunpack.c.h.b16 %v670
        %v3320 = vunpack.c.l.b16 %v671
        %v3321 = vunpack.c.l.b16 %v672
        %v3322 = vunpack.c.h.b16 %v672
        %v3323 = vunpack.c.l.b16 %v673
        %v3324 = vunpack.c.l.b16 %v674
        %v3325 = vunpack.c.h.b16 %v674
        %v3326 = vunpack.c.l.b16 %v675
        %v3327 = vunpack.c.l.b16 %v676
        %v3328 = vunpack.c.h.b16 %v676
        %v3329 = vunpack.c.l.b16 %v677
        %v3330 = vunpack.c.l.b16 %v678
        %v3331 = vunpack.c.h.b16 %v678
        %v3332 = vunpack.c.l.b16 %v679
        %v3333 = vunpack.c.l.b16 %v680
        %v3334 = vunpack.c.h.b16 %v680
        %v3335 = vunpack.c.l.b16 %v681
        %v3336 = vunpack.c.l.b16 %v682
        %v3337 = vunpack.c.h.b16 %v682
        %v3338 = vunpack.c.l.b16 %v683
        %v3339 = vunpack.c.l.b16 %v684
        %v3340 = vunpack.c.h.b16 %v684
        %v3341 = vunpack.c.l.b16 %v685
        %v3342 = vunpack.c.l.b16 %v686
        %v3343 = vunpack.c.h.b16 %v686
        %v3344 = vunpack.c.l.b16 %v687
        %v3345 = vunpack.c.l.b16 %v688
        %v3346 = vunpack.c.h.b16 %v688
        %v3347 = vunpack.c.l.b16 %v689
        %v3348 = vunpack.c.l.b16 %v690
        %v3349 = vunpack.c.h.b16 %v690
        %v3350 = vunpack.c.l.b16 %v691
        %v3351 = vunpack.c.l.b16 %v692
        %v3352 = vunpack.c.h.b16 %v692
        %v3353 = vunpack.c.l.b16 %v693
        %v3354 = vunpack.c.l.b16 %v694
        %v3355 = vunpack.c.h.b16 %v694
        %v3356 = vunpack.c.l.b16 %v695
        %v3357 = vunpack.c.l.b16 %v696
        %v3358 = vunpack.c.h.b16 %v696
        %v3359 = vunpack.c.l.b16 %v697
        %v3360 = vunpack.c.l.b16 %v698
        %v3361 = vunpack.c.h.b16 %v698
        %v3362 = vunpack.c.l.b16 %v699
        %v3363 = vunpack.c.l.b16 %v700
        %v3364 = vunpack.c.h.b16 %v700
        %v3365 = vunpack.c.l.b16 %v701
        %v3366 = vunpack.c.l.b16 %v702
        %v3367 = vunpack.c.h.b16 %v702
        %v3368 = vunpack.c.l.b16 %v703
        %v3369 = vunpack.c.l.b16 %v704
        %v3370 = vunpack.c.h.b16 %v704
        %v3371 = vunpack.c.l.b16 %v705
        %v3372 = vunpack.c.l.b16 %v706
        %v3373 = vunpack.c.h.b16 %v706
        %v3374 = vunpack.c.l.b16 %v707
        %v3375 = vunpack.c.l.b16 %v708
        %v3376 = vunpack.c.h.b16 %v708
        %v3377 = vunpack.c.l.b16 %v709
        %v3378 = vunpack.c.l.b16 %v710
        %v3379 = vunpack.c.h.b16 %v710
        %v3380 = vunpack.c.l.b16 %v711
        %v3381 = vunpack.c.l.b16 %v712
        %v3382 = vunpack.c.h.b16 %v712
        %v3383 = vunpack.c.l.b16 %v713
        %v3384 = vunpack.c.l.b16 %v714
        %v3385 = vunpack.c.h.b16 %v714
        %v3386 = vunpack.c.l.b16 %v715
        %v3387 = vunpack.c.l.b16 %v716
        %v3388 = vunpack.c.h.b16 %v716
        %v3389 = vunpack.c.l.b16 %v717
        %v3390 = vunpack.c.l.b16 %v718
        %v3391 = vunpack.c.h.b16 %v718
        %v3392 = vunpack.c.l.b16 %v719
        %v3393 = vunpack.c.l.b16 %v720
        %v3394 = vunpack.c.h.b16 %v720
        %v3395 = vunpack.c.l.b16 %v721
        %v3396 = vunpack.c.l.b16 %v722
        %v3397 = vunpack.c.h.b16 %v722
        %v3398 = vunpack.c.l.b16 %v723
        %v3399 = vunpack.c.l.b16 %v724
        %v3400 = vunpack.c.h.b16 %v724
        %v3401 = vunpack.c.l.b16 %v725
        %v3402 = vpack.c.b16 %v3261, %v3258
        %v3403 = vpack.c.b16 %v3262, %v3259
        %v3404 = vpack.c.b16 %v3263, %v3260
        %v3405 = vpack.c.b16 %v3267, %v3264
        %v3406 = vpack.c.b16 %v3268, %v3265
        %v3407 = vpack.c.b16 %v3269, %v3266
        %v3408 = vpack.c.b16 %v3273, %v3270
        %v3409 = vpack.c.b16 %v3274, %v3271
        %v3410 = vpack.c.b16 %v3275, %v3272
        %v3411 = vpack.c.b16 %v3279, %v3276
        %v3412 = vpack.c.b16 %v3280, %v3277
        %v3413 = vpack.c.b16 %v3281, %v3278
        %v3414 = vpack.c.b16 %v3285, %v3282
        %v3415 = vpack.c.b16 %v3286, %v3283
        %v3416 = vpack.c.b16 %v3287, %v3284
        %v3417 = vpack.c.b16 %v3291, %v3288
        %v3418 = vpack.c.b16 %v3292, %v3289
        %v3419 = vpack.c.b16 %v3293, %v3290
        %v3420 = vpack.c.b16 %v3297, %v3294
        %v3421 = vpack.c.b16 %v3298, %v3295
        %v3422 = vpack.c.b16 %v3299, %v3296
        %v3423 = vpack.c.b16 %v3303, %v3300
        %v3424 = vpack.c.b16 %v3304, %v3301
        %v3425 = vpack.c.b16 %v3305, %v3302
        %v3426 = vpack.c.b16 %v3309, %v3306
        %v3427 = vpack.c.b16 %v3310, %v3307
        %v3428 = vpack.c.b16 %v3311, %v3308
        %v3429 = vpack.c.b16 %v3315, %v3312
        %v3430 = vpack.c.b16 %v3316, %v3313
        %v3431 = vpack.c.b16 %v3317, %v3314
        %v3432 = vpack.c.b16 %v3321, %v3318
        %v3433 = vpack.c.b16 %v3322, %v3319
        %v3434 = vpack.c.b16 %v3323, %v3320
        %v3435 = vpack.c.b16 %v3327, %v3324
        %v3436 = vpack.c.b16 %v3328, %v3325
        %v3437 = vpack.c.b16 %v3329, %v3326
        %v3438 = vpack.c.b16 %v3333, %v3330
        %v3439 = vpack.c.b16 %v3334, %v3331
        %v3440 = vpack.c.b16 %v3335, %v3332
        %v3441 = vpack.c.b16 %v3339, %v3336
        %v3442 = vpack.c.b16 %v3340, %v3337
        %v3443 = vpack.c.b16 %v3341, %v3338
        %v3444 = vpack.c.b16 %v3345, %v3342
        %v3445 = vpack.c.b16 %v3346, %v3343
        %v3446 = vpack.c.b16 %v3347, %v3344
        %v3447 = vpack.c.b16 %v3351, %v3348
        %v3448 = vpack.c.b16 %v3352, %v3349
        %v3449 = vpack.c.b16 %v3353, %v3350
        %v3450 = vpack.c.b16 %v3357, %v3354
        %v3451 = vpack.c.b16 %v3358, %v3355
        %v3452 = vpack.c.b16 %v3359, %v3356
        %v3453 = vpack.c.b16 %v3363, %v3360
        %v3454 = vpack.c.b16 %v3364, %v3361
        %v3455 = vpack.c.b16 %v3365, %v3362
        %v3456 = vpack.c.b16 %v3369, %v3366
        %v3457 = vpack.c.b16 %v3370, %v3367
        %v3458 = vpack.c.b16 %v3371, %v3368
        %v3459 = vpack.c.b16 %v3375, %v3372
        %v3460 = vpack.c.b16 %v3376, %v3373
        %v3461 = vpack.c.b16 %v3377, %v3374
        %v3462 = vpack.c.b16 %v3381, %v3378
        %v3463 = vpack.c.b16 %v3382, %v3379
        %v3464 = vpack.c.b16 %v3383, %v3380
        %v3465 = vpack.c.b16 %v3387, %v3384
        %v3466 = vpack.c.b16 %v3388, %v3385
        %v3467 = vpack.c.b16 %v3389, %v3386
        %v3468 = vpack.c.b16 %v3393, %v3390
        %v3469 = vpack.c.b16 %v3394, %v3391
        %v3470 = vpack.c.b16 %v3395, %v3392
        %v3471 = vpack.c.b16 %v3399, %v3396
        %v3472 = vpack.c.b16 %v3400, %v3397
        %v3473 = vpack.c.b16 %v3401, %v3398
        %3546 = vmatprep.subr.bf16.mxu0 %v3403
        %3547 = vmatpush1.bf16.msra.mxu0 %v3402
        %3548 = vmatprep.subr.bf16.mxu0 %v3406
        %3549 = vmatpush1.bf16.msra.mxu0 %v3405
        %3550 = vmatprep.subr.bf16.mxu0 %v3409
        %3551 = vmatpush1.bf16.msra.mxu0 %v3408
        %3552 = vmatprep.subr.bf16.mxu0 %v3412
        %3553 = vmatpush1.bf16.msra.mxu0 %v3411
        %3554 = vmatprep.subr.bf16.mxu0 %v3415
        %3555 = vmatpush1.bf16.msra.mxu0 %v3414
        %3556 = vmatprep.subr.bf16.mxu0 %v3418
        %3557 = vmatpush1.bf16.msra.mxu0 %v3417
        %3558 = vmatprep.subr.bf16.mxu0 %v3421
        %3559 = vmatpush1.bf16.msra.mxu0 %v3420
        %3560 = vmatprep.subr.bf16.mxu0 %v3424
        %3561 = vmatpush1.bf16.msra.mxu0 %v3423
        %3562 = vmatprep.subr.bf16.mxu0 %v3427
        %3563 = vmatpush1.bf16.msra.mxu0 %v3426
        %3564 = vmatprep.subr.bf16.mxu0 %v3430
        %3565 = vmatpush1.bf16.msra.mxu0 %v3429
        %3566 = vmatprep.subr.bf16.mxu0 %v3433
        %3567 = vmatpush1.bf16.msra.mxu0 %v3432
        %3568 = vmatprep.subr.bf16.mxu0 %v3436
        %3569 = vmatpush1.bf16.msra.mxu0 %v3435
        %3570 = vmatprep.subr.bf16.mxu0 %v3439
        %3571 = vmatpush1.bf16.msra.mxu0 %v3438
        %3572 = vmatprep.subr.bf16.mxu0 %v3442
        %3573 = vmatpush1.bf16.msra.mxu0 %v3441
        %3574 = vmatprep.subr.bf16.mxu0 %v3445
        %3575 = vmatpush1.bf16.msra.mxu0 %v3444
        %3576 = vmatprep.subr.bf16.mxu0 %v3448
        %3577 = vmatpush1.bf16.msra.mxu0 %v3447
        %3578 = vmatprep.mubr.bf16.mxu0 %v3142
        %3579 = vmatmul.mubr.bf16.gmra.mrb[0].mxu0 %v3141
        %v3580 = vpop.f32.mrb[0].mxu0
        %v3581 = vadd.f32 %v3150, %v3580
        %v3582 = vpop.f32.mrb[0].mxu0
        %v3583 = vadd.f32 %v3154, %v3582
        %v3584 = vpop.f32.mrb[0].mxu0
        %v3585 = vpop.f32.mrb[0].mxu0
        %3586 = vdwg.mxu0
        %3587 = vmatprep.subr.bf16.mxu0 %v3451
        %3588 = vmatpush1.bf16.msra.mxu0 %v3450
        %3589 = vmatprep.subr.bf16.mxu0 %v3454
        %3590 = vmatpush1.bf16.msra.mxu0 %v3453
        %3591 = vmatprep.subr.bf16.mxu0 %v3457
        %3592 = vmatpush1.bf16.msra.mxu0 %v3456
        %3593 = vmatprep.subr.bf16.mxu0 %v3460
        %3594 = vmatpush1.bf16.msra.mxu0 %v3459
        %3595 = vmatprep.subr.bf16.mxu0 %v3463
        %3596 = vmatpush1.bf16.msra.mxu0 %v3462
        %3597 = vmatprep.subr.bf16.mxu0 %v3466
        %3598 = vmatpush1.bf16.msra.mxu0 %v3465
        %3599 = vmatprep.subr.bf16.mxu0 %v3469
        %3600 = vmatpush1.bf16.msra.mxu0 %v3468
        %3601 = vmatprep.subr.bf16.mxu0 %v3472
        %3602 = vmatpush1.bf16.msra.mxu0 %v3471
        %3603 = vmatprep.subr.bf16.mxu0 0
        %3604 = vmatpush1.bf16.msra.mxu0 0
        %3605 = vmatprep.subr.bf16.mxu0 0
        %3606 = vmatpush1.bf16.msra.mxu0 0
        %3607 = vmatprep.subr.bf16.mxu0 0
        %3608 = vmatpush1.bf16.msra.mxu0 0
        %3609 = vmatprep.subr.bf16.mxu0 0
        %3610 = vmatpush1.bf16.msra.mxu0 0
        %3611 = vmatprep.subr.bf16.mxu0 0
        %3612 = vmatpush1.bf16.msra.mxu0 0
        %3613 = vmatprep.subr.bf16.mxu0 0
        %3614 = vmatpush1.bf16.msra.mxu0 0
        %3615 = vmatprep.subr.bf16.mxu0 0
        %3616 = vmatpush1.bf16.msra.mxu0 0
        %3617 = vmatprep.subr.bf16.mxu0 0
        %3618 = vmatpush1.bf16.msra.mxu0 0
        %3619 = vmatprep.mubr.bf16.mxu0 0
        %3620 = vmatmul.mubr.bf16.gmra.mrb[0].mxu0 %v3143
        %v3621 = vpop.f32.mrb[0].mxu0
        %v3622 = vadd.f32 %v3581, %v3621
        %v3623 = vpop.f32.mrb[0].mxu0
        %v3624 = vadd.f32 %v3583, %v3623
        %v3625 = vpop.f32.mrb[0].mxu0
        %v3626 = vpop.f32.mrb[0].mxu0
        %3627 = vdwg.mxu0
        %3628 = vmatprep.subr.bf16.mxu0 0
        %3629 = vmatpush1.bf16.msra.mxu0 %v3404
        %3630 = vmatprep.subr.bf16.mxu0 0
        %3631 = vmatpush1.bf16.msra.mxu0 %v3407
        %3632 = vmatprep.subr.bf16.mxu0 0
        %3633 = vmatpush1.bf16.msra.mxu0 %v3410
        %3634 = vmatprep.subr.bf16.mxu0 0
        %3635 = vmatpush1.bf16.msra.mxu0 %v3413
        %3636 = vmatprep.subr.bf16.mxu0 0
        %3637 = vmatpush1.bf16.msra.mxu0 %v3416
        %3638 = vmatprep.subr.bf16.mxu0 0
        %3639 = vmatpush1.bf16.msra.mxu0 %v3419
        %3640 = vmatprep.subr.bf16.mxu0 0
        %3641 = vmatpush1.bf16.msra.mxu0 %v3422
        %3642 = vmatprep.subr.bf16.mxu0 0
        %3643 = vmatpush1.bf16.msra.mxu0 %v3425
        %3644 = vmatprep.subr.bf16.mxu0 0
        %3645 = vmatpush1.bf16.msra.mxu0 %v3428
        %3646 = vmatprep.subr.bf16.mxu0 0
        %3647 = vmatpush1.bf16.msra.mxu0 %v3431
        %3648 = vmatprep.subr.bf16.mxu0 0
        %3649 = vmatpush1.bf16.msra.mxu0 %v3434
        %3650 = vmatprep.subr.bf16.mxu0 0
        %3651 = vmatpush1.bf16.msra.mxu0 %v3437
        %3652 = vmatprep.subr.bf16.mxu0 0
        %3653 = vmatpush1.bf16.msra.mxu0 %v3440
        %3654 = vmatprep.subr.bf16.mxu0 0
        %3655 = vmatpush1.bf16.msra.mxu0 %v3443
        %3656 = vmatprep.subr.bf16.mxu0 0
        %3657 = vmatpush1.bf16.msra.mxu0 %v3446
        %3658 = vmatprep.subr.bf16.mxu0 0
        %3659 = vmatpush1.bf16.msra.mxu0 %v3449
        %3660 = vmatprep.mubr.bf16.mxu0 %v3142
        %3661 = vmatmul.mubr.bf16.gmra.mrb[0].mxu0 %v3141
        %v3662 = vpop.f32.mrb[0].mxu0
        %v3663 = vadd.f32 %v3158, %v3662
        %v3664 = vpop.f32.mrb[0].mxu0
        %v3665 = vpop.f32.mrb[0].mxu0
        %v3666 = vpop.f32.mrb[0].mxu0
        %3667 = vdwg.mxu0
        %3668 = vmatprep.subr.bf16.mxu0 0
        %3669 = vmatpush1.bf16.msra.mxu0 %v3452
        %3670 = vmatprep.subr.bf16.mxu0 0
        %3671 = vmatpush1.bf16.msra.mxu0 %v3455
        %3672 = vmatprep.subr.bf16.mxu0 0
        %3673 = vmatpush1.bf16.msra.mxu0 %v3458
        %3674 = vmatprep.subr.bf16.mxu0 0
        %3675 = vmatpush1.bf16.msra.mxu0 %v3461
        %3676 = vmatprep.subr.bf16.mxu0 0
        %3677 = vmatpush1.bf16.msra.mxu0 %v3464
        %3678 = vmatprep.subr.bf16.mxu0 0
        %3679 = vmatpush1.bf16.msra.mxu0 %v3467
        %3680 = vmatprep.subr.bf16.mxu0 0
        %3681 = vmatpush1.bf16.msra.mxu0 %v3470
        %3682 = vmatprep.subr.bf16.mxu0 0
        %3683 = vmatpush1.bf16.msra.mxu0 %v3473
        %3684 = vmatprep.subr.bf16.mxu0 0
        %3685 = vmatpush1.bf16.msra.mxu0 0
        %3686 = vmatprep.subr.bf16.mxu0 0
        %3687 = vmatpush1.bf16.msra.mxu0 0
        %3688 = vmatprep.subr.bf16.mxu0 0
        %3689 = vmatpush1.bf16.msra.mxu0 0
        %3690 = vmatprep.subr.bf16.mxu0 0
        %3691 = vmatpush1.bf16.msra.mxu0 0
        %3692 = vmatprep.subr.bf16.mxu0 0
        %3693 = vmatpush1.bf16.msra.mxu0 0
        %3694 = vmatprep.subr.bf16.mxu0 0
        %3695 = vmatpush1.bf16.msra.mxu0 0
        %3696 = vmatprep.subr.bf16.mxu0 0
        %3697 = vmatpush1.bf16.msra.mxu0 0
        %3698 = vmatprep.subr.bf16.mxu0 0
        %3699 = vmatpush1.bf16.msra.mxu0 0
        %3700 = vmatprep.mubr.bf16.mxu0 0
        %3701 = vmatmul.mubr.bf16.gmra.mrb[0].mxu0 %v3143
        %v3702 = vpop.f32.mrb[0].mxu0
        %v3703 = vadd.f32 %v3663, %v3702
        %v3704 = vpop.f32.mrb[0].mxu0
        %v3705 = vpop.f32.mrb[0].mxu0
        %v3706 = vpop.f32.mrb[0].mxu0
        %3707 = vdwg.mxu0
        %v3708 = vadd.f32 %v3622, %v386
        %v3709 = vadd.f32 %v3624, %v387
        %v3710 = vadd.f32 %v3703, %v388
        %s3711 = scalar_lea.vmem [#allocation3], 4
        %v3712 = vld [vmem:[%s3711] ss:$8 sm:$0x7]
        %s3713 = scalar_lea.vmem [#allocation3], 5
        %v3714 = vld [vmem:[%s3713] ss:$8 sm:$0x7]
        %v3715 = vadd.f32 %v3708, %v3709
        %v3716 = vadd.f32 %v3715, %v3710
        %3717 = vadd.xlane.f32.xlu0 %v3716
        %v3718 = vpop.xlane.xlu0 %3717
        %v3719 = vmul.f32 %v3718, %v333
        %v3720 = vsub.f32 %v3708, %v3719
        %v3721 = vsub.f32 %v3709, %v3719
        %v3722 = vsub.f32 %v3710, %v3719
        %v3723 = vmul.f32 %v3720, %v3720
        %v3724 = vmul.f32 %v3721, %v3721
        %v3725 = vmul.f32 %v3722, %v3722
        %v3726 = vadd.f32 %v3723, %v3724
        %v3727 = vadd.f32 %v3726, %v3725
        %3728 = vadd.xlane.f32.xlu0 %v3727
        %v3729 = vpop.xlane.xlu0 %3728
        %v3730 = vmul.f32 %v3729, %v333
        %v3731 = vadd.f32 %v3730, 1e-12
        %v3732 = vrsqrt.pop %v3731
        %v3733 = vmul.f32 %v3720, %v3732
        %v3734 = vmul.f32 %v3721, %v3732
        %v3735 = vmul.f32 %v3722, %v3732
        %v3737 = vlaneseq
        %v3738 = vshrl.u32 %v3737, 7
        %v3739 = vsub.s32 0, %v3738
        %v3740 = vrot.slane %v3712, %v3739
        %v3741 = vlaneseq
        %v3742 = vshrl.u32 %v3741, 7
        %v3743 = vsub.s32 1, %v3742
        %v3744 = vrot.slane %v3712, %v3743
        %v3745 = vlaneseq
        %v3746 = vshrl.u32 %v3745, 7
        %v3747 = vsub.s32 2, %v3746
        %v3748 = vrot.slane %v3712, %v3747
        %v3752 = vmul.f32 %v3733, %v3740
        %v3753 = vmul.f32 %v3734, %v3744
        %v3754 = vmul.f32 %v3735, %v3748
        %v3756 = vlaneseq
        %v3757 = vshrl.u32 %v3756, 7
        %v3758 = vsub.s32 0, %v3757
        %v3759 = vrot.slane %v3714, %v3758
        %v3760 = vlaneseq
        %v3761 = vshrl.u32 %v3760, 7
        %v3762 = vsub.s32 1, %v3761
        %v3763 = vrot.slane %v3714, %v3762
        %v3764 = vlaneseq
        %v3765 = vshrl.u32 %v3764, 7
        %v3766 = vsub.s32 2, %v3765
        %v3767 = vrot.slane %v3714, %v3766
        %v3771 = vadd.f32 %v3752, %v3759
        %v3772 = vadd.f32 %v3753, %v3763
        %v3773 = vadd.f32 %v3754, %v3767
        %v3774 = vpack.c.bf16 %v3771, %v3771
        %v3775 = vpack.c.bf16 %v3772, %v3772
        %v3776 = vpack.c.bf16 %v3773, %v3773
        %s3777 = scalar_lea.vmem [#allocation3], 6
        %v3778 = vld [vmem:[%s3777] ss:$8 sm:$0xf]
        %v3779 = vld [vmem:[%s3777] ss:$8 sm:$0x30]
        %v3780 = vor.u32 %v3778, %v3779
        %v3782 = vlaneseq
        %v3783 = vshrl.u32 %v3782, 7
        %v3784 = vsub.s32 0, %v3783
        %v3785 = vrot.slane %v3780, %v3784
        %v3786 = vlaneseq
        %v3787 = vshrl.u32 %v3786, 7
        %v3788 = vsub.s32 1, %v3787
        %v3789 = vrot.slane %v3780, %v3788
        %v3790 = vlaneseq
        %v3791 = vshrl.u32 %v3790, 7
        %v3792 = vsub.s32 2, %v3791
        %v3793 = vrot.slane %v3780, %v3792
        %v3794 = vlaneseq
        %v3795 = vshrl.u32 %v3794, 7
        %v3796 = vsub.s32 3, %v3795
        %v3797 = vrot.slane %v3780, %v3796
        %v3798 = vlaneseq
        %v3799 = vshrl.u32 %v3798, 7
        %v3800 = vsub.s32 4, %v3799
        %v3801 = vrot.slane %v3780, %v3800
        %v3802 = vlaneseq
        %v3803 = vshrl.u32 %v3802, 7
        %v3804 = vsub.s32 5, %v3803
        %v3805 = vrot.slane %v3780, %v3804
        %v3956 = vunpack.c.l.b16 %v726
        %v3957 = vunpack.c.h.b16 %v726
        %v3958 = vunpack.c.l.b16 %v727
        %v3959 = vunpack.c.h.b16 %v727
        %v3960 = vunpack.c.l.b16 %v728
        %v3961 = vunpack.c.h.b16 %v728
        %v3962 = vunpack.c.l.b16 %v729
        %v3963 = vunpack.c.h.b16 %v729
        %v3964 = vunpack.c.l.b16 %v730
        %v3965 = vunpack.c.h.b16 %v730
        %v3966 = vunpack.c.l.b16 %v731
        %v3967 = vunpack.c.h.b16 %v731
        %v3968 = vunpack.c.l.b16 %v732
        %v3969 = vunpack.c.h.b16 %v732
        %v3970 = vunpack.c.l.b16 %v733
        %v3971 = vunpack.c.h.b16 %v733
        %v3972 = vunpack.c.l.b16 %v734
        %v3973 = vunpack.c.h.b16 %v734
        %v3974 = vunpack.c.l.b16 %v735
        %v3975 = vunpack.c.h.b16 %v735
        %v3976 = vunpack.c.l.b16 %v736
        %v3977 = vunpack.c.h.b16 %v736
        %v3978 = vunpack.c.l.b16 %v737
        %v3979 = vunpack.c.h.b16 %v737
        %v3980 = vunpack.c.l.b16 %v738
        %v3981 = vunpack.c.h.b16 %v738
        %v3982 = vunpack.c.l.b16 %v739
        %v3983 = vunpack.c.h.b16 %v739
        %v3984 = vunpack.c.l.b16 %v740
        %v3985 = vunpack.c.h.b16 %v740
        %v3986 = vunpack.c.l.b16 %v741
        %v3987 = vunpack.c.h.b16 %v741
        %v3988 = vunpack.c.l.b16 %v742
        %v3989 = vunpack.c.h.b16 %v742
        %v3990 = vunpack.c.l.b16 %v743
        %v3991 = vunpack.c.h.b16 %v743
        %v3992 = vunpack.c.l.b16 %v744
        %v3993 = vunpack.c.h.b16 %v744
        %v3994 = vunpack.c.l.b16 %v745
        %v3995 = vunpack.c.h.b16 %v745
        %v3996 = vunpack.c.l.b16 %v746
        %v3997 = vunpack.c.h.b16 %v746
        %v3998 = vunpack.c.l.b16 %v747
        %v3999 = vunpack.c.h.b16 %v747
        %v4000 = vunpack.c.l.b16 %v748
        %v4001 = vunpack.c.h.b16 %v748
        %v4002 = vunpack.c.l.b16 %v749
        %v4003 = vunpack.c.h.b16 %v749
        %v4004 = vunpack.c.l.b16 %v750
        %v4005 = vunpack.c.h.b16 %v750
        %v4006 = vunpack.c.l.b16 %v751
        %v4007 = vunpack.c.h.b16 %v751
        %v4008 = vunpack.c.l.b16 %v752
        %v4009 = vunpack.c.h.b16 %v752
        %v4010 = vunpack.c.l.b16 %v753
        %v4011 = vunpack.c.h.b16 %v753
        %v4012 = vunpack.c.l.b16 %v754
        %v4013 = vunpack.c.h.b16 %v754
        %v4014 = vunpack.c.l.b16 %v755
        %v4015 = vunpack.c.h.b16 %v755
        %v4016 = vunpack.c.l.b16 %v756
        %v4017 = vunpack.c.h.b16 %v756
        %v4018 = vunpack.c.l.b16 %v757
        %v4019 = vunpack.c.h.b16 %v757
        %v4020 = vunpack.c.l.b16 %v758
        %v4021 = vunpack.c.h.b16 %v758
        %v4022 = vunpack.c.l.b16 %v759
        %v4023 = vunpack.c.h.b16 %v759
        %v4024 = vunpack.c.l.b16 %v760
        %v4025 = vunpack.c.h.b16 %v760
        %v4026 = vunpack.c.l.b16 %v761
        %v4027 = vunpack.c.h.b16 %v761
        %v4028 = vunpack.c.l.b16 %v762
        %v4029 = vunpack.c.h.b16 %v762
        %v4030 = vunpack.c.l.b16 %v763
        %v4031 = vunpack.c.h.b16 %v763
        %v4032 = vunpack.c.l.b16 %v764
        %v4033 = vunpack.c.h.b16 %v764
        %v4034 = vunpack.c.l.b16 %v765
        %v4035 = vunpack.c.h.b16 %v765
        %v4036 = vunpack.c.l.b16 %v766
        %v4037 = vunpack.c.h.b16 %v766
        %v4038 = vunpack.c.l.b16 %v767
        %v4039 = vunpack.c.h.b16 %v767
        %v4040 = vunpack.c.l.b16 %v768
        %v4041 = vunpack.c.h.b16 %v768
        %v4042 = vunpack.c.l.b16 %v769
        %v4043 = vunpack.c.h.b16 %v769
        %v4044 = vunpack.c.l.b16 %v770
        %v4045 = vunpack.c.h.b16 %v770
        %v4046 = vunpack.c.l.b16 %v771
        %v4047 = vunpack.c.h.b16 %v771
        %v4048 = vunpack.c.l.b16 %v772
        %v4049 = vunpack.c.h.b16 %v772
        %v4050 = vunpack.c.l.b16 %v773
        %v4051 = vunpack.c.h.b16 %v773
        %v4052 = vunpack.c.l.b16 %v774
        %v4053 = vunpack.c.h.b16 %v774
        %v4054 = vunpack.c.l.b16 %v775
        %v4055 = vunpack.c.h.b16 %v775
        %v4056 = vunpack.c.l.b16 %v776
        %v4057 = vunpack.c.h.b16 %v776
        %v4058 = vunpack.c.l.b16 %v777
        %v4059 = vunpack.c.h.b16 %v777
        %v4060 = vunpack.c.l.b16 %v778
        %v4061 = vunpack.c.h.b16 %v778
        %v4062 = vunpack.c.l.b16 %v779
        %v4063 = vunpack.c.h.b16 %v779
        %v4064 = vunpack.c.l.b16 %v780
        %v4065 = vunpack.c.h.b16 %v780
        %v4066 = vunpack.c.l.b16 %v781
        %v4067 = vunpack.c.h.b16 %v781
        %v4068 = vunpack.c.l.b16 %v782
        %v4069 = vunpack.c.h.b16 %v782
        %v4070 = vunpack.c.l.b16 %v783
        %v4071 = vunpack.c.h.b16 %v783
        %v4072 = vunpack.c.l.b16 %v784
        %v4073 = vunpack.c.h.b16 %v784
        %v4074 = vunpack.c.l.b16 %v785
        %v4075 = vunpack.c.h.b16 %v785
        %v4076 = vunpack.c.l.b16 %v786
        %v4077 = vunpack.c.h.b16 %v786
        %v4078 = vunpack.c.l.b16 %v787
        %v4079 = vunpack.c.h.b16 %v787
        %v4080 = vunpack.c.l.b16 %v788
        %v4081 = vunpack.c.h.b16 %v788
        %v4082 = vunpack.c.l.b16 %v789
        %v4083 = vunpack.c.h.b16 %v789
        %v4084 = vunpack.c.l.b16 %v790
        %v4085 = vunpack.c.h.b16 %v790
        %v4086 = vunpack.c.l.b16 %v791
        %v4087 = vunpack.c.h.b16 %v791
        %v4088 = vunpack.c.l.b16 %v792
        %v4089 = vunpack.c.h.b16 %v792
        %v4090 = vunpack.c.l.b16 %v793
        %v4091 = vunpack.c.h.b16 %v793
        %v4092 = vunpack.c.l.b16 %v794
        %v4093 = vunpack.c.h.b16 %v794
        %v4094 = vunpack.c.l.b16 %v795
        %v4095 = vunpack.c.h.b16 %v795
        %v4096 = vunpack.c.l.b16 %v796
        %v4097 = vunpack.c.h.b16 %v796
        %v4098 = vunpack.c.l.b16 %v797
        %v4099 = vunpack.c.h.b16 %v797
        %v4100 = vunpack.c.l.b16 %v798
        %v4101 = vunpack.c.h.b16 %v798
        %v4102 = vunpack.c.l.b16 %v799
        %v4103 = vunpack.c.h.b16 %v799
        %v4104 = vunpack.c.l.b16 %v800
        %v4105 = vunpack.c.h.b16 %v800
        %v4106 = vunpack.c.l.b16 %v801
        %v4107 = vunpack.c.h.b16 %v801
        %v4108 = vunpack.c.l.b16 %v802
        %v4109 = vunpack.c.h.b16 %v802
        %v4110 = vunpack.c.l.b16 %v803
        %v4111 = vunpack.c.h.b16 %v803
        %v4112 = vunpack.c.l.b16 %v804
        %v4113 = vunpack.c.h.b16 %v804
        %v4114 = vunpack.c.l.b16 %v805
        %v4115 = vunpack.c.h.b16 %v805
        %v4116 = vunpack.c.l.b16 %v806
        %v4117 = vunpack.c.h.b16 %v806
        %v4118 = vunpack.c.l.b16 %v807
        %v4119 = vunpack.c.h.b16 %v807
        %v4120 = vunpack.c.l.b16 %v808
        %v4121 = vunpack.c.h.b16 %v808
        %v4122 = vunpack.c.l.b16 %v809
        %v4123 = vunpack.c.h.b16 %v809
        %v4124 = vunpack.c.l.b16 %v810
        %v4125 = vunpack.c.h.b16 %v810
        %v4126 = vunpack.c.l.b16 %v811
        %v4127 = vunpack.c.h.b16 %v811
        %v4128 = vunpack.c.l.b16 %v812
        %v4129 = vunpack.c.h.b16 %v812
        %v4130 = vunpack.c.l.b16 %v813
        %v4131 = vunpack.c.h.b16 %v813
        %v4132 = vunpack.c.l.b16 %v814
        %v4133 = vunpack.c.h.b16 %v814
        %v4134 = vunpack.c.l.b16 %v815
        %v4135 = vunpack.c.h.b16 %v815
        %v4136 = vunpack.c.l.b16 %v816
        %v4137 = vunpack.c.h.b16 %v816
        %v4138 = vunpack.c.l.b16 %v817
        %v4139 = vunpack.c.h.b16 %v817
        %v4140 = vunpack.c.l.b16 %v818
        %v4141 = vunpack.c.h.b16 %v818
        %v4142 = vunpack.c.l.b16 %v819
        %v4143 = vunpack.c.h.b16 %v819
        %v4144 = vunpack.c.l.b16 %v820
        %v4145 = vunpack.c.h.b16 %v820
        %v4146 = vunpack.c.l.b16 %v821
        %v4147 = vunpack.c.h.b16 %v821
        %v4148 = vunpack.c.l.b16 %v822
        %v4149 = vunpack.c.h.b16 %v822
        %v4150 = vunpack.c.l.b16 %v823
        %v4151 = vunpack.c.h.b16 %v823
        %v4152 = vunpack.c.l.b16 %v824
        %v4153 = vunpack.c.h.b16 %v824
        %v4154 = vunpack.c.l.b16 %v825
        %v4155 = vunpack.c.h.b16 %v825
        %v4156 = vunpack.c.l.b16 %v826
        %v4157 = vunpack.c.h.b16 %v826
        %v4158 = vunpack.c.l.b16 %v827
        %v4159 = vunpack.c.h.b16 %v827
        %v4160 = vunpack.c.l.b16 %v828
        %v4161 = vunpack.c.h.b16 %v828
        %v4162 = vunpack.c.l.b16 %v829
        %v4163 = vunpack.c.h.b16 %v829
        %v4164 = vunpack.c.l.b16 %v830
        %v4165 = vunpack.c.h.b16 %v830
        %v4166 = vunpack.c.l.b16 %v831
        %v4167 = vunpack.c.h.b16 %v831
        %v4168 = vunpack.c.l.b16 %v832
        %v4169 = vunpack.c.h.b16 %v832
        %v4170 = vunpack.c.l.b16 %v833
        %v4171 = vunpack.c.h.b16 %v833
        %v4172 = vunpack.c.l.b16 %v834
        %v4173 = vunpack.c.h.b16 %v834
        %v4174 = vunpack.c.l.b16 %v835
        %v4175 = vunpack.c.h.b16 %v835
        %v4176 = vunpack.c.l.b16 %v836
        %v4177 = vunpack.c.h.b16 %v836
        %v4178 = vunpack.c.l.b16 %v837
        %v4179 = vunpack.c.h.b16 %v837
        %v4180 = vunpack.c.l.b16 %v838
        %v4181 = vunpack.c.h.b16 %v838
        %v4182 = vunpack.c.l.b16 %v839
        %v4183 = vunpack.c.h.b16 %v839
        %v4184 = vunpack.c.l.b16 %v840
        %v4185 = vunpack.c.h.b16 %v840
        %v4186 = vunpack.c.l.b16 %v841
        %v4187 = vunpack.c.h.b16 %v841
        %v4188 = vunpack.c.l.b16 %v842
        %v4189 = vunpack.c.h.b16 %v842
        %v4190 = vunpack.c.l.b16 %v843
        %v4191 = vunpack.c.h.b16 %v843
        %v4192 = vunpack.c.l.b16 %v844
        %v4193 = vunpack.c.h.b16 %v844
        %v4194 = vunpack.c.l.b16 %v845
        %v4195 = vunpack.c.h.b16 %v845
        %v4196 = vunpack.c.l.b16 %v846
        %v4197 = vunpack.c.h.b16 %v846
        %v4198 = vunpack.c.l.b16 %v847
        %v4199 = vunpack.c.h.b16 %v847
        %v4200 = vunpack.c.l.b16 %v848
        %v4201 = vunpack.c.h.b16 %v848
        %v4202 = vunpack.c.l.b16 %v849
        %v4203 = vunpack.c.h.b16 %v849
        %v4204 = vunpack.c.l.b16 %v850
        %v4205 = vunpack.c.h.b16 %v850
        %v4206 = vunpack.c.l.b16 %v851
        %v4207 = vunpack.c.h.b16 %v851
        %v4208 = vunpack.c.l.b16 %v852
        %v4209 = vunpack.c.h.b16 %v852
        %v4210 = vunpack.c.l.b16 %v853
        %v4211 = vunpack.c.h.b16 %v853
        %v4212 = vunpack.c.l.b16 %v854
        %v4213 = vunpack.c.h.b16 %v854
        %v4214 = vunpack.c.l.b16 %v855
        %v4215 = vunpack.c.h.b16 %v855
        %v4216 = vunpack.c.l.b16 %v856
        %v4217 = vunpack.c.h.b16 %v856
        %v4218 = vunpack.c.l.b16 %v857
        %v4219 = vunpack.c.h.b16 %v857
        %v4220 = vunpack.c.l.b16 %v858
        %v4221 = vunpack.c.h.b16 %v858
        %v4222 = vunpack.c.l.b16 %v859
        %v4223 = vunpack.c.h.b16 %v859
        %v4224 = vunpack.c.l.b16 %v860
        %v4225 = vunpack.c.h.b16 %v860
        %v4226 = vunpack.c.l.b16 %v861
        %v4227 = vunpack.c.h.b16 %v861
        %v4228 = vunpack.c.l.b16 %v862
        %v4229 = vunpack.c.h.b16 %v862
        %v4230 = vunpack.c.l.b16 %v863
        %v4231 = vunpack.c.h.b16 %v863
        %v4232 = vunpack.c.l.b16 %v864
        %v4233 = vunpack.c.h.b16 %v864
        %v4234 = vunpack.c.l.b16 %v865
        %v4235 = vunpack.c.h.b16 %v865
        %v4236 = vunpack.c.l.b16 %v866
        %v4237 = vunpack.c.h.b16 %v866
        %v4238 = vunpack.c.l.b16 %v867
        %v4239 = vunpack.c.h.b16 %v867
        %v4240 = vunpack.c.l.b16 %v868
        %v4241 = vunpack.c.h.b16 %v868
        %v4242 = vunpack.c.l.b16 %v869
        %v4243 = vunpack.c.h.b16 %v869
        %v4244 = vpack.c.b16 %v3962, %v3956
        %v4245 = vpack.c.b16 %v3963, %v3957
        %v4246 = vpack.c.b16 %v3964, %v3958
        %v4247 = vpack.c.b16 %v3965, %v3959
        %v4248 = vpack.c.b16 %v3966, %v3960
        %v4249 = vpack.c.b16 %v3967, %v3961
        %v4250 = vpack.c.b16 %v3974, %v3968
        %v4251 = vpack.c.b16 %v3975, %v3969
        %v4252 = vpack.c.b16 %v3976, %v3970
        %v4253 = vpack.c.b16 %v3977, %v3971
        %v4254 = vpack.c.b16 %v3978, %v3972
        %v4255 = vpack.c.b16 %v3979, %v3973
        %v4256 = vpack.c.b16 %v3986, %v3980
        %v4257 = vpack.c.b16 %v3987, %v3981
        %v4258 = vpack.c.b16 %v3988, %v3982
        %v4259 = vpack.c.b16 %v3989, %v3983
        %v4260 = vpack.c.b16 %v3990, %v3984
        %v4261 = vpack.c.b16 %v3991, %v3985
        %v4262 = vpack.c.b16 %v3998, %v3992
        %v4263 = vpack.c.b16 %v3999, %v3993
        %v4264 = vpack.c.b16 %v4000, %v3994
        %v4265 = vpack.c.b16 %v4001, %v3995
        %v4266 = vpack.c.b16 %v4002, %v3996
        %v4267 = vpack.c.b16 %v4003, %v3997
        %v4268 = vpack.c.b16 %v4010, %v4004
        %v4269 = vpack.c.b16 %v4011, %v4005
        %v4270 = vpack.c.b16 %v4012, %v4006
        %v4271 = vpack.c.b16 %v4013, %v4007
        %v4272 = vpack.c.b16 %v4014, %v4008
        %v4273 = vpack.c.b16 %v4015, %v4009
        %v4274 = vpack.c.b16 %v4022, %v4016
        %v4275 = vpack.c.b16 %v4023, %v4017
        %v4276 = vpack.c.b16 %v4024, %v4018
        %v4277 = vpack.c.b16 %v4025, %v4019
        %v4278 = vpack.c.b16 %v4026, %v4020
        %v4279 = vpack.c.b16 %v4027, %v4021
        %v4280 = vpack.c.b16 %v4034, %v4028
        %v4281 = vpack.c.b16 %v4035, %v4029
        %v4282 = vpack.c.b16 %v4036, %v4030
        %v4283 = vpack.c.b16 %v4037, %v4031
        %v4284 = vpack.c.b16 %v4038, %v4032
        %v4285 = vpack.c.b16 %v4039, %v4033
        %v4286 = vpack.c.b16 %v4046, %v4040
        %v4287 = vpack.c.b16 %v4047, %v4041
        %v4288 = vpack.c.b16 %v4048, %v4042
        %v4289 = vpack.c.b16 %v4049, %v4043
        %v4290 = vpack.c.b16 %v4050, %v4044
        %v4291 = vpack.c.b16 %v4051, %v4045
        %v4292 = vpack.c.b16 %v4058, %v4052
        %v4293 = vpack.c.b16 %v4059, %v4053
        %v4294 = vpack.c.b16 %v4060, %v4054
        %v4295 = vpack.c.b16 %v4061, %v4055
        %v4296 = vpack.c.b16 %v4062, %v4056
        %v4297 = vpack.c.b16 %v4063, %v4057
        %v4298 = vpack.c.b16 %v4070, %v4064
        %v4299 = vpack.c.b16 %v4071, %v4065
        %v4300 = vpack.c.b16 %v4072, %v4066
        %v4301 = vpack.c.b16 %v4073, %v4067
        %v4302 = vpack.c.b16 %v4074, %v4068
        %v4303 = vpack.c.b16 %v4075, %v4069
        %v4304 = vpack.c.b16 %v4082, %v4076
        %v4305 = vpack.c.b16 %v4083, %v4077
        %v4306 = vpack.c.b16 %v4084, %v4078
        %v4307 = vpack.c.b16 %v4085, %v4079
        %v4308 = vpack.c.b16 %v4086, %v4080
        %v4309 = vpack.c.b16 %v4087, %v4081
        %v4310 = vpack.c.b16 %v4094, %v4088
        %v4311 = vpack.c.b16 %v4095, %v4089
        %v4312 = vpack.c.b16 %v4096, %v4090
        %v4313 = vpack.c.b16 %v4097, %v4091
        %v4314 = vpack.c.b16 %v4098, %v4092
        %v4315 = vpack.c.b16 %v4099, %v4093
        %v4316 = vpack.c.b16 %v4106, %v4100
        %v4317 = vpack.c.b16 %v4107, %v4101
        %v4318 = vpack.c.b16 %v4108, %v4102
        %v4319 = vpack.c.b16 %v4109, %v4103
        %v4320 = vpack.c.b16 %v4110, %v4104
        %v4321 = vpack.c.b16 %v4111, %v4105
        %v4322 = vpack.c.b16 %v4118, %v4112
        %v4323 = vpack.c.b16 %v4119, %v4113
        %v4324 = vpack.c.b16 %v4120, %v4114
        %v4325 = vpack.c.b16 %v4121, %v4115
        %v4326 = vpack.c.b16 %v4122, %v4116
        %v4327 = vpack.c.b16 %v4123, %v4117
        %v4328 = vpack.c.b16 %v4130, %v4124
        %v4329 = vpack.c.b16 %v4131, %v4125
        %v4330 = vpack.c.b16 %v4132, %v4126
        %v4331 = vpack.c.b16 %v4133, %v4127
        %v4332 = vpack.c.b16 %v4134, %v4128
        %v4333 = vpack.c.b16 %v4135, %v4129
        %v4334 = vpack.c.b16 %v4142, %v4136
        %v4335 = vpack.c.b16 %v4143, %v4137
        %v4336 = vpack.c.b16 %v4144, %v4138
        %v4337 = vpack.c.b16 %v4145, %v4139
        %v4338 = vpack.c.b16 %v4146, %v4140
        %v4339 = vpack.c.b16 %v4147, %v4141
        %v4340 = vpack.c.b16 %v4154, %v4148
        %v4341 = vpack.c.b16 %v4155, %v4149
        %v4342 = vpack.c.b16 %v4156, %v4150
        %v4343 = vpack.c.b16 %v4157, %v4151
        %v4344 = vpack.c.b16 %v4158, %v4152
        %v4345 = vpack.c.b16 %v4159, %v4153
        %v4346 = vpack.c.b16 %v4166, %v4160
        %v4347 = vpack.c.b16 %v4167, %v4161
        %v4348 = vpack.c.b16 %v4168, %v4162
        %v4349 = vpack.c.b16 %v4169, %v4163
        %v4350 = vpack.c.b16 %v4170, %v4164
        %v4351 = vpack.c.b16 %v4171, %v4165
        %v4352 = vpack.c.b16 %v4178, %v4172
        %v4353 = vpack.c.b16 %v4179, %v4173
        %v4354 = vpack.c.b16 %v4180, %v4174
        %v4355 = vpack.c.b16 %v4181, %v4175
        %v4356 = vpack.c.b16 %v4182, %v4176
        %v4357 = vpack.c.b16 %v4183, %v4177
        %v4358 = vpack.c.b16 %v4190, %v4184
        %v4359 = vpack.c.b16 %v4191, %v4185
        %v4360 = vpack.c.b16 %v4192, %v4186
        %v4361 = vpack.c.b16 %v4193, %v4187
        %v4362 = vpack.c.b16 %v4194, %v4188
        %v4363 = vpack.c.b16 %v4195, %v4189
        %v4364 = vpack.c.b16 %v4202, %v4196
        %v4365 = vpack.c.b16 %v4203, %v4197
        %v4366 = vpack.c.b16 %v4204, %v4198
        %v4367 = vpack.c.b16 %v4205, %v4199
        %v4368 = vpack.c.b16 %v4206, %v4200
        %v4369 = vpack.c.b16 %v4207, %v4201
        %v4370 = vpack.c.b16 %v4214, %v4208
        %v4371 = vpack.c.b16 %v4215, %v4209
        %v4372 = vpack.c.b16 %v4216, %v4210
        %v4373 = vpack.c.b16 %v4217, %v4211
        %v4374 = vpack.c.b16 %v4218, %v4212
        %v4375 = vpack.c.b16 %v4219, %v4213
        %v4376 = vpack.c.b16 %v4226, %v4220
        %v4377 = vpack.c.b16 %v4227, %v4221
        %v4378 = vpack.c.b16 %v4228, %v4222
        %v4379 = vpack.c.b16 %v4229, %v4223
        %v4380 = vpack.c.b16 %v4230, %v4224
        %v4381 = vpack.c.b16 %v4231, %v4225
        %v4382 = vpack.c.b16 %v4238, %v4232
        %v4383 = vpack.c.b16 %v4239, %v4233
        %v4384 = vpack.c.b16 %v4240, %v4234
        %v4385 = vpack.c.b16 %v4241, %v4235
        %v4386 = vpack.c.b16 %v4242, %v4236
        %v4387 = vpack.c.b16 %v4243, %v4237
        %4532 = vmatprep.subr.bf16.mxu0 %v4245
        %4533 = vmatpush1.bf16.msra.mxu0 %v4244
        %4534 = vmatprep.subr.bf16.mxu0 %v4251
        %4535 = vmatpush1.bf16.msra.mxu0 %v4250
        %4536 = vmatprep.subr.bf16.mxu0 %v4257
        %4537 = vmatpush1.bf16.msra.mxu0 %v4256
        %4538 = vmatprep.subr.bf16.mxu0 %v4263
        %4539 = vmatpush1.bf16.msra.mxu0 %v4262
        %4540 = vmatprep.subr.bf16.mxu0 %v4269
        %4541 = vmatpush1.bf16.msra.mxu0 %v4268
        %4542 = vmatprep.subr.bf16.mxu0 %v4275
        %4543 = vmatpush1.bf16.msra.mxu0 %v4274
        %4544 = vmatprep.subr.bf16.mxu0 %v4281
        %4545 = vmatpush1.bf16.msra.mxu0 %v4280
        %4546 = vmatprep.subr.bf16.mxu0 %v4287
        %4547 = vmatpush1.bf16.msra.mxu0 %v4286
        %4548 = vmatprep.subr.bf16.mxu0 %v4293
        %4549 = vmatpush1.bf16.msra.mxu0 %v4292
        %4550 = vmatprep.subr.bf16.mxu0 %v4299
        %4551 = vmatpush1.bf16.msra.mxu0 %v4298
        %4552 = vmatprep.subr.bf16.mxu0 %v4305
        %4553 = vmatpush1.bf16.msra.mxu0 %v4304
        %4554 = vmatprep.subr.bf16.mxu0 %v4311
        %4555 = vmatpush1.bf16.msra.mxu0 %v4310
        %4556 = vmatprep.subr.bf16.mxu0 %v4317
        %4557 = vmatpush1.bf16.msra.mxu0 %v4316
        %4558 = vmatprep.subr.bf16.mxu0 %v4323
        %4559 = vmatpush1.bf16.msra.mxu0 %v4322
        %4560 = vmatprep.subr.bf16.mxu0 %v4329
        %4561 = vmatpush1.bf16.msra.mxu0 %v4328
        %4562 = vmatprep.subr.bf16.mxu0 %v4335
        %4563 = vmatpush1.bf16.msra.mxu0 %v4334
        %4564 = vmatprep.mubr.bf16.mxu0 %v3775
        %4565 = vmatmul.mubr.bf16.gmra.mrb[0].mxu0 %v3774
        %v4566 = vpop.f32.mrb[0].mxu0
        %v4567 = vadd.f32 %v3785, %v4566
        %v4568 = vpop.f32.mrb[0].mxu0
        %v4569 = vadd.f32 %v3789, %v4568
        %v4570 = vpop.f32.mrb[0].mxu0
        %v4571 = vpop.f32.mrb[0].mxu0
        %4572 = vdwg.mxu0
        %4573 = vmatprep.subr.bf16.mxu0 %v4341
        %4574 = vmatpush1.bf16.msra.mxu0 %v4340
        %4575 = vmatprep.subr.bf16.mxu0 %v4347
        %4576 = vmatpush1.bf16.msra.mxu0 %v4346
        %4577 = vmatprep.subr.bf16.mxu0 %v4353
        %4578 = vmatpush1.bf16.msra.mxu0 %v4352
        %4579 = vmatprep.subr.bf16.mxu0 %v4359
        %4580 = vmatpush1.bf16.msra.mxu0 %v4358
        %4581 = vmatprep.subr.bf16.mxu0 %v4365
        %4582 = vmatpush1.bf16.msra.mxu0 %v4364
        %4583 = vmatprep.subr.bf16.mxu0 %v4371
        %4584 = vmatpush1.bf16.msra.mxu0 %v4370
        %4585 = vmatprep.subr.bf16.mxu0 %v4377
        %4586 = vmatpush1.bf16.msra.mxu0 %v4376
        %4587 = vmatprep.subr.bf16.mxu0 %v4383
        %4588 = vmatpush1.bf16.msra.mxu0 %v4382
        %4589 = vmatprep.subr.bf16.mxu0 0
        %4590 = vmatpush1.bf16.msra.mxu0 0
        %4591 = vmatprep.subr.bf16.mxu0 0
        %4592 = vmatpush1.bf16.msra.mxu0 0
        %4593 = vmatprep.subr.bf16.mxu0 0
        %4594 = vmatpush1.bf16.msra.mxu0 0
        %4595 = vmatprep.subr.bf16.mxu0 0
        %4596 = vmatpush1.bf16.msra.mxu0 0
        %4597 = vmatprep.subr.bf16.mxu0 0
        %4598 = vmatpush1.bf16.msra.mxu0 0
        %4599 = vmatprep.subr.bf16.mxu0 0
        %4600 = vmatpush1.bf16.msra.mxu0 0
        %4601 = vmatprep.subr.bf16.mxu0 0
        %4602 = vmatpush1.bf16.msra.mxu0 0
        %4603 = vmatprep.subr.bf16.mxu0 0
        %4604 = vmatpush1.bf16.msra.mxu0 0
        %4605 = vmatprep.mubr.bf16.mxu0 0
        %4606 = vmatmul.mubr.bf16.gmra.mrb[0].mxu0 %v3776
        %v4607 = vpop.f32.mrb[0].mxu0
        %v4608 = vadd.f32 %v4567, %v4607
        %v4609 = vpop.f32.mrb[0].mxu0
        %v4610 = vadd.f32 %v4569, %v4609
        %v4611 = vpop.f32.mrb[0].mxu0
        %v4612 = vpop.f32.mrb[0].mxu0
        %4613 = vdwg.mxu0
        %4614 = vmatprep.subr.bf16.mxu0 %v4247
        %4615 = vmatpush1.bf16.msra.mxu0 %v4246
        %4616 = vmatprep.subr.bf16.mxu0 %v4253
        %4617 = vmatpush1.bf16.msra.mxu0 %v4252
        %4618 = vmatprep.subr.bf16.mxu0 %v4259
        %4619 = vmatpush1.bf16.msra.mxu0 %v4258
        %4620 = vmatprep.subr.bf16.mxu0 %v4265
        %4621 = vmatpush1.bf16.msra.mxu0 %v4264
        %4622 = vmatprep.subr.bf16.mxu0 %v4271
        %4623 = vmatpush1.bf16.msra.mxu0 %v4270
        %4624 = vmatprep.subr.bf16.mxu0 %v4277
        %4625 = vmatpush1.bf16.msra.mxu0 %v4276
        %4626 = vmatprep.subr.bf16.mxu0 %v4283
        %4627 = vmatpush1.bf16.msra.mxu0 %v4282
        %4628 = vmatprep.subr.bf16.mxu0 %v4289
        %4629 = vmatpush1.bf16.msra.mxu0 %v4288
        %4630 = vmatprep.subr.bf16.mxu0 %v4295
        %4631 = vmatpush1.bf16.msra.mxu0 %v4294
        %4632 = vmatprep.subr.bf16.mxu0 %v4301
        %4633 = vmatpush1.bf16.msra.mxu0 %v4300
        %4634 = vmatprep.subr.bf16.mxu0 %v4307
        %4635 = vmatpush1.bf16.msra.mxu0 %v4306
        %4636 = vmatprep.subr.bf16.mxu0 %v4313
        %4637 = vmatpush1.bf16.msra.mxu0 %v4312
        %4638 = vmatprep.subr.bf16.mxu0 %v4319
        %4639 = vmatpush1.bf16.msra.mxu0 %v4318
        %4640 = vmatprep.subr.bf16.mxu0 %v4325
        %4641 = vmatpush1.bf16.msra.mxu0 %v4324
        %4642 = vmatprep.subr.bf16.mxu0 %v4331
        %4643 = vmatpush1.bf16.msra.mxu0 %v4330
        %4644 = vmatprep.subr.bf16.mxu0 %v4337
        %4645 = vmatpush1.bf16.msra.mxu0 %v4336
        %4646 = vmatprep.mubr.bf16.mxu0 %v3775
        %4647 = vmatmul.mubr.bf16.gmra.mrb[0].mxu0 %v3774
        %v4648 = vpop.f32.mrb[0].mxu0
        %v4649 = vadd.f32 %v3793, %v4648
        %v4650 = vpop.f32.mrb[0].mxu0
        %v4651 = vadd.f32 %v3797, %v4650
        %v4652 = vpop.f32.mrb[0].mxu0
        %v4653 = vpop.f32.mrb[0].mxu0
        %4654 = vdwg.mxu0
        %4655 = vmatprep.subr.bf16.mxu0 %v4343
        %4656 = vmatpush1.bf16.msra.mxu0 %v4342
        %4657 = vmatprep.subr.bf16.mxu0 %v4349
        %4658 = vmatpush1.bf16.msra.mxu0 %v4348
        %4659 = vmatprep.subr.bf16.mxu0 %v4355
        %4660 = vmatpush1.bf16.msra.mxu0 %v4354
        %4661 = vmatprep.subr.bf16.mxu0 %v4361
        %4662 = vmatpush1.bf16.msra.mxu0 %v4360
        %4663 = vmatprep.subr.bf16.mxu0 %v4367
        %4664 = vmatpush1.bf16.msra.mxu0 %v4366
        %4665 = vmatprep.subr.bf16.mxu0 %v4373
        %4666 = vmatpush1.bf16.msra.mxu0 %v4372
        %4667 = vmatprep.subr.bf16.mxu0 %v4379
        %4668 = vmatpush1.bf16.msra.mxu0 %v4378
        %4669 = vmatprep.subr.bf16.mxu0 %v4385
        %4670 = vmatpush1.bf16.msra.mxu0 %v4384
        %4671 = vmatprep.subr.bf16.mxu0 0
        %4672 = vmatpush1.bf16.msra.mxu0 0
        %4673 = vmatprep.subr.bf16.mxu0 0
        %4674 = vmatpush1.bf16.msra.mxu0 0
        %4675 = vmatprep.subr.bf16.mxu0 0
        %4676 = vmatpush1.bf16.msra.mxu0 0
        %4677 = vmatprep.subr.bf16.mxu0 0
        %4678 = vmatpush1.bf16.msra.mxu0 0
        %4679 = vmatprep.subr.bf16.mxu0 0
        %4680 = vmatpush1.bf16.msra.mxu0 0
        %4681 = vmatprep.subr.bf16.mxu0 0
        %4682 = vmatpush1.bf16.msra.mxu0 0
        %4683 = vmatprep.subr.bf16.mxu0 0
        %4684 = vmatpush1.bf16.msra.mxu0 0
        %4685 = vmatprep.subr.bf16.mxu0 0
        %4686 = vmatpush1.bf16.msra.mxu0 0
        %4687 = vmatprep.mubr.bf16.mxu0 0
        %4688 = vmatmul.mubr.bf16.gmra.mrb[0].mxu0 %v3776
        %v4689 = vpop.f32.mrb[0].mxu0
        %v4690 = vadd.f32 %v4649, %v4689
        %v4691 = vpop.f32.mrb[0].mxu0
        %v4692 = vadd.f32 %v4651, %v4691
        %v4693 = vpop.f32.mrb[0].mxu0
        %v4694 = vpop.f32.mrb[0].mxu0
        %4695 = vdwg.mxu0
        %4696 = vmatprep.subr.bf16.mxu0 %v4249
        %4697 = vmatpush1.bf16.msra.mxu0 %v4248
        %4698 = vmatprep.subr.bf16.mxu0 %v4255
        %4699 = vmatpush1.bf16.msra.mxu0 %v4254
        %4700 = vmatprep.subr.bf16.mxu0 %v4261
        %4701 = vmatpush1.bf16.msra.mxu0 %v4260
        %4702 = vmatprep.subr.bf16.mxu0 %v4267
        %4703 = vmatpush1.bf16.msra.mxu0 %v4266
        %4704 = vmatprep.subr.bf16.mxu0 %v4273
        %4705 = vmatpush1.bf16.msra.mxu0 %v4272
        %4706 = vmatprep.subr.bf16.mxu0 %v4279
        %4707 = vmatpush1.bf16.msra.mxu0 %v4278
        %4708 = vmatprep.subr.bf16.mxu0 %v4285
        %4709 = vmatpush1.bf16.msra.mxu0 %v4284
        %4710 = vmatprep.subr.bf16.mxu0 %v4291
        %4711 = vmatpush1.bf16.msra.mxu0 %v4290
        %4712 = vmatprep.subr.bf16.mxu0 %v4297
        %4713 = vmatpush1.bf16.msra.mxu0 %v4296
        %4714 = vmatprep.subr.bf16.mxu0 %v4303
        %4715 = vmatpush1.bf16.msra.mxu0 %v4302
        %4716 = vmatprep.subr.bf16.mxu0 %v4309
        %4717 = vmatpush1.bf16.msra.mxu0 %v4308
        %4718 = vmatprep.subr.bf16.mxu0 %v4315
        %4719 = vmatpush1.bf16.msra.mxu0 %v4314
        %4720 = vmatprep.subr.bf16.mxu0 %v4321
        %4721 = vmatpush1.bf16.msra.mxu0 %v4320
        %4722 = vmatprep.subr.bf16.mxu0 %v4327
        %4723 = vmatpush1.bf16.msra.mxu0 %v4326
        %4724 = vmatprep.subr.bf16.mxu0 %v4333
        %4725 = vmatpush1.bf16.msra.mxu0 %v4332
        %4726 = vmatprep.subr.bf16.mxu0 %v4339
        %4727 = vmatpush1.bf16.msra.mxu0 %v4338
        %4728 = vmatprep.mubr.bf16.mxu0 %v3775
        %4729 = vmatmul.mubr.bf16.gmra.mrb[0].mxu0 %v3774
        %v4730 = vpop.f32.mrb[0].mxu0
        %v4731 = vadd.f32 %v3801, %v4730
        %v4732 = vpop.f32.mrb[0].mxu0
        %v4733 = vadd.f32 %v3805, %v4732
        %v4734 = vpop.f32.mrb[0].mxu0
        %v4735 = vpop.f32.mrb[0].mxu0
        %4736 = vdwg.mxu0
        %4737 = vmatprep.subr.bf16.mxu0 %v4345
        %4738 = vmatpush1.bf16.msra.mxu0 %v4344
        %4739 = vmatprep.subr.bf16.mxu0 %v4351
        %4740 = vmatpush1.bf16.msra.mxu0 %v4350
        %4741 = vmatprep.subr.bf16.mxu0 %v4357
        %4742 = vmatpush1.bf16.msra.mxu0 %v4356
        %4743 = vmatprep.subr.bf16.mxu0 %v4363
        %4744 = vmatpush1.bf16.msra.mxu0 %v4362
        %4745 = vmatprep.subr.bf16.mxu0 %v4369
        %4746 = vmatpush1.bf16.msra.mxu0 %v4368
        %4747 = vmatprep.subr.bf16.mxu0 %v4375
        %4748 = vmatpush1.bf16.msra.mxu0 %v4374
        %4749 = vmatprep.subr.bf16.mxu0 %v4381
        %4750 = vmatpush1.bf16.msra.mxu0 %v4380
        %4751 = vmatprep.subr.bf16.mxu0 %v4387
        %4752 = vmatpush1.bf16.msra.mxu0 %v4386
        %4753 = vmatprep.subr.bf16.mxu0 0
        %4754 = vmatpush1.bf16.msra.mxu0 0
        %4755 = vmatprep.subr.bf16.mxu0 0
        %4756 = vmatpush1.bf16.msra.mxu0 0
        %4757 = vmatprep.subr.bf16.mxu0 0
        %4758 = vmatpush1.bf16.msra.mxu0 0
        %4759 = vmatprep.subr.bf16.mxu0 0
        %4760 = vmatpush1.bf16.msra.mxu0 0
        %4761 = vmatprep.subr.bf16.mxu0 0
        %4762 = vmatpush1.bf16.msra.mxu0 0
        %4763 = vmatprep.subr.bf16.mxu0 0
        %4764 = vmatpush1.bf16.msra.mxu0 0
        %4765 = vmatprep.subr.bf16.mxu0 0
        %4766 = vmatpush1.bf16.msra.mxu0 0
        %4767 = vmatprep.subr.bf16.mxu0 0
        %4768 = vmatpush1.bf16.msra.mxu0 0
        %4769 = vmatprep.mubr.bf16.mxu0 0
        %4770 = vmatmul.mubr.bf16.gmra.mrb[0].mxu0 %v3776
        %v4771 = vpop.f32.mrb[0].mxu0
        %v4772 = vadd.f32 %v4731, %v4771
        %v4773 = vpop.f32.mrb[0].mxu0
        %v4774 = vadd.f32 %v4733, %v4773
        %v4775 = vpop.f32.mrb[0].mxu0
        %v4776 = vpop.f32.mrb[0].mxu0
        %4777 = vdwg.mxu0
        %v4778 = vmul.f32 %v4608, %v4608
        %v4779 = vmul.f32 %v4610, %v4610
        %v4780 = vmul.f32 %v4690, %v4690
        %v4781 = vmul.f32 %v4692, %v4692
        %v4782 = vmul.f32 %v4772, %v4772
        %v4783 = vmul.f32 %v4774, %v4774
        %v4784 = vmul.f32 %v4608, %v4778
        %v4785 = vmul.f32 %v4610, %v4779
        %v4786 = vmul.f32 %v4690, %v4780
        %v4787 = vmul.f32 %v4692, %v4781
        %v4788 = vmul.f32 %v4772, %v4782
        %v4789 = vmul.f32 %v4774, %v4783
        %v4790 = vmul.f32 %v4784, 0.044715
        %v4791 = vmul.f32 %v4785, 0.044715
        %v4792 = vmul.f32 %v4786, 0.044715
        %v4793 = vmul.f32 %v4787, 0.044715
        %v4794 = vmul.f32 %v4788, 0.044715
        %v4795 = vmul.f32 %v4789, 0.044715
        %v4796 = vadd.f32 %v4608, %v4790
        %v4797 = vadd.f32 %v4610, %v4791
        %v4798 = vadd.f32 %v4690, %v4792
        %v4799 = vadd.f32 %v4692, %v4793
        %v4800 = vadd.f32 %v4772, %v4794
        %v4801 = vadd.f32 %v4774, %v4795
        %v4802 = vmul.f32 %v4796, 0.7978846
        %v4803 = vmul.f32 %v4797, 0.7978846
        %v4804 = vmul.f32 %v4798, 0.7978846
        %v4805 = vmul.f32 %v4799, 0.7978846
        %v4806 = vmul.f32 %v4800, 0.7978846
        %v4807 = vmul.f32 %v4801, 0.7978846
        %v4808 = vtanh.pop %v4802
        %v4809 = vtanh.pop %v4803
        %v4810 = vtanh.pop %v4804
        %v4811 = vtanh.pop %v4805
        %v4812 = vtanh.pop %v4806
        %v4813 = vtanh.pop %v4807
        %v4814 = vadd.f32 %v4808, 1.0
        %v4815 = vadd.f32 %v4809, 1.0
        %v4816 = vadd.f32 %v4810, 1.0
        %v4817 = vadd.f32 %v4811, 1.0
        %v4818 = vadd.f32 %v4812, 1.0
        %v4819 = vadd.f32 %v4813, 1.0
        %v4820 = vmul.f32 %v4814, 0.5
        %v4821 = vmul.f32 %v4815, 0.5
        %v4822 = vmul.f32 %v4816, 0.5
        %v4823 = vmul.f32 %v4817, 0.5
        %v4824 = vmul.f32 %v4818, 0.5
        %v4825 = vmul.f32 %v4819, 0.5
        %v4826 = vmul.f32 %v4608, %v4820
        %v4827 = vmul.f32 %v4610, %v4821
        %v4828 = vmul.f32 %v4690, %v4822
        %v4829 = vmul.f32 %v4692, %v4823
        %v4830 = vmul.f32 %v4772, %v4824
        %v4831 = vmul.f32 %v4774, %v4825
        %v4832 = vld [vmem:[#allocation8] sm:$0xff]
        %v4833 = vld [vmem:[#allocation8 + $0x8] sm:$0xf]
        %v4834 = vld [vmem:[#allocation8 + $0xc] sm:$0xff]
        %v4835 = vld [vmem:[#allocation8 + $0x14] sm:$0xf]
        %v4836 = vld [vmem:[#allocation8 + $0x18] sm:$0xff]
        %v4837 = vld [vmem:[#allocation8 + $0x20] sm:$0xf]
        %v4838 = vld [vmem:[#allocation8 + $0x24] sm:$0xff]
        %v4839 = vld [vmem:[#allocation8 + $0x2c] sm:$0xf]
        %v4840 = vld [vmem:[#allocation8 + $0x30] sm:$0xff]
        %v4841 = vld [vmem:[#allocation8 + $0x38] sm:$0xf]
        %v4842 = vld [vmem:[#allocation8 + $0x3c] sm:$0xff]
        %v4843 = vld [vmem:[#allocation8 + $0x44] sm:$0xf]
        %v4844 = vld [vmem:[#allocation8 + $0x48] sm:$0xff]
        %v4845 = vld [vmem:[#allocation8 + $0x50] sm:$0xf]
        %v4846 = vld [vmem:[#allocation8 + $0x54] sm:$0xff]
        %v4847 = vld [vmem:[#allocation8 + $0x5c] sm:$0xf]
        %v4848 = vld [vmem:[#allocation8 + $0x60] sm:$0xff]
        %v4849 = vld [vmem:[#allocation8 + $0x68] sm:$0xf]
        %v4850 = vld [vmem:[#allocation8 + $0x6c] sm:$0xff]
        %v4851 = vld [vmem:[#allocation8 + $0x74] sm:$0xf]
        %v4852 = vld [vmem:[#allocation8 + $0x78] sm:$0xff]
        %v4853 = vld [vmem:[#allocation8 + $0x80] sm:$0xf]
        %v4854 = vld [vmem:[#allocation8 + $0x84] sm:$0xff]
        %v4855 = vld [vmem:[#allocation8 + $0x8c] sm:$0xf]
        %v4856 = vld [vmem:[#allocation8 + $0x90] sm:$0xff]
        %v4857 = vld [vmem:[#allocation8 + $0x98] sm:$0xf]
        %v4858 = vld [vmem:[#allocation8 + $0x9c] sm:$0xff]
        %v4859 = vld [vmem:[#allocation8 + $0xa4] sm:$0xf]
        %v4860 = vld [vmem:[#allocation8 + $0xa8] sm:$0xff]
        %v4861 = vld [vmem:[#allocation8 + $0xb0] sm:$0xf]
        %v4862 = vld [vmem:[#allocation8 + $0xb4] sm:$0xff]
        %v4863 = vld [vmem:[#allocation8 + $0xbc] sm:$0xf]
        %v4864 = vld [vmem:[#allocation8 + $0xc0] sm:$0xff]
        %v4865 = vld [vmem:[#allocation8 + $0xc8] sm:$0xf]
        %v4866 = vld [vmem:[#allocation8 + $0xcc] sm:$0xff]
        %v4867 = vld [vmem:[#allocation8 + $0xd4] sm:$0xf]
        %v4868 = vld [vmem:[#allocation8 + $0xd8] sm:$0xff]
        %v4869 = vld [vmem:[#allocation8 + $0xe0] sm:$0xf]
        %v4870 = vld [vmem:[#allocation8 + $0xe4] sm:$0xff]
        %v4871 = vld [vmem:[#allocation8 + $0xec] sm:$0xf]
        %v4872 = vld [vmem:[#allocation8 + $0xf0] sm:$0xff]
        %v4873 = vld [vmem:[#allocation8 + $0xf8] sm:$0xf]
        %v4874 = vld [vmem:[#allocation8 + $0xfc] sm:$0xff]
        %v4875 = vld [vmem:[#allocation8 + $0x104] sm:$0xf]
        %v4876 = vld [vmem:[#allocation8 + $0x108] sm:$0xff]
        %v4877 = vld [vmem:[#allocation8 + $0x110] sm:$0xf]
        %v4878 = vld [vmem:[#allocation8 + $0x114] sm:$0xff]
        %v4879 = vld [vmem:[#allocation8 + $0x11c] sm:$0xf]
        %v4880 = vld [vmem:[#allocation8 + $0x120] sm:$0xff]
        %v4881 = vld [vmem:[#allocation8 + $0x128] sm:$0xf]
        %v4882 = vld [vmem:[#allocation8 + $0x12c] sm:$0xff]
        %v4883 = vld [vmem:[#allocation8 + $0x134] sm:$0xf]
        %v4884 = vld [vmem:[#allocation8 + $0x138] sm:$0xff]
        %v4885 = vld [vmem:[#allocation8 + $0x140] sm:$0xf]
        %v4886 = vld [vmem:[#allocation8 + $0x144] sm:$0xff]
        %v4887 = vld [vmem:[#allocation8 + $0x14c] sm:$0xf]
        %v4888 = vld [vmem:[#allocation8 + $0x150] sm:$0xff]
        %v4889 = vld [vmem:[#allocation8 + $0x158] sm:$0xf]
        %v4890 = vld [vmem:[#allocation8 + $0x15c] sm:$0xff]
        %v4891 = vld [vmem:[#allocation8 + $0x164] sm:$0xf]
        %v4892 = vld [vmem:[#allocation8 + $0x168] sm:$0xff]
        %v4893 = vld [vmem:[#allocation8 + $0x170] sm:$0xf]
        %v4894 = vld [vmem:[#allocation8 + $0x174] sm:$0xff]
        %v4895 = vld [vmem:[#allocation8 + $0x17c] sm:$0xf]
        %v4896 = vld [vmem:[#allocation8 + $0x180] sm:$0xff]
        %v4897 = vld [vmem:[#allocation8 + $0x188] sm:$0xf]
        %v4898 = vld [vmem:[#allocation8 + $0x18c] sm:$0xff]
        %v4899 = vld [vmem:[#allocation8 + $0x194] sm:$0xf]
        %v4900 = vld [vmem:[#allocation8 + $0x198] sm:$0xff]
        %v4901 = vld [vmem:[#allocation8 + $0x1a0] sm:$0xf]
        %v4902 = vld [vmem:[#allocation8 + $0x1a4] sm:$0xff]
        %v4903 = vld [vmem:[#allocation8 + $0x1ac] sm:$0xf]
        %v4904 = vld [vmem:[#allocation8 + $0x1b0] sm:$0xff]
        %v4905 = vld [vmem:[#allocation8 + $0x1b8] sm:$0xf]
        %v4906 = vld [vmem:[#allocation8 + $0x1bc] sm:$0xff]
        %v4907 = vld [vmem:[#allocation8 + $0x1c4] sm:$0xf]
        %v4908 = vld [vmem:[#allocation8 + $0x1c8] sm:$0xff]
        %v4909 = vld [vmem:[#allocation8 + $0x1d0] sm:$0xf]
        %v4910 = vld [vmem:[#allocation8 + $0x1d4] sm:$0xff]
        %v4911 = vld [vmem:[#allocation8 + $0x1dc] sm:$0xf]
        %v4912 = vld [vmem:[#allocation8 + $0x1e0] sm:$0xff]
        %v4913 = vld [vmem:[#allocation8 + $0x1e8] sm:$0xf]
        %v4914 = vld [vmem:[#allocation8 + $0x1ec] sm:$0xff]
        %v4915 = vld [vmem:[#allocation8 + $0x1f4] sm:$0xf]
        %v4916 = vld [vmem:[#allocation8 + $0x1f8] sm:$0xff]
        %v4917 = vld [vmem:[#allocation8 + $0x200] sm:$0xf]
        %v4918 = vld [vmem:[#allocation8 + $0x204] sm:$0xff]
        %v4919 = vld [vmem:[#allocation8 + $0x20c] sm:$0xf]
        %v4920 = vld [vmem:[#allocation8 + $0x210] sm:$0xff]
        %v4921 = vld [vmem:[#allocation8 + $0x218] sm:$0xf]
        %v4922 = vld [vmem:[#allocation8 + $0x21c] sm:$0xff]
        %v4923 = vld [vmem:[#allocation8 + $0x224] sm:$0xf]
        %v4924 = vld [vmem:[#allocation8 + $0x228] sm:$0xff]
        %v4925 = vld [vmem:[#allocation8 + $0x230] sm:$0xf]
        %v4926 = vld [vmem:[#allocation8 + $0x234] sm:$0xff]
        %v4927 = vld [vmem:[#allocation8 + $0x23c] sm:$0xf]
        %v4928 = vld [vmem:[#allocation8 + $0x240] sm:$0xff]
        %v4929 = vld [vmem:[#allocation8 + $0x248] sm:$0xf]
        %v4930 = vld [vmem:[#allocation8 + $0x24c] sm:$0xff]
        %v4931 = vld [vmem:[#allocation8 + $0x254] sm:$0xf]
        %v4932 = vld [vmem:[#allocation8 + $0x258] sm:$0xff]
        %v4933 = vld [vmem:[#allocation8 + $0x260] sm:$0xf]
        %v4934 = vld [vmem:[#allocation8 + $0x264] sm:$0xff]
        %v4935 = vld [vmem:[#allocation8 + $0x26c] sm:$0xf]
        %v4936 = vld [vmem:[#allocation8 + $0x270] sm:$0xff]
        %v4937 = vld [vmem:[#allocation8 + $0x278] sm:$0xf]
        %v4938 = vld [vmem:[#allocation8 + $0x27c] sm:$0xff]
        %v4939 = vld [vmem:[#allocation8 + $0x284] sm:$0xf]
        %v4940 = vld [vmem:[#allocation8 + $0x288] sm:$0xff]
        %v4941 = vld [vmem:[#allocation8 + $0x290] sm:$0xf]
        %v4942 = vld [vmem:[#allocation8 + $0x294] sm:$0xff]
        %v4943 = vld [vmem:[#allocation8 + $0x29c] sm:$0xf]
        %v4944 = vld [vmem:[#allocation8 + $0x2a0] sm:$0xff]
        %v4945 = vld [vmem:[#allocation8 + $0x2a8] sm:$0xf]
        %v4946 = vld [vmem:[#allocation8 + $0x2ac] sm:$0xff]
        %v4947 = vld [vmem:[#allocation8 + $0x2b4] sm:$0xf]
        %v4948 = vld [vmem:[#allocation8 + $0x2b8] sm:$0xff]
        %v4949 = vld [vmem:[#allocation8 + $0x2c0] sm:$0xf]
        %v4950 = vld [vmem:[#allocation8 + $0x2c4] sm:$0xff]
        %v4951 = vld [vmem:[#allocation8 + $0x2cc] sm:$0xf]
        %v4952 = vld [vmem:[#allocation8 + $0x2d0] sm:$0xff]
        %v4953 = vld [vmem:[#allocation8 + $0x2d8] sm:$0xf]
        %v4954 = vld [vmem:[#allocation8 + $0x2dc] sm:$0xff]
        %v4955 = vld [vmem:[#allocation8 + $0x2e4] sm:$0xf]
        %v4956 = vld [vmem:[#allocation8 + $0x2e8] sm:$0xff]
        %v4957 = vld [vmem:[#allocation8 + $0x2f0] sm:$0xf]
        %v4958 = vld [vmem:[#allocation8 + $0x2f4] sm:$0xff]
        %v4959 = vld [vmem:[#allocation8 + $0x2fc] sm:$0xf]
        %v4960 = vld [vmem:[#allocation8 + $0x300] sm:$0xff]
        %v4961 = vld [vmem:[#allocation8 + $0x308] sm:$0xf]
        %v4962 = vld [vmem:[#allocation8 + $0x30c] sm:$0xff]
        %v4963 = vld [vmem:[#allocation8 + $0x314] sm:$0xf]
        %v4964 = vld [vmem:[#allocation8 + $0x318] sm:$0xff]
        %v4965 = vld [vmem:[#allocation8 + $0x320] sm:$0xf]
        %v4966 = vld [vmem:[#allocation8 + $0x324] sm:$0xff]
        %v4967 = vld [vmem:[#allocation8 + $0x32c] sm:$0xf]
        %v4968 = vld [vmem:[#allocation8 + $0x330] sm:$0xff]
        %v4969 = vld [vmem:[#allocation8 + $0x338] sm:$0xf]
        %v4970 = vld [vmem:[#allocation8 + $0x33c] sm:$0xff]
        %v4971 = vld [vmem:[#allocation8 + $0x344] sm:$0xf]
        %v4972 = vld [vmem:[#allocation8 + $0x348] sm:$0xff]
        %v4973 = vld [vmem:[#allocation8 + $0x350] sm:$0xf]
        %v4974 = vld [vmem:[#allocation8 + $0x354] sm:$0xff]
        %v4975 = vld [vmem:[#allocation8 + $0x35c] sm:$0xf]
        %v4976 = vld [vmem:[#allocation8 + $0x360] sm:$0xff]
        %v4977 = vld [vmem:[#allocation8 + $0x368] sm:$0xf]
        %v4978 = vld [vmem:[#allocation8 + $0x36c] sm:$0xff]
        %v4979 = vld [vmem:[#allocation8 + $0x374] sm:$0xf]
        %v4980 = vld [vmem:[#allocation8 + $0x378] sm:$0xff]
        %v4981 = vld [vmem:[#allocation8 + $0x380] sm:$0xf]
        %v4982 = vld [vmem:[#allocation8 + $0x384] sm:$0xff]
        %v4983 = vld [vmem:[#allocation8 + $0x38c] sm:$0xf]
        %v4984 = vld [vmem:[#allocation8 + $0x390] sm:$0xff]
        %v4985 = vld [vmem:[#allocation8 + $0x398] sm:$0xf]
        %v4986 = vld [vmem:[#allocation8 + $0x39c] sm:$0xff]
        %v4987 = vld [vmem:[#allocation8 + $0x3a4] sm:$0xf]
        %v4988 = vld [vmem:[#allocation8 + $0x3a8] sm:$0xff]
        %v4989 = vld [vmem:[#allocation8 + $0x3b0] sm:$0xf]
        %v4990 = vld [vmem:[#allocation8 + $0x3b4] sm:$0xff]
        %v4991 = vld [vmem:[#allocation8 + $0x3bc] sm:$0xf]
        %v4992 = vld [vmem:[#allocation8 + $0x3c0] sm:$0xff]
        %v4993 = vld [vmem:[#allocation8 + $0x3c8] sm:$0xf]
        %v4994 = vld [vmem:[#allocation8 + $0x3cc] sm:$0xff]
        %v4995 = vld [vmem:[#allocation8 + $0x3d4] sm:$0xf]
        %v4996 = vld [vmem:[#allocation8 + $0x3d8] sm:$0xff]
        %v4997 = vld [vmem:[#allocation8 + $0x3e0] sm:$0xf]
        %v4998 = vld [vmem:[#allocation8 + $0x3e4] sm:$0xff]
        %v4999 = vld [vmem:[#allocation8 + $0x3ec] sm:$0xf]
        %v5000 = vld [vmem:[#allocation8 + $0x3f0] sm:$0xff]
        %v5001 = vld [vmem:[#allocation8 + $0x3f8] sm:$0xf]
        %v5002 = vld [vmem:[#allocation8 + $0x3fc] sm:$0xff]
        %v5003 = vld [vmem:[#allocation8 + $0x404] sm:$0xf]
        %v5004 = vld [vmem:[#allocation8 + $0x408] sm:$0xff]
        %v5005 = vld [vmem:[#allocation8 + $0x410] sm:$0xf]
        %v5006 = vld [vmem:[#allocation8 + $0x414] sm:$0xff]
        %v5007 = vld [vmem:[#allocation8 + $0x41c] sm:$0xf]
        %v5008 = vld [vmem:[#allocation8 + $0x420] sm:$0xff]
        %v5009 = vld [vmem:[#allocation8 + $0x428] sm:$0xf]
        %v5010 = vld [vmem:[#allocation8 + $0x42c] sm:$0xff]
        %v5011 = vld [vmem:[#allocation8 + $0x434] sm:$0xf]
        %v5012 = vld [vmem:[#allocation8 + $0x438] sm:$0xff]
        %v5013 = vld [vmem:[#allocation8 + $0x440] sm:$0xf]
        %v5014 = vld [vmem:[#allocation8 + $0x444] sm:$0xff]
        %v5015 = vld [vmem:[#allocation8 + $0x44c] sm:$0xf]
        %v5016 = vld [vmem:[#allocation8 + $0x450] sm:$0xff]
        %v5017 = vld [vmem:[#allocation8 + $0x458] sm:$0xf]
        %v5018 = vld [vmem:[#allocation8 + $0x45c] sm:$0xff]
        %v5019 = vld [vmem:[#allocation8 + $0x464] sm:$0xf]
        %v5020 = vld [vmem:[#allocation8 + $0x468] sm:$0xff]
        %v5021 = vld [vmem:[#allocation8 + $0x470] sm:$0xf]
        %v5022 = vld [vmem:[#allocation8 + $0x474] sm:$0xff]
        %v5023 = vld [vmem:[#allocation8 + $0x47c] sm:$0xf]
        %v5024 = vpack.c.bf16 %v4826, %v4826
        %v5025 = vpack.c.bf16 %v4827, %v4827
        %v5026 = vpack.c.bf16 %v4828, %v4828
        %v5027 = vpack.c.bf16 %v4829, %v4829
        %v5028 = vpack.c.bf16 %v4830, %v4830
        %v5029 = vpack.c.bf16 %v4831, %v4831
        %s5030 = scalar_lea.vmem [#allocation3], 7
        %v5031 = vld [vmem:[%s5030] ss:$8 sm:$0x7]
        %v5033 = vlaneseq
        %v5034 = vshrl.u32 %v5033, 7
        %v5035 = vsub.s32 0, %v5034
        %v5036 = vrot.slane %v5031, %v5035
        %v5037 = vlaneseq
        %v5038 = vshrl.u32 %v5037, 7
        %v5039 = vsub.s32 1, %v5038
        %v5040 = vrot.slane %v5031, %v5039
        %v5041 = vlaneseq
        %v5042 = vshrl.u32 %v5041, 7
        %v5043 = vsub.s32 2, %v5042
        %v5044 = vrot.slane %v5031, %v5043
        %v5240 = vunpack.c.l.b16 %v4832
        %v5241 = vunpack.c.h.b16 %v4832
        %v5242 = vunpack.c.l.b16 %v4833
        %v5243 = vunpack.c.l.b16 %v4834
        %v5244 = vunpack.c.h.b16 %v4834
        %v5245 = vunpack.c.l.b16 %v4835
        %v5246 = vunpack.c.l.b16 %v4836
        %v5247 = vunpack.c.h.b16 %v4836
        %v5248 = vunpack.c.l.b16 %v4837
        %v5249 = vunpack.c.l.b16 %v4838
        %v5250 = vunpack.c.h.b16 %v4838
        %v5251 = vunpack.c.l.b16 %v4839
        %v5252 = vunpack.c.l.b16 %v4840
        %v5253 = vunpack.c.h.b16 %v4840
        %v5254 = vunpack.c.l.b16 %v4841
        %v5255 = vunpack.c.l.b16 %v4842
        %v5256 = vunpack.c.h.b16 %v4842
        %v5257 = vunpack.c.l.b16 %v4843
        %v5258 = vunpack.c.l.b16 %v4844
        %v5259 = vunpack.c.h.b16 %v4844
        %v5260 = vunpack.c.l.b16 %v4845
        %v5261 = vunpack.c.l.b16 %v4846
        %v5262 = vunpack.c.h.b16 %v4846
        %v5263 = vunpack.c.l.b16 %v4847
        %v5264 = vunpack.c.l.b16 %v4848
        %v5265 = vunpack.c.h.b16 %v4848
        %v5266 = vunpack.c.l.b16 %v4849
        %v5267 = vunpack.c.l.b16 %v4850
        %v5268 = vunpack.c.h.b16 %v4850
        %v5269 = vunpack.c.l.b16 %v4851
        %v5270 = vunpack.c.l.b16 %v4852
        %v5271 = vunpack.c.h.b16 %v4852
        %v5272 = vunpack.c.l.b16 %v4853
        %v5273 = vunpack.c.l.b16 %v4854
        %v5274 = vunpack.c.h.b16 %v4854
        %v5275 = vunpack.c.l.b16 %v4855
        %v5276 = vunpack.c.l.b16 %v4856
        %v5277 = vunpack.c.h.b16 %v4856
        %v5278 = vunpack.c.l.b16 %v4857
        %v5279 = vunpack.c.l.b16 %v4858
        %v5280 = vunpack.c.h.b16 %v4858
        %v5281 = vunpack.c.l.b16 %v4859
        %v5282 = vunpack.c.l.b16 %v4860
        %v5283 = vunpack.c.h.b16 %v4860
        %v5284 = vunpack.c.l.b16 %v4861
        %v5285 = vunpack.c.l.b16 %v4862
        %v5286 = vunpack.c.h.b16 %v4862
        %v5287 = vunpack.c.l.b16 %v4863
        %v5288 = vunpack.c.l.b16 %v4864
        %v5289 = vunpack.c.h.b16 %v4864
        %v5290 = vunpack.c.l.b16 %v4865
        %v5291 = vunpack.c.l.b16 %v4866
        %v5292 = vunpack.c.h.b16 %v4866
        %v5293 = vunpack.c.l.b16 %v4867
        %v5294 = vunpack.c.l.b16 %v4868
        %v5295 = vunpack.c.h.b16 %v4868
        %v5296 = vunpack.c.l.b16 %v4869
        %v5297 = vunpack.c.l.b16 %v4870
        %v5298 = vunpack.c.h.b16 %v4870
        %v5299 = vunpack.c.l.b16 %v4871
        %v5300 = vunpack.c.l.b16 %v4872
        %v5301 = vunpack.c.h.b16 %v4872
        %v5302 = vunpack.c.l.b16 %v4873
        %v5303 = vunpack.c.l.b16 %v4874
        %v5304 = vunpack.c.h.b16 %v4874
        %v5305 = vunpack.c.l.b16 %v4875
        %v5306 = vunpack.c.l.b16 %v4876
        %v5307 = vunpack.c.h.b16 %v4876
        %v5308 = vunpack.c.l.b16 %v4877
        %v5309 = vunpack.c.l.b16 %v4878
        %v5310 = vunpack.c.h.b16 %v4878
        %v5311 = vunpack.c.l.b16 %v4879
        %v5312 = vunpack.c.l.b16 %v4880
        %v5313 = vunpack.c.h.b16 %v4880
        %v5314 = vunpack.c.l.b16 %v4881
        %v5315 = vunpack.c.l.b16 %v4882
        %v5316 = vunpack.c.h.b16 %v4882
        %v5317 = vunpack.c.l.b16 %v4883
        %v5318 = vunpack.c.l.b16 %v4884
        %v5319 = vunpack.c.h.b16 %v4884
        %v5320 = vunpack.c.l.b16 %v4885
        %v5321 = vunpack.c.l.b16 %v4886
        %v5322 = vunpack.c.h.b16 %v4886
        %v5323 = vunpack.c.l.b16 %v4887
        %v5324 = vunpack.c.l.b16 %v4888
        %v5325 = vunpack.c.h.b16 %v4888
        %v5326 = vunpack.c.l.b16 %v4889
        %v5327 = vunpack.c.l.b16 %v4890
        %v5328 = vunpack.c.h.b16 %v4890
        %v5329 = vunpack.c.l.b16 %v4891
        %v5330 = vunpack.c.l.b16 %v4892
        %v5331 = vunpack.c.h.b16 %v4892
        %v5332 = vunpack.c.l.b16 %v4893
        %v5333 = vunpack.c.l.b16 %v4894
        %v5334 = vunpack.c.h.b16 %v4894
        %v5335 = vunpack.c.l.b16 %v4895
        %v5336 = vunpack.c.l.b16 %v4896
        %v5337 = vunpack.c.h.b16 %v4896
        %v5338 = vunpack.c.l.b16 %v4897
        %v5339 = vunpack.c.l.b16 %v4898
        %v5340 = vunpack.c.h.b16 %v4898
        %v5341 = vunpack.c.l.b16 %v4899
        %v5342 = vunpack.c.l.b16 %v4900
        %v5343 = vunpack.c.h.b16 %v4900
        %v5344 = vunpack.c.l.b16 %v4901
        %v5345 = vunpack.c.l.b16 %v4902
        %v5346 = vunpack.c.h.b16 %v4902
        %v5347 = vunpack.c.l.b16 %v4903
        %v5348 = vunpack.c.l.b16 %v4904
        %v5349 = vunpack.c.h.b16 %v4904
        %v5350 = vunpack.c.l.b16 %v4905
        %v5351 = vunpack.c.l.b16 %v4906
        %v5352 = vunpack.c.h.b16 %v4906
        %v5353 = vunpack.c.l.b16 %v4907
        %v5354 = vunpack.c.l.b16 %v4908
        %v5355 = vunpack.c.h.b16 %v4908
        %v5356 = vunpack.c.l.b16 %v4909
        %v5357 = vunpack.c.l.b16 %v4910
        %v5358 = vunpack.c.h.b16 %v4910
        %v5359 = vunpack.c.l.b16 %v4911
        %v5360 = vunpack.c.l.b16 %v4912
        %v5361 = vunpack.c.h.b16 %v4912
        %v5362 = vunpack.c.l.b16 %v4913
        %v5363 = vunpack.c.l.b16 %v4914
        %v5364 = vunpack.c.h.b16 %v4914
        %v5365 = vunpack.c.l.b16 %v4915
        %v5366 = vunpack.c.l.b16 %v4916
        %v5367 = vunpack.c.h.b16 %v4916
        %v5368 = vunpack.c.l.b16 %v4917
        %v5369 = vunpack.c.l.b16 %v4918
        %v5370 = vunpack.c.h.b16 %v4918
        %v5371 = vunpack.c.l.b16 %v4919
        %v5372 = vunpack.c.l.b16 %v4920
        %v5373 = vunpack.c.h.b16 %v4920
        %v5374 = vunpack.c.l.b16 %v4921
        %v5375 = vunpack.c.l.b16 %v4922
        %v5376 = vunpack.c.h.b16 %v4922
        %v5377 = vunpack.c.l.b16 %v4923
        %v5378 = vunpack.c.l.b16 %v4924
        %v5379 = vunpack.c.h.b16 %v4924
        %v5380 = vunpack.c.l.b16 %v4925
        %v5381 = vunpack.c.l.b16 %v4926
        %v5382 = vunpack.c.h.b16 %v4926
        %v5383 = vunpack.c.l.b16 %v4927
        %v5384 = vunpack.c.l.b16 %v4928
        %v5385 = vunpack.c.h.b16 %v4928
        %v5386 = vunpack.c.l.b16 %v4929
        %v5387 = vunpack.c.l.b16 %v4930
        %v5388 = vunpack.c.h.b16 %v4930
        %v5389 = vunpack.c.l.b16 %v4931
        %v5390 = vunpack.c.l.b16 %v4932
        %v5391 = vunpack.c.h.b16 %v4932
        %v5392 = vunpack.c.l.b16 %v4933
        %v5393 = vunpack.c.l.b16 %v4934
        %v5394 = vunpack.c.h.b16 %v4934
        %v5395 = vunpack.c.l.b16 %v4935
        %v5396 = vunpack.c.l.b16 %v4936
        %v5397 = vunpack.c.h.b16 %v4936
        %v5398 = vunpack.c.l.b16 %v4937
        %v5399 = vunpack.c.l.b16 %v4938
        %v5400 = vunpack.c.h.b16 %v4938
        %v5401 = vunpack.c.l.b16 %v4939
        %v5402 = vunpack.c.l.b16 %v4940
        %v5403 = vunpack.c.h.b16 %v4940
        %v5404 = vunpack.c.l.b16 %v4941
        %v5405 = vunpack.c.l.b16 %v4942
        %v5406 = vunpack.c.h.b16 %v4942
        %v5407 = vunpack.c.l.b16 %v4943
        %v5408 = vunpack.c.l.b16 %v4944
        %v5409 = vunpack.c.h.b16 %v4944
        %v5410 = vunpack.c.l.b16 %v4945
        %v5411 = vunpack.c.l.b16 %v4946
        %v5412 = vunpack.c.h.b16 %v4946
        %v5413 = vunpack.c.l.b16 %v4947
        %v5414 = vunpack.c.l.b16 %v4948
        %v5415 = vunpack.c.h.b16 %v4948
        %v5416 = vunpack.c.l.b16 %v4949
        %v5417 = vunpack.c.l.b16 %v4950
        %v5418 = vunpack.c.h.b16 %v4950
        %v5419 = vunpack.c.l.b16 %v4951
        %v5420 = vunpack.c.l.b16 %v4952
        %v5421 = vunpack.c.h.b16 %v4952
        %v5422 = vunpack.c.l.b16 %v4953
        %v5423 = vunpack.c.l.b16 %v4954
        %v5424 = vunpack.c.h.b16 %v4954
        %v5425 = vunpack.c.l.b16 %v4955
        %v5426 = vunpack.c.l.b16 %v4956
        %v5427 = vunpack.c.h.b16 %v4956
        %v5428 = vunpack.c.l.b16 %v4957
        %v5429 = vunpack.c.l.b16 %v4958
        %v5430 = vunpack.c.h.b16 %v4958
        %v5431 = vunpack.c.l.b16 %v4959
        %v5432 = vunpack.c.l.b16 %v4960
        %v5433 = vunpack.c.h.b16 %v4960
        %v5434 = vunpack.c.l.b16 %v4961
        %v5435 = vunpack.c.l.b16 %v4962
        %v5436 = vunpack.c.h.b16 %v4962
        %v5437 = vunpack.c.l.b16 %v4963
        %v5438 = vunpack.c.l.b16 %v4964
        %v5439 = vunpack.c.h.b16 %v4964
        %v5440 = vunpack.c.l.b16 %v4965
        %v5441 = vunpack.c.l.b16 %v4966
        %v5442 = vunpack.c.h.b16 %v4966
        %v5443 = vunpack.c.l.b16 %v4967
        %v5444 = vunpack.c.l.b16 %v4968
        %v5445 = vunpack.c.h.b16 %v4968
        %v5446 = vunpack.c.l.b16 %v4969
        %v5447 = vunpack.c.l.b16 %v4970
        %v5448 = vunpack.c.h.b16 %v4970
        %v5449 = vunpack.c.l.b16 %v4971
        %v5450 = vunpack.c.l.b16 %v4972
        %v5451 = vunpack.c.h.b16 %v4972
        %v5452 = vunpack.c.l.b16 %v4973
        %v5453 = vunpack.c.l.b16 %v4974
        %v5454 = vunpack.c.h.b16 %v4974
        %v5455 = vunpack.c.l.b16 %v4975
        %v5456 = vunpack.c.l.b16 %v4976
        %v5457 = vunpack.c.h.b16 %v4976
        %v5458 = vunpack.c.l.b16 %v4977
        %v5459 = vunpack.c.l.b16 %v4978
        %v5460 = vunpack.c.h.b16 %v4978
        %v5461 = vunpack.c.l.b16 %v4979
        %v5462 = vunpack.c.l.b16 %v4980
        %v5463 = vunpack.c.h.b16 %v4980
        %v5464 = vunpack.c.l.b16 %v4981
        %v5465 = vunpack.c.l.b16 %v4982
        %v5466 = vunpack.c.h.b16 %v4982
        %v5467 = vunpack.c.l.b16 %v4983
        %v5468 = vunpack.c.l.b16 %v4984
        %v5469 = vunpack.c.h.b16 %v4984
        %v5470 = vunpack.c.l.b16 %v4985
        %v5471 = vunpack.c.l.b16 %v4986
        %v5472 = vunpack.c.h.b16 %v4986
        %v5473 = vunpack.c.l.b16 %v4987
        %v5474 = vunpack.c.l.b16 %v4988
        %v5475 = vunpack.c.h.b16 %v4988
        %v5476 = vunpack.c.l.b16 %v4989
        %v5477 = vunpack.c.l.b16 %v4990
        %v5478 = vunpack.c.h.b16 %v4990
        %v5479 = vunpack.c.l.b16 %v4991
        %v5480 = vunpack.c.l.b16 %v4992
        %v5481 = vunpack.c.h.b16 %v4992
        %v5482 = vunpack.c.l.b16 %v4993
        %v5483 = vunpack.c.l.b16 %v4994
        %v5484 = vunpack.c.h.b16 %v4994
        %v5485 = vunpack.c.l.b16 %v4995
        %v5486 = vunpack.c.l.b16 %v4996
        %v5487 = vunpack.c.h.b16 %v4996
        %v5488 = vunpack.c.l.b16 %v4997
        %v5489 = vunpack.c.l.b16 %v4998
        %v5490 = vunpack.c.h.b16 %v4998
        %v5491 = vunpack.c.l.b16 %v4999
        %v5492 = vunpack.c.l.b16 %v5000
        %v5493 = vunpack.c.h.b16 %v5000
        %v5494 = vunpack.c.l.b16 %v5001
        %v5495 = vunpack.c.l.b16 %v5002
        %v5496 = vunpack.c.h.b16 %v5002
        %v5497 = vunpack.c.l.b16 %v5003
        %v5498 = vunpack.c.l.b16 %v5004
        %v5499 = vunpack.c.h.b16 %v5004
        %v5500 = vunpack.c.l.b16 %v5005
        %v5501 = vunpack.c.l.b16 %v5006
        %v5502 = vunpack.c.h.b16 %v5006
        %v5503 = vunpack.c.l.b16 %v5007
        %v5504 = vunpack.c.l.b16 %v5008
        %v5505 = vunpack.c.h.b16 %v5008
        %v5506 = vunpack.c.l.b16 %v5009
        %v5507 = vunpack.c.l.b16 %v5010
        %v5508 = vunpack.c.h.b16 %v5010
        %v5509 = vunpack.c.l.b16 %v5011
        %v5510 = vunpack.c.l.b16 %v5012
        %v5511 = vunpack.c.h.b16 %v5012
        %v5512 = vunpack.c.l.b16 %v5013
        %v5513 = vunpack.c.l.b16 %v5014
        %v5514 = vunpack.c.h.b16 %v5014
        %v5515 = vunpack.c.l.b16 %v5015
        %v5516 = vunpack.c.l.b16 %v5016
        %v5517 = vunpack.c.h.b16 %v5016
        %v5518 = vunpack.c.l.b16 %v5017
        %v5519 = vunpack.c.l.b16 %v5018
        %v5520 = vunpack.c.h.b16 %v5018
        %v5521 = vunpack.c.l.b16 %v5019
        %v5522 = vunpack.c.l.b16 %v5020
        %v5523 = vunpack.c.h.b16 %v5020
        %v5524 = vunpack.c.l.b16 %v5021
        %v5525 = vunpack.c.l.b16 %v5022
        %v5526 = vunpack.c.h.b16 %v5022
        %v5527 = vunpack.c.l.b16 %v5023
        %v5528 = vpack.c.b16 %v5243, %v5240
        %v5529 = vpack.c.b16 %v5244, %v5241
        %v5530 = vpack.c.b16 %v5245, %v5242
        %v5531 = vpack.c.b16 %v5249, %v5246
        %v5532 = vpack.c.b16 %v5250, %v5247
        %v5533 = vpack.c.b16 %v5251, %v5248
        %v5534 = vpack.c.b16 %v5255, %v5252
        %v5535 = vpack.c.b16 %v5256, %v5253
        %v5536 = vpack.c.b16 %v5257, %v5254
        %v5537 = vpack.c.b16 %v5261, %v5258
        %v5538 = vpack.c.b16 %v5262, %v5259
        %v5539 = vpack.c.b16 %v5263, %v5260
        %v5540 = vpack.c.b16 %v5267, %v5264
        %v5541 = vpack.c.b16 %v5268, %v5265
        %v5542 = vpack.c.b16 %v5269, %v5266
        %v5543 = vpack.c.b16 %v5273, %v5270
        %v5544 = vpack.c.b16 %v5274, %v5271
        %v5545 = vpack.c.b16 %v5275, %v5272
        %v5546 = vpack.c.b16 %v5279, %v5276
        %v5547 = vpack.c.b16 %v5280, %v5277
        %v5548 = vpack.c.b16 %v5281, %v5278
        %v5549 = vpack.c.b16 %v5285, %v5282
        %v5550 = vpack.c.b16 %v5286, %v5283
        %v5551 = vpack.c.b16 %v5287, %v5284
        %v5552 = vpack.c.b16 %v5291, %v5288
        %v5553 = vpack.c.b16 %v5292, %v5289
        %v5554 = vpack.c.b16 %v5293, %v5290
        %v5555 = vpack.c.b16 %v5297, %v5294
        %v5556 = vpack.c.b16 %v5298, %v5295
        %v5557 = vpack.c.b16 %v5299, %v5296
        %v5558 = vpack.c.b16 %v5303, %v5300
        %v5559 = vpack.c.b16 %v5304, %v5301
        %v5560 = vpack.c.b16 %v5305, %v5302
        %v5561 = vpack.c.b16 %v5309, %v5306
        %v5562 = vpack.c.b16 %v5310, %v5307
        %v5563 = vpack.c.b16 %v5311, %v5308
        %v5564 = vpack.c.b16 %v5315, %v5312
        %v5565 = vpack.c.b16 %v5316, %v5313
        %v5566 = vpack.c.b16 %v5317, %v5314
        %v5567 = vpack.c.b16 %v5321, %v5318
        %v5568 = vpack.c.b16 %v5322, %v5319
        %v5569 = vpack.c.b16 %v5323, %v5320
        %v5570 = vpack.c.b16 %v5327, %v5324
        %v5571 = vpack.c.b16 %v5328, %v5325
        %v5572 = vpack.c.b16 %v5329, %v5326
        %v5573 = vpack.c.b16 %v5333, %v5330
        %v5574 = vpack.c.b16 %v5334, %v5331
        %v5575 = vpack.c.b16 %v5335, %v5332
        %v5576 = vpack.c.b16 %v5339, %v5336
        %v5577 = vpack.c.b16 %v5340, %v5337
        %v5578 = vpack.c.b16 %v5341, %v5338
        %v5579 = vpack.c.b16 %v5345, %v5342
        %v5580 = vpack.c.b16 %v5346, %v5343
        %v5581 = vpack.c.b16 %v5347, %v5344
        %v5582 = vpack.c.b16 %v5351, %v5348
        %v5583 = vpack.c.b16 %v5352, %v5349
        %v5584 = vpack.c.b16 %v5353, %v5350
        %v5585 = vpack.c.b16 %v5357, %v5354
        %v5586 = vpack.c.b16 %v5358, %v5355
        %v5587 = vpack.c.b16 %v5359, %v5356
        %v5588 = vpack.c.b16 %v5363, %v5360
        %v5589 = vpack.c.b16 %v5364, %v5361
        %v5590 = vpack.c.b16 %v5365, %v5362
        %v5591 = vpack.c.b16 %v5369, %v5366
        %v5592 = vpack.c.b16 %v5370, %v5367
        %v5593 = vpack.c.b16 %v5371, %v5368
        %v5594 = vpack.c.b16 %v5375, %v5372
        %v5595 = vpack.c.b16 %v5376, %v5373
        %v5596 = vpack.c.b16 %v5377, %v5374
        %v5597 = vpack.c.b16 %v5381, %v5378
        %v5598 = vpack.c.b16 %v5382, %v5379
        %v5599 = vpack.c.b16 %v5383, %v5380
        %v5600 = vpack.c.b16 %v5387, %v5384
        %v5601 = vpack.c.b16 %v5388, %v5385
        %v5602 = vpack.c.b16 %v5389, %v5386
        %v5603 = vpack.c.b16 %v5393, %v5390
        %v5604 = vpack.c.b16 %v5394, %v5391
        %v5605 = vpack.c.b16 %v5395, %v5392
        %v5606 = vpack.c.b16 %v5399, %v5396
        %v5607 = vpack.c.b16 %v5400, %v5397
        %v5608 = vpack.c.b16 %v5401, %v5398
        %v5609 = vpack.c.b16 %v5405, %v5402
        %v5610 = vpack.c.b16 %v5406, %v5403
        %v5611 = vpack.c.b16 %v5407, %v5404
        %v5612 = vpack.c.b16 %v5411, %v5408
        %v5613 = vpack.c.b16 %v5412, %v5409
        %v5614 = vpack.c.b16 %v5413, %v5410
        %v5615 = vpack.c.b16 %v5417, %v5414
        %v5616 = vpack.c.b16 %v5418, %v5415
        %v5617 = vpack.c.b16 %v5419, %v5416
        %v5618 = vpack.c.b16 %v5423, %v5420
        %v5619 = vpack.c.b16 %v5424, %v5421
        %v5620 = vpack.c.b16 %v5425, %v5422
        %v5621 = vpack.c.b16 %v5429, %v5426
        %v5622 = vpack.c.b16 %v5430, %v5427
        %v5623 = vpack.c.b16 %v5431, %v5428
        %v5624 = vpack.c.b16 %v5435, %v5432
        %v5625 = vpack.c.b16 %v5436, %v5433
        %v5626 = vpack.c.b16 %v5437, %v5434
        %v5627 = vpack.c.b16 %v5441, %v5438
        %v5628 = vpack.c.b16 %v5442, %v5439
        %v5629 = vpack.c.b16 %v5443, %v5440
        %v5630 = vpack.c.b16 %v5447, %v5444
        %v5631 = vpack.c.b16 %v5448, %v5445
        %v5632 = vpack.c.b16 %v5449, %v5446
        %v5633 = vpack.c.b16 %v5453, %v5450
        %v5634 = vpack.c.b16 %v5454, %v5451
        %v5635 = vpack.c.b16 %v5455, %v5452
        %v5636 = vpack.c.b16 %v5459, %v5456
        %v5637 = vpack.c.b16 %v5460, %v5457
        %v5638 = vpack.c.b16 %v5461, %v5458
        %v5639 = vpack.c.b16 %v5465, %v5462
        %v5640 = vpack.c.b16 %v5466, %v5463
        %v5641 = vpack.c.b16 %v5467, %v5464
        %v5642 = vpack.c.b16 %v5471, %v5468
        %v5643 = vpack.c.b16 %v5472, %v5469
        %v5644 = vpack.c.b16 %v5473, %v5470
        %v5645 = vpack.c.b16 %v5477, %v5474
        %v5646 = vpack.c.b16 %v5478, %v5475
        %v5647 = vpack.c.b16 %v5479, %v5476
        %v5648 = vpack.c.b16 %v5483, %v5480
        %v5649 = vpack.c.b16 %v5484, %v5481
        %v5650 = vpack.c.b16 %v5485, %v5482
        %v5651 = vpack.c.b16 %v5489, %v5486
        %v5652 = vpack.c.b16 %v5490, %v5487
        %v5653 = vpack.c.b16 %v5491, %v5488
        %v5654 = vpack.c.b16 %v5495, %v5492
        %v5655 = vpack.c.b16 %v5496, %v5493
        %v5656 = vpack.c.b16 %v5497, %v5494
        %v5657 = vpack.c.b16 %v5501, %v5498
        %v5658 = vpack.c.b16 %v5502, %v5499
        %v5659 = vpack.c.b16 %v5503, %v5500
        %v5660 = vpack.c.b16 %v5507, %v5504
        %v5661 = vpack.c.b16 %v5508, %v5505
        %v5662 = vpack.c.b16 %v5509, %v5506
        %v5663 = vpack.c.b16 %v5513, %v5510
        %v5664 = vpack.c.b16 %v5514, %v5511
        %v5665 = vpack.c.b16 %v5515, %v5512
        %v5666 = vpack.c.b16 %v5519, %v5516
        %v5667 = vpack.c.b16 %v5520, %v5517
        %v5668 = vpack.c.b16 %v5521, %v5518
        %v5669 = vpack.c.b16 %v5525, %v5522
        %v5670 = vpack.c.b16 %v5526, %v5523
        %v5671 = vpack.c.b16 %v5527, %v5524
        %5816 = vmatprep.subr.bf16.mxu0 %v5529
        %5817 = vmatpush1.bf16.msra.mxu0 %v5528
        %5818 = vmatprep.subr.bf16.mxu0 %v5532
        %5819 = vmatpush1.bf16.msra.mxu0 %v5531
        %5820 = vmatprep.subr.bf16.mxu0 %v5535
        %5821 = vmatpush1.bf16.msra.mxu0 %v5534
        %5822 = vmatprep.subr.bf16.mxu0 %v5538
        %5823 = vmatpush1.bf16.msra.mxu0 %v5537
        %5824 = vmatprep.subr.bf16.mxu0 %v5541
        %5825 = vmatpush1.bf16.msra.mxu0 %v5540
        %5826 = vmatprep.subr.bf16.mxu0 %v5544
        %5827 = vmatpush1.bf16.msra.mxu0 %v5543
        %5828 = vmatprep.subr.bf16.mxu0 %v5547
        %5829 = vmatpush1.bf16.msra.mxu0 %v5546
        %5830 = vmatprep.subr.bf16.mxu0 %v5550
        %5831 = vmatpush1.bf16.msra.mxu0 %v5549
        %5832 = vmatprep.subr.bf16.mxu0 %v5553
        %5833 = vmatpush1.bf16.msra.mxu0 %v5552
        %5834 = vmatprep.subr.bf16.mxu0 %v5556
        %5835 = vmatpush1.bf16.msra.mxu0 %v5555
        %5836 = vmatprep.subr.bf16.mxu0 %v5559
        %5837 = vmatpush1.bf16.msra.mxu0 %v5558
        %5838 = vmatprep.subr.bf16.mxu0 %v5562
        %5839 = vmatpush1.bf16.msra.mxu0 %v5561
        %5840 = vmatprep.subr.bf16.mxu0 %v5565
        %5841 = vmatpush1.bf16.msra.mxu0 %v5564
        %5842 = vmatprep.subr.bf16.mxu0 %v5568
        %5843 = vmatpush1.bf16.msra.mxu0 %v5567
        %5844 = vmatprep.subr.bf16.mxu0 %v5571
        %5845 = vmatpush1.bf16.msra.mxu0 %v5570
        %5846 = vmatprep.subr.bf16.mxu0 %v5574
        %5847 = vmatpush1.bf16.msra.mxu0 %v5573
        %5848 = vmatprep.mubr.bf16.mxu0 %v5025
        %5849 = vmatmul.mubr.bf16.gmra.mrb[0].mxu0 %v5024
        %v5850 = vpop.f32.mrb[0].mxu0
        %v5851 = vadd.f32 %v5036, %v5850
        %v5852 = vpop.f32.mrb[0].mxu0
        %v5853 = vadd.f32 %v5040, %v5852
        %v5854 = vpop.f32.mrb[0].mxu0
        %v5855 = vpop.f32.mrb[0].mxu0
        %5856 = vdwg.mxu0
        %5857 = vmatprep.subr.bf16.mxu0 %v5577
        %5858 = vmatpush1.bf16.msra.mxu0 %v5576
        %5859 = vmatprep.subr.bf16.mxu0 %v5580
        %5860 = vmatpush1.bf16.msra.mxu0 %v5579
        %5861 = vmatprep.subr.bf16.mxu0 %v5583
        %5862 = vmatpush1.bf16.msra.mxu0 %v5582
        %5863 = vmatprep.subr.bf16.mxu0 %v5586
        %5864 = vmatpush1.bf16.msra.mxu0 %v5585
        %5865 = vmatprep.subr.bf16.mxu0 %v5589
        %5866 = vmatpush1.bf16.msra.mxu0 %v5588
        %5867 = vmatprep.subr.bf16.mxu0 %v5592
        %5868 = vmatpush1.bf16.msra.mxu0 %v5591
        %5869 = vmatprep.subr.bf16.mxu0 %v5595
        %5870 = vmatpush1.bf16.msra.mxu0 %v5594
        %5871 = vmatprep.subr.bf16.mxu0 %v5598
        %5872 = vmatpush1.bf16.msra.mxu0 %v5597
        %5873 = vmatprep.subr.bf16.mxu0 %v5601
        %5874 = vmatpush1.bf16.msra.mxu0 %v5600
        %5875 = vmatprep.subr.bf16.mxu0 %v5604
        %5876 = vmatpush1.bf16.msra.mxu0 %v5603
        %5877 = vmatprep.subr.bf16.mxu0 %v5607
        %5878 = vmatpush1.bf16.msra.mxu0 %v5606
        %5879 = vmatprep.subr.bf16.mxu0 %v5610
        %5880 = vmatpush1.bf16.msra.mxu0 %v5609
        %5881 = vmatprep.subr.bf16.mxu0 %v5613
        %5882 = vmatpush1.bf16.msra.mxu0 %v5612
        %5883 = vmatprep.subr.bf16.mxu0 %v5616
        %5884 = vmatpush1.bf16.msra.mxu0 %v5615
        %5885 = vmatprep.subr.bf16.mxu0 %v5619
        %5886 = vmatpush1.bf16.msra.mxu0 %v5618
        %5887 = vmatprep.subr.bf16.mxu0 %v5622
        %5888 = vmatpush1.bf16.msra.mxu0 %v5621
        %5889 = vmatprep.mubr.bf16.mxu0 %v5027
        %5890 = vmatmul.mubr.bf16.gmra.mrb[0].mxu0 %v5026
        %v5891 = vpop.f32.mrb[0].mxu0
        %v5892 = vadd.f32 %v5851, %v5891
        %v5893 = vpop.f32.mrb[0].mxu0
        %v5894 = vadd.f32 %v5853, %v5893
        %v5895 = vpop.f32.mrb[0].mxu0
        %v5896 = vpop.f32.mrb[0].mxu0
        %5897 = vdwg.mxu0
        %5898 = vmatprep.subr.bf16.mxu0 %v5625
        %5899 = vmatpush1.bf16.msra.mxu0 %v5624
        %5900 = vmatprep.subr.bf16.mxu0 %v5628
        %5901 = vmatpush1.bf16.msra.mxu0 %v5627
        %5902 = vmatprep.subr.bf16.mxu0 %v5631
        %5903 = vmatpush1.bf16.msra.mxu0 %v5630
        %5904 = vmatprep.subr.bf16.mxu0 %v5634
        %5905 = vmatpush1.bf16.msra.mxu0 %v5633
        %5906 = vmatprep.subr.bf16.mxu0 %v5637
        %5907 = vmatpush1.bf16.msra.mxu0 %v5636
        %5908 = vmatprep.subr.bf16.mxu0 %v5640
        %5909 = vmatpush1.bf16.msra.mxu0 %v5639
        %5910 = vmatprep.subr.bf16.mxu0 %v5643
        %5911 = vmatpush1.bf16.msra.mxu0 %v5642
        %5912 = vmatprep.subr.bf16.mxu0 %v5646
        %5913 = vmatpush1.bf16.msra.mxu0 %v5645
        %5914 = vmatprep.subr.bf16.mxu0 %v5649
        %5915 = vmatpush1.bf16.msra.mxu0 %v5648
        %5916 = vmatprep.subr.bf16.mxu0 %v5652
        %5917 = vmatpush1.bf16.msra.mxu0 %v5651
        %5918 = vmatprep.subr.bf16.mxu0 %v5655
        %5919 = vmatpush1.bf16.msra.mxu0 %v5654
        %5920 = vmatprep.subr.bf16.mxu0 %v5658
        %5921 = vmatpush1.bf16.msra.mxu0 %v5657
        %5922 = vmatprep.subr.bf16.mxu0 %v5661
        %5923 = vmatpush1.bf16.msra.mxu0 %v5660
        %5924 = vmatprep.subr.bf16.mxu0 %v5664
        %5925 = vmatpush1.bf16.msra.mxu0 %v5663
        %5926 = vmatprep.subr.bf16.mxu0 %v5667
        %5927 = vmatpush1.bf16.msra.mxu0 %v5666
        %5928 = vmatprep.subr.bf16.mxu0 %v5670
        %5929 = vmatpush1.bf16.msra.mxu0 %v5669
        %5930 = vmatprep.mubr.bf16.mxu0 %v5029
        %5931 = vmatmul.mubr.bf16.gmra.mrb[0].mxu0 %v5028
        %v5932 = vpop.f32.mrb[0].mxu0
        %v5933 = vadd.f32 %v5892, %v5932
        %v5934 = vpop.f32.mrb[0].mxu0
        %v5935 = vadd.f32 %v5894, %v5934
        %v5936 = vpop.f32.mrb[0].mxu0
        %v5937 = vpop.f32.mrb[0].mxu0
        %5938 = vdwg.mxu0
        %5939 = vmatprep.subr.bf16.mxu0 0
        %5940 = vmatpush1.bf16.msra.mxu0 %v5530
        %5941 = vmatprep.subr.bf16.mxu0 0
        %5942 = vmatpush1.bf16.msra.mxu0 %v5533
        %5943 = vmatprep.subr.bf16.mxu0 0
        %5944 = vmatpush1.bf16.msra.mxu0 %v5536
        %5945 = vmatprep.subr.bf16.mxu0 0
        %5946 = vmatpush1.bf16.msra.mxu0 %v5539
        %5947 = vmatprep.subr.bf16.mxu0 0
        %5948 = vmatpush1.bf16.msra.mxu0 %v5542
        %5949 = vmatprep.subr.bf16.mxu0 0
        %5950 = vmatpush1.bf16.msra.mxu0 %v5545
        %5951 = vmatprep.subr.bf16.mxu0 0
        %5952 = vmatpush1.bf16.msra.mxu0 %v5548
        %5953 = vmatprep.subr.bf16.mxu0 0
        %5954 = vmatpush1.bf16.msra.mxu0 %v5551
        %5955 = vmatprep.subr.bf16.mxu0 0
        %5956 = vmatpush1.bf16.msra.mxu0 %v5554
        %5957 = vmatprep.subr.bf16.mxu0 0
        %5958 = vmatpush1.bf16.msra.mxu0 %v5557
        %5959 = vmatprep.subr.bf16.mxu0 0
        %5960 = vmatpush1.bf16.msra.mxu0 %v5560
        %5961 = vmatprep.subr.bf16.mxu0 0
        %5962 = vmatpush1.bf16.msra.mxu0 %v5563
        %5963 = vmatprep.subr.bf16.mxu0 0
        %5964 = vmatpush1.bf16.msra.mxu0 %v5566
        %5965 = vmatprep.subr.bf16.mxu0 0
        %5966 = vmatpush1.bf16.msra.mxu0 %v5569
        %5967 = vmatprep.subr.bf16.mxu0 0
        %5968 = vmatpush1.bf16.msra.mxu0 %v5572
        %5969 = vmatprep.subr.bf16.mxu0 0
        %5970 = vmatpush1.bf16.msra.mxu0 %v5575
        %5971 = vmatprep.mubr.bf16.mxu0 %v5025
        %5972 = vmatmul.mubr.bf16.gmra.mrb[0].mxu0 %v5024
        %v5973 = vpop.f32.mrb[0].mxu0
        %v5974 = vadd.f32 %v5044, %v5973
        %v5975 = vpop.f32.mrb[0].mxu0
        %v5976 = vpop.f32.mrb[0].mxu0
        %v5977 = vpop.f32.mrb[0].mxu0
        %5978 = vdwg.mxu0
        %5979 = vmatprep.subr.bf16.mxu0 0
        %5980 = vmatpush1.bf16.msra.mxu0 %v5578
        %5981 = vmatprep.subr.bf16.mxu0 0
        %5982 = vmatpush1.bf16.msra.mxu0 %v5581
        %5983 = vmatprep.subr.bf16.mxu0 0
        %5984 = vmatpush1.bf16.msra.mxu0 %v5584
        %5985 = vmatprep.subr.bf16.mxu0 0
        %5986 = vmatpush1.bf16.msra.mxu0 %v5587
        %5987 = vmatprep.subr.bf16.mxu0 0
        %5988 = vmatpush1.bf16.msra.mxu0 %v5590
        %5989 = vmatprep.subr.bf16.mxu0 0
        %5990 = vmatpush1.bf16.msra.mxu0 %v5593
        %5991 = vmatprep.subr.bf16.mxu0 0
        %5992 = vmatpush1.bf16.msra.mxu0 %v5596
        %5993 = vmatprep.subr.bf16.mxu0 0
        %5994 = vmatpush1.bf16.msra.mxu0 %v5599
        %5995 = vmatprep.subr.bf16.mxu0 0
        %5996 = vmatpush1.bf16.msra.mxu0 %v5602
        %5997 = vmatprep.subr.bf16.mxu0 0
        %5998 = vmatpush1.bf16.msra.mxu0 %v5605
        %5999 = vmatprep.subr.bf16.mxu0 0
        %6000 = vmatpush1.bf16.msra.mxu0 %v5608
        %6001 = vmatprep.subr.bf16.mxu0 0
        %6002 = vmatpush1.bf16.msra.mxu0 %v5611
        %6003 = vmatprep.subr.bf16.mxu0 0
        %6004 = vmatpush1.bf16.msra.mxu0 %v5614
        %6005 = vmatprep.subr.bf16.mxu0 0
        %6006 = vmatpush1.bf16.msra.mxu0 %v5617
        %6007 = vmatprep.subr.bf16.mxu0 0
        %6008 = vmatpush1.bf16.msra.mxu0 %v5620
        %6009 = vmatprep.subr.bf16.mxu0 0
        %6010 = vmatpush1.bf16.msra.mxu0 %v5623
        %6011 = vmatprep.mubr.bf16.mxu0 %v5027
        %6012 = vmatmul.mubr.bf16.gmra.mrb[0].mxu0 %v5026
        %v6013 = vpop.f32.mrb[0].mxu0
        %v6014 = vadd.f32 %v5974, %v6013
        %v6015 = vpop.f32.mrb[0].mxu0
        %v6016 = vpop.f32.mrb[0].mxu0
        %v6017 = vpop.f32.mrb[0].mxu0
        %6018 = vdwg.mxu0
        %6019 = vmatprep.subr.bf16.mxu0 0
        %6020 = vmatpush1.bf16.msra.mxu0 %v5626
        %6021 = vmatprep.subr.bf16.mxu0 0
        %6022 = vmatpush1.bf16.msra.mxu0 %v5629
        %6023 = vmatprep.subr.bf16.mxu0 0
        %6024 = vmatpush1.bf16.msra.mxu0 %v5632
        %6025 = vmatprep.subr.bf16.mxu0 0
        %6026 = vmatpush1.bf16.msra.mxu0 %v5635
        %6027 = vmatprep.subr.bf16.mxu0 0
        %6028 = vmatpush1.bf16.msra.mxu0 %v5638
        %6029 = vmatprep.subr.bf16.mxu0 0
        %6030 = vmatpush1.bf16.msra.mxu0 %v5641
        %6031 = vmatprep.subr.bf16.mxu0 0
        %6032 = vmatpush1.bf16.msra.mxu0 %v5644
        %6033 = vmatprep.subr.bf16.mxu0 0
        %6034 = vmatpush1.bf16.msra.mxu0 %v5647
        %6035 = vmatprep.subr.bf16.mxu0 0
        %6036 = vmatpush1.bf16.msra.mxu0 %v5650
        %6037 = vmatprep.subr.bf16.mxu0 0
        %6038 = vmatpush1.bf16.msra.mxu0 %v5653
        %6039 = vmatprep.subr.bf16.mxu0 0
        %6040 = vmatpush1.bf16.msra.mxu0 %v5656
        %6041 = vmatprep.subr.bf16.mxu0 0
        %6042 = vmatpush1.bf16.msra.mxu0 %v5659
        %6043 = vmatprep.subr.bf16.mxu0 0
        %6044 = vmatpush1.bf16.msra.mxu0 %v5662
        %6045 = vmatprep.subr.bf16.mxu0 0
        %6046 = vmatpush1.bf16.msra.mxu0 %v5665
        %6047 = vmatprep.subr.bf16.mxu0 0
        %6048 = vmatpush1.bf16.msra.mxu0 %v5668
        %6049 = vmatprep.subr.bf16.mxu0 0
        %6050 = vmatpush1.bf16.msra.mxu0 %v5671
        %6051 = vmatprep.mubr.bf16.mxu0 %v5029
        %6052 = vmatmul.mubr.bf16.gmra.mrb[0].mxu0 %v5028
        %v6053 = vpop.f32.mrb[0].mxu0
        %v6054 = vadd.f32 %v6014, %v6053
        %v6055 = vpop.f32.mrb[0].mxu0
        %v6056 = vpop.f32.mrb[0].mxu0
        %v6057 = vpop.f32.mrb[0].mxu0
        %6058 = vdwg.mxu0
        %v6059 = vadd.f32 %v5933, %v3771
        %v6060 = vadd.f32 %v5935, %v3772
        %v6061 = vadd.f32 %v6054, %v3773
        %s6062 = scalar_lea.vmem [#allocation3], 72
        %v6063 = vld [vmem:[%s6062] ss:$8 sm:$0x7]
        %s6064 = scalar_lea.vmem [#allocation3], 73
        %v6065 = vld [vmem:[%s6064] ss:$8 sm:$0x7]
        %v6066 = vadd.f32 %v6059, %v6060
        %v6067 = vadd.f32 %v6066, %v6061
        %6068 = vadd.xlane.f32.xlu0 %v6067
        %v6069 = vpop.xlane.xlu0 %6068
        %v6070 = vmul.f32 %v6069, %v333
        %v6071 = vsub.f32 %v6059, %v6070
        %v6072 = vsub.f32 %v6060, %v6070
        %v6073 = vsub.f32 %v6061, %v6070
        %v6074 = vmul.f32 %v6071, %v6071
        %v6075 = vmul.f32 %v6072, %v6072
        %v6076 = vmul.f32 %v6073, %v6073
        %v6077 = vadd.f32 %v6074, %v6075
        %v6078 = vadd.f32 %v6077, %v6076
        %6079 = vadd.xlane.f32.xlu0 %v6078
        %v6080 = vpop.xlane.xlu0 %6079
        %v6081 = vmul.f32 %v6080, %v333
        %v6082 = vadd.f32 %v6081, 1e-12
        %v6083 = vrsqrt.pop %v6082
        %v6084 = vmul.f32 %v6071, %v6083
        %v6085 = vmul.f32 %v6072, %v6083
        %v6086 = vmul.f32 %v6073, %v6083
        %v6088 = vlaneseq
        %v6089 = vshrl.u32 %v6088, 7
        %v6090 = vsub.s32 0, %v6089
        %v6091 = vrot.slane %v6063, %v6090
        %v6092 = vlaneseq
        %v6093 = vshrl.u32 %v6092, 7
        %v6094 = vsub.s32 1, %v6093
        %v6095 = vrot.slane %v6063, %v6094
        %v6096 = vlaneseq
        %v6097 = vshrl.u32 %v6096, 7
        %v6098 = vsub.s32 2, %v6097
        %v6099 = vrot.slane %v6063, %v6098
        %v6103 = vmul.f32 %v6084, %v6091
        %v6104 = vmul.f32 %v6085, %v6095
        %v6105 = vmul.f32 %v6086, %v6099
        %v6107 = vlaneseq
        %v6108 = vshrl.u32 %v6107, 7
        %v6109 = vsub.s32 0, %v6108
        %v6110 = vrot.slane %v6065, %v6109
        %v6111 = vlaneseq
        %v6112 = vshrl.u32 %v6111, 7
        %v6113 = vsub.s32 1, %v6112
        %v6114 = vrot.slane %v6065, %v6113
        %v6115 = vlaneseq
        %v6116 = vshrl.u32 %v6115, 7
        %v6117 = vsub.s32 2, %v6116
        %v6118 = vrot.slane %v6065, %v6117
        %v6122 = vadd.f32 %v6103, %v6110
        %v6123 = vadd.f32 %v6104, %v6114
        %v6124 = vadd.f32 %v6105, %v6118
        %s6125 = scalar_lea.vmem [#allocation6], 3456
        %v6126 = vld [vmem:[%s6125] sm:$0xff]
        %v6127 = vld [vmem:[%s6125 + $0x8] sm:$0xff]
        %v6128 = vld [vmem:[%s6125 + $0x10] sm:$0xff]
        %v6129 = vld [vmem:[%s6125 + $0x18] sm:$0xff]
        %v6130 = vld [vmem:[%s6125 + $0x20] sm:$0xf]
        %v6131 = vld [vmem:[%s6125 + $0x48] sm:$0xff]
        %v6132 = vld [vmem:[%s6125 + $0x50] sm:$0xff]
        %v6133 = vld [vmem:[%s6125 + $0x58] sm:$0xff]
        %v6134 = vld [vmem:[%s6125 + $0x60] sm:$0xff]
        %v6135 = vld [vmem:[%s6125 + $0x68] sm:$0xf]
        %v6136 = vld [vmem:[%s6125 + $0x90] sm:$0xff]
        %v6137 = vld [vmem:[%s6125 + $0x98] sm:$0xff]
        %v6138 = vld [vmem:[%s6125 + $0xa0] sm:$0xff]
        %v6139 = vld [vmem:[%s6125 + $0xa8] sm:$0xff]
        %v6140 = vld [vmem:[%s6125 + $0xb0] sm:$0xf]
        %v6141 = vld [vmem:[%s6125 + $0xd8] sm:$0xff]
        %v6142 = vld [vmem:[%s6125 + $0xe0] sm:$0xff]
        %v6143 = vld [vmem:[%s6125 + $0xe8] sm:$0xff]
        %v6144 = vld [vmem:[%s6125 + $0xf0] sm:$0xff]
        %v6145 = vld [vmem:[%s6125 + $0xf8] sm:$0xf]
        %v6146 = vld [vmem:[%s6125 + $0x120] sm:$0xff]
        %v6147 = vld [vmem:[%s6125 + $0x128] sm:$0xff]
        %v6148 = vld [vmem:[%s6125 + $0x130] sm:$0xff]
        %v6149 = vld [vmem:[%s6125 + $0x138] sm:$0xff]
        %v6150 = vld [vmem:[%s6125 + $0x140] sm:$0xf]
        %v6151 = vld [vmem:[%s6125 + $0x168] sm:$0xff]
        %v6152 = vld [vmem:[%s6125 + $0x170] sm:$0xff]
        %v6153 = vld [vmem:[%s6125 + $0x178] sm:$0xff]
        %v6154 = vld [vmem:[%s6125 + $0x180] sm:$0xff]
        %v6155 = vld [vmem:[%s6125 + $0x188] sm:$0xf]
        %v6156 = vld [vmem:[%s6125 + $0x1b0] sm:$0xff]
        %v6157 = vld [vmem:[%s6125 + $0x1b8] sm:$0xff]
        %v6158 = vld [vmem:[%s6125 + $0x1c0] sm:$0xff]
        %v6159 = vld [vmem:[%s6125 + $0x1c8] sm:$0xff]
        %v6160 = vld [vmem:[%s6125 + $0x1d0] sm:$0xf]
        %v6161 = vld [vmem:[%s6125 + $0x1f8] sm:$0xff]
        %v6162 = vld [vmem:[%s6125 + $0x200] sm:$0xff]
        %v6163 = vld [vmem:[%s6125 + $0x208] sm:$0xff]
        %v6164 = vld [vmem:[%s6125 + $0x210] sm:$0xff]
        %v6165 = vld [vmem:[%s6125 + $0x218] sm:$0xf]
        %v6166 = vld [vmem:[%s6125 + $0x240] sm:$0xff]
        %v6167 = vld [vmem:[%s6125 + $0x248] sm:$0xff]
        %v6168 = vld [vmem:[%s6125 + $0x250] sm:$0xff]
        %v6169 = vld [vmem:[%s6125 + $0x258] sm:$0xff]
        %v6170 = vld [vmem:[%s6125 + $0x260] sm:$0xf]
        %v6171 = vld [vmem:[%s6125 + $0x288] sm:$0xff]
        %v6172 = vld [vmem:[%s6125 + $0x290] sm:$0xff]
        %v6173 = vld [vmem:[%s6125 + $0x298] sm:$0xff]
        %v6174 = vld [vmem:[%s6125 + $0x2a0] sm:$0xff]
        %v6175 = vld [vmem:[%s6125 + $0x2a8] sm:$0xf]
        %v6176 = vld [vmem:[%s6125 + $0x2d0] sm:$0xff]
        %v6177 = vld [vmem:[%s6125 + $0x2d8] sm:$0xff]
        %v6178 = vld [vmem:[%s6125 + $0x2e0] sm:$0xff]
        %v6179 = vld [vmem:[%s6125 + $0x2e8] sm:$0xff]
        %v6180 = vld [vmem:[%s6125 + $0x2f0] sm:$0xf]
        %v6181 = vld [vmem:[%s6125 + $0x318] sm:$0xff]
        %v6182 = vld [vmem:[%s6125 + $0x320] sm:$0xff]
        %v6183 = vld [vmem:[%s6125 + $0x328] sm:$0xff]
        %v6184 = vld [vmem:[%s6125 + $0x330] sm:$0xff]
        %v6185 = vld [vmem:[%s6125 + $0x338] sm:$0xf]
        %v6186 = vld [vmem:[%s6125 + $0x360] sm:$0xff]
        %v6187 = vld [vmem:[%s6125 + $0x368] sm:$0xff]
        %v6188 = vld [vmem:[%s6125 + $0x370] sm:$0xff]
        %v6189 = vld [vmem:[%s6125 + $0x378] sm:$0xff]
        %v6190 = vld [vmem:[%s6125 + $0x380] sm:$0xf]
        %v6191 = vld [vmem:[%s6125 + $0x3a8] sm:$0xff]
        %v6192 = vld [vmem:[%s6125 + $0x3b0] sm:$0xff]
        %v6193 = vld [vmem:[%s6125 + $0x3b8] sm:$0xff]
        %v6194 = vld [vmem:[%s6125 + $0x3c0] sm:$0xff]
        %v6195 = vld [vmem:[%s6125 + $0x3c8] sm:$0xf]
        %v6196 = vld [vmem:[%s6125 + $0x3f0] sm:$0xff]
        %v6197 = vld [vmem:[%s6125 + $0x3f8] sm:$0xff]
        %v6198 = vld [vmem:[%s6125 + $0x400] sm:$0xff]
        %v6199 = vld [vmem:[%s6125 + $0x408] sm:$0xff]
        %v6200 = vld [vmem:[%s6125 + $0x410] sm:$0xf]
        %v6201 = vld [vmem:[%s6125 + $0x438] sm:$0xff]
        %v6202 = vld [vmem:[%s6125 + $0x440] sm:$0xff]
        %v6203 = vld [vmem:[%s6125 + $0x448] sm:$0xff]
        %v6204 = vld [vmem:[%s6125 + $0x450] sm:$0xff]
        %v6205 = vld [vmem:[%s6125 + $0x458] sm:$0xf]
        %v6206 = vld [vmem:[%s6125 + $0x480] sm:$0xff]
        %v6207 = vld [vmem:[%s6125 + $0x488] sm:$0xff]
        %v6208 = vld [vmem:[%s6125 + $0x490] sm:$0xff]
        %v6209 = vld [vmem:[%s6125 + $0x498] sm:$0xff]
        %v6210 = vld [vmem:[%s6125 + $0x4a0] sm:$0xf]
        %v6211 = vld [vmem:[%s6125 + $0x4c8] sm:$0xff]
        %v6212 = vld [vmem:[%s6125 + $0x4d0] sm:$0xff]
        %v6213 = vld [vmem:[%s6125 + $0x4d8] sm:$0xff]
        %v6214 = vld [vmem:[%s6125 + $0x4e0] sm:$0xff]
        %v6215 = vld [vmem:[%s6125 + $0x4e8] sm:$0xf]
        %v6216 = vld [vmem:[%s6125 + $0x510] sm:$0xff]
        %v6217 = vld [vmem:[%s6125 + $0x518] sm:$0xff]
        %v6218 = vld [vmem:[%s6125 + $0x520] sm:$0xff]
        %v6219 = vld [vmem:[%s6125 + $0x528] sm:$0xff]
        %v6220 = vld [vmem:[%s6125 + $0x530] sm:$0xf]
        %v6221 = vld [vmem:[%s6125 + $0x558] sm:$0xff]
        %v6222 = vld [vmem:[%s6125 + $0x560] sm:$0xff]
        %v6223 = vld [vmem:[%s6125 + $0x568] sm:$0xff]
        %v6224 = vld [vmem:[%s6125 + $0x570] sm:$0xff]
        %v6225 = vld [vmem:[%s6125 + $0x578] sm:$0xf]
        %v6226 = vld [vmem:[%s6125 + $0x5a0] sm:$0xff]
        %v6227 = vld [vmem:[%s6125 + $0x5a8] sm:$0xff]
        %v6228 = vld [vmem:[%s6125 + $0x5b0] sm:$0xff]
        %v6229 = vld [vmem:[%s6125 + $0x5b8] sm:$0xff]
        %v6230 = vld [vmem:[%s6125 + $0x5c0] sm:$0xf]
        %v6231 = vld [vmem:[%s6125 + $0x5e8] sm:$0xff]
        %v6232 = vld [vmem:[%s6125 + $0x5f0] sm:$0xff]
        %v6233 = vld [vmem:[%s6125 + $0x5f8] sm:$0xff]
        %v6234 = vld [vmem:[%s6125 + $0x600] sm:$0xff]
        %v6235 = vld [vmem:[%s6125 + $0x608] sm:$0xf]
        %v6236 = vld [vmem:[%s6125 + $0x630] sm:$0xff]
        %v6237 = vld [vmem:[%s6125 + $0x638] sm:$0xff]
        %v6238 = vld [vmem:[%s6125 + $0x640] sm:$0xff]
        %v6239 = vld [vmem:[%s6125 + $0x648] sm:$0xff]
        %v6240 = vld [vmem:[%s6125 + $0x650] sm:$0xf]
        %v6241 = vld [vmem:[%s6125 + $0x678] sm:$0xff]
        %v6242 = vld [vmem:[%s6125 + $0x680] sm:$0xff]
        %v6243 = vld [vmem:[%s6125 + $0x688] sm:$0xff]
        %v6244 = vld [vmem:[%s6125 + $0x690] sm:$0xff]
        %v6245 = vld [vmem:[%s6125 + $0x698] sm:$0xf]
        %v6246 = vld [vmem:[%s6125 + $0x6c0] sm:$0xff]
        %v6247 = vld [vmem:[%s6125 + $0x6c8] sm:$0xff]
        %v6248 = vld [vmem:[%s6125 + $0x6d0] sm:$0xff]
        %v6249 = vld [vmem:[%s6125 + $0x6d8] sm:$0xff]
        %v6250 = vld [vmem:[%s6125 + $0x6e0] sm:$0xf]
        %v6251 = vld [vmem:[%s6125 + $0x708] sm:$0xff]
        %v6252 = vld [vmem:[%s6125 + $0x710] sm:$0xff]
        %v6253 = vld [vmem:[%s6125 + $0x718] sm:$0xff]
        %v6254 = vld [vmem:[%s6125 + $0x720] sm:$0xff]
        %v6255 = vld [vmem:[%s6125 + $0x728] sm:$0xf]
        %v6256 = vld [vmem:[%s6125 + $0x750] sm:$0xff]
        %v6257 = vld [vmem:[%s6125 + $0x758] sm:$0xff]
        %v6258 = vld [vmem:[%s6125 + $0x760] sm:$0xff]
        %v6259 = vld [vmem:[%s6125 + $0x768] sm:$0xff]
        %v6260 = vld [vmem:[%s6125 + $0x770] sm:$0xf]
        %v6261 = vld [vmem:[%s6125 + $0x798] sm:$0xff]
        %v6262 = vld [vmem:[%s6125 + $0x7a0] sm:$0xff]
        %v6263 = vld [vmem:[%s6125 + $0x7a8] sm:$0xff]
        %v6264 = vld [vmem:[%s6125 + $0x7b0] sm:$0xff]
        %v6265 = vld [vmem:[%s6125 + $0x7b8] sm:$0xf]
        %v6266 = vld [vmem:[%s6125 + $0x7e0] sm:$0xff]
        %v6267 = vld [vmem:[%s6125 + $0x7e8] sm:$0xff]
        %v6268 = vld [vmem:[%s6125 + $0x7f0] sm:$0xff]
        %v6269 = vld [vmem:[%s6125 + $0x7f8] sm:$0xff]
        %v6270 = vld [vmem:[%s6125 + $0x800] sm:$0xf]
        %v6271 = vld [vmem:[%s6125 + $0x828] sm:$0xff]
        %v6272 = vld [vmem:[%s6125 + $0x830] sm:$0xff]
        %v6273 = vld [vmem:[%s6125 + $0x838] sm:$0xff]
        %v6274 = vld [vmem:[%s6125 + $0x840] sm:$0xff]
        %v6275 = vld [vmem:[%s6125 + $0x848] sm:$0xf]
        %v6276 = vld [vmem:[%s6125 + $0x870] sm:$0xff]
        %v6277 = vld [vmem:[%s6125 + $0x878] sm:$0xff]
        %v6278 = vld [vmem:[%s6125 + $0x880] sm:$0xff]
        %v6279 = vld [vmem:[%s6125 + $0x888] sm:$0xff]
        %v6280 = vld [vmem:[%s6125 + $0x890] sm:$0xf]
        %v6281 = vld [vmem:[%s6125 + $0x8b8] sm:$0xff]
        %v6282 = vld [vmem:[%s6125 + $0x8c0] sm:$0xff]
        %v6283 = vld [vmem:[%s6125 + $0x8c8] sm:$0xff]
        %v6284 = vld [vmem:[%s6125 + $0x8d0] sm:$0xff]
        %v6285 = vld [vmem:[%s6125 + $0x8d8] sm:$0xf]
        %v6286 = vld [vmem:[%s6125 + $0x900] sm:$0xff]
        %v6287 = vld [vmem:[%s6125 + $0x908] sm:$0xff]
        %v6288 = vld [vmem:[%s6125 + $0x910] sm:$0xff]
        %v6289 = vld [vmem:[%s6125 + $0x918] sm:$0xff]
        %v6290 = vld [vmem:[%s6125 + $0x920] sm:$0xf]
        %v6291 = vld [vmem:[%s6125 + $0x948] sm:$0xff]
        %v6292 = vld [vmem:[%s6125 + $0x950] sm:$0xff]
        %v6293 = vld [vmem:[%s6125 + $0x958] sm:$0xff]
        %v6294 = vld [vmem:[%s6125 + $0x960] sm:$0xff]
        %v6295 = vld [vmem:[%s6125 + $0x968] sm:$0xf]
        %v6296 = vld [vmem:[%s6125 + $0x990] sm:$0xff]
        %v6297 = vld [vmem:[%s6125 + $0x998] sm:$0xff]
        %v6298 = vld [vmem:[%s6125 + $0x9a0] sm:$0xff]
        %v6299 = vld [vmem:[%s6125 + $0x9a8] sm:$0xff]
        %v6300 = vld [vmem:[%s6125 + $0x9b0] sm:$0xf]
        %v6301 = vld [vmem:[%s6125 + $0x9d8] sm:$0xff]
        %v6302 = vld [vmem:[%s6125 + $0x9e0] sm:$0xff]
        %v6303 = vld [vmem:[%s6125 + $0x9e8] sm:$0xff]
        %v6304 = vld [vmem:[%s6125 + $0x9f0] sm:$0xff]
        %v6305 = vld [vmem:[%s6125 + $0x9f8] sm:$0xf]
        %v6306 = vld [vmem:[%s6125 + $0xa20] sm:$0xff]
        %v6307 = vld [vmem:[%s6125 + $0xa28] sm:$0xff]
        %v6308 = vld [vmem:[%s6125 + $0xa30] sm:$0xff]
        %v6309 = vld [vmem:[%s6125 + $0xa38] sm:$0xff]
        %v6310 = vld [vmem:[%s6125 + $0xa40] sm:$0xf]
        %v6311 = vld [vmem:[%s6125 + $0xa68] sm:$0xff]
        %v6312 = vld [vmem:[%s6125 + $0xa70] sm:$0xff]
        %v6313 = vld [vmem:[%s6125 + $0xa78] sm:$0xff]
        %v6314 = vld [vmem:[%s6125 + $0xa80] sm:$0xff]
        %v6315 = vld [vmem:[%s6125 + $0xa88] sm:$0xf]
        %v6316 = vld [vmem:[%s6125 + $0xab0] sm:$0xff]
        %v6317 = vld [vmem:[%s6125 + $0xab8] sm:$0xff]
        %v6318 = vld [vmem:[%s6125 + $0xac0] sm:$0xff]
        %v6319 = vld [vmem:[%s6125 + $0xac8] sm:$0xff]
        %v6320 = vld [vmem:[%s6125 + $0xad0] sm:$0xf]
        %v6321 = vld [vmem:[%s6125 + $0xaf8] sm:$0xff]
        %v6322 = vld [vmem:[%s6125 + $0xb00] sm:$0xff]
        %v6323 = vld [vmem:[%s6125 + $0xb08] sm:$0xff]
        %v6324 = vld [vmem:[%s6125 + $0xb10] sm:$0xff]
        %v6325 = vld [vmem:[%s6125 + $0xb18] sm:$0xf]
        %v6326 = vld [vmem:[%s6125 + $0xb40] sm:$0xff]
        %v6327 = vld [vmem:[%s6125 + $0xb48] sm:$0xff]
        %v6328 = vld [vmem:[%s6125 + $0xb50] sm:$0xff]
        %v6329 = vld [vmem:[%s6125 + $0xb58] sm:$0xff]
        %v6330 = vld [vmem:[%s6125 + $0xb60] sm:$0xf]
        %v6331 = vld [vmem:[%s6125 + $0xb88] sm:$0xff]
        %v6332 = vld [vmem:[%s6125 + $0xb90] sm:$0xff]
        %v6333 = vld [vmem:[%s6125 + $0xb98] sm:$0xff]
        %v6334 = vld [vmem:[%s6125 + $0xba0] sm:$0xff]
        %v6335 = vld [vmem:[%s6125 + $0xba8] sm:$0xf]
        %v6336 = vld [vmem:[%s6125 + $0xbd0] sm:$0xff]
        %v6337 = vld [vmem:[%s6125 + $0xbd8] sm:$0xff]
        %v6338 = vld [vmem:[%s6125 + $0xbe0] sm:$0xff]
        %v6339 = vld [vmem:[%s6125 + $0xbe8] sm:$0xff]
        %v6340 = vld [vmem:[%s6125 + $0xbf0] sm:$0xf]
        %v6341 = vld [vmem:[%s6125 + $0xc18] sm:$0xff]
        %v6342 = vld [vmem:[%s6125 + $0xc20] sm:$0xff]
        %v6343 = vld [vmem:[%s6125 + $0xc28] sm:$0xff]
        %v6344 = vld [vmem:[%s6125 + $0xc30] sm:$0xff]
        %v6345 = vld [vmem:[%s6125 + $0xc38] sm:$0xf]
        %v6346 = vld [vmem:[%s6125 + $0xc60] sm:$0xff]
        %v6347 = vld [vmem:[%s6125 + $0xc68] sm:$0xff]
        %v6348 = vld [vmem:[%s6125 + $0xc70] sm:$0xff]
        %v6349 = vld [vmem:[%s6125 + $0xc78] sm:$0xff]
        %v6350 = vld [vmem:[%s6125 + $0xc80] sm:$0xf]
        %v6351 = vld [vmem:[%s6125 + $0xca8] sm:$0xff]
        %v6352 = vld [vmem:[%s6125 + $0xcb0] sm:$0xff]
        %v6353 = vld [vmem:[%s6125 + $0xcb8] sm:$0xff]
        %v6354 = vld [vmem:[%s6125 + $0xcc0] sm:$0xff]
        %v6355 = vld [vmem:[%s6125 + $0xcc8] sm:$0xf]
        %v6356 = vld [vmem:[%s6125 + $0xcf0] sm:$0xff]
        %v6357 = vld [vmem:[%s6125 + $0xcf8] sm:$0xff]
        %v6358 = vld [vmem:[%s6125 + $0xd00] sm:$0xff]
        %v6359 = vld [vmem:[%s6125 + $0xd08] sm:$0xff]
        %v6360 = vld [vmem:[%s6125 + $0xd10] sm:$0xf]
        %v6361 = vld [vmem:[%s6125 + $0xd38] sm:$0xff]
        %v6362 = vld [vmem:[%s6125 + $0xd40] sm:$0xff]
        %v6363 = vld [vmem:[%s6125 + $0xd48] sm:$0xff]
        %v6364 = vld [vmem:[%s6125 + $0xd50] sm:$0xff]
        %v6365 = vld [vmem:[%s6125 + $0xd58] sm:$0xf]
        %v6366 = vld [vmem:[%s6125 + $0x24] sm:$0xff]
        %v6367 = vld [vmem:[%s6125 + $0x2c] sm:$0xf]
        %v6368 = vld [vmem:[%s6125 + $0x6c] sm:$0xff]
        %v6369 = vld [vmem:[%s6125 + $0x74] sm:$0xf]
        %v6370 = vld [vmem:[%s6125 + $0xb4] sm:$0xff]
        %v6371 = vld [vmem:[%s6125 + $0xbc] sm:$0xf]
        %v6372 = vld [vmem:[%s6125 + $0xfc] sm:$0xff]
        %v6373 = vld [vmem:[%s6125 + $0x104] sm:$0xf]
        %v6374 = vld [vmem:[%s6125 + $0x144] sm:$0xff]
        %v6375 = vld [vmem:[%s6125 + $0x14c] sm:$0xf]
        %v6376 = vld [vmem:[%s6125 + $0x18c] sm:$0xff]
        %v6377 = vld [vmem:[%s6125 + $0x194] sm:$0xf]
        %v6378 = vld [vmem:[%s6125 + $0x1d4] sm:$0xff]
        %v6379 = vld [vmem:[%s6125 + $0x1dc] sm:$0xf]
        %v6380 = vld [vmem:[%s6125 + $0x21c] sm:$0xff]
        %v6381 = vld [vmem:[%s6125 + $0x224] sm:$0xf]
        %v6382 = vld [vmem:[%s6125 + $0x264] sm:$0xff]
        %v6383 = vld [vmem:[%s6125 + $0x26c] sm:$0xf]
        %v6384 = vld [vmem:[%s6125 + $0x2ac] sm:$0xff]
        %v6385 = vld [vmem:[%s6125 + $0x2b4] sm:$0xf]
        %v6386 = vld [vmem:[%s6125 + $0x2f4] sm:$0xff]
        %v6387 = vld [vmem:[%s6125 + $0x2fc] sm:$0xf]
        %v6388 = vld [vmem:[%s6125 + $0x33c] sm:$0xff]
        %v6389 = vld [vmem:[%s6125 + $0x344] sm:$0xf]
        %v6390 = vld [vmem:[%s6125 + $0x384] sm:$0xff]
        %v6391 = vld [vmem:[%s6125 + $0x38c] sm:$0xf]
        %v6392 = vld [vmem:[%s6125 + $0x3cc] sm:$0xff]
        %v6393 = vld [vmem:[%s6125 + $0x3d4] sm:$0xf]
        %v6394 = vld [vmem:[%s6125 + $0x414] sm:$0xff]
        %v6395 = vld [vmem:[%s6125 + $0x41c] sm:$0xf]
        %v6396 = vld [vmem:[%s6125 + $0x45c] sm:$0xff]
        %v6397 = vld [vmem:[%s6125 + $0x464] sm:$0xf]
        %v6398 = vld [vmem:[%s6125 + $0x4a4] sm:$0xff]
        %v6399 = vld [vmem:[%s6125 + $0x4ac] sm:$0xf]
        %v6400 = vld [vmem:[%s6125 + $0x4ec] sm:$0xff]
        %v6401 = vld [vmem:[%s6125 + $0x4f4] sm:$0xf]
        %v6402 = vld [vmem:[%s6125 + $0x534] sm:$0xff]
        %v6403 = vld [vmem:[%s6125 + $0x53c] sm:$0xf]
        %v6404 = vld [vmem:[%s6125 + $0x57c] sm:$0xff]
        %v6405 = vld [vmem:[%s6125 + $0x584] sm:$0xf]
        %v6406 = vld [vmem:[%s6125 + $0x5c4] sm:$0xff]
        %v6407 = vld [vmem:[%s6125 + $0x5cc] sm:$0xf]
        %v6408 = vld [vmem:[%s6125 + $0x60c] sm:$0xff]
        %v6409 = vld [vmem:[%s6125 + $0x614] sm:$0xf]
        %v6410 = vld [vmem:[%s6125 + $0x654] sm:$0xff]
        %v6411 = vld [vmem:[%s6125 + $0x65c] sm:$0xf]
        %v6412 = vld [vmem:[%s6125 + $0x69c] sm:$0xff]
        %v6413 = vld [vmem:[%s6125 + $0x6a4] sm:$0xf]
        %v6414 = vld [vmem:[%s6125 + $0x6e4] sm:$0xff]
        %v6415 = vld [vmem:[%s6125 + $0x6ec] sm:$0xf]
        %v6416 = vld [vmem:[%s6125 + $0x72c] sm:$0xff]
        %v6417 = vld [vmem:[%s6125 + $0x734] sm:$0xf]
        %v6418 = vld [vmem:[%s6125 + $0x774] sm:$0xff]
        %v6419 = vld [vmem:[%s6125 + $0x77c] sm:$0xf]
        %v6420 = vld [vmem:[%s6125 + $0x7bc] sm:$0xff]
        %v6421 = vld [vmem:[%s6125 + $0x7c4] sm:$0xf]
        %v6422 = vld [vmem:[%s6125 + $0x804] sm:$0xff]
        %v6423 = vld [vmem:[%s6125 + $0x80c] sm:$0xf]
        %v6424 = vld [vmem:[%s6125 + $0x84c] sm:$0xff]
        %v6425 = vld [vmem:[%s6125 + $0x854] sm:$0xf]
        %v6426 = vld [vmem:[%s6125 + $0x894] sm:$0xff]
        %v6427 = vld [vmem:[%s6125 + $0x89c] sm:$0xf]
        %v6428 = vld [vmem:[%s6125 + $0x8dc] sm:$0xff]
        %v6429 = vld [vmem:[%s6125 + $0x8e4] sm:$0xf]
        %v6430 = vld [vmem:[%s6125 + $0x924] sm:$0xff]
        %v6431 = vld [vmem:[%s6125 + $0x92c] sm:$0xf]
        %v6432 = vld [vmem:[%s6125 + $0x96c] sm:$0xff]
        %v6433 = vld [vmem:[%s6125 + $0x974] sm:$0xf]
        %v6434 = vld [vmem:[%s6125 + $0x9b4] sm:$0xff]
        %v6435 = vld [vmem:[%s6125 + $0x9bc] sm:$0xf]
        %v6436 = vld [vmem:[%s6125 + $0x9fc] sm:$0xff]
        %v6437 = vld [vmem:[%s6125 + $0xa04] sm:$0xf]
        %v6438 = vld [vmem:[%s6125 + $0xa44] sm:$0xff]
        %v6439 = vld [vmem:[%s6125 + $0xa4c] sm:$0xf]
        %v6440 = vld [vmem:[%s6125 + $0xa8c] sm:$0xff]
        %v6441 = vld [vmem:[%s6125 + $0xa94] sm:$0xf]
        %v6442 = vld [vmem:[%s6125 + $0xad4] sm:$0xff]
        %v6443 = vld [vmem:[%s6125 + $0xadc] sm:$0xf]
        %v6444 = vld [vmem:[%s6125 + $0xb1c] sm:$0xff]
        %v6445 = vld [vmem:[%s6125 + $0xb24] sm:$0xf]
        %v6446 = vld [vmem:[%s6125 + $0xb64] sm:$0xff]
        %v6447 = vld [vmem:[%s6125 + $0xb6c] sm:$0xf]
        %v6448 = vld [vmem:[%s6125 + $0xbac] sm:$0xff]
        %v6449 = vld [vmem:[%s6125 + $0xbb4] sm:$0xf]
        %v6450 = vld [vmem:[%s6125 + $0xbf4] sm:$0xff]
        %v6451 = vld [vmem:[%s6125 + $0xbfc] sm:$0xf]
        %v6452 = vld [vmem:[%s6125 + $0xc3c] sm:$0xff]
        %v6453 = vld [vmem:[%s6125 + $0xc44] sm:$0xf]
        %v6454 = vld [vmem:[%s6125 + $0xc84] sm:$0xff]
        %v6455 = vld [vmem:[%s6125 + $0xc8c] sm:$0xf]
        %v6456 = vld [vmem:[%s6125 + $0xccc] sm:$0xff]
        %v6457 = vld [vmem:[%s6125 + $0xcd4] sm:$0xf]
        %v6458 = vld [vmem:[%s6125 + $0xd14] sm:$0xff]
        %v6459 = vld [vmem:[%s6125 + $0xd1c] sm:$0xf]
        %v6460 = vld [vmem:[%s6125 + $0xd5c] sm:$0xff]
        %v6461 = vld [vmem:[%s6125 + $0xd64] sm:$0xf]
        %v6462 = vld [vmem:[%s6125 + $0x30] sm:$0xff]
        %v6463 = vld [vmem:[%s6125 + $0x38] sm:$0xff]
        %v6464 = vld [vmem:[%s6125 + $0x40] sm:$0xff]
        %v6465 = vld [vmem:[%s6125 + $0x78] sm:$0xff]
        %v6466 = vld [vmem:[%s6125 + $0x80] sm:$0xff]
        %v6467 = vld [vmem:[%s6125 + $0x88] sm:$0xff]
        %v6468 = vld [vmem:[%s6125 + $0xc0] sm:$0xff]
        %v6469 = vld [vmem:[%s6125 + $0xc8] sm:$0xff]
        %v6470 = vld [vmem:[%s6125 + $0xd0] sm:$0xff]
        %v6471 = vld [vmem:[%s6125 + $0x108] sm:$0xff]
        %v6472 = vld [vmem:[%s6125 + $0x110] sm:$0xff]
        %v6473 = vld [vmem:[%s6125 + $0x118] sm:$0xff]
        %v6474 = vld [vmem:[%s6125 + $0x150] sm:$0xff]
        %v6475 = vld [vmem:[%s6125 + $0x158] sm:$0xff]
        %v6476 = vld [vmem:[%s6125 + $0x160] sm:$0xff]
        %v6477 = vld [vmem:[%s6125 + $0x198] sm:$0xff]
        %v6478 = vld [vmem:[%s6125 + $0x1a0] sm:$0xff]
        %v6479 = vld [vmem:[%s6125 + $0x1a8] sm:$0xff]
        %v6480 = vld [vmem:[%s6125 + $0x1e0] sm:$0xff]
        %v6481 = vld [vmem:[%s6125 + $0x1e8] sm:$0xff]
        %v6482 = vld [vmem:[%s6125 + $0x1f0] sm:$0xff]
        %v6483 = vld [vmem:[%s6125 + $0x228] sm:$0xff]
        %v6484 = vld [vmem:[%s6125 + $0x230] sm:$0xff]
        %v6485 = vld [vmem:[%s6125 + $0x238] sm:$0xff]
        %v6486 = vld [vmem:[%s6125 + $0x270] sm:$0xff]
        %v6487 = vld [vmem:[%s6125 + $0x278] sm:$0xff]
        %v6488 = vld [vmem:[%s6125 + $0x280] sm:$0xff]
        %v6489 = vld [vmem:[%s6125 + $0x2b8] sm:$0xff]
        %v6490 = vld [vmem:[%s6125 + $0x2c0] sm:$0xff]
        %v6491 = vld [vmem:[%s6125 + $0x2c8] sm:$0xff]
        %v6492 = vld [vmem:[%s6125 + $0x300] sm:$0xff]
        %v6493 = vld [vmem:[%s6125 + $0x308] sm:$0xff]
        %v6494 = vld [vmem:[%s6125 + $0x310] sm:$0xff]
        %v6495 = vld [vmem:[%s6125 + $0x348] sm:$0xff]
        %v6496 = vld [vmem:[%s6125 + $0x350] sm:$0xff]
        %v6497 = vld [vmem:[%s6125 + $0x358] sm:$0xff]
        %v6498 = vld [vmem:[%s6125 + $0x390] sm:$0xff]
        %v6499 = vld [vmem:[%s6125 + $0x398] sm:$0xff]
        %v6500 = vld [vmem:[%s6125 + $0x3a0] sm:$0xff]
        %v6501 = vld [vmem:[%s6125 + $0x3d8] sm:$0xff]
        %v6502 = vld [vmem:[%s6125 + $0x3e0] sm:$0xff]
        %v6503 = vld [vmem:[%s6125 + $0x3e8] sm:$0xff]
        %v6504 = vld [vmem:[%s6125 + $0x420] sm:$0xff]
        %v6505 = vld [vmem:[%s6125 + $0x428] sm:$0xff]
        %v6506 = vld [vmem:[%s6125 + $0x430] sm:$0xff]
        %v6507 = vld [vmem:[%s6125 + $0x468] sm:$0xff]
        %v6508 = vld [vmem:[%s6125 + $0x470] sm:$0xff]
        %v6509 = vld [vmem:[%s6125 + $0x478] sm:$0xff]
        %v6510 = vld [vmem:[%s6125 + $0x4b0] sm:$0xff]
        %v6511 = vld [vmem:[%s6125 + $0x4b8] sm:$0xff]
        %v6512 = vld [vmem:[%s6125 + $0x4c0] sm:$0xff]
        %v6513 = vld [vmem:[%s6125 + $0x4f8] sm:$0xff]
        %v6514 = vld [vmem:[%s6125 + $0x500] sm:$0xff]
        %v6515 = vld [vmem:[%s6125 + $0x508] sm:$0xff]
        %v6516 = vld [vmem:[%s6125 + $0x540] sm:$0xff]
        %v6517 = vld [vmem:[%s6125 + $0x548] sm:$0xff]
        %v6518 = vld [vmem:[%s6125 + $0x550] sm:$0xff]
        %v6519 = vld [vmem:[%s6125 + $0x588] sm:$0xff]
        %v6520 = vld [vmem:[%s6125 + $0x590] sm:$0xff]
        %v6521 = vld [vmem:[%s6125 + $0x598] sm:$0xff]
        %v6522 = vld [vmem:[%s6125 + $0x5d0] sm:$0xff]
        %v6523 = vld [vmem:[%s6125 + $0x5d8] sm:$0xff]
        %v6524 = vld [vmem:[%s6125 + $0x5e0] sm:$0xff]
        %v6525 = vld [vmem:[%s6125 + $0x618] sm:$0xff]
        %v6526 = vld [vmem:[%s6125 + $0x620] sm:$0xff]
        %v6527 = vld [vmem:[%s6125 + $0x628] sm:$0xff]
        %v6528 = vld [vmem:[%s6125 + $0x660] sm:$0xff]
        %v6529 = vld [vmem:[%s6125 + $0x668] sm:$0xff]
        %v6530 = vld [vmem:[%s6125 + $0x670] sm:$0xff]
        %v6531 = vld [vmem:[%s6125 + $0x6a8] sm:$0xff]
        %v6532 = vld [vmem:[%s6125 + $0x6b0] sm:$0xff]
        %v6533 = vld [vmem:[%s6125 + $0x6b8] sm:$0xff]
        %v6534 = vld [vmem:[%s6125 + $0x6f0] sm:$0xff]
        %v6535 = vld [vmem:[%s6125 + $0x6f8] sm:$0xff]
        %v6536 = vld [vmem:[%s6125 + $0x700] sm:$0xff]
        %v6537 = vld [vmem:[%s6125 + $0x738] sm:$0xff]
        %v6538 = vld [vmem:[%s6125 + $0x740] sm:$0xff]
        %v6539 = vld [vmem:[%s6125 + $0x748] sm:$0xff]
        %v6540 = vld [vmem:[%s6125 + $0x780] sm:$0xff]
        %v6541 = vld [vmem:[%s6125 + $0x788] sm:$0xff]
        %v6542 = vld [vmem:[%s6125 + $0x790] sm:$0xff]
        %v6543 = vld [vmem:[%s6125 + $0x7c8] sm:$0xff]
        %v6544 = vld [vmem:[%s6125 + $0x7d0] sm:$0xff]
        %v6545 = vld [vmem:[%s6125 + $0x7d8] sm:$0xff]
        %v6546 = vld [vmem:[%s6125 + $0x810] sm:$0xff]
        %v6547 = vld [vmem:[%s6125 + $0x818] sm:$0xff]
        %v6548 = vld [vmem:[%s6125 + $0x820] sm:$0xff]
        %v6549 = vld [vmem:[%s6125 + $0x858] sm:$0xff]
        %v6550 = vld [vmem:[%s6125 + $0x860] sm:$0xff]
        %v6551 = vld [vmem:[%s6125 + $0x868] sm:$0xff]
        %v6552 = vld [vmem:[%s6125 + $0x8a0] sm:$0xff]
        %v6553 = vld [vmem:[%s6125 + $0x8a8] sm:$0xff]
        %v6554 = vld [vmem:[%s6125 + $0x8b0] sm:$0xff]
        %v6555 = vld [vmem:[%s6125 + $0x8e8] sm:$0xff]
        %v6556 = vld [vmem:[%s6125 + $0x8f0] sm:$0xff]
        %v6557 = vld [vmem:[%s6125 + $0x8f8] sm:$0xff]
        %v6558 = vld [vmem:[%s6125 + $0x930] sm:$0xff]
        %v6559 = vld [vmem:[%s6125 + $0x938] sm:$0xff]
        %v6560 = vld [vmem:[%s6125 + $0x940] sm:$0xff]
        %v6561 = vld [vmem:[%s6125 + $0x978] sm:$0xff]
        %v6562 = vld [vmem:[%s6125 + $0x980] sm:$0xff]
        %v6563 = vld [vmem:[%s6125 + $0x988] sm:$0xff]
        %v6564 = vld [vmem:[%s6125 + $0x9c0] sm:$0xff]
        %v6565 = vld [vmem:[%s6125 + $0x9c8] sm:$0xff]
        %v6566 = vld [vmem:[%s6125 + $0x9d0] sm:$0xff]
        %v6567 = vld [vmem:[%s6125 + $0xa08] sm:$0xff]
        %v6568 = vld [vmem:[%s6125 + $0xa10] sm:$0xff]
        %v6569 = vld [vmem:[%s6125 + $0xa18] sm:$0xff]
        %v6570 = vld [vmem:[%s6125 + $0xa50] sm:$0xff]
        %v6571 = vld [vmem:[%s6125 + $0xa58] sm:$0xff]
        %v6572 = vld [vmem:[%s6125 + $0xa60] sm:$0xff]
        %v6573 = vld [vmem:[%s6125 + $0xa98] sm:$0xff]
        %v6574 = vld [vmem:[%s6125 + $0xaa0] sm:$0xff]
        %v6575 = vld [vmem:[%s6125 + $0xaa8] sm:$0xff]
        %v6576 = vld [vmem:[%s6125 + $0xae0] sm:$0xff]
        %v6577 = vld [vmem:[%s6125 + $0xae8] sm:$0xff]
        %v6578 = vld [vmem:[%s6125 + $0xaf0] sm:$0xff]
        %v6579 = vld [vmem:[%s6125 + $0xb28] sm:$0xff]
        %v6580 = vld [vmem:[%s6125 + $0xb30] sm:$0xff]
        %v6581 = vld [vmem:[%s6125 + $0xb38] sm:$0xff]
        %v6582 = vld [vmem:[%s6125 + $0xb70] sm:$0xff]
        %v6583 = vld [vmem:[%s6125 + $0xb78] sm:$0xff]
        %v6584 = vld [vmem:[%s6125 + $0xb80] sm:$0xff]
        %v6585 = vld [vmem:[%s6125 + $0xbb8] sm:$0xff]
        %v6586 = vld [vmem:[%s6125 + $0xbc0] sm:$0xff]
        %v6587 = vld [vmem:[%s6125 + $0xbc8] sm:$0xff]
        %v6588 = vld [vmem:[%s6125 + $0xc00] sm:$0xff]
        %v6589 = vld [vmem:[%s6125 + $0xc08] sm:$0xff]
        %v6590 = vld [vmem:[%s6125 + $0xc10] sm:$0xff]
        %v6591 = vld [vmem:[%s6125 + $0xc48] sm:$0xff]
        %v6592 = vld [vmem:[%s6125 + $0xc50] sm:$0xff]
        %v6593 = vld [vmem:[%s6125 + $0xc58] sm:$0xff]
        %v6594 = vld [vmem:[%s6125 + $0xc90] sm:$0xff]
        %v6595 = vld [vmem:[%s6125 + $0xc98] sm:$0xff]
        %v6596 = vld [vmem:[%s6125 + $0xca0] sm:$0xff]
        %v6597 = vld [vmem:[%s6125 + $0xcd8] sm:$0xff]
        %v6598 = vld [vmem:[%s6125 + $0xce0] sm:$0xff]
        %v6599 = vld [vmem:[%s6125 + $0xce8] sm:$0xff]
        %v6600 = vld [vmem:[%s6125 + $0xd20] sm:$0xff]
        %v6601 = vld [vmem:[%s6125 + $0xd28] sm:$0xff]
        %v6602 = vld [vmem:[%s6125 + $0xd30] sm:$0xff]
        %v6603 = vld [vmem:[%s6125 + $0xd68] sm:$0xff]
        %v6604 = vld [vmem:[%s6125 + $0xd70] sm:$0xff]
        %v6605 = vld [vmem:[%s6125 + $0xd78] sm:$0xff]
        %v6606 = vpack.c.bf16 %v6122, %v6122
        %v6607 = vpack.c.bf16 %v6123, %v6123
        %v6608 = vpack.c.bf16 %v6124, %v6124
        %s6609 = scalar_lea.vmem [#allocation3], 74
        %v6610 = vld [vmem:[%s6609] ss:$8 sm:$0xf]
        %v6611 = vld [vmem:[%s6609] ss:$8 sm:$0xf0]
        %v6612 = vor.u32 %v6610, %v6611
        %s6613 = scalar_lea.vmem [#allocation3], 138
        %v6614 = vld [vmem:[%s6613] ss:$8 sm:$0x1]
        %v6617 = vlaneseq
        %v6618 = vshrl.u32 %v6617, 7
        %v6619 = vsub.s32 0, %v6618
        %v6620 = vrot.slane %v6612, %v6619
        %v6621 = vlaneseq
        %v6622 = vshrl.u32 %v6621, 7
        %v6623 = vsub.s32 1, %v6622
        %v6624 = vrot.slane %v6612, %v6623
        %v6625 = vlaneseq
        %v6626 = vshrl.u32 %v6625, 7
        %v6627 = vsub.s32 2, %v6626
        %v6628 = vrot.slane %v6612, %v6627
        %v6629 = vlaneseq
        %v6630 = vshrl.u32 %v6629, 7
        %v6631 = vsub.s32 3, %v6630
        %v6632 = vrot.slane %v6612, %v6631
        %v6633 = vlaneseq
        %v6634 = vshrl.u32 %v6633, 7
        %v6635 = vsub.s32 4, %v6634
        %v6636 = vrot.slane %v6612, %v6635
        %v6637 = vlaneseq
        %v6638 = vshrl.u32 %v6637, 7
        %v6639 = vsub.s32 5, %v6638
        %v6640 = vrot.slane %v6612, %v6639
        %v6641 = vlaneseq
        %v6642 = vshrl.u32 %v6641, 7
        %v6643 = vsub.s32 6, %v6642
        %v6644 = vrot.slane %v6612, %v6643
        %v6645 = vlaneseq
        %v6646 = vshrl.u32 %v6645, 7
        %v6647 = vsub.s32 7, %v6646
        %v6648 = vrot.slane %v6612, %v6647
        %v6649 = vlaneseq
        %v6650 = vshrl.u32 %v6649, 7
        %v6651 = vsub.s32 0, %v6650
        %v6652 = vrot.slane %v6614, %v6651
        %v6902 = vunpack.c.l.b16 %v6126
        %v6903 = vunpack.c.h.b16 %v6126
        %v6904 = vunpack.c.l.b16 %v6127
        %v6905 = vunpack.c.h.b16 %v6127
        %v6906 = vunpack.c.l.b16 %v6128
        %v6907 = vunpack.c.h.b16 %v6128
        %v6908 = vunpack.c.l.b16 %v6129
        %v6909 = vunpack.c.h.b16 %v6129
        %v6910 = vunpack.c.l.b16 %v6130
        %v6911 = vunpack.c.l.b16 %v6131
        %v6912 = vunpack.c.h.b16 %v6131
        %v6913 = vunpack.c.l.b16 %v6132
        %v6914 = vunpack.c.h.b16 %v6132
        %v6915 = vunpack.c.l.b16 %v6133
        %v6916 = vunpack.c.h.b16 %v6133
        %v6917 = vunpack.c.l.b16 %v6134
        %v6918 = vunpack.c.h.b16 %v6134
        %v6919 = vunpack.c.l.b16 %v6135
        %v6920 = vunpack.c.l.b16 %v6136
        %v6921 = vunpack.c.h.b16 %v6136
        %v6922 = vunpack.c.l.b16 %v6137
        %v6923 = vunpack.c.h.b16 %v6137
        %v6924 = vunpack.c.l.b16 %v6138
        %v6925 = vunpack.c.h.b16 %v6138
        %v6926 = vunpack.c.l.b16 %v6139
        %v6927 = vunpack.c.h.b16 %v6139
        %v6928 = vunpack.c.l.b16 %v6140
        %v6929 = vunpack.c.l.b16 %v6141
        %v6930 = vunpack.c.h.b16 %v6141
        %v6931 = vunpack.c.l.b16 %v6142
        %v6932 = vunpack.c.h.b16 %v6142
        %v6933 = vunpack.c.l.b16 %v6143
        %v6934 = vunpack.c.h.b16 %v6143
        %v6935 = vunpack.c.l.b16 %v6144
        %v6936 = vunpack.c.h.b16 %v6144
        %v6937 = vunpack.c.l.b16 %v6145
        %v6938 = vunpack.c.l.b16 %v6146
        %v6939 = vunpack.c.h.b16 %v6146
        %v6940 = vunpack.c.l.b16 %v6147
        %v6941 = vunpack.c.h.b16 %v6147
        %v6942 = vunpack.c.l.b16 %v6148
        %v6943 = vunpack.c.h.b16 %v6148
        %v6944 = vunpack.c.l.b16 %v6149
        %v6945 = vunpack.c.h.b16 %v6149
        %v6946 = vunpack.c.l.b16 %v6150
        %v6947 = vunpack.c.l.b16 %v6151
        %v6948 = vunpack.c.h.b16 %v6151
        %v6949 = vunpack.c.l.b16 %v6152
        %v6950 = vunpack.c.h.b16 %v6152
        %v6951 = vunpack.c.l.b16 %v6153
        %v6952 = vunpack.c.h.b16 %v6153
        %v6953 = vunpack.c.l.b16 %v6154
        %v6954 = vunpack.c.h.b16 %v6154
        %v6955 = vunpack.c.l.b16 %v6155
        %v6956 = vunpack.c.l.b16 %v6156
        %v6957 = vunpack.c.h.b16 %v6156
        %v6958 = vunpack.c.l.b16 %v6157
        %v6959 = vunpack.c.h.b16 %v6157
        %v6960 = vunpack.c.l.b16 %v6158
        %v6961 = vunpack.c.h.b16 %v6158
        %v6962 = vunpack.c.l.b16 %v6159
        %v6963 = vunpack.c.h.b16 %v6159
        %v6964 = vunpack.c.l.b16 %v6160
        %v6965 = vunpack.c.l.b16 %v6161
        %v6966 = vunpack.c.h.b16 %v6161
        %v6967 = vunpack.c.l.b16 %v6162
        %v6968 = vunpack.c.h.b16 %v6162
        %v6969 = vunpack.c.l.b16 %v6163
        %v6970 = vunpack.c.h.b16 %v6163
        %v6971 = vunpack.c.l.b16 %v6164
        %v6972 = vunpack.c.h.b16 %v6164
        %v6973 = vunpack.c.l.b16 %v6165
        %v6974 = vunpack.c.l.b16 %v6166
        %v6975 = vunpack.c.h.b16 %v6166
        %v6976 = vunpack.c.l.b16 %v6167
        %v6977 = vunpack.c.h.b16 %v6167
        %v6978 = vunpack.c.l.b16 %v6168
        %v6979 = vunpack.c.h.b16 %v6168
        %v6980 = vunpack.c.l.b16 %v6169
        %v6981 = vunpack.c.h.b16 %v6169
        %v6982 = vunpack.c.l.b16 %v6170
        %v6983 = vunpack.c.l.b16 %v6171
        %v6984 = vunpack.c.h.b16 %v6171
        %v6985 = vunpack.c.l.b16 %v6172
        %v6986 = vunpack.c.h.b16 %v6172
        %v6987 = vunpack.c.l.b16 %v6173
        %v6988 = vunpack.c.h.b16 %v6173
        %v6989 = vunpack.c.l.b16 %v6174
        %v6990 = vunpack.c.h.b16 %v6174
        %v6991 = vunpack.c.l.b16 %v6175
        %v6992 = vunpack.c.l.b16 %v6176
        %v6993 = vunpack.c.h.b16 %v6176
        %v6994 = vunpack.c.l.b16 %v6177
        %v6995 = vunpack.c.h.b16 %v6177
        %v6996 = vunpack.c.l.b16 %v6178
        %v6997 = vunpack.c.h.b16 %v6178
        %v6998 = vunpack.c.l.b16 %v6179
        %v6999 = vunpack.c.h.b16 %v6179
        %v7000 = vunpack.c.l.b16 %v6180
        %v7001 = vunpack.c.l.b16 %v6181
        %v7002 = vunpack.c.h.b16 %v6181
        %v7003 = vunpack.c.l.b16 %v6182
        %v7004 = vunpack.c.h.b16 %v6182
        %v7005 = vunpack.c.l.b16 %v6183
        %v7006 = vunpack.c.h.b16 %v6183
        %v7007 = vunpack.c.l.b16 %v6184
        %v7008 = vunpack.c.h.b16 %v6184
        %v7009 = vunpack.c.l.b16 %v6185
        %v7010 = vunpack.c.l.b16 %v6186
        %v7011 = vunpack.c.h.b16 %v6186
        %v7012 = vunpack.c.l.b16 %v6187
        %v7013 = vunpack.c.h.b16 %v6187
        %v7014 = vunpack.c.l.b16 %v6188
        %v7015 = vunpack.c.h.b16 %v6188
        %v7016 = vunpack.c.l.b16 %v6189
        %v7017 = vunpack.c.h.b16 %v6189
        %v7018 = vunpack.c.l.b16 %v6190
        %v7019 = vunpack.c.l.b16 %v6191
        %v7020 = vunpack.c.h.b16 %v6191
        %v7021 = vunpack.c.l.b16 %v6192
        %v7022 = vunpack.c.h.b16 %v6192
        %v7023 = vunpack.c.l.b16 %v6193
        %v7024 = vunpack.c.h.b16 %v6193
        %v7025 = vunpack.c.l.b16 %v6194
        %v7026 = vunpack.c.h.b16 %v6194
        %v7027 = vunpack.c.l.b16 %v6195
        %v7028 = vunpack.c.l.b16 %v6196
        %v7029 = vunpack.c.h.b16 %v6196
        %v7030 = vunpack.c.l.b16 %v6197
        %v7031 = vunpack.c.h.b16 %v6197
        %v7032 = vunpack.c.l.b16 %v6198
        %v7033 = vunpack.c.h.b16 %v6198
        %v7034 = vunpack.c.l.b16 %v6199
        %v7035 = vunpack.c.h.b16 %v6199
        %v7036 = vunpack.c.l.b16 %v6200
        %v7037 = vunpack.c.l.b16 %v6201
        %v7038 = vunpack.c.h.b16 %v6201
        %v7039 = vunpack.c.l.b16 %v6202
        %v7040 = vunpack.c.h.b16 %v6202
        %v7041 = vunpack.c.l.b16 %v6203
        %v7042 = vunpack.c.h.b16 %v6203
        %v7043 = vunpack.c.l.b16 %v6204
        %v7044 = vunpack.c.h.b16 %v6204
        %v7045 = vunpack.c.l.b16 %v6205
        %v7046 = vunpack.c.l.b16 %v6206
        %v7047 = vunpack.c.h.b16 %v6206
        %v7048 = vunpack.c.l.b16 %v6207
        %v7049 = vunpack.c.h.b16 %v6207
        %v7050 = vunpack.c.l.b16 %v6208
        %v7051 = vunpack.c.h.b16 %v6208
        %v7052 = vunpack.c.l.b16 %v6209
        %v7053 = vunpack.c.h.b16 %v6209
        %v7054 = vunpack.c.l.b16 %v6210
        %v7055 = vunpack.c.l.b16 %v6211
        %v7056 = vunpack.c.h.b16 %v6211
        %v7057 = vunpack.c.l.b16 %v6212
        %v7058 = vunpack.c.h.b16 %v6212
        %v7059 = vunpack.c.l.b16 %v6213
        %v7060 = vunpack.c.h.b16 %v6213
        %v7061 = vunpack.c.l.b16 %v6214
        %v7062 = vunpack.c.h.b16 %v6214
        %v7063 = vunpack.c.l.b16 %v6215
        %v7064 = vunpack.c.l.b16 %v6216
        %v7065 = vunpack.c.h.b16 %v6216
        %v7066 = vunpack.c.l.b16 %v6217
        %v7067 = vunpack.c.h.b16 %v6217
        %v7068 = vunpack.c.l.b16 %v6218
        %v7069 = vunpack.c.h.b16 %v6218
        %v7070 = vunpack.c.l.b16 %v6219
        %v7071 = vunpack.c.h.b16 %v6219
        %v7072 = vunpack.c.l.b16 %v6220
        %v7073 = vunpack.c.l.b16 %v6221
        %v7074 = vunpack.c.h.b16 %v6221
        %v7075 = vunpack.c.l.b16 %v6222
        %v7076 = vunpack.c.h.b16 %v6222
        %v7077 = vunpack.c.l.b16 %v6223
        %v7078 = vunpack.c.h.b16 %v6223
        %v7079 = vunpack.c.l.b16 %v6224
        %v7080 = vunpack.c.h.b16 %v6224
        %v7081 = vunpack.c.l.b16 %v6225
        %v7082 = vunpack.c.l.b16 %v6226
        %v7083 = vunpack.c.h.b16 %v6226
        %v7084 = vunpack.c.l.b16 %v6227
        %v7085 = vunpack.c.h.b16 %v6227
        %v7086 = vunpack.c.l.b16 %v6228
        %v7087 = vunpack.c.h.b16 %v6228
        %v7088 = vunpack.c.l.b16 %v6229
        %v7089 = vunpack.c.h.b16 %v6229
        %v7090 = vunpack.c.l.b16 %v6230
        %v7091 = vunpack.c.l.b16 %v6231
        %v7092 = vunpack.c.h.b16 %v6231
        %v7093 = vunpack.c.l.b16 %v6232
        %v7094 = vunpack.c.h.b16 %v6232
        %v7095 = vunpack.c.l.b16 %v6233
        %v7096 = vunpack.c.h.b16 %v6233
        %v7097 = vunpack.c.l.b16 %v6234
        %v7098 = vunpack.c.h.b16 %v6234
        %v7099 = vunpack.c.l.b16 %v6235
        %v7100 = vunpack.c.l.b16 %v6236
        %v7101 = vunpack.c.h.b16 %v6236
        %v7102 = vunpack.c.l.b16 %v6237
        %v7103 = vunpack.c.h.b16 %v6237
        %v7104 = vunpack.c.l.b16 %v6238
        %v7105 = vunpack.c.h.b16 %v6238
        %v7106 = vunpack.c.l.b16 %v6239
        %v7107 = vunpack.c.h.b16 %v6239
        %v7108 = vunpack.c.l.b16 %v6240
        %v7109 = vunpack.c.l.b16 %v6241
        %v7110 = vunpack.c.h.b16 %v6241
        %v7111 = vunpack.c.l.b16 %v6242
        %v7112 = vunpack.c.h.b16 %v6242
        %v7113 = vunpack.c.l.b16 %v6243
        %v7114 = vunpack.c.h.b16 %v6243
        %v7115 = vunpack.c.l.b16 %v6244
        %v7116 = vunpack.c.h.b16 %v6244
        %v7117 = vunpack.c.l.b16 %v6245
        %v7118 = vunpack.c.l.b16 %v6246
        %v7119 = vunpack.c.h.b16 %v6246
        %v7120 = vunpack.c.l.b16 %v6247
        %v7121 = vunpack.c.h.b16 %v6247
        %v7122 = vunpack.c.l.b16 %v6248
        %v7123 = vunpack.c.h.b16 %v6248
        %v7124 = vunpack.c.l.b16 %v6249
        %v7125 = vunpack.c.h.b16 %v6249
        %v7126 = vunpack.c.l.b16 %v6250
        %v7127 = vunpack.c.l.b16 %v6251
        %v7128 = vunpack.c.h.b16 %v6251
        %v7129 = vunpack.c.l.b16 %v6252
        %v7130 = vunpack.c.h.b16 %v6252
        %v7131 = vunpack.c.l.b16 %v6253
        %v7132 = vunpack.c.h.b16 %v6253
        %v7133 = vunpack.c.l.b16 %v6254
        %v7134 = vunpack.c.h.b16 %v6254
        %v7135 = vunpack.c.l.b16 %v6255
        %v7136 = vunpack.c.l.b16 %v6256
        %v7137 = vunpack.c.h.b16 %v6256
        %v7138 = vunpack.c.l.b16 %v6257
        %v7139 = vunpack.c.h.b16 %v6257
        %v7140 = vunpack.c.l.b16 %v6258
        %v7141 = vunpack.c.h.b16 %v6258
        %v7142 = vunpack.c.l.b16 %v6259
        %v7143 = vunpack.c.h.b16 %v6259
        %v7144 = vunpack.c.l.b16 %v6260
        %v7145 = vunpack.c.l.b16 %v6261
        %v7146 = vunpack.c.h.b16 %v6261
        %v7147 = vunpack.c.l.b16 %v6262
        %v7148 = vunpack.c.h.b16 %v6262
        %v7149 = vunpack.c.l.b16 %v6263
        %v7150 = vunpack.c.h.b16 %v6263
        %v7151 = vunpack.c.l.b16 %v6264
        %v7152 = vunpack.c.h.b16 %v6264
        %v7153 = vunpack.c.l.b16 %v6265
        %v7154 = vunpack.c.l.b16 %v6266
        %v7155 = vunpack.c.h.b16 %v6266
        %v7156 = vunpack.c.l.b16 %v6267
        %v7157 = vunpack.c.h.b16 %v6267
        %v7158 = vunpack.c.l.b16 %v6268
        %v7159 = vunpack.c.h.b16 %v6268
        %v7160 = vunpack.c.l.b16 %v6269
        %v7161 = vunpack.c.h.b16 %v6269
        %v7162 = vunpack.c.l.b16 %v6270
        %v7163 = vunpack.c.l.b16 %v6271
        %v7164 = vunpack.c.h.b16 %v6271
        %v7165 = vunpack.c.l.b16 %v6272
        %v7166 = vunpack.c.h.b16 %v6272
        %v7167 = vunpack.c.l.b16 %v6273
        %v7168 = vunpack.c.h.b16 %v6273
        %v7169 = vunpack.c.l.b16 %v6274
        %v7170 = vunpack.c.h.b16 %v6274
        %v7171 = vunpack.c.l.b16 %v6275
        %v7172 = vunpack.c.l.b16 %v6276
        %v7173 = vunpack.c.h.b16 %v6276
        %v7174 = vunpack.c.l.b16 %v6277
        %v7175 = vunpack.c.h.b16 %v6277
        %v7176 = vunpack.c.l.b16 %v6278
        %v7177 = vunpack.c.h.b16 %v6278
        %v7178 = vunpack.c.l.b16 %v6279
        %v7179 = vunpack.c.h.b16 %v6279
        %v7180 = vunpack.c.l.b16 %v6280
        %v7181 = vunpack.c.l.b16 %v6281
        %v7182 = vunpack.c.h.b16 %v6281
        %v7183 = vunpack.c.l.b16 %v6282
        %v7184 = vunpack.c.h.b16 %v6282
        %v7185 = vunpack.c.l.b16 %v6283
        %v7186 = vunpack.c.h.b16 %v6283
        %v7187 = vunpack.c.l.b16 %v6284
        %v7188 = vunpack.c.h.b16 %v6284
        %v7189 = vunpack.c.l.b16 %v6285
        %v7190 = vunpack.c.l.b16 %v6286
        %v7191 = vunpack.c.h.b16 %v6286
        %v7192 = vunpack.c.l.b16 %v6287
        %v7193 = vunpack.c.h.b16 %v6287
        %v7194 = vunpack.c.l.b16 %v6288
        %v7195 = vunpack.c.h.b16 %v6288
        %v7196 = vunpack.c.l.b16 %v6289
        %v7197 = vunpack.c.h.b16 %v6289
        %v7198 = vunpack.c.l.b16 %v6290
        %v7199 = vunpack.c.l.b16 %v6291
        %v7200 = vunpack.c.h.b16 %v6291
        %v7201 = vunpack.c.l.b16 %v6292
        %v7202 = vunpack.c.h.b16 %v6292
        %v7203 = vunpack.c.l.b16 %v6293
        %v7204 = vunpack.c.h.b16 %v6293
        %v7205 = vunpack.c.l.b16 %v6294
        %v7206 = vunpack.c.h.b16 %v6294
        %v7207 = vunpack.c.l.b16 %v6295
        %v7208 = vunpack.c.l.b16 %v6296
        %v7209 = vunpack.c.h.b16 %v6296
        %v7210 = vunpack.c.l.b16 %v6297
        %v7211 = vunpack.c.h.b16 %v6297
        %v7212 = vunpack.c.l.b16 %v6298
        %v7213 = vunpack.c.h.b16 %v6298
        %v7214 = vunpack.c.l.b16 %v6299
        %v7215 = vunpack.c.h.b16 %v6299
        %v7216 = vunpack.c.l.b16 %v6300
        %v7217 = vunpack.c.l.b16 %v6301
        %v7218 = vunpack.c.h.b16 %v6301
        %v7219 = vunpack.c.l.b16 %v6302
        %v7220 = vunpack.c.h.b16 %v6302
        %v7221 = vunpack.c.l.b16 %v6303
        %v7222 = vunpack.c.h.b16 %v6303
        %v7223 = vunpack.c.l.b16 %v6304
        %v7224 = vunpack.c.h.b16 %v6304
        %v7225 = vunpack.c.l.b16 %v6305
        %v7226 = vunpack.c.l.b16 %v6306
        %v7227 = vunpack.c.h.b16 %v6306
        %v7228 = vunpack.c.l.b16 %v6307
        %v7229 = vunpack.c.h.b16 %v6307
        %v7230 = vunpack.c.l.b16 %v6308
        %v7231 = vunpack.c.h.b16 %v6308
        %v7232 = vunpack.c.l.b16 %v6309
        %v7233 = vunpack.c.h.b16 %v6309
        %v7234 = vunpack.c.l.b16 %v6310
        %v7235 = vunpack.c.l.b16 %v6311
        %v7236 = vunpack.c.h.b16 %v6311
        %v7237 = vunpack.c.l.b16 %v6312
        %v7238 = vunpack.c.h.b16 %v6312
        %v7239 = vunpack.c.l.b16 %v6313
        %v7240 = vunpack.c.h.b16 %v6313
        %v7241 = vunpack.c.l.b16 %v6314
        %v7242 = vunpack.c.h.b16 %v6314
        %v7243 = vunpack.c.l.b16 %v6315
        %v7244 = vunpack.c.l.b16 %v6316
        %v7245 = vunpack.c.h.b16 %v6316
        %v7246 = vunpack.c.l.b16 %v6317
        %v7247 = vunpack.c.h.b16 %v6317
        %v7248 = vunpack.c.l.b16 %v6318
        %v7249 = vunpack.c.h.b16 %v6318
        %v7250 = vunpack.c.l.b16 %v6319
        %v7251 = vunpack.c.h.b16 %v6319
        %v7252 = vunpack.c.l.b16 %v6320
        %v7253 = vunpack.c.l.b16 %v6321
        %v7254 = vunpack.c.h.b16 %v6321
        %v7255 = vunpack.c.l.b16 %v6322
        %v7256 = vunpack.c.h.b16 %v6322
        %v7257 = vunpack.c.l.b16 %v6323
        %v7258 = vunpack.c.h.b16 %v6323
        %v7259 = vunpack.c.l.b16 %v6324
        %v7260 = vunpack.c.h.b16 %v6324
        %v7261 = vunpack.c.l.b16 %v6325
        %v7262 = vunpack.c.l.b16 %v6326
        %v7263 = vunpack.c.h.b16 %v6326
        %v7264 = vunpack.c.l.b16 %v6327
        %v7265 = vunpack.c.h.b16 %v6327
        %v7266 = vunpack.c.l.b16 %v6328
        %v7267 = vunpack.c.h.b16 %v6328
        %v7268 = vunpack.c.l.b16 %v6329
        %v7269 = vunpack.c.h.b16 %v6329
        %v7270 = vunpack.c.l.b16 %v6330
        %v7271 = vunpack.c.l.b16 %v6331
        %v7272 = vunpack.c.h.b16 %v6331
        %v7273 = vunpack.c.l.b16 %v6332
        %v7274 = vunpack.c.h.b16 %v6332
        %v7275 = vunpack.c.l.b16 %v6333
        %v7276 = vunpack.c.h.b16 %v6333
        %v7277 = vunpack.c.l.b16 %v6334
        %v7278 = vunpack.c.h.b16 %v6334
        %v7279 = vunpack.c.l.b16 %v6335
        %v7280 = vunpack.c.l.b16 %v6336
        %v7281 = vunpack.c.h.b16 %v6336
        %v7282 = vunpack.c.l.b16 %v6337
        %v7283 = vunpack.c.h.b16 %v6337
        %v7284 = vunpack.c.l.b16 %v6338
        %v7285 = vunpack.c.h.b16 %v6338
        %v7286 = vunpack.c.l.b16 %v6339
        %v7287 = vunpack.c.h.b16 %v6339
        %v7288 = vunpack.c.l.b16 %v6340
        %v7289 = vunpack.c.l.b16 %v6341
        %v7290 = vunpack.c.h.b16 %v6341
        %v7291 = vunpack.c.l.b16 %v6342
        %v7292 = vunpack.c.h.b16 %v6342
        %v7293 = vunpack.c.l.b16 %v6343
        %v7294 = vunpack.c.h.b16 %v6343
        %v7295 = vunpack.c.l.b16 %v6344
        %v7296 = vunpack.c.h.b16 %v6344
        %v7297 = vunpack.c.l.b16 %v6345
        %v7298 = vunpack.c.l.b16 %v6346
        %v7299 = vunpack.c.h.b16 %v6346
        %v7300 = vunpack.c.l.b16 %v6347
        %v7301 = vunpack.c.h.b16 %v6347
        %v7302 = vunpack.c.l.b16 %v6348
        %v7303 = vunpack.c.h.b16 %v6348
        %v7304 = vunpack.c.l.b16 %v6349
        %v7305 = vunpack.c.h.b16 %v6349
        %v7306 = vunpack.c.l.b16 %v6350
        %v7307 = vunpack.c.l.b16 %v6351
        %v7308 = vunpack.c.h.b16 %v6351
        %v7309 = vunpack.c.l.b16 %v6352
        %v7310 = vunpack.c.h.b16 %v6352
        %v7311 = vunpack.c.l.b16 %v6353
        %v7312 = vunpack.c.h.b16 %v6353
        %v7313 = vunpack.c.l.b16 %v6354
        %v7314 = vunpack.c.h.b16 %v6354
        %v7315 = vunpack.c.l.b16 %v6355
        %v7316 = vunpack.c.l.b16 %v6356
        %v7317 = vunpack.c.h.b16 %v6356
        %v7318 = vunpack.c.l.b16 %v6357
        %v7319 = vunpack.c.h.b16 %v6357
        %v7320 = vunpack.c.l.b16 %v6358
        %v7321 = vunpack.c.h.b16 %v6358
        %v7322 = vunpack.c.l.b16 %v6359
        %v7323 = vunpack.c.h.b16 %v6359
        %v7324 = vunpack.c.l.b16 %v6360
        %v7325 = vunpack.c.l.b16 %v6361
        %v7326 = vunpack.c.h.b16 %v6361
        %v7327 = vunpack.c.l.b16 %v6362
        %v7328 = vunpack.c.h.b16 %v6362
        %v7329 = vunpack.c.l.b16 %v6363
        %v7330 = vunpack.c.h.b16 %v6363
        %v7331 = vunpack.c.l.b16 %v6364
        %v7332 = vunpack.c.h.b16 %v6364
        %v7333 = vunpack.c.l.b16 %v6365
        %v7334 = vpack.c.b16 %v6911, %v6902
        %v7335 = vpack.c.b16 %v6912, %v6903
        %v7336 = vpack.c.b16 %v6913, %v6904
        %v7337 = vpack.c.b16 %v6914, %v6905
        %v7338 = vpack.c.b16 %v6915, %v6906
        %v7339 = vpack.c.b16 %v6916, %v6907
        %v7340 = vpack.c.b16 %v6917, %v6908
        %v7341 = vpack.c.b16 %v6918, %v6909
        %v7342 = vpack.c.b16 %v6919, %v6910
        %v7343 = vpack.c.b16 %v6929, %v6920
        %v7344 = vpack.c.b16 %v6930, %v6921
        %v7345 = vpack.c.b16 %v6931, %v6922
        %v7346 = vpack.c.b16 %v6932, %v6923
        %v7347 = vpack.c.b16 %v6933, %v6924
        %v7348 = vpack.c.b16 %v6934, %v6925
        %v7349 = vpack.c.b16 %v6935, %v6926
        %v7350 = vpack.c.b16 %v6936, %v6927
        %v7351 = vpack.c.b16 %v6937, %v6928
        %v7352 = vpack.c.b16 %v6947, %v6938
        %v7353 = vpack.c.b16 %v6948, %v6939
        %v7354 = vpack.c.b16 %v6949, %v6940
        %v7355 = vpack.c.b16 %v6950, %v6941
        %v7356 = vpack.c.b16 %v6951, %v6942
        %v7357 = vpack.c.b16 %v6952, %v6943
        %v7358 = vpack.c.b16 %v6953, %v6944
        %v7359 = vpack.c.b16 %v6954, %v6945
        %v7360 = vpack.c.b16 %v6955, %v6946
        %v7361 = vpack.c.b16 %v6965, %v6956
        %v7362 = vpack.c.b16 %v6966, %v6957
        %v7363 = vpack.c.b16 %v6967, %v6958
        %v7364 = vpack.c.b16 %v6968, %v6959
        %v7365 = vpack.c.b16 %v6969, %v6960
        %v7366 = vpack.c.b16 %v6970, %v6961
        %v7367 = vpack.c.b16 %v6971, %v6962
        %v7368 = vpack.c.b16 %v6972, %v6963
        %v7369 = vpack.c.b16 %v6973, %v6964
        %v7370 = vpack.c.b16 %v6983, %v6974
        %v7371 = vpack.c.b16 %v6984, %v6975
        %v7372 = vpack.c.b16 %v6985, %v6976
        %v7373 = vpack.c.b16 %v6986, %v6977
        %v7374 = vpack.c.b16 %v6987, %v6978
        %v7375 = vpack.c.b16 %v6988, %v6979
        %v7376 = vpack.c.b16 %v6989, %v6980
        %v7377 = vpack.c.b16 %v6990, %v6981
        %v7378 = vpack.c.b16 %v6991, %v6982
        %v7379 = vpack.c.b16 %v7001, %v6992
        %v7380 = vpack.c.b16 %v7002, %v6993
        %v7381 = vpack.c.b16 %v7003, %v6994
        %v7382 = vpack.c.b16 %v7004, %v6995
        %v7383 = vpack.c.b16 %v7005, %v6996
        %v7384 = vpack.c.b16 %v7006, %v6997
        %v7385 = vpack.c.b16 %v7007, %v6998
        %v7386 = vpack.c.b16 %v7008, %v6999
        %v7387 = vpack.c.b16 %v7009, %v7000
        %v7388 = vpack.c.b16 %v7019, %v7010
        %v7389 = vpack.c.b16 %v7020, %v7011
        %v7390 = vpack.c.b16 %v7021, %v7012
        %v7391 = vpack.c.b16 %v7022, %v7013
        %v7392 = vpack.c.b16 %v7023, %v7014
        %v7393 = vpack.c.b16 %v7024, %v7015
        %v7394 = vpack.c.b16 %v7025, %v7016
        %v7395 = vpack.c.b16 %v7026, %v7017
        %v7396 = vpack.c.b16 %v7027, %v7018
        %v7397 = vpack.c.b16 %v7037, %v7028
        %v7398 = vpack.c.b16 %v7038, %v7029
        %v7399 = vpack.c.b16 %v7039, %v7030
        %v7400 = vpack.c.b16 %v7040, %v7031
        %v7401 = vpack.c.b16 %v7041, %v7032
        %v7402 = vpack.c.b16 %v7042, %v7033
        %v7403 = vpack.c.b16 %v7043, %v7034
        %v7404 = vpack.c.b16 %v7044, %v7035
        %v7405 = vpack.c.b16 %v7045, %v7036
        %v7406 = vpack.c.b16 %v7055, %v7046
        %v7407 = vpack.c.b16 %v7056, %v7047
        %v7408 = vpack.c.b16 %v7057, %v7048
        %v7409 = vpack.c.b16 %v7058, %v7049
        %v7410 = vpack.c.b16 %v7059, %v7050
        %v7411 = vpack.c.b16 %v7060, %v7051
        %v7412 = vpack.c.b16 %v7061, %v7052
        %v7413 = vpack.c.b16 %v7062, %v7053
        %v7414 = vpack.c.b16 %v7063, %v7054
        %v7415 = vpack.c.b16 %v7073, %v7064
        %v7416 = vpack.c.b16 %v7074, %v7065
        %v7417 = vpack.c.b16 %v7075, %v7066
        %v7418 = vpack.c.b16 %v7076, %v7067
        %v7419 = vpack.c.b16 %v7077, %v7068
        %v7420 = vpack.c.b16 %v7078, %v7069
        %v7421 = vpack.c.b16 %v7079, %v7070
        %v7422 = vpack.c.b16 %v7080, %v7071
        %v7423 = vpack.c.b16 %v7081, %v7072
        %v7424 = vpack.c.b16 %v7091, %v7082
        %v7425 = vpack.c.b16 %v7092, %v7083
        %v7426 = vpack.c.b16 %v7093, %v7084
        %v7427 = vpack.c.b16 %v7094, %v7085
        %v7428 = vpack.c.b16 %v7095, %v7086
        %v7429 = vpack.c.b16 %v7096, %v7087
        %v7430 = vpack.c.b16 %v7097, %v7088
        %v7431 = vpack.c.b16 %v7098, %v7089
        %v7432 = vpack.c.b16 %v7099, %v7090
        %v7433 = vpack.c.b16 %v7109, %v7100
        %v7434 = vpack.c.b16 %v7110, %v7101
        %v7435 = vpack.c.b16 %v7111, %v7102
        %v7436 = vpack.c.b16 %v7112, %v7103
        %v7437 = vpack.c.b16 %v7113, %v7104
        %v7438 = vpack.c.b16 %v7114, %v7105
        %v7439 = vpack.c.b16 %v7115, %v7106
        %v7440 = vpack.c.b16 %v7116, %v7107
        %v7441 = vpack.c.b16 %v7117, %v7108
        %v7442 = vpack.c.b16 %v7127, %v7118
        %v7443 = vpack.c.b16 %v7128, %v7119
        %v7444 = vpack.c.b16 %v7129, %v7120
        %v7445 = vpack.c.b16 %v7130, %v7121
        %v7446 = vpack.c.b16 %v7131, %v7122
        %v7447 = vpack.c.b16 %v7132, %v7123
        %v7448 = vpack.c.b16 %v7133, %v7124
        %v7449 = vpack.c.b16 %v7134, %v7125
        %v7450 = vpack.c.b16 %v7135, %v7126
        %v7451 = vpack.c.b16 %v7145, %v7136
        %v7452 = vpack.c.b16 %v7146, %v7137
        %v7453 = vpack.c.b16 %v7147, %v7138
        %v7454 = vpack.c.b16 %v7148, %v7139
        %v7455 = vpack.c.b16 %v7149, %v7140
        %v7456 = vpack.c.b16 %v7150, %v7141
        %v7457 = vpack.c.b16 %v7151, %v7142
        %v7458 = vpack.c.b16 %v7152, %v7143
        %v7459 = vpack.c.b16 %v7153, %v7144
        %v7460 = vpack.c.b16 %v7163, %v7154
        %v7461 = vpack.c.b16 %v7164, %v7155
        %v7462 = vpack.c.b16 %v7165, %v7156
        %v7463 = vpack.c.b16 %v7166, %v7157
        %v7464 = vpack.c.b16 %v7167, %v7158
        %v7465 = vpack.c.b16 %v7168, %v7159
        %v7466 = vpack.c.b16 %v7169, %v7160
        %v7467 = vpack.c.b16 %v7170, %v7161
        %v7468 = vpack.c.b16 %v7171, %v7162
        %v7469 = vpack.c.b16 %v7181, %v7172
        %v7470 = vpack.c.b16 %v7182, %v7173
        %v7471 = vpack.c.b16 %v7183, %v7174
        %v7472 = vpack.c.b16 %v7184, %v7175
        %v7473 = vpack.c.b16 %v7185, %v7176
        %v7474 = vpack.c.b16 %v7186, %v7177
        %v7475 = vpack.c.b16 %v7187, %v7178
        %v7476 = vpack.c.b16 %v7188, %v7179
        %v7477 = vpack.c.b16 %v7189, %v7180
        %v7478 = vpack.c.b16 %v7199, %v7190
        %v7479 = vpack.c.b16 %v7200, %v7191
        %v7480 = vpack.c.b16 %v7201, %v7192
        %v7481 = vpack.c.b16 %v7202, %v7193
        %v7482 = vpack.c.b16 %v7203, %v7194
        %v7483 = vpack.c.b16 %v7204, %v7195
        %v7484 = vpack.c.b16 %v7205, %v7196
        %v7485 = vpack.c.b16 %v7206, %v7197
        %v7486 = vpack.c.b16 %v7207, %v7198
        %v7487 = vpack.c.b16 %v7217, %v7208
        %v7488 = vpack.c.b16 %v7218, %v7209
        %v7489 = vpack.c.b16 %v7219, %v7210
        %v7490 = vpack.c.b16 %v7220, %v7211
        %v7491 = vpack.c.b16 %v7221, %v7212
        %v7492 = vpack.c.b16 %v7222, %v7213
        %v7493 = vpack.c.b16 %v7223, %v7214
        %v7494 = vpack.c.b16 %v7224, %v7215
        %v7495 = vpack.c.b16 %v7225, %v7216
        %v7496 = vpack.c.b16 %v7235, %v7226
        %v7497 = vpack.c.b16 %v7236, %v7227
        %v7498 = vpack.c.b16 %v7237, %v7228
        %v7499 = vpack.c.b16 %v7238, %v7229
        %v7500 = vpack.c.b16 %v7239, %v7230
        %v7501 = vpack.c.b16 %v7240, %v7231
        %v7502 = vpack.c.b16 %v7241, %v7232
        %v7503 = vpack.c.b16 %v7242, %v7233
        %v7504 = vpack.c.b16 %v7243, %v7234
        %v7505 = vpack.c.b16 %v7253, %v7244
        %v7506 = vpack.c.b16 %v7254, %v7245
        %v7507 = vpack.c.b16 %v7255, %v7246
        %v7508 = vpack.c.b16 %v7256, %v7247
        %v7509 = vpack.c.b16 %v7257, %v7248
        %v7510 = vpack.c.b16 %v7258, %v7249
        %v7511 = vpack.c.b16 %v7259, %v7250
        %v7512 = vpack.c.b16 %v7260, %v7251
        %v7513 = vpack.c.b16 %v7261, %v7252
        %v7514 = vpack.c.b16 %v7271, %v7262
        %v7515 = vpack.c.b16 %v7272, %v7263
        %v7516 = vpack.c.b16 %v7273, %v7264
        %v7517 = vpack.c.b16 %v7274, %v7265
        %v7518 = vpack.c.b16 %v7275, %v7266
        %v7519 = vpack.c.b16 %v7276, %v7267
        %v7520 = vpack.c.b16 %v7277, %v7268
        %v7521 = vpack.c.b16 %v7278, %v7269
        %v7522 = vpack.c.b16 %v7279, %v7270
        %v7523 = vpack.c.b16 %v7289, %v7280
        %v7524 = vpack.c.b16 %v7290, %v7281
        %v7525 = vpack.c.b16 %v7291, %v7282
        %v7526 = vpack.c.b16 %v7292, %v7283
        %v7527 = vpack.c.b16 %v7293, %v7284
        %v7528 = vpack.c.b16 %v7294, %v7285
        %v7529 = vpack.c.b16 %v7295, %v7286
        %v7530 = vpack.c.b16 %v7296, %v7287
        %v7531 = vpack.c.b16 %v7297, %v7288
        %v7532 = vpack.c.b16 %v7307, %v7298
        %v7533 = vpack.c.b16 %v7308, %v7299
        %v7534 = vpack.c.b16 %v7309, %v7300
        %v7535 = vpack.c.b16 %v7310, %v7301
        %v7536 = vpack.c.b16 %v7311, %v7302
        %v7537 = vpack.c.b16 %v7312, %v7303
        %v7538 = vpack.c.b16 %v7313, %v7304
        %v7539 = vpack.c.b16 %v7314, %v7305
        %v7540 = vpack.c.b16 %v7315, %v7306
        %v7541 = vpack.c.b16 %v7325, %v7316
        %v7542 = vpack.c.b16 %v7326, %v7317
        %v7543 = vpack.c.b16 %v7327, %v7318
        %v7544 = vpack.c.b16 %v7328, %v7319
        %v7545 = vpack.c.b16 %v7329, %v7320
        %v7546 = vpack.c.b16 %v7330, %v7321
        %v7547 = vpack.c.b16 %v7331, %v7322
        %v7548 = vpack.c.b16 %v7332, %v7323
        %v7549 = vpack.c.b16 %v7333, %v7324
        %7766 = vmatprep.subr.bf16.mxu0 %v7335
        %7767 = vmatpush1.bf16.msra.mxu0 %v7334
        %7768 = vmatprep.subr.bf16.mxu0 %v7344
        %7769 = vmatpush1.bf16.msra.mxu0 %v7343
        %7770 = vmatprep.subr.bf16.mxu0 %v7353
        %7771 = vmatpush1.bf16.msra.mxu0 %v7352
        %7772 = vmatprep.subr.bf16.mxu0 %v7362
        %7773 = vmatpush1.bf16.msra.mxu0 %v7361
        %7774 = vmatprep.subr.bf16.mxu0 %v7371
        %7775 = vmatpush1.bf16.msra.mxu0 %v7370
        %7776 = vmatprep.subr.bf16.mxu0 %v7380
        %7777 = vmatpush1.bf16.msra.mxu0 %v7379
        %7778 = vmatprep.subr.bf16.mxu0 %v7389
        %7779 = vmatpush1.bf16.msra.mxu0 %v7388
        %7780 = vmatprep.subr.bf16.mxu0 %v7398
        %7781 = vmatpush1.bf16.msra.mxu0 %v7397
        %7782 = vmatprep.subr.bf16.mxu0 %v7407
        %7783 = vmatpush1.bf16.msra.mxu0 %v7406
        %7784 = vmatprep.subr.bf16.mxu0 %v7416
        %7785 = vmatpush1.bf16.msra.mxu0 %v7415
        %7786 = vmatprep.subr.bf16.mxu0 %v7425
        %7787 = vmatpush1.bf16.msra.mxu0 %v7424
        %7788 = vmatprep.subr.bf16.mxu0 %v7434
        %7789 = vmatpush1.bf16.msra.mxu0 %v7433
        %7790 = vmatprep.subr.bf16.mxu0 %v7443
        %7791 = vmatpush1.bf16.msra.mxu0 %v7442
        %7792 = vmatprep.subr.bf16.mxu0 %v7452
        %7793 = vmatpush1.bf16.msra.mxu0 %v7451
        %7794 = vmatprep.subr.bf16.mxu0 %v7461
        %7795 = vmatpush1.bf16.msra.mxu0 %v7460
        %7796 = vmatprep.subr.bf16.mxu0 %v7470
        %7797 = vmatpush1.bf16.msra.mxu0 %v7469
        %7798 = vmatprep.mubr.bf16.mxu0 %v6607
        %7799 = vmatmul.mubr.bf16.gmra.mrb[0].mxu0 %v6606
        %v7800 = vpop.f32.mrb[0].mxu0
        %v7801 = vadd.f32 %v6620, %v7800
        %v7802 = vpop.f32.mrb[0].mxu0
        %v7803 = vadd.f32 %v6624, %v7802
        %v7804 = vpop.f32.mrb[0].mxu0
        %v7805 = vpop.f32.mrb[0].mxu0
        %7806 = vdwg.mxu0
        %7807 = vmatprep.subr.bf16.mxu0 %v7479
        %7808 = vmatpush1.bf16.msra.mxu0 %v7478
        %7809 = vmatprep.subr.bf16.mxu0 %v7488
        %7810 = vmatpush1.bf16.msra.mxu0 %v7487
        %7811 = vmatprep.subr.bf16.mxu0 %v7497
        %7812 = vmatpush1.bf16.msra.mxu0 %v7496
        %7813 = vmatprep.subr.bf16.mxu0 %v7506
        %7814 = vmatpush1.bf16.msra.mxu0 %v7505
        %7815 = vmatprep.subr.bf16.mxu0 %v7515
        %7816 = vmatpush1.bf16.msra.mxu0 %v7514
        %7817 = vmatprep.subr.bf16.mxu0 %v7524
        %7818 = vmatpush1.bf16.msra.mxu0 %v7523
        %7819 = vmatprep.subr.bf16.mxu0 %v7533
        %7820 = vmatpush1.bf16.msra.mxu0 %v7532
        %7821 = vmatprep.subr.bf16.mxu0 %v7542
        %7822 = vmatpush1.bf16.msra.mxu0 %v7541
        %7823 = vmatprep.subr.bf16.mxu0 0
        %7824 = vmatpush1.bf16.msra.mxu0 0
        %7825 = vmatprep.subr.bf16.mxu0 0
        %7826 = vmatpush1.bf16.msra.mxu0 0
        %7827 = vmatprep.subr.bf16.mxu0 0
        %7828 = vmatpush1.bf16.msra.mxu0 0
        %7829 = vmatprep.subr.bf16.mxu0 0
        %7830 = vmatpush1.bf16.msra.mxu0 0
        %7831 = vmatprep.subr.bf16.mxu0 0
        %7832 = vmatpush1.bf16.msra.mxu0 0
        %7833 = vmatprep.subr.bf16.mxu0 0
        %7834 = vmatpush1.bf16.msra.mxu0 0
        %7835 = vmatprep.subr.bf16.mxu0 0
        %7836 = vmatpush1.bf16.msra.mxu0 0
        %7837 = vmatprep.subr.bf16.mxu0 0
        %7838 = vmatpush1.bf16.msra.mxu0 0
        %7839 = vmatprep.mubr.bf16.mxu0 0
        %7840 = vmatmul.mubr.bf16.gmra.mrb[0].mxu0 %v6608
        %v7841 = vpop.f32.mrb[0].mxu0
        %v7842 = vadd.f32 %v7801, %v7841
        %v7843 = vpop.f32.mrb[0].mxu0
        %v7844 = vadd.f32 %v7803, %v7843
        %v7845 = vpop.f32.mrb[0].mxu0
        %v7846 = vpop.f32.mrb[0].mxu0
        %7847 = vdwg.mxu0
        %7848 = vmatprep.subr.bf16.mxu0 %v7337
        %7849 = vmatpush1.bf16.msra.mxu0 %v7336
        %7850 = vmatprep.subr.bf16.mxu0 %v7346
        %7851 = vmatpush1.bf16.msra.mxu0 %v7345
        %7852 = vmatprep.subr.bf16.mxu0 %v7355
        %7853 = vmatpush1.bf16.msra.mxu0 %v7354
        %7854 = vmatprep.subr.bf16.mxu0 %v7364
        %7855 = vmatpush1.bf16.msra.mxu0 %v7363
        %7856 = vmatprep.subr.bf16.mxu0 %v7373
        %7857 = vmatpush1.bf16.msra.mxu0 %v7372
        %7858 = vmatprep.subr.bf16.mxu0 %v7382
        %7859 = vmatpush1.bf16.msra.mxu0 %v7381
        %7860 = vmatprep.subr.bf16.mxu0 %v7391
        %7861 = vmatpush1.bf16.msra.mxu0 %v7390
        %7862 = vmatprep.subr.bf16.mxu0 %v7400
        %7863 = vmatpush1.bf16.msra.mxu0 %v7399
        %7864 = vmatprep.subr.bf16.mxu0 %v7409
        %7865 = vmatpush1.bf16.msra.mxu0 %v7408
        %7866 = vmatprep.subr.bf16.mxu0 %v7418
        %7867 = vmatpush1.bf16.msra.mxu0 %v7417
        %7868 = vmatprep.subr.bf16.mxu0 %v7427
        %7869 = vmatpush1.bf16.msra.mxu0 %v7426
        %7870 = vmatprep.subr.bf16.mxu0 %v7436
        %7871 = vmatpush1.bf16.msra.mxu0 %v7435
        %7872 = vmatprep.subr.bf16.mxu0 %v7445
        %7873 = vmatpush1.bf16.msra.mxu0 %v7444
        %7874 = vmatprep.subr.bf16.mxu0 %v7454
        %7875 = vmatpush1.bf16.msra.mxu0 %v7453
        %7876 = vmatprep.subr.bf16.mxu0 %v7463
        %7877 = vmatpush1.bf16.msra.mxu0 %v7462
        %7878 = vmatprep.subr.bf16.mxu0 %v7472
        %7879 = vmatpush1.bf16.msra.mxu0 %v7471
        %7880 = vmatprep.mubr.bf16.mxu0 %v6607
        %7881 = vmatmul.mubr.bf16.gmra.mrb[0].mxu0 %v6606
        %v7882 = vpop.f32.mrb[0].mxu0
        %v7883 = vadd.f32 %v6628, %v7882
        %v7884 = vpop.f32.mrb[0].mxu0
        %v7885 = vadd.f32 %v6632, %v7884
        %v7886 = vpop.f32.mrb[0].mxu0
        %v7887 = vpop.f32.mrb[0].mxu0
        %7888 = vdwg.mxu0
        %7889 = vmatprep.subr.bf16.mxu0 %v7481
        %7890 = vmatpush1.bf16.msra.mxu0 %v7480
        %7891 = vmatprep.subr.bf16.mxu0 %v7490
        %7892 = vmatpush1.bf16.msra.mxu0 %v7489
        %7893 = vmatprep.subr.bf16.mxu0 %v7499
        %7894 = vmatpush1.bf16.msra.mxu0 %v7498
        %7895 = vmatprep.subr.bf16.mxu0 %v7508
        %7896 = vmatpush1.bf16.msra.mxu0 %v7507
        %7897 = vmatprep.subr.bf16.mxu0 %v7517
        %7898 = vmatpush1.bf16.msra.mxu0 %v7516
        %7899 = vmatprep.subr.bf16.mxu0 %v7526
        %7900 = vmatpush1.bf16.msra.mxu0 %v7525
        %7901 = vmatprep.subr.bf16.mxu0 %v7535
        %7902 = vmatpush1.bf16.msra.mxu0 %v7534
        %7903 = vmatprep.subr.bf16.mxu0 %v7544
        %7904 = vmatpush1.bf16.msra.mxu0 %v7543
        %7905 = vmatprep.subr.bf16.mxu0 0
        %7906 = vmatpush1.bf16.msra.mxu0 0
        %7907 = vmatprep.subr.bf16.mxu0 0
        %7908 = vmatpush1.bf16.msra.mxu0 0
        %7909 = vmatprep.subr.bf16.mxu0 0
        %7910 = vmatpush1.bf16.msra.mxu0 0
        %7911 = vmatprep.subr.bf16.mxu0 0
        %7912 = vmatpush1.bf16.msra.mxu0 0
        %7913 = vmatprep.subr.bf16.mxu0 0
        %7914 = vmatpush1.bf16.msra.mxu0 0
        %7915 = vmatprep.subr.bf16.mxu0 0
        %7916 = vmatpush1.bf16.msra.mxu0 0
        %7917 = vmatprep.subr.bf16.mxu0 0
        %7918 = vmatpush1.bf16.msra.mxu0 0
        %7919 = vmatprep.subr.bf16.mxu0 0
        %7920 = vmatpush1.bf16.msra.mxu0 0
        %7921 = vmatprep.mubr.bf16.mxu0 0
        %7922 = vmatmul.mubr.bf16.gmra.mrb[0].mxu0 %v6608
        %v7923 = vpop.f32.mrb[0].mxu0
        %v7924 = vadd.f32 %v7883, %v7923
        %v7925 = vpop.f32.mrb[0].mxu0
        %v7926 = vadd.f32 %v7885, %v7925
        %v7927 = vpop.f32.mrb[0].mxu0
        %v7928 = vpop.f32.mrb[0].mxu0
        %7929 = vdwg.mxu0
        %7930 = vmatprep.subr.bf16.mxu0 %v7339
        %7931 = vmatpush1.bf16.msra.mxu0 %v7338
        %7932 = vmatprep.subr.bf16.mxu0 %v7348
        %7933 = vmatpush1.bf16.msra.mxu0 %v7347
        %7934 = vmatprep.subr.bf16.mxu0 %v7357
        %7935 = vmatpush1.bf16.msra.mxu0 %v7356
        %7936 = vmatprep.subr.bf16.mxu0 %v7366
        %7937 = vmatpush1.bf16.msra.mxu0 %v7365
        %7938 = vmatprep.subr.bf16.mxu0 %v7375
        %7939 = vmatpush1.bf16.msra.mxu0 %v7374
        %7940 = vmatprep.subr.bf16.mxu0 %v7384
        %7941 = vmatpush1.bf16.msra.mxu0 %v7383
        %7942 = vmatprep.subr.bf16.mxu0 %v7393
        %7943 = vmatpush1.bf16.msra.mxu0 %v7392
        %7944 = vmatprep.subr.bf16.mxu0 %v7402
        %7945 = vmatpush1.bf16.msra.mxu0 %v7401
        %7946 = vmatprep.subr.bf16.mxu0 %v7411
        %7947 = vmatpush1.bf16.msra.mxu0 %v7410
        %7948 = vmatprep.subr.bf16.mxu0 %v7420
        %7949 = vmatpush1.bf16.msra.mxu0 %v7419
        %7950 = vmatprep.subr.bf16.mxu0 %v7429
        %7951 = vmatpush1.bf16.msra.mxu0 %v7428
        %7952 = vmatprep.subr.bf16.mxu0 %v7438
        %7953 = vmatpush1.bf16.msra.mxu0 %v7437
        %7954 = vmatprep.subr.bf16.mxu0 %v7447
        %7955 = vmatpush1.bf16.msra.mxu0 %v7446
        %7956 = vmatprep.subr.bf16.mxu0 %v7456
        %7957 = vmatpush1.bf16.msra.mxu0 %v7455
        %7958 = vmatprep.subr.bf16.mxu0 %v7465
        %7959 = vmatpush1.bf16.msra.mxu0 %v7464
        %7960 = vmatprep.subr.bf16.mxu0 %v7474
        %7961 = vmatpush1.bf16.msra.mxu0 %v7473
        %7962 = vmatprep.mubr.bf16.mxu0 %v6607
        %7963 = vmatmul.mubr.bf16.gmra.mrb[0].mxu0 %v6606
        %v7964 = vpop.f32.mrb[0].mxu0
        %v7965 = vadd.f32 %v6636, %v7964
        %v7966 = vpop.f32.mrb[0].mxu0
        %v7967 = vadd.f32 %v6640, %v7966
        %v7968 = vpop.f32.mrb[0].mxu0
        %v7969 = vpop.f32.mrb[0].mxu0
        %7970 = vdwg.mxu0
        %7971 = vmatprep.subr.bf16.mxu0 %v7483
        %7972 = vmatpush1.bf16.msra.mxu0 %v7482
        %7973 = vmatprep.subr.bf16.mxu0 %v7492
        %7974 = vmatpush1.bf16.msra.mxu0 %v7491
        %7975 = vmatprep.subr.bf16.mxu0 %v7501
        %7976 = vmatpush1.bf16.msra.mxu0 %v7500
        %7977 = vmatprep.subr.bf16.mxu0 %v7510
        %7978 = vmatpush1.bf16.msra.mxu0 %v7509
        %7979 = vmatprep.subr.bf16.mxu0 %v7519
        %7980 = vmatpush1.bf16.msra.mxu0 %v7518
        %7981 = vmatprep.subr.bf16.mxu0 %v7528
        %7982 = vmatpush1.bf16.msra.mxu0 %v7527
        %7983 = vmatprep.subr.bf16.mxu0 %v7537
        %7984 = vmatpush1.bf16.msra.mxu0 %v7536
        %7985 = vmatprep.subr.bf16.mxu0 %v7546
        %7986 = vmatpush1.bf16.msra.mxu0 %v7545
        %7987 = vmatprep.subr.bf16.mxu0 0
        %7988 = vmatpush1.bf16.msra.mxu0 0
        %7989 = vmatprep.subr.bf16.mxu0 0
        %7990 = vmatpush1.bf16.msra.mxu0 0
        %7991 = vmatprep.subr.bf16.mxu0 0
        %7992 = vmatpush1.bf16.msra.mxu0 0
        %7993 = vmatprep.subr.bf16.mxu0 0
        %7994 = vmatpush1.bf16.msra.mxu0 0
        %7995 = vmatprep.subr.bf16.mxu0 0
        %7996 = vmatpush1.bf16.msra.mxu0 0
        %7997 = vmatprep.subr.bf16.mxu0 0
        %7998 = vmatpush1.bf16.msra.mxu0 0
        %7999 = vmatprep.subr.bf16.mxu0 0
        %8000 = vmatpush1.bf16.msra.mxu0 0
        %8001 = vmatprep.subr.bf16.mxu0 0
        %8002 = vmatpush1.bf16.msra.mxu0 0
        %8003 = vmatprep.mubr.bf16.mxu0 0
        %8004 = vmatmul.mubr.bf16.gmra.mrb[0].mxu0 %v6608
        %v8005 = vpop.f32.mrb[0].mxu0
        %v8006 = vadd.f32 %v7965, %v8005
        %v8007 = vpop.f32.mrb[0].mxu0
        %v8008 = vadd.f32 %v7967, %v8007
        %v8009 = vpop.f32.mrb[0].mxu0
        %v8010 = vpop.f32.mrb[0].mxu0
        %8011 = vdwg.mxu0
        %8012 = vmatprep.subr.bf16.mxu0 %v7341
        %8013 = vmatpush1.bf16.msra.mxu0 %v7340
        %8014 = vmatprep.subr.bf16.mxu0 %v7350
        %8015 = vmatpush1.bf16.msra.mxu0 %v7349
        %8016 = vmatprep.subr.bf16.mxu0 %v7359
        %8017 = vmatpush1.bf16.msra.mxu0 %v7358
        %8018 = vmatprep.subr.bf16.mxu0 %v7368
        %8019 = vmatpush1.bf16.msra.mxu0 %v7367
        %8020 = vmatprep.subr.bf16.mxu0 %v7377
        %8021 = vmatpush1.bf16.msra.mxu0 %v7376
        %8022 = vmatprep.subr.bf16.mxu0 %v7386
        %8023 = vmatpush1.bf16.msra.mxu0 %v7385
        %8024 = vmatprep.subr.bf16.mxu0 %v7395
        %8025 = vmatpush1.bf16.msra.mxu0 %v7394
        %8026 = vmatprep.subr.bf16.mxu0 %v7404
        %8027 = vmatpush1.bf16.msra.mxu0 %v7403
        %8028 = vmatprep.subr.bf16.mxu0 %v7413
        %8029 = vmatpush1.bf16.msra.mxu0 %v7412
        %8030 = vmatprep.subr.bf16.mxu0 %v7422
        %8031 = vmatpush1.bf16.msra.mxu0 %v7421
        %8032 = vmatprep.subr.bf16.mxu0 %v7431
        %8033 = vmatpush1.bf16.msra.mxu0 %v7430
        %8034 = vmatprep.subr.bf16.mxu0 %v7440
        %8035 = vmatpush1.bf16.msra.mxu0 %v7439
        %8036 = vmatprep.subr.bf16.mxu0 %v7449
        %8037 = vmatpush1.bf16.msra.mxu0 %v7448
        %8038 = vmatprep.subr.bf16.mxu0 %v7458
        %8039 = vmatpush1.bf16.msra.mxu0 %v7457
        %8040 = vmatprep.subr.bf16.mxu0 %v7467
        %8041 = vmatpush1.bf16.msra.mxu0 %v7466
        %8042 = vmatprep.subr.bf16.mxu0 %v7476
        %8043 = vmatpush1.bf16.msra.mxu0 %v7475
        %8044 = vmatprep.mubr.bf16.mxu0 %v6607
        %8045 = vmatmul.mubr.bf16.gmra.mrb[0].mxu0 %v6606
        %v8046 = vpop.f32.mrb[0].mxu0
        %v8047 = vadd.f32 %v6644, %v8046
        %v8048 = vpop.f32.mrb[0].mxu0
        %v8049 = vadd.f32 %v6648, %v8048
        %v8050 = vpop.f32.mrb[0].mxu0
        %v8051 = vpop.f32.mrb[0].mxu0
        %8052 = vdwg.mxu0
        %8053 = vmatprep.subr.bf16.mxu0 %v7485
        %8054 = vmatpush1.bf16.msra.mxu0 %v7484
        %8055 = vmatprep.subr.bf16.mxu0 %v7494
        %8056 = vmatpush1.bf16.msra.mxu0 %v7493
        %8057 = vmatprep.subr.bf16.mxu0 %v7503
        %8058 = vmatpush1.bf16.msra.mxu0 %v7502
        %8059 = vmatprep.subr.bf16.mxu0 %v7512
        %8060 = vmatpush1.bf16.msra.mxu0 %v7511
        %8061 = vmatprep.subr.bf16.mxu0 %v7521
        %8062 = vmatpush1.bf16.msra.mxu0 %v7520
        %8063 = vmatprep.subr.bf16.mxu0 %v7530
        %8064 = vmatpush1.bf16.msra.mxu0 %v7529
        %8065 = vmatprep.subr.bf16.mxu0 %v7539
        %8066 = vmatpush1.bf16.msra.mxu0 %v7538
        %8067 = vmatprep.subr.bf16.mxu0 %v7548
        %8068 = vmatpush1.bf16.msra.mxu0 %v7547
        %8069 = vmatprep.subr.bf16.mxu0 0
        %8070 = vmatpush1.bf16.msra.mxu0 0
        %8071 = vmatprep.subr.bf16.mxu0 0
        %8072 = vmatpush1.bf16.msra.mxu0 0
        %8073 = vmatprep.subr.bf16.mxu0 0
        %8074 = vmatpush1.bf16.msra.mxu0 0
        %8075 = vmatprep.subr.bf16.mxu0 0
        %8076 = vmatpush1.bf16.msra.mxu0 0
        %8077 = vmatprep.subr.bf16.mxu0 0
        %8078 = vmatpush1.bf16.msra.mxu0 0
        %8079 = vmatprep.subr.bf16.mxu0 0
        %8080 = vmatpush1.bf16.msra.mxu0 0
        %8081 = vmatprep.subr.bf16.mxu0 0
        %8082 = vmatpush1.bf16.msra.mxu0 0
        %8083 = vmatprep.subr.bf16.mxu0 0
        %8084 = vmatpush1.bf16.msra.mxu0 0
        %8085 = vmatprep.mubr.bf16.mxu0 0
        %8086 = vmatmul.mubr.bf16.gmra.mrb[0].mxu0 %v6608
        %v8087 = vpop.f32.mrb[0].mxu0
        %v8088 = vadd.f32 %v8047, %v8087
        %v8089 = vpop.f32.mrb[0].mxu0
        %v8090 = vadd.f32 %v8049, %v8089
        %v8091 = vpop.f32.mrb[0].mxu0
        %v8092 = vpop.f32.mrb[0].mxu0
        %8093 = vdwg.mxu0
        %8094 = vmatprep.subr.bf16.mxu0 0
        %8095 = vmatpush1.bf16.msra.mxu0 %v7342
        %8096 = vmatprep.subr.bf16.mxu0 0
        %8097 = vmatpush1.bf16.msra.mxu0 %v7351
        %8098 = vmatprep.subr.bf16.mxu0 0
        %8099 = vmatpush1.bf16.msra.mxu0 %v7360
        %8100 = vmatprep.subr.bf16.mxu0 0
        %8101 = vmatpush1.bf16.msra.mxu0 %v7369
        %8102 = vmatprep.subr.bf16.mxu0 0
        %8103 = vmatpush1.bf16.msra.mxu0 %v7378
        %8104 = vmatprep.subr.bf16.mxu0 0
        %8105 = vmatpush1.bf16.msra.mxu0 %v7387
        %8106 = vmatprep.subr.bf16.mxu0 0
        %8107 = vmatpush1.bf16.msra.mxu0 %v7396
        %8108 = vmatprep.subr.bf16.mxu0 0
        %8109 = vmatpush1.bf16.msra.mxu0 %v7405
        %8110 = vmatprep.subr.bf16.mxu0 0
        %8111 = vmatpush1.bf16.msra.mxu0 %v7414
        %8112 = vmatprep.subr.bf16.mxu0 0
        %8113 = vmatpush1.bf16.msra.mxu0 %v7423
        %8114 = vmatprep.subr.bf16.mxu0 0
        %8115 = vmatpush1.bf16.msra.mxu0 %v7432
        %8116 = vmatprep.subr.bf16.mxu0 0
        %8117 = vmatpush1.bf16.msra.mxu0 %v7441
        %8118 = vmatprep.subr.bf16.mxu0 0
        %8119 = vmatpush1.bf16.msra.mxu0 %v7450
        %8120 = vmatprep.subr.bf16.mxu0 0
        %8121 = vmatpush1.bf16.msra.mxu0 %v7459
        %8122 = vmatprep.subr.bf16.mxu0 0
        %8123 = vmatpush1.bf16.msra.mxu0 %v7468
        %8124 = vmatprep.subr.bf16.mxu0 0
        %8125 = vmatpush1.bf16.msra.mxu0 %v7477
        %8126 = vmatprep.mubr.bf16.mxu0 %v6607
        %8127 = vmatmul.mubr.bf16.gmra.mrb[0].mxu0 %v6606
        %v8128 = vpop.f32.mrb[0].mxu0
        %v8129 = vadd.f32 %v6652, %v8128
        %v8130 = vpop.f32.mrb[0].mxu0
        %v8131 = vpop.f32.mrb[0].mxu0
        %v8132 = vpop.f32.mrb[0].mxu0
        %8133 = vdwg.mxu0
        %8134 = vmatprep.subr.bf16.mxu0 0
        %8135 = vmatpush1.bf16.msra.mxu0 %v7486
        %8136 = vmatprep.subr.bf16.mxu0 0
        %8137 = vmatpush1.bf16.msra.mxu0 %v7495
        %8138 = vmatprep.subr.bf16.mxu0 0
        %8139 = vmatpush1.bf16.msra.mxu0 %v7504
        %8140 = vmatprep.subr.bf16.mxu0 0
        %8141 = vmatpush1.bf16.msra.mxu0 %v7513
        %8142 = vmatprep.subr.bf16.mxu0 0
        %8143 = vmatpush1.bf16.msra.mxu0 %v7522
        %8144 = vmatprep.subr.bf16.mxu0 0
        %8145 = vmatpush1.bf16.msra.mxu0 %v7531
        %8146 = vmatprep.subr.bf16.mxu0 0
        %8147 = vmatpush1.bf16.msra.mxu0 %v7540
        %8148 = vmatprep.subr.bf16.mxu0 0
        %8149 = vmatpush1.bf16.msra.mxu0 %v7549
        %8150 = vmatprep.subr.bf16.mxu0 0
        %8151 = vmatpush1.bf16.msra.mxu0 0
        %8152 = vmatprep.subr.bf16.mxu0 0
        %8153 = vmatpush1.bf16.msra.mxu0 0
        %8154 = vmatprep.subr.bf16.mxu0 0
        %8155 = vmatpush1.bf16.msra.mxu0 0
        %8156 = vmatprep.subr.bf16.mxu0 0
        %8157 = vmatpush1.bf16.msra.mxu0 0
        %8158 = vmatprep.subr.bf16.mxu0 0
        %8159 = vmatpush1.bf16.msra.mxu0 0
        %8160 = vmatprep.subr.bf16.mxu0 0
        %8161 = vmatpush1.bf16.msra.mxu0 0
        %8162 = vmatprep.subr.bf16.mxu0 0
        %8163 = vmatpush1.bf16.msra.mxu0 0
        %8164 = vmatprep.subr.bf16.mxu0 0
        %8165 = vmatpush1.bf16.msra.mxu0 0
        %8166 = vmatprep.mubr.bf16.mxu0 0
        %8167 = vmatmul.mubr.bf16.gmra.mrb[0].mxu0 %v6608
        %v8168 = vpop.f32.mrb[0].mxu0
        %v8169 = vadd.f32 %v8129, %v8168
        %v8170 = vpop.f32.mrb[0].mxu0
        %v8171 = vpop.f32.mrb[0].mxu0
        %v8172 = vpop.f32.mrb[0].mxu0
        %8173 = vdwg.mxu0
        %v8174 = vpack.c.bf16 %v7842, %v7842
        %v8175 = vpack.c.bf16 %v7844, %v7844
        %v8176 = vpack.c.bf16 %v7924, %v7924
        %v8177 = vpack.c.bf16 %v7926, %v7926
        %v8178 = vpack.c.bf16 %v8006, %v8006
        %v8179 = vpack.c.bf16 %v8008, %v8008
        %v8180 = vpack.c.bf16 %v8088, %v8088
        %v8181 = vpack.c.bf16 %v8090, %v8090
        %v8182 = vpack.c.bf16 %v8169, %v8169
        %8184 = vrot.lane.b32.xlu0 %v8174, 64
        %v8185 = vpop.permute.xlu0 %8184
        %8187 = vrot.lane.b32.xlu0 %v8175, 64
        %v8188 = vpop.permute.xlu0 %8187
        %8190 = vrot.lane.b32.xlu0 %v8176, 64
        %v8191 = vpop.permute.xlu0 %8190
        %8193 = vrot.lane.b32.xlu0 %v8177, 64
        %v8194 = vpop.permute.xlu0 %8193
        %8196 = vrot.lane.b32.xlu0 %v8178, 64
        %v8197 = vpop.permute.xlu0 %8196
        %8199 = vrot.lane.b32.xlu0 %v8179, 64
        %v8200 = vpop.permute.xlu0 %8199
        %8202 = vrot.lane.b32.xlu0 %v8180, 64
        %v8203 = vpop.permute.xlu0 %8202
        %8205 = vrot.lane.b32.xlu0 %v8181, 64
        %v8206 = vpop.permute.xlu0 %8205
        %8208 = vrot.lane.b32.xlu0 %v8182, 64
        %v8209 = vpop.permute.xlu0 %8208
        %v8211 = vsel %vm2474, %v8174, 0
        %v8214 = vsel %vm2474, %v8177, 0
        %8216 = vmatprep.subr.bf16.mxu0 0
        %8217 = vmatpush1.bf16.xpose.msra.mxu0 %v8214
        %8218 = vmatprep.subr.bf16.mxu0 0
        %8219 = vmatpush1.bf16.xpose.msra.mxu0 0
        %8220 = vmatprep.subr.bf16.mxu0 0
        %8221 = vmatpush1.bf16.xpose.msra.mxu0 0
        %8222 = vmatprep.subr.bf16.mxu0 0
        %8223 = vmatpush1.bf16.xpose.msra.mxu0 0
        %8224 = vmatprep.subr.bf16.mxu0 0
        %8225 = vmatpush1.bf16.xpose.msra.mxu0 0
        %8226 = vmatprep.subr.bf16.mxu0 0
        %8227 = vmatpush1.bf16.xpose.msra.mxu0 0
        %8228 = vmatprep.subr.bf16.mxu0 0
        %8229 = vmatpush1.bf16.xpose.msra.mxu0 0
        %8230 = vmatprep.subr.bf16.mxu0 0
        %8231 = vmatpush1.bf16.xpose.msra.mxu0 0
        %8232 = vmatprep.subr.bf16.mxu0 0
        %8233 = vmatpush1.bf16.xpose.msra.mxu0 0
        %8234 = vmatprep.subr.bf16.mxu0 0
        %8235 = vmatpush1.bf16.xpose.msra.mxu0 0
        %8236 = vmatprep.subr.bf16.mxu0 0
        %8237 = vmatpush1.bf16.xpose.msra.mxu0 0
        %8238 = vmatprep.subr.bf16.mxu0 0
        %8239 = vmatpush1.bf16.xpose.msra.mxu0 0
        %8240 = vmatprep.subr.bf16.mxu0 0
        %8241 = vmatpush1.bf16.xpose.msra.mxu0 0
        %8242 = vmatprep.subr.bf16.mxu0 0
        %8243 = vmatpush1.bf16.xpose.msra.mxu0 0
        %8244 = vmatprep.subr.bf16.mxu0 0
        %8245 = vmatpush1.bf16.xpose.msra.mxu0 0
        %8246 = vmatprep.subr.bf16.mxu0 0
        %8247 = vmatpush1.bf16.xpose.msra.mxu0 0
        %8248 = vmatprep.mubr.bf16.mxu0 0
        %8249 = vmatmul.mubr.bf16.gmra.mrb[0].mxu0 %v8211
        %v8250 = vpop.f32.mrb[0].mxu0
        %v8251 = vadd.f32 0.0, %v8250
        %v8252 = vpop.f32.mrb[0].mxu0
        %v8253 = vpop.f32.mrb[0].mxu0
        %v8254 = vpop.f32.mrb[0].mxu0
        %8255 = vdwg.mxu0
        %v8257 = vsel %vm2474, %v8185, 0
        %v8260 = vsel %vm2474, %v8194, 0
        %8262 = vmatprep.subr.bf16.mxu0 0
        %8263 = vmatpush1.bf16.xpose.msra.mxu0 %v8260
        %8264 = vmatprep.subr.bf16.mxu0 0
        %8265 = vmatpush1.bf16.xpose.msra.mxu0 0
        %8266 = vmatprep.subr.bf16.mxu0 0
        %8267 = vmatpush1.bf16.xpose.msra.mxu0 0
        %8268 = vmatprep.subr.bf16.mxu0 0
        %8269 = vmatpush1.bf16.xpose.msra.mxu0 0
        %8270 = vmatprep.subr.bf16.mxu0 0
        %8271 = vmatpush1.bf16.xpose.msra.mxu0 0
        %8272 = vmatprep.subr.bf16.mxu0 0
        %8273 = vmatpush1.bf16.xpose.msra.mxu0 0
        %8274 = vmatprep.subr.bf16.mxu0 0
        %8275 = vmatpush1.bf16.xpose.msra.mxu0 0
        %8276 = vmatprep.subr.bf16.mxu0 0
        %8277 = vmatpush1.bf16.xpose.msra.mxu0 0
        %8278 = vmatprep.subr.bf16.mxu0 0
        %8279 = vmatpush1.bf16.xpose.msra.mxu0 0
        %8280 = vmatprep.subr.bf16.mxu0 0
        %8281 = vmatpush1.bf16.xpose.msra.mxu0 0
        %8282 = vmatprep.subr.bf16.mxu0 0
        %8283 = vmatpush1.bf16.xpose.msra.mxu0 0
        %8284 = vmatprep.subr.bf16.mxu0 0
        %8285 = vmatpush1.bf16.xpose.msra.mxu0 0
        %8286 = vmatprep.subr.bf16.mxu0 0
        %8287 = vmatpush1.bf16.xpose.msra.mxu0 0
        %8288 = vmatprep.subr.bf16.mxu0 0
        %8289 = vmatpush1.bf16.xpose.msra.mxu0 0
        %8290 = vmatprep.subr.bf16.mxu0 0
        %8291 = vmatpush1.bf16.xpose.msra.mxu0 0
        %8292 = vmatprep.subr.bf16.mxu0 0
        %8293 = vmatpush1.bf16.xpose.msra.mxu0 0
        %8294 = vmatprep.mubr.bf16.mxu0 0
        %8295 = vmatmul.mubr.bf16.gmra.mrb[0].mxu0 %v8257
        %v8296 = vpop.f32.mrb[0].mxu0
        %v8297 = vadd.f32 0.0, %v8296
        %v8298 = vpop.f32.mrb[0].mxu0
        %v8299 = vpop.f32.mrb[0].mxu0
        %v8300 = vpop.f32.mrb[0].mxu0
        %8301 = vdwg.mxu0
        %v8303 = vsel %vm2474, %v8175, 0
        %v8306 = vsel %vm2474, %v8178, 0
        %8308 = vmatprep.subr.bf16.mxu0 0
        %8309 = vmatpush1.bf16.xpose.msra.mxu0 %v8306
        %8310 = vmatprep.subr.bf16.mxu0 0
        %8311 = vmatpush1.bf16.xpose.msra.mxu0 0
        %8312 = vmatprep.subr.bf16.mxu0 0
        %8313 = vmatpush1.bf16.xpose.msra.mxu0 0
        %8314 = vmatprep.subr.bf16.mxu0 0
        %8315 = vmatpush1.bf16.xpose.msra.mxu0 0
        %8316 = vmatprep.subr.bf16.mxu0 0
        %8317 = vmatpush1.bf16.xpose.msra.mxu0 0
        %8318 = vmatprep.subr.bf16.mxu0 0
        %8319 = vmatpush1.bf16.xpose.msra.mxu0 0
        %8320 = vmatprep.subr.bf16.mxu0 0
        %8321 = vmatpush1.bf16.xpose.msra.mxu0 0
        %8322 = vmatprep.subr.bf16.mxu0 0
        %8323 = vmatpush1.bf16.xpose.msra.mxu0 0
        %8324 = vmatprep.subr.bf16.mxu0 0
        %8325 = vmatpush1.bf16.xpose.msra.mxu0 0
        %8326 = vmatprep.subr.bf16.mxu0 0
        %8327 = vmatpush1.bf16.xpose.msra.mxu0 0
        %8328 = vmatprep.subr.bf16.mxu0 0
        %8329 = vmatpush1.bf16.xpose.msra.mxu0 0
        %8330 = vmatprep.subr.bf16.mxu0 0
        %8331 = vmatpush1.bf16.xpose.msra.mxu0 0
        %8332 = vmatprep.subr.bf16.mxu0 0
        %8333 = vmatpush1.bf16.xpose.msra.mxu0 0
        %8334 = vmatprep.subr.bf16.mxu0 0
        %8335 = vmatpush1.bf16.xpose.msra.mxu0 0
        %8336 = vmatprep.subr.bf16.mxu0 0
        %8337 = vmatpush1.bf16.xpose.msra.mxu0 0
        %8338 = vmatprep.subr.bf16.mxu0 0
        %8339 = vmatpush1.bf16.xpose.msra.mxu0 0
        %8340 = vmatprep.mubr.bf16.mxu0 0
        %8341 = vmatmul.mubr.bf16.gmra.mrb[0].mxu0 %v8303
        %v8342 = vpop.f32.mrb[0].mxu0
        %v8343 = vadd.f32 0.0, %v8342
        %v8344 = vpop.f32.mrb[0].mxu0
        %v8345 = vpop.f32.mrb[0].mxu0
        %v8346 = vpop.f32.mrb[0].mxu0
        %8347 = vdwg.mxu0
        %v8349 = vsel %vm2474, %v8188, 0
        %v8352 = vsel %vm2474, %v8197, 0
        %8354 = vmatprep.subr.bf16.mxu0 0
        %8355 = vmatpush1.bf16.xpose.msra.mxu0 %v8352
        %8356 = vmatprep.subr.bf16.mxu0 0
        %8357 = vmatpush1.bf16.xpose.msra.mxu0 0
        %8358 = vmatprep.subr.bf16.mxu0 0
        %8359 = vmatpush1.bf16.xpose.msra.mxu0 0
        %8360 = vmatprep.subr.bf16.mxu0 0
        %8361 = vmatpush1.bf16.xpose.msra.mxu0 0
        %8362 = vmatprep.subr.bf16.mxu0 0
        %8363 = vmatpush1.bf16.xpose.msra.mxu0 0
        %8364 = vmatprep.subr.bf16.mxu0 0
        %8365 = vmatpush1.bf16.xpose.msra.mxu0 0
        %8366 = vmatprep.subr.bf16.mxu0 0
        %8367 = vmatpush1.bf16.xpose.msra.mxu0 0
        %8368 = vmatprep.subr.bf16.mxu0 0
        %8369 = vmatpush1.bf16.xpose.msra.mxu0 0
        %8370 = vmatprep.subr.bf16.mxu0 0
        %8371 = vmatpush1.bf16.xpose.msra.mxu0 0
        %8372 = vmatprep.subr.bf16.mxu0 0
        %8373 = vmatpush1.bf16.xpose.msra.mxu0 0
        %8374 = vmatprep.subr.bf16.mxu0 0
        %8375 = vmatpush1.bf16.xpose.msra.mxu0 0
        %8376 = vmatprep.subr.bf16.mxu0 0
        %8377 = vmatpush1.bf16.xpose.msra.mxu0 0
        %8378 = vmatprep.subr.bf16.mxu0 0
        %8379 = vmatpush1.bf16.xpose.msra.mxu0 0
        %8380 = vmatprep.subr.bf16.mxu0 0
        %8381 = vmatpush1.bf16.xpose.msra.mxu0 0
        %8382 = vmatprep.subr.bf16.mxu0 0
        %8383 = vmatpush1.bf16.xpose.msra.mxu0 0
        %8384 = vmatprep.subr.bf16.mxu0 0
        %8385 = vmatpush1.bf16.xpose.msra.mxu0 0
        %8386 = vmatprep.mubr.bf16.mxu0 0
        %8387 = vmatmul.mubr.bf16.gmra.mrb[0].mxu0 %v8349
        %v8388 = vpop.f32.mrb[0].mxu0
        %v8389 = vadd.f32 0.0, %v8388
        %v8390 = vpop.f32.mrb[0].mxu0
        %v8391 = vpop.f32.mrb[0].mxu0
        %v8392 = vpop.f32.mrb[0].mxu0
        %8393 = vdwg.mxu0
        %v8395 = vsel %vm2474, %v8176, 0
        %v8398 = vsel %vm2474, %v8179, 0
        %8400 = vmatprep.subr.bf16.mxu0 0
        %8401 = vmatpush1.bf16.xpose.msra.mxu0 %v8398
        %8402 = vmatprep.subr.bf16.mxu0 0
        %8403 = vmatpush1.bf16.xpose.msra.mxu0 0
        %8404 = vmatprep.subr.bf16.mxu0 0
        %8405 = vmatpush1.bf16.xpose.msra.mxu0 0
        %8406 = vmatprep.subr.bf16.mxu0 0
        %8407 = vmatpush1.bf16.xpose.msra.mxu0 0
        %8408 = vmatprep.subr.bf16.mxu0 0
        %8409 = vmatpush1.bf16.xpose.msra.mxu0 0
        %8410 = vmatprep.subr.bf16.mxu0 0
        %8411 = vmatpush1.bf16.xpose.msra.mxu0 0
        %8412 = vmatprep.subr.bf16.mxu0 0
        %8413 = vmatpush1.bf16.xpose.msra.mxu0 0
        %8414 = vmatprep.subr.bf16.mxu0 0
        %8415 = vmatpush1.bf16.xpose.msra.mxu0 0
        %8416 = vmatprep.subr.bf16.mxu0 0
        %8417 = vmatpush1.bf16.xpose.msra.mxu0 0
        %8418 = vmatprep.subr.bf16.mxu0 0
        %8419 = vmatpush1.bf16.xpose.msra.mxu0 0
        %8420 = vmatprep.subr.bf16.mxu0 0
        %8421 = vmatpush1.bf16.xpose.msra.mxu0 0
        %8422 = vmatprep.subr.bf16.mxu0 0
        %8423 = vmatpush1.bf16.xpose.msra.mxu0 0
        %8424 = vmatprep.subr.bf16.mxu0 0
        %8425 = vmatpush1.bf16.xpose.msra.mxu0 0
        %8426 = vmatprep.subr.bf16.mxu0 0
        %8427 = vmatpush1.bf16.xpose.msra.mxu0 0
        %8428 = vmatprep.subr.bf16.mxu0 0
        %8429 = vmatpush1.bf16.xpose.msra.mxu0 0
        %8430 = vmatprep.subr.bf16.mxu0 0
        %8431 = vmatpush1.bf16.xpose.msra.mxu0 0
        %8432 = vmatprep.mubr.bf16.mxu0 0
        %8433 = vmatmul.mubr.bf16.gmra.mrb[0].mxu0 %v8395
        %v8434 = vpop.f32.mrb[0].mxu0
        %v8435 = vadd.f32 0.0, %v8434
        %v8436 = vpop.f32.mrb[0].mxu0
        %v8437 = vpop.f32.mrb[0].mxu0
        %v8438 = vpop.f32.mrb[0].mxu0
        %8439 = vdwg.mxu0
        %v8441 = vsel %vm2474, %v8191, 0
        %v8444 = vsel %vm2474, %v8200, 0
        %8446 = vmatprep.subr.bf16.mxu0 0
        %8447 = vmatpush1.bf16.xpose.msra.mxu0 %v8444
        %8448 = vmatprep.subr.bf16.mxu0 0
        %8449 = vmatpush1.bf16.xpose.msra.mxu0 0
        %8450 = vmatprep.subr.bf16.mxu0 0
        %8451 = vmatpush1.bf16.xpose.msra.mxu0 0
        %8452 = vmatprep.subr.bf16.mxu0 0
        %8453 = vmatpush1.bf16.xpose.msra.mxu0 0
        %8454 = vmatprep.subr.bf16.mxu0 0
        %8455 = vmatpush1.bf16.xpose.msra.mxu0 0
        %8456 = vmatprep.subr.bf16.mxu0 0
        %8457 = vmatpush1.bf16.xpose.msra.mxu0 0
        %8458 = vmatprep.subr.bf16.mxu0 0
        %8459 = vmatpush1.bf16.xpose.msra.mxu0 0
        %8460 = vmatprep.subr.bf16.mxu0 0
        %8461 = vmatpush1.bf16.xpose.msra.mxu0 0
        %8462 = vmatprep.subr.bf16.mxu0 0
        %8463 = vmatpush1.bf16.xpose.msra.mxu0 0
        %8464 = vmatprep.subr.bf16.mxu0 0
        %8465 = vmatpush1.bf16.xpose.msra.mxu0 0
        %8466 = vmatprep.subr.bf16.mxu0 0
        %8467 = vmatpush1.bf16.xpose.msra.mxu0 0
        %8468 = vmatprep.subr.bf16.mxu0 0
        %8469 = vmatpush1.bf16.xpose.msra.mxu0 0
        %8470 = vmatprep.subr.bf16.mxu0 0
        %8471 = vmatpush1.bf16.xpose.msra.mxu0 0
        %8472 = vmatprep.subr.bf16.mxu0 0
        %8473 = vmatpush1.bf16.xpose.msra.mxu0 0
        %8474 = vmatprep.subr.bf16.mxu0 0
        %8475 = vmatpush1.bf16.xpose.msra.mxu0 0
        %8476 = vmatprep.subr.bf16.mxu0 0
        %8477 = vmatpush1.bf16.xpose.msra.mxu0 0
        %8478 = vmatprep.mubr.bf16.mxu0 0
        %8479 = vmatmul.mubr.bf16.gmra.mrb[0].mxu0 %v8441
        %v8480 = vpop.f32.mrb[0].mxu0
        %v8481 = vadd.f32 0.0, %v8480
        %v8482 = vpop.f32.mrb[0].mxu0
        %v8483 = vpop.f32.mrb[0].mxu0
        %v8484 = vpop.f32.mrb[0].mxu0
        %8485 = vdwg.mxu0
        %v8486 = vmul.f32 %v8251, 0.125
        %v8487 = vmul.f32 %v8297, 0.125
        %v8488 = vmul.f32 %v8343, 0.125
        %v8489 = vmul.f32 %v8389, 0.125
        %v8490 = vmul.f32 %v8435, 0.125
        %v8491 = vmul.f32 %v8481, 0.125
        %v8492 = vadd.f32 %v8486, %v2761
        %v8493 = vadd.f32 %v8487, %v2761
        %v8494 = vadd.f32 %v8488, %v2761
        %v8495 = vadd.f32 %v8489, %v2761
        %v8496 = vadd.f32 %v8490, %v2761
        %v8497 = vadd.f32 %v8491, %v2761
        %v8498 = vsel %vm2769, %v8492, -inf
        %8499 = vmax.xlane.f32.xlu0 %v8498
        %v8500 = vpop.xlane.xlu0 %8499
        %v8501 = vsel %vm2769, %v8493, -inf
        %8502 = vmax.xlane.f32.xlu0 %v8501
        %v8503 = vpop.xlane.xlu0 %8502
        %v8504 = vsel %vm2769, %v8494, -inf
        %8505 = vmax.xlane.f32.xlu0 %v8504
        %v8506 = vpop.xlane.xlu0 %8505
        %v8507 = vsel %vm2769, %v8495, -inf
        %8508 = vmax.xlane.f32.xlu0 %v8507
        %v8509 = vpop.xlane.xlu0 %8508
        %v8510 = vsel %vm2769, %v8496, -inf
        %8511 = vmax.xlane.f32.xlu0 %v8510
        %v8512 = vpop.xlane.xlu0 %8511
        %v8513 = vsel %vm2769, %v8497, -inf
        %8514 = vmax.xlane.f32.xlu0 %v8513
        %v8515 = vpop.xlane.xlu0 %8514
        %v8516 = vsub.f32 %v8492, %v8500
        %v8517 = vsub.f32 %v8493, %v8503
        %v8518 = vsub.f32 %v8494, %v8506
        %v8519 = vsub.f32 %v8495, %v8509
        %v8520 = vsub.f32 %v8496, %v8512
        %v8521 = vsub.f32 %v8497, %v8515
        %v8522 = vmul.f32 %v8516, 1.442695
        %v8523 = vpow.pop %v8522
        %v8524 = vmul.f32 %v8517, 1.442695
        %v8525 = vpow.pop %v8524
        %v8526 = vmul.f32 %v8518, 1.442695
        %v8527 = vpow.pop %v8526
        %v8528 = vmul.f32 %v8519, 1.442695
        %v8529 = vpow.pop %v8528
        %v8530 = vmul.f32 %v8520, 1.442695
        %v8531 = vpow.pop %v8530
        %v8532 = vmul.f32 %v8521, 1.442695
        %v8533 = vpow.pop %v8532
        %v8534 = vsel %vm2769, %v8523, 0.0
        %8535 = vadd.xlane.f32.xlu0 %v8534
        %v8536 = vpop.xlane.xlu0 %8535
        %v8537 = vsel %vm2769, %v8525, 0.0
        %8538 = vadd.xlane.f32.xlu0 %v8537
        %v8539 = vpop.xlane.xlu0 %8538
        %v8540 = vsel %vm2769, %v8527, 0.0
        %8541 = vadd.xlane.f32.xlu0 %v8540
        %v8542 = vpop.xlane.xlu0 %8541
        %v8543 = vsel %vm2769, %v8529, 0.0
        %8544 = vadd.xlane.f32.xlu0 %v8543
        %v8545 = vpop.xlane.xlu0 %8544
        %v8546 = vsel %vm2769, %v8531, 0.0
        %8547 = vadd.xlane.f32.xlu0 %v8546
        %v8548 = vpop.xlane.xlu0 %8547
        %v8549 = vsel %vm2769, %v8533, 0.0
        %8550 = vadd.xlane.f32.xlu0 %v8549
        %v8551 = vpop.xlane.xlu0 %8550
        %v8552 = vrcp.pop %v8536
        %v8553 = vrcp.pop %v8539
        %v8554 = vrcp.pop %v8542
        %v8555 = vrcp.pop %v8545
        %v8556 = vrcp.pop %v8548
        %v8557 = vrcp.pop %v8551
        %v8558 = vmul.f32 %v8523, %v8552
        %v8559 = vmul.f32 %v8525, %v8553
        %v8560 = vmul.f32 %v8527, %v8554
        %v8561 = vmul.f32 %v8529, %v8555
        %v8562 = vmul.f32 %v8531, %v8556
        %v8563 = vmul.f32 %v8533, %v8557
        %v8564 = vpack.c.bf16 %v8558, %v8558
        %v8565 = vpack.c.bf16 %v8559, %v8559
        %v8566 = vpack.c.bf16 %v8560, %v8560
        %v8567 = vpack.c.bf16 %v8561, %v8561
        %v8568 = vpack.c.bf16 %v8562, %v8562
        %v8569 = vpack.c.bf16 %v8563, %v8563
        %v8571 = vsel %vm2769, %v8564, 0
        %v8574 = vsel %vm2845, %v8180, 0
        %8576 = vmatprep.subr.bf16.mxu0 0
        %8577 = vmatpush1.bf16.msra.mxu0 %v8574
        %8578 = vmatprep.subr.bf16.mxu0 0
        %8579 = vmatpush1.bf16.msra.mxu0 0
        %8580 = vmatprep.subr.bf16.mxu0 0
        %8581 = vmatpush1.bf16.msra.mxu0 0
        %8582 = vmatprep.subr.bf16.mxu0 0
        %8583 = vmatpush1.bf16.msra.mxu0 0
        %8584 = vmatprep.subr.bf16.mxu0 0
        %8585 = vmatpush1.bf16.msra.mxu0 0
        %8586 = vmatprep.subr.bf16.mxu0 0
        %8587 = vmatpush1.bf16.msra.mxu0 0
        %8588 = vmatprep.subr.bf16.mxu0 0
        %8589 = vmatpush1.bf16.msra.mxu0 0
        %8590 = vmatprep.subr.bf16.mxu0 0
        %8591 = vmatpush1.bf16.msra.mxu0 0
        %8592 = vmatprep.subr.bf16.mxu0 0
        %8593 = vmatpush1.bf16.msra.mxu0 0
        %8594 = vmatprep.subr.bf16.mxu0 0
        %8595 = vmatpush1.bf16.msra.mxu0 0
        %8596 = vmatprep.subr.bf16.mxu0 0
        %8597 = vmatpush1.bf16.msra.mxu0 0
        %8598 = vmatprep.subr.bf16.mxu0 0
        %8599 = vmatpush1.bf16.msra.mxu0 0
        %8600 = vmatprep.subr.bf16.mxu0 0
        %8601 = vmatpush1.bf16.msra.mxu0 0
        %8602 = vmatprep.subr.bf16.mxu0 0
        %8603 = vmatpush1.bf16.msra.mxu0 0
        %8604 = vmatprep.subr.bf16.mxu0 0
        %8605 = vmatpush1.bf16.msra.mxu0 0
        %8606 = vmatprep.subr.bf16.mxu0 0
        %8607 = vmatpush1.bf16.msra.mxu0 0
        %8608 = vmatprep.mubr.bf16.mxu0 0
        %8609 = vmatmul.mubr.bf16.gmra.mrb[0].mxu0 %v8571
        %v8610 = vpop.f32.mrb[0].mxu0
        %v8611 = vadd.f32 0.0, %v8610
        %v8612 = vpop.f32.mrb[0].mxu0
        %v8613 = vpop.f32.mrb[0].mxu0
        %v8614 = vpop.f32.mrb[0].mxu0
        %8615 = vdwg.mxu0
        %v8617 = vsel %vm2769, %v8565, 0
        %v8620 = vsel %vm2845, %v8203, 0
        %8622 = vmatprep.subr.bf16.mxu0 0
        %8623 = vmatpush1.bf16.msra.mxu0 %v8620
        %8624 = vmatprep.subr.bf16.mxu0 0
        %8625 = vmatpush1.bf16.msra.mxu0 0
        %8626 = vmatprep.subr.bf16.mxu0 0
        %8627 = vmatpush1.bf16.msra.mxu0 0
        %8628 = vmatprep.subr.bf16.mxu0 0
        %8629 = vmatpush1.bf16.msra.mxu0 0
        %8630 = vmatprep.subr.bf16.mxu0 0
        %8631 = vmatpush1.bf16.msra.mxu0 0
        %8632 = vmatprep.subr.bf16.mxu0 0
        %8633 = vmatpush1.bf16.msra.mxu0 0
        %8634 = vmatprep.subr.bf16.mxu0 0
        %8635 = vmatpush1.bf16.msra.mxu0 0
        %8636 = vmatprep.subr.bf16.mxu0 0
        %8637 = vmatpush1.bf16.msra.mxu0 0
        %8638 = vmatprep.subr.bf16.mxu0 0
        %8639 = vmatpush1.bf16.msra.mxu0 0
        %8640 = vmatprep.subr.bf16.mxu0 0
        %8641 = vmatpush1.bf16.msra.mxu0 0
        %8642 = vmatprep.subr.bf16.mxu0 0
        %8643 = vmatpush1.bf16.msra.mxu0 0
        %8644 = vmatprep.subr.bf16.mxu0 0
        %8645 = vmatpush1.bf16.msra.mxu0 0
        %8646 = vmatprep.subr.bf16.mxu0 0
        %8647 = vmatpush1.bf16.msra.mxu0 0
        %8648 = vmatprep.subr.bf16.mxu0 0
        %8649 = vmatpush1.bf16.msra.mxu0 0
        %8650 = vmatprep.subr.bf16.mxu0 0
        %8651 = vmatpush1.bf16.msra.mxu0 0
        %8652 = vmatprep.subr.bf16.mxu0 0
        %8653 = vmatpush1.bf16.msra.mxu0 0
        %8654 = vmatprep.mubr.bf16.mxu0 0
        %8655 = vmatmul.mubr.bf16.gmra.mrb[0].mxu0 %v8617
        %v8656 = vpop.f32.mrb[0].mxu0
        %v8657 = vadd.f32 0.0, %v8656
        %v8658 = vpop.f32.mrb[0].mxu0
        %v8659 = vpop.f32.mrb[0].mxu0
        %v8660 = vpop.f32.mrb[0].mxu0
        %8661 = vdwg.mxu0
        %v8663 = vsel %vm2769, %v8566, 0
        %v8666 = vsel %vm2845, %v8181, 0
        %8668 = vmatprep.subr.bf16.mxu0 0
        %8669 = vmatpush1.bf16.msra.mxu0 %v8666
        %8670 = vmatprep.subr.bf16.mxu0 0
        %8671 = vmatpush1.bf16.msra.mxu0 0
        %8672 = vmatprep.subr.bf16.mxu0 0
        %8673 = vmatpush1.bf16.msra.mxu0 0
        %8674 = vmatprep.subr.bf16.mxu0 0
        %8675 = vmatpush1.bf16.msra.mxu0 0
        %8676 = vmatprep.subr.bf16.mxu0 0
        %8677 = vmatpush1.bf16.msra.mxu0 0
        %8678 = vmatprep.subr.bf16.mxu0 0
        %8679 = vmatpush1.bf16.msra.mxu0 0
        %8680 = vmatprep.subr.bf16.mxu0 0
        %8681 = vmatpush1.bf16.msra.mxu0 0
        %8682 = vmatprep.subr.bf16.mxu0 0
        %8683 = vmatpush1.bf16.msra.mxu0 0
        %8684 = vmatprep.subr.bf16.mxu0 0
        %8685 = vmatpush1.bf16.msra.mxu0 0
        %8686 = vmatprep.subr.bf16.mxu0 0
        %8687 = vmatpush1.bf16.msra.mxu0 0
        %8688 = vmatprep.subr.bf16.mxu0 0
        %8689 = vmatpush1.bf16.msra.mxu0 0
        %8690 = vmatprep.subr.bf16.mxu0 0
        %8691 = vmatpush1.bf16.msra.mxu0 0
        %8692 = vmatprep.subr.bf16.mxu0 0
        %8693 = vmatpush1.bf16.msra.mxu0 0
        %8694 = vmatprep.subr.bf16.mxu0 0
        %8695 = vmatpush1.bf16.msra.mxu0 0
        %8696 = vmatprep.subr.bf16.mxu0 0
        %8697 = vmatpush1.bf16.msra.mxu0 0
        %8698 = vmatprep.subr.bf16.mxu0 0
        %8699 = vmatpush1.bf16.msra.mxu0 0
        %8700 = vmatprep.mubr.bf16.mxu0 0
        %8701 = vmatmul.mubr.bf16.gmra.mrb[0].mxu0 %v8663
        %v8702 = vpop.f32.mrb[0].mxu0
        %v8703 = vadd.f32 0.0, %v8702
        %v8704 = vpop.f32.mrb[0].mxu0
        %v8705 = vpop.f32.mrb[0].mxu0
        %v8706 = vpop.f32.mrb[0].mxu0
        %8707 = vdwg.mxu0
        %v8709 = vsel %vm2769, %v8567, 0
        %v8712 = vsel %vm2845, %v8206, 0
        %8714 = vmatprep.subr.bf16.mxu0 0
        %8715 = vmatpush1.bf16.msra.mxu0 %v8712
        %8716 = vmatprep.subr.bf16.mxu0 0
        %8717 = vmatpush1.bf16.msra.mxu0 0
        %8718 = vmatprep.subr.bf16.mxu0 0
        %8719 = vmatpush1.bf16.msra.mxu0 0
        %8720 = vmatprep.subr.bf16.mxu0 0
        %8721 = vmatpush1.bf16.msra.mxu0 0
        %8722 = vmatprep.subr.bf16.mxu0 0
        %8723 = vmatpush1.bf16.msra.mxu0 0
        %8724 = vmatprep.subr.bf16.mxu0 0
        %8725 = vmatpush1.bf16.msra.mxu0 0
        %8726 = vmatprep.subr.bf16.mxu0 0
        %8727 = vmatpush1.bf16.msra.mxu0 0
        %8728 = vmatprep.subr.bf16.mxu0 0
        %8729 = vmatpush1.bf16.msra.mxu0 0
        %8730 = vmatprep.subr.bf16.mxu0 0
        %8731 = vmatpush1.bf16.msra.mxu0 0
        %8732 = vmatprep.subr.bf16.mxu0 0
        %8733 = vmatpush1.bf16.msra.mxu0 0
        %8734 = vmatprep.subr.bf16.mxu0 0
        %8735 = vmatpush1.bf16.msra.mxu0 0
        %8736 = vmatprep.subr.bf16.mxu0 0
        %8737 = vmatpush1.bf16.msra.mxu0 0
        %8738 = vmatprep.subr.bf16.mxu0 0
        %8739 = vmatpush1.bf16.msra.mxu0 0
        %8740 = vmatprep.subr.bf16.mxu0 0
        %8741 = vmatpush1.bf16.msra.mxu0 0
        %8742 = vmatprep.subr.bf16.mxu0 0
        %8743 = vmatpush1.bf16.msra.mxu0 0
        %8744 = vmatprep.subr.bf16.mxu0 0
        %8745 = vmatpush1.bf16.msra.mxu0 0
        %8746 = vmatprep.mubr.bf16.mxu0 0
        %8747 = vmatmul.mubr.bf16.gmra.mrb[0].mxu0 %v8709
        %v8748 = vpop.f32.mrb[0].mxu0
        %v8749 = vadd.f32 0.0, %v8748
        %v8750 = vpop.f32.mrb[0].mxu0
        %v8751 = vpop.f32.mrb[0].mxu0
        %v8752 = vpop.f32.mrb[0].mxu0
        %8753 = vdwg.mxu0
        %v8755 = vsel %vm2769, %v8568, 0
        %v8758 = vsel %vm2845, %v8182, 0
        %8760 = vmatprep.subr.bf16.mxu0 0
        %8761 = vmatpush1.bf16.msra.mxu0 %v8758
        %8762 = vmatprep.subr.bf16.mxu0 0
        %8763 = vmatpush1.bf16.msra.mxu0 0
        %8764 = vmatprep.subr.bf16.mxu0 0
        %8765 = vmatpush1.bf16.msra.mxu0 0
        %8766 = vmatprep.subr.bf16.mxu0 0
        %8767 = vmatpush1.bf16.msra.mxu0 0
        %8768 = vmatprep.subr.bf16.mxu0 0
        %8769 = vmatpush1.bf16.msra.mxu0 0
        %8770 = vmatprep.subr.bf16.mxu0 0
        %8771 = vmatpush1.bf16.msra.mxu0 0
        %8772 = vmatprep.subr.bf16.mxu0 0
        %8773 = vmatpush1.bf16.msra.mxu0 0
        %8774 = vmatprep.subr.bf16.mxu0 0
        %8775 = vmatpush1.bf16.msra.mxu0 0
        %8776 = vmatprep.subr.bf16.mxu0 0
        %8777 = vmatpush1.bf16.msra.mxu0 0
        %8778 = vmatprep.subr.bf16.mxu0 0
        %8779 = vmatpush1.bf16.msra.mxu0 0
        %8780 = vmatprep.subr.bf16.mxu0 0
        %8781 = vmatpush1.bf16.msra.mxu0 0
        %8782 = vmatprep.subr.bf16.mxu0 0
        %8783 = vmatpush1.bf16.msra.mxu0 0
        %8784 = vmatprep.subr.bf16.mxu0 0
        %8785 = vmatpush1.bf16.msra.mxu0 0
        %8786 = vmatprep.subr.bf16.mxu0 0
        %8787 = vmatpush1.bf16.msra.mxu0 0
        %8788 = vmatprep.subr.bf16.mxu0 0
        %8789 = vmatpush1.bf16.msra.mxu0 0
        %8790 = vmatprep.subr.bf16.mxu0 0
        %8791 = vmatpush1.bf16.msra.mxu0 0
        %8792 = vmatprep.mubr.bf16.mxu0 0
        %8793 = vmatmul.mubr.bf16.gmra.mrb[0].mxu0 %v8755
        %v8794 = vpop.f32.mrb[0].mxu0
        %v8795 = vadd.f32 0.0, %v8794
        %v8796 = vpop.f32.mrb[0].mxu0
        %v8797 = vpop.f32.mrb[0].mxu0
        %v8798 = vpop.f32.mrb[0].mxu0
        %8799 = vdwg.mxu0
        %v8801 = vsel %vm2769, %v8569, 0
        %v8804 = vsel %vm2845, %v8209, 0
        %8806 = vmatprep.subr.bf16.mxu0 0
        %8807 = vmatpush1.bf16.msra.mxu0 %v8804
        %8808 = vmatprep.subr.bf16.mxu0 0
        %8809 = vmatpush1.bf16.msra.mxu0 0
        %8810 = vmatprep.subr.bf16.mxu0 0
        %8811 = vmatpush1.bf16.msra.mxu0 0
        %8812 = vmatprep.subr.bf16.mxu0 0
        %8813 = vmatpush1.bf16.msra.mxu0 0
        %8814 = vmatprep.subr.bf16.mxu0 0
        %8815 = vmatpush1.bf16.msra.mxu0 0
        %8816 = vmatprep.subr.bf16.mxu0 0
        %8817 = vmatpush1.bf16.msra.mxu0 0
        %8818 = vmatprep.subr.bf16.mxu0 0
        %8819 = vmatpush1.bf16.msra.mxu0 0
        %8820 = vmatprep.subr.bf16.mxu0 0
        %8821 = vmatpush1.bf16.msra.mxu0 0
        %8822 = vmatprep.subr.bf16.mxu0 0
        %8823 = vmatpush1.bf16.msra.mxu0 0
        %8824 = vmatprep.subr.bf16.mxu0 0
        %8825 = vmatpush1.bf16.msra.mxu0 0
        %8826 = vmatprep.subr.bf16.mxu0 0
        %8827 = vmatpush1.bf16.msra.mxu0 0
        %8828 = vmatprep.subr.bf16.mxu0 0
        %8829 = vmatpush1.bf16.msra.mxu0 0
        %8830 = vmatprep.subr.bf16.mxu0 0
        %8831 = vmatpush1.bf16.msra.mxu0 0
        %8832 = vmatprep.subr.bf16.mxu0 0
        %8833 = vmatpush1.bf16.msra.mxu0 0
        %8834 = vmatprep.subr.bf16.mxu0 0
        %8835 = vmatpush1.bf16.msra.mxu0 0
        %8836 = vmatprep.subr.bf16.mxu0 0
        %8837 = vmatpush1.bf16.msra.mxu0 0
        %8838 = vmatprep.mubr.bf16.mxu0 0
        %8839 = vmatmul.mubr.bf16.gmra.mrb[0].mxu0 %v8801
        %v8840 = vpop.f32.mrb[0].mxu0
        %v8841 = vadd.f32 0.0, %v8840
        %v8842 = vpop.f32.mrb[0].mxu0
        %v8843 = vpop.f32.mrb[0].mxu0
        %v8844 = vpop.f32.mrb[0].mxu0
        %8845 = vdwg.mxu0
        %8846 = vst.msk [vmem:[#allocation2] sm:$0xff] %vm2474, %v8611
        %8848 = vrot.lane.b32.xlu0 %v8657, 64
        %v8849 = vpop.permute.xlu0 %8848
        %8851 = vst.msk [vmem:[#allocation2] sm:$0xff] %vm3124, %v8849
        %8852 = vst.msk [vmem:[#allocation2 + $0x8] sm:$0xff] %vm2474, %v8703
        %8854 = vrot.lane.b32.xlu0 %v8749, 64
        %v8855 = vpop.permute.xlu0 %8854
        %8857 = vst.msk [vmem:[#allocation2 + $0x8] sm:$0xff] %vm3124, %v8855
        %8858 = vst.msk [vmem:[#allocation2 + $0x10] sm:$0xff] %vm2474, %v8795
        %8860 = vrot.lane.b32.xlu0 %v8841, 64
        %v8861 = vpop.permute.xlu0 %8860
        %8863 = vst.msk [vmem:[#allocation2 + $0x10] sm:$0xff] %vm3124, %v8861
        %v8864 = vld [vmem:[#allocation2] sm:$0xff]
        %v8865 = vld [vmem:[#allocation2 + $0x8] sm:$0xff]
        %v8866 = vld [vmem:[#allocation2 + $0x10] sm:$0xff]
        %v8867 = vpack.c.bf16 %v8864, %v8864
        %v8868 = vpack.c.bf16 %v8865, %v8865
        %v8869 = vpack.c.bf16 %v8866, %v8866
        %s8870 = scalar_lea.vmem [#allocation3], 75
        %v8871 = vld [vmem:[%s8870] ss:$8 sm:$0x7]
        %v8873 = vlaneseq
        %v8874 = vshrl.u32 %v8873, 7
        %v8875 = vsub.s32 0, %v8874
        %v8876 = vrot.slane %v8871, %v8875
        %v8877 = vlaneseq
        %v8878 = vshrl.u32 %v8877, 7
        %v8879 = vsub.s32 1, %v8878
        %v8880 = vrot.slane %v8871, %v8879
        %v8881 = vlaneseq
        %v8882 = vshrl.u32 %v8881, 7
        %v8883 = vsub.s32 2, %v8882
        %v8884 = vrot.slane %v8871, %v8883
        %v8984 = vunpack.c.l.b16 %v6366
        %v8985 = vunpack.c.h.b16 %v6366
        %v8986 = vunpack.c.l.b16 %v6367
        %v8987 = vunpack.c.l.b16 %v6368
        %v8988 = vunpack.c.h.b16 %v6368
        %v8989 = vunpack.c.l.b16 %v6369
        %v8990 = vunpack.c.l.b16 %v6370
        %v8991 = vunpack.c.h.b16 %v6370
        %v8992 = vunpack.c.l.b16 %v6371
        %v8993 = vunpack.c.l.b16 %v6372
        %v8994 = vunpack.c.h.b16 %v6372
        %v8995 = vunpack.c.l.b16 %v6373
        %v8996 = vunpack.c.l.b16 %v6374
        %v8997 = vunpack.c.h.b16 %v6374
        %v8998 = vunpack.c.l.b16 %v6375
        %v8999 = vunpack.c.l.b16 %v6376
        %v9000 = vunpack.c.h.b16 %v6376
        %v9001 = vunpack.c.l.b16 %v6377
        %v9002 = vunpack.c.l.b16 %v6378
        %v9003 = vunpack.c.h.b16 %v6378
        %v9004 = vunpack.c.l.b16 %v6379
        %v9005 = vunpack.c.l.b16 %v6380
        %v9006 = vunpack.c.h.b16 %v6380
        %v9007 = vunpack.c.l.b16 %v6381
        %v9008 = vunpack.c.l.b16 %v6382
        %v9009 = vunpack.c.h.b16 %v6382
        %v9010 = vunpack.c.l.b16 %v6383
        %v9011 = vunpack.c.l.b16 %v6384
        %v9012 = vunpack.c.h.b16 %v6384
        %v9013 = vunpack.c.l.b16 %v6385
        %v9014 = vunpack.c.l.b16 %v6386
        %v9015 = vunpack.c.h.b16 %v6386
        %v9016 = vunpack.c.l.b16 %v6387
        %v9017 = vunpack.c.l.b16 %v6388
        %v9018 = vunpack.c.h.b16 %v6388
        %v9019 = vunpack.c.l.b16 %v6389
        %v9020 = vunpack.c.l.b16 %v6390
        %v9021 = vunpack.c.h.b16 %v6390
        %v9022 = vunpack.c.l.b16 %v6391
        %v9023 = vunpack.c.l.b16 %v6392
        %v9024 = vunpack.c.h.b16 %v6392
        %v9025 = vunpack.c.l.b16 %v6393
        %v9026 = vunpack.c.l.b16 %v6394
        %v9027 = vunpack.c.h.b16 %v6394
        %v9028 = vunpack.c.l.b16 %v6395
        %v9029 = vunpack.c.l.b16 %v6396
        %v9030 = vunpack.c.h.b16 %v6396
        %v9031 = vunpack.c.l.b16 %v6397
        %v9032 = vunpack.c.l.b16 %v6398
        %v9033 = vunpack.c.h.b16 %v6398
        %v9034 = vunpack.c.l.b16 %v6399
        %v9035 = vunpack.c.l.b16 %v6400
        %v9036 = vunpack.c.h.b16 %v6400
        %v9037 = vunpack.c.l.b16 %v6401
        %v9038 = vunpack.c.l.b16 %v6402
        %v9039 = vunpack.c.h.b16 %v6402
        %v9040 = vunpack.c.l.b16 %v6403
        %v9041 = vunpack.c.l.b16 %v6404
        %v9042 = vunpack.c.h.b16 %v6404
        %v9043 = vunpack.c.l.b16 %v6405
        %v9044 = vunpack.c.l.b16 %v6406
        %v9045 = vunpack.c.h.b16 %v6406
        %v9046 = vunpack.c.l.b16 %v6407
        %v9047 = vunpack.c.l.b16 %v6408
        %v9048 = vunpack.c.h.b16 %v6408
        %v9049 = vunpack.c.l.b16 %v6409
        %v9050 = vunpack.c.l.b16 %v6410
        %v9051 = vunpack.c.h.b16 %v6410
        %v9052 = vunpack.c.l.b16 %v6411
        %v9053 = vunpack.c.l.b16 %v6412
        %v9054 = vunpack.c.h.b16 %v6412
        %v9055 = vunpack.c.l.b16 %v6413
        %v9056 = vunpack.c.l.b16 %v6414
        %v9057 = vunpack.c.h.b16 %v6414
        %v9058 = vunpack.c.l.b16 %v6415
        %v9059 = vunpack.c.l.b16 %v6416
        %v9060 = vunpack.c.h.b16 %v6416
        %v9061 = vunpack.c.l.b16 %v6417
        %v9062 = vunpack.c.l.b16 %v6418
        %v9063 = vunpack.c.h.b16 %v6418
        %v9064 = vunpack.c.l.b16 %v6419
        %v9065 = vunpack.c.l.b16 %v6420
        %v9066 = vunpack.c.h.b16 %v6420
        %v9067 = vunpack.c.l.b16 %v6421
        %v9068 = vunpack.c.l.b16 %v6422
        %v9069 = vunpack.c.h.b16 %v6422
        %v9070 = vunpack.c.l.b16 %v6423
        %v9071 = vunpack.c.l.b16 %v6424
        %v9072 = vunpack.c.h.b16 %v6424
        %v9073 = vunpack.c.l.b16 %v6425
        %v9074 = vunpack.c.l.b16 %v6426
        %v9075 = vunpack.c.h.b16 %v6426
        %v9076 = vunpack.c.l.b16 %v6427
        %v9077 = vunpack.c.l.b16 %v6428
        %v9078 = vunpack.c.h.b16 %v6428
        %v9079 = vunpack.c.l.b16 %v6429
        %v9080 = vunpack.c.l.b16 %v6430
        %v9081 = vunpack.c.h.b16 %v6430
        %v9082 = vunpack.c.l.b16 %v6431
        %v9083 = vunpack.c.l.b16 %v6432
        %v9084 = vunpack.c.h.b16 %v6432
        %v9085 = vunpack.c.l.b16 %v6433
        %v9086 = vunpack.c.l.b16 %v6434
        %v9087 = vunpack.c.h.b16 %v6434
        %v9088 = vunpack.c.l.b16 %v6435
        %v9089 = vunpack.c.l.b16 %v6436
        %v9090 = vunpack.c.h.b16 %v6436
        %v9091 = vunpack.c.l.b16 %v6437
        %v9092 = vunpack.c.l.b16 %v6438
        %v9093 = vunpack.c.h.b16 %v6438
        %v9094 = vunpack.c.l.b16 %v6439
        %v9095 = vunpack.c.l.b16 %v6440
        %v9096 = vunpack.c.h.b16 %v6440
        %v9097 = vunpack.c.l.b16 %v6441
        %v9098 = vunpack.c.l.b16 %v6442
        %v9099 = vunpack.c.h.b16 %v6442
        %v9100 = vunpack.c.l.b16 %v6443
        %v9101 = vunpack.c.l.b16 %v6444
        %v9102 = vunpack.c.h.b16 %v6444
        %v9103 = vunpack.c.l.b16 %v6445
        %v9104 = vunpack.c.l.b16 %v6446
        %v9105 = vunpack.c.h.b16 %v6446
        %v9106 = vunpack.c.l.b16 %v6447
        %v9107 = vunpack.c.l.b16 %v6448
        %v9108 = vunpack.c.h.b16 %v6448
        %v9109 = vunpack.c.l.b16 %v6449
        %v9110 = vunpack.c.l.b16 %v6450
        %v9111 = vunpack.c.h.b16 %v6450
        %v9112 = vunpack.c.l.b16 %v6451
        %v9113 = vunpack.c.l.b16 %v6452
        %v9114 = vunpack.c.h.b16 %v6452
        %v9115 = vunpack.c.l.b16 %v6453
        %v9116 = vunpack.c.l.b16 %v6454
        %v9117 = vunpack.c.h.b16 %v6454
        %v9118 = vunpack.c.l.b16 %v6455
        %v9119 = vunpack.c.l.b16 %v6456
        %v9120 = vunpack.c.h.b16 %v6456
        %v9121 = vunpack.c.l.b16 %v6457
        %v9122 = vunpack.c.l.b16 %v6458
        %v9123 = vunpack.c.h.b16 %v6458
        %v9124 = vunpack.c.l.b16 %v6459
        %v9125 = vunpack.c.l.b16 %v6460
        %v9126 = vunpack.c.h.b16 %v6460
        %v9127 = vunpack.c.l.b16 %v6461
        %v9128 = vpack.c.b16 %v8987, %v8984
        %v9129 = vpack.c.b16 %v8988, %v8985
        %v9130 = vpack.c.b16 %v8989, %v8986
        %v9131 = vpack.c.b16 %v8993, %v8990
        %v9132 = vpack.c.b16 %v8994, %v8991
        %v9133 = vpack.c.b16 %v8995, %v8992
        %v9134 = vpack.c.b16 %v8999, %v8996
        %v9135 = vpack.c.b16 %v9000, %v8997
        %v9136 = vpack.c.b16 %v9001, %v8998
        %v9137 = vpack.c.b16 %v9005, %v9002
        %v9138 = vpack.c.b16 %v9006, %v9003
        %v9139 = vpack.c.b16 %v9007, %v9004
        %v9140 = vpack.c.b16 %v9011, %v9008
        %v9141 = vpack.c.b16 %v9012, %v9009
        %v9142 = vpack.c.b16 %v9013, %v9010
        %v9143 = vpack.c.b16 %v9017, %v9014
        %v9144 = vpack.c.b16 %v9018, %v9015
        %v9145 = vpack.c.b16 %v9019, %v9016
        %v9146 = vpack.c.b16 %v9023, %v9020
        %v9147 = vpack.c.b16 %v9024, %v9021
        %v9148 = vpack.c.b16 %v9025, %v9022
        %v9149 = vpack.c.b16 %v9029, %v9026
        %v9150 = vpack.c.b16 %v9030, %v9027
        %v9151 = vpack.c.b16 %v9031, %v9028
        %v9152 = vpack.c.b16 %v9035, %v9032
        %v9153 = vpack.c.b16 %v9036, %v9033
        %v9154 = vpack.c.b16 %v9037, %v9034
        %v9155 = vpack.c.b16 %v9041, %v9038
        %v9156 = vpack.c.b16 %v9042, %v9039
        %v9157 = vpack.c.b16 %v9043, %v9040
        %v9158 = vpack.c.b16 %v9047, %v9044
        %v9159 = vpack.c.b16 %v9048, %v9045
        %v9160 = vpack.c.b16 %v9049, %v9046
        %v9161 = vpack.c.b16 %v9053, %v9050
        %v9162 = vpack.c.b16 %v9054, %v9051
        %v9163 = vpack.c.b16 %v9055, %v9052
        %v9164 = vpack.c.b16 %v9059, %v9056
        %v9165 = vpack.c.b16 %v9060, %v9057
        %v9166 = vpack.c.b16 %v9061, %v9058
        %v9167 = vpack.c.b16 %v9065, %v9062
        %v9168 = vpack.c.b16 %v9066, %v9063
        %v9169 = vpack.c.b16 %v9067, %v9064
        %v9170 = vpack.c.b16 %v9071, %v9068
        %v9171 = vpack.c.b16 %v9072, %v9069
        %v9172 = vpack.c.b16 %v9073, %v9070
        %v9173 = vpack.c.b16 %v9077, %v9074
        %v9174 = vpack.c.b16 %v9078, %v9075
        %v9175 = vpack.c.b16 %v9079, %v9076
        %v9176 = vpack.c.b16 %v9083, %v9080
        %v9177 = vpack.c.b16 %v9084, %v9081
        %v9178 = vpack.c.b16 %v9085, %v9082
        %v9179 = vpack.c.b16 %v9089, %v9086
        %v9180 = vpack.c.b16 %v9090, %v9087
        %v9181 = vpack.c.b16 %v9091, %v9088
        %v9182 = vpack.c.b16 %v9095, %v9092
        %v9183 = vpack.c.b16 %v9096, %v9093
        %v9184 = vpack.c.b16 %v9097, %v9094
        %v9185 = vpack.c.b16 %v9101, %v9098
        %v9186 = vpack.c.b16 %v9102, %v9099
        %v9187 = vpack.c.b16 %v9103, %v9100
        %v9188 = vpack.c.b16 %v9107, %v9104
        %v9189 = vpack.c.b16 %v9108, %v9105
        %v9190 = vpack.c.b16 %v9109, %v9106
        %v9191 = vpack.c.b16 %v9113, %v9110
        %v9192 = vpack.c.b16 %v9114, %v9111
        %v9193 = vpack.c.b16 %v9115, %v9112
        %v9194 = vpack.c.b16 %v9119, %v9116
        %v9195 = vpack.c.b16 %v9120, %v9117
        %v9196 = vpack.c.b16 %v9121, %v9118
        %v9197 = vpack.c.b16 %v9125, %v9122
        %v9198 = vpack.c.b16 %v9126, %v9123
        %v9199 = vpack.c.b16 %v9127, %v9124
        %9272 = vmatprep.subr.bf16.mxu0 %v9129
        %9273 = vmatpush1.bf16.msra.mxu0 %v9128
        %9274 = vmatprep.subr.bf16.mxu0 %v9132
        %9275 = vmatpush1.bf16.msra.mxu0 %v9131
        %9276 = vmatprep.subr.bf16.mxu0 %v9135
        %9277 = vmatpush1.bf16.msra.mxu0 %v9134
        %9278 = vmatprep.subr.bf16.mxu0 %v9138
        %9279 = vmatpush1.bf16.msra.mxu0 %v9137
        %9280 = vmatprep.subr.bf16.mxu0 %v9141
        %9281 = vmatpush1.bf16.msra.mxu0 %v9140
        %9282 = vmatprep.subr.bf16.mxu0 %v9144
        %9283 = vmatpush1.bf16.msra.mxu0 %v9143
        %9284 = vmatprep.subr.bf16.mxu0 %v9147
        %9285 = vmatpush1.bf16.msra.mxu0 %v9146
        %9286 = vmatprep.subr.bf16.mxu0 %v9150
        %9287 = vmatpush1.bf16.msra.mxu0 %v9149
        %9288 = vmatprep.subr.bf16.mxu0 %v9153
        %9289 = vmatpush1.bf16.msra.mxu0 %v9152
        %9290 = vmatprep.subr.bf16.mxu0 %v9156
        %9291 = vmatpush1.bf16.msra.mxu0 %v9155
        %9292 = vmatprep.subr.bf16.mxu0 %v9159
        %9293 = vmatpush1.bf16.msra.mxu0 %v9158
        %9294 = vmatprep.subr.bf16.mxu0 %v9162
        %9295 = vmatpush1.bf16.msra.mxu0 %v9161
        %9296 = vmatprep.subr.bf16.mxu0 %v9165
        %9297 = vmatpush1.bf16.msra.mxu0 %v9164
        %9298 = vmatprep.subr.bf16.mxu0 %v9168
        %9299 = vmatpush1.bf16.msra.mxu0 %v9167
        %9300 = vmatprep.subr.bf16.mxu0 %v9171
        %9301 = vmatpush1.bf16.msra.mxu0 %v9170
        %9302 = vmatprep.subr.bf16.mxu0 %v9174
        %9303 = vmatpush1.bf16.msra.mxu0 %v9173
        %9304 = vmatprep.mubr.bf16.mxu0 %v8868
        %9305 = vmatmul.mubr.bf16.gmra.mrb[0].mxu0 %v8867
        %v9306 = vpop.f32.mrb[0].mxu0
        %v9307 = vadd.f32 %v8876, %v9306
        %v9308 = vpop.f32.mrb[0].mxu0
        %v9309 = vadd.f32 %v8880, %v9308
        %v9310 = vpop.f32.mrb[0].mxu0
        %v9311 = vpop.f32.mrb[0].mxu0
        %9312 = vdwg.mxu0
        %9313 = vmatprep.subr.bf16.mxu0 %v9177
        %9314 = vmatpush1.bf16.msra.mxu0 %v9176
        %9315 = vmatprep.subr.bf16.mxu0 %v9180
        %9316 = vmatpush1.bf16.msra.mxu0 %v9179
        %9317 = vmatprep.subr.bf16.mxu0 %v9183
        %9318 = vmatpush1.bf16.msra.mxu0 %v9182
        %9319 = vmatprep.subr.bf16.mxu0 %v9186
        %9320 = vmatpush1.bf16.msra.mxu0 %v9185
        %9321 = vmatprep.subr.bf16.mxu0 %v9189
        %9322 = vmatpush1.bf16.msra.mxu0 %v9188
        %9323 = vmatprep.subr.bf16.mxu0 %v9192
        %9324 = vmatpush1.bf16.msra.mxu0 %v9191
        %9325 = vmatprep.subr.bf16.mxu0 %v9195
        %9326 = vmatpush1.bf16.msra.mxu0 %v9194
        %9327 = vmatprep.subr.bf16.mxu0 %v9198
        %9328 = vmatpush1.bf16.msra.mxu0 %v9197
        %9329 = vmatprep.subr.bf16.mxu0 0
        %9330 = vmatpush1.bf16.msra.mxu0 0
        %9331 = vmatprep.subr.bf16.mxu0 0
        %9332 = vmatpush1.bf16.msra.mxu0 0
        %9333 = vmatprep.subr.bf16.mxu0 0
        %9334 = vmatpush1.bf16.msra.mxu0 0
        %9335 = vmatprep.subr.bf16.mxu0 0
        %9336 = vmatpush1.bf16.msra.mxu0 0
        %9337 = vmatprep.subr.bf16.mxu0 0
        %9338 = vmatpush1.bf16.msra.mxu0 0
        %9339 = vmatprep.subr.bf16.mxu0 0
        %9340 = vmatpush1.bf16.msra.mxu0 0
        %9341 = vmatprep.subr.bf16.mxu0 0
        %9342 = vmatpush1.bf16.msra.mxu0 0
        %9343 = vmatprep.subr.bf16.mxu0 0
        %9344 = vmatpush1.bf16.msra.mxu0 0
        %9345 = vmatprep.mubr.bf16.mxu0 0
        %9346 = vmatmul.mubr.bf16.gmra.mrb[0].mxu0 %v8869
        %v9347 = vpop.f32.mrb[0].mxu0
        %v9348 = vadd.f32 %v9307, %v9347
        %v9349 = vpop.f32.mrb[0].mxu0
        %v9350 = vadd.f32 %v9309, %v9349
        %v9351 = vpop.f32.mrb[0].mxu0
        %v9352 = vpop.f32.mrb[0].mxu0
        %9353 = vdwg.mxu0
        %9354 = vmatprep.subr.bf16.mxu0 0
        %9355 = vmatpush1.bf16.msra.mxu0 %v9130
        %9356 = vmatprep.subr.bf16.mxu0 0
        %9357 = vmatpush1.bf16.msra.mxu0 %v9133
        %9358 = vmatprep.subr.bf16.mxu0 0
        %9359 = vmatpush1.bf16.msra.mxu0 %v9136
        %9360 = vmatprep.subr.bf16.mxu0 0
        %9361 = vmatpush1.bf16.msra.mxu0 %v9139
        %9362 = vmatprep.subr.bf16.mxu0 0
        %9363 = vmatpush1.bf16.msra.mxu0 %v9142
        %9364 = vmatprep.subr.bf16.mxu0 0
        %9365 = vmatpush1.bf16.msra.mxu0 %v9145
        %9366 = vmatprep.subr.bf16.mxu0 0
        %9367 = vmatpush1.bf16.msra.mxu0 %v9148
        %9368 = vmatprep.subr.bf16.mxu0 0
        %9369 = vmatpush1.bf16.msra.mxu0 %v9151
        %9370 = vmatprep.subr.bf16.mxu0 0
        %9371 = vmatpush1.bf16.msra.mxu0 %v9154
        %9372 = vmatprep.subr.bf16.mxu0 0
        %9373 = vmatpush1.bf16.msra.mxu0 %v9157
        %9374 = vmatprep.subr.bf16.mxu0 0
        %9375 = vmatpush1.bf16.msra.mxu0 %v9160
        %9376 = vmatprep.subr.bf16.mxu0 0
        %9377 = vmatpush1.bf16.msra.mxu0 %v9163
        %9378 = vmatprep.subr.bf16.mxu0 0
        %9379 = vmatpush1.bf16.msra.mxu0 %v9166
        %9380 = vmatprep.subr.bf16.mxu0 0
        %9381 = vmatpush1.bf16.msra.mxu0 %v9169
        %9382 = vmatprep.subr.bf16.mxu0 0
        %9383 = vmatpush1.bf16.msra.mxu0 %v9172
        %9384 = vmatprep.subr.bf16.mxu0 0
        %9385 = vmatpush1.bf16.msra.mxu0 %v9175
        %9386 = vmatprep.mubr.bf16.mxu0 %v8868
        %9387 = vmatmul.mubr.bf16.gmra.mrb[0].mxu0 %v8867
        %v9388 = vpop.f32.mrb[0].mxu0
        %v9389 = vadd.f32 %v8884, %v9388
        %v9390 = vpop.f32.mrb[0].mxu0
        %v9391 = vpop.f32.mrb[0].mxu0
        %v9392 = vpop.f32.mrb[0].mxu0
        %9393 = vdwg.mxu0
        %9394 = vmatprep.subr.bf16.mxu0 0
        %9395 = vmatpush1.bf16.msra.mxu0 %v9178
        %9396 = vmatprep.subr.bf16.mxu0 0
        %9397 = vmatpush1.bf16.msra.mxu0 %v9181
        %9398 = vmatprep.subr.bf16.mxu0 0
        %9399 = vmatpush1.bf16.msra.mxu0 %v9184
        %9400 = vmatprep.subr.bf16.mxu0 0
        %9401 = vmatpush1.bf16.msra.mxu0 %v9187
        %9402 = vmatprep.subr.bf16.mxu0 0
        %9403 = vmatpush1.bf16.msra.mxu0 %v9190
        %9404 = vmatprep.subr.bf16.mxu0 0
        %9405 = vmatpush1.bf16.msra.mxu0 %v9193
        %9406 = vmatprep.subr.bf16.mxu0 0
        %9407 = vmatpush1.bf16.msra.mxu0 %v9196
        %9408 = vmatprep.subr.bf16.mxu0 0
        %9409 = vmatpush1.bf16.msra.mxu0 %v9199
        %9410 = vmatprep.subr.bf16.mxu0 0
        %9411 = vmatpush1.bf16.msra.mxu0 0
        %9412 = vmatprep.subr.bf16.mxu0 0
        %9413 = vmatpush1.bf16.msra.mxu0 0
        %9414 = vmatprep.subr.bf16.mxu0 0
        %9415 = vmatpush1.bf16.msra.mxu0 0
        %9416 = vmatprep.subr.bf16.mxu0 0
        %9417 = vmatpush1.bf16.msra.mxu0 0
        %9418 = vmatprep.subr.bf16.mxu0 0
        %9419 = vmatpush1.bf16.msra.mxu0 0
        %9420 = vmatprep.subr.bf16.mxu0 0
        %9421 = vmatpush1.bf16.msra.mxu0 0
        %9422 = vmatprep.subr.bf16.mxu0 0
        %9423 = vmatpush1.bf16.msra.mxu0 0
        %9424 = vmatprep.subr.bf16.mxu0 0
        %9425 = vmatpush1.bf16.msra.mxu0 0
        %9426 = vmatprep.mubr.bf16.mxu0 0
        %9427 = vmatmul.mubr.bf16.gmra.mrb[0].mxu0 %v8869
        %v9428 = vpop.f32.mrb[0].mxu0
        %v9429 = vadd.f32 %v9389, %v9428
        %v9430 = vpop.f32.mrb[0].mxu0
        %v9431 = vpop.f32.mrb[0].mxu0
        %v9432 = vpop.f32.mrb[0].mxu0
        %9433 = vdwg.mxu0
        %v9434 = vadd.f32 %v9348, %v6122
        %v9435 = vadd.f32 %v9350, %v6123
        %v9436 = vadd.f32 %v9429, %v6124
        %s9437 = scalar_lea.vmem [#allocation3], 76
        %v9438 = vld [vmem:[%s9437] ss:$8 sm:$0x7]
        %s9439 = scalar_lea.vmem [#allocation3], 77
        %v9440 = vld [vmem:[%s9439] ss:$8 sm:$0x7]
        %v9441 = vadd.f32 %v9434, %v9435
        %v9442 = vadd.f32 %v9441, %v9436
        %9443 = vadd.xlane.f32.xlu0 %v9442
        %v9444 = vpop.xlane.xlu0 %9443
        %v9445 = vmul.f32 %v9444, %v333
        %v9446 = vsub.f32 %v9434, %v9445
        %v9447 = vsub.f32 %v9435, %v9445
        %v9448 = vsub.f32 %v9436, %v9445
        %v9449 = vmul.f32 %v9446, %v9446
        %v9450 = vmul.f32 %v9447, %v9447
        %v9451 = vmul.f32 %v9448, %v9448
        %v9452 = vadd.f32 %v9449, %v9450
        %v9453 = vadd.f32 %v9452, %v9451
        %9454 = vadd.xlane.f32.xlu0 %v9453
        %v9455 = vpop.xlane.xlu0 %9454
        %v9456 = vmul.f32 %v9455, %v333
        %v9457 = vadd.f32 %v9456, 1e-12
        %v9458 = vrsqrt.pop %v9457
        %v9459 = vmul.f32 %v9446, %v9458
        %v9460 = vmul.f32 %v9447, %v9458
        %v9461 = vmul.f32 %v9448, %v9458
        %v9463 = vlaneseq
        %v9464 = vshrl.u32 %v9463, 7
        %v9465 = vsub.s32 0, %v9464
        %v9466 = vrot.slane %v9438, %v9465
        %v9467 = vlaneseq
        %v9468 = vshrl.u32 %v9467, 7
        %v9469 = vsub.s32 1, %v9468
        %v9470 = vrot.slane %v9438, %v9469
        %v9471 = vlaneseq
        %v9472 = vshrl.u32 %v9471, 7
        %v9473 = vsub.s32 2, %v9472
        %v9474 = vrot.slane %v9438, %v9473
        %v9478 = vmul.f32 %v9459, %v9466
        %v9479 = vmul.f32 %v9460, %v9470
        %v9480 = vmul.f32 %v9461, %v9474
        %v9482 = vlaneseq
        %v9483 = vshrl.u32 %v9482, 7
        %v9484 = vsub.s32 0, %v9483
        %v9485 = vrot.slane %v9440, %v9484
        %v9486 = vlaneseq
        %v9487 = vshrl.u32 %v9486, 7
        %v9488 = vsub.s32 1, %v9487
        %v9489 = vrot.slane %v9440, %v9488
        %v9490 = vlaneseq
        %v9491 = vshrl.u32 %v9490, 7
        %v9492 = vsub.s32 2, %v9491
        %v9493 = vrot.slane %v9440, %v9492
        %v9497 = vadd.f32 %v9478, %v9485
        %v9498 = vadd.f32 %v9479, %v9489
        %v9499 = vadd.f32 %v9480, %v9493
        %v9500 = vpack.c.bf16 %v9497, %v9497
        %v9501 = vpack.c.bf16 %v9498, %v9498
        %v9502 = vpack.c.bf16 %v9499, %v9499
        %s9503 = scalar_lea.vmem [#allocation3], 78
        %v9504 = vld [vmem:[%s9503] ss:$8 sm:$0xf]
        %v9505 = vld [vmem:[%s9503] ss:$8 sm:$0x30]
        %v9506 = vor.u32 %v9504, %v9505
        %v9508 = vlaneseq
        %v9509 = vshrl.u32 %v9508, 7
        %v9510 = vsub.s32 0, %v9509
        %v9511 = vrot.slane %v9506, %v9510
        %v9512 = vlaneseq
        %v9513 = vshrl.u32 %v9512, 7
        %v9514 = vsub.s32 1, %v9513
        %v9515 = vrot.slane %v9506, %v9514
        %v9516 = vlaneseq
        %v9517 = vshrl.u32 %v9516, 7
        %v9518 = vsub.s32 2, %v9517
        %v9519 = vrot.slane %v9506, %v9518
        %v9520 = vlaneseq
        %v9521 = vshrl.u32 %v9520, 7
        %v9522 = vsub.s32 3, %v9521
        %v9523 = vrot.slane %v9506, %v9522
        %v9524 = vlaneseq
        %v9525 = vshrl.u32 %v9524, 7
        %v9526 = vsub.s32 4, %v9525
        %v9527 = vrot.slane %v9506, %v9526
        %v9528 = vlaneseq
        %v9529 = vshrl.u32 %v9528, 7
        %v9530 = vsub.s32 5, %v9529
        %v9531 = vrot.slane %v9506, %v9530
        %v9682 = vunpack.c.l.b16 %v6462
        %v9683 = vunpack.c.h.b16 %v6462
        %v9684 = vunpack.c.l.b16 %v6463
        %v9685 = vunpack.c.h.b16 %v6463
        %v9686 = vunpack.c.l.b16 %v6464
        %v9687 = vunpack.c.h.b16 %v6464
        %v9688 = vunpack.c.l.b16 %v6465
        %v9689 = vunpack.c.h.b16 %v6465
        %v9690 = vunpack.c.l.b16 %v6466
        %v9691 = vunpack.c.h.b16 %v6466
        %v9692 = vunpack.c.l.b16 %v6467
        %v9693 = vunpack.c.h.b16 %v6467
        %v9694 = vunpack.c.l.b16 %v6468
        %v9695 = vunpack.c.h.b16 %v6468
        %v9696 = vunpack.c.l.b16 %v6469
        %v9697 = vunpack.c.h.b16 %v6469
        %v9698 = vunpack.c.l.b16 %v6470
        %v9699 = vunpack.c.h.b16 %v6470
        %v9700 = vunpack.c.l.b16 %v6471
        %v9701 = vunpack.c.h.b16 %v6471
        %v9702 = vunpack.c.l.b16 %v6472
        %v9703 = vunpack.c.h.b16 %v6472
        %v9704 = vunpack.c.l.b16 %v6473
        %v9705 = vunpack.c.h.b16 %v6473
        %v9706 = vunpack.c.l.b16 %v6474
        %v9707 = vunpack.c.h.b16 %v6474
        %v9708 = vunpack.c.l.b16 %v6475
        %v9709 = vunpack.c.h.b16 %v6475
        %v9710 = vunpack.c.l.b16 %v6476
        %v9711 = vunpack.c.h.b16 %v6476
        %v9712 = vunpack.c.l.b16 %v6477
        %v9713 = vunpack.c.h.b16 %v6477
        %v9714 = vunpack.c.l.b16 %v6478
        %v9715 = vunpack.c.h.b16 %v6478
        %v9716 = vunpack.c.l.b16 %v6479
        %v9717 = vunpack.c.h.b16 %v6479
        %v9718 = vunpack.c.l.b16 %v6480
        %v9719 = vunpack.c.h.b16 %v6480
        %v9720 = vunpack.c.l.b16 %v6481
        %v9721 = vunpack.c.h.b16 %v6481
        %v9722 = vunpack.c.l.b16 %v6482
        %v9723 = vunpack.c.h.b16 %v6482
        %v9724 = vunpack.c.l.b16 %v6483
        %v9725 = vunpack.c.h.b16 %v6483
        %v9726 = vunpack.c.l.b16 %v6484
        %v9727 = vunpack.c.h.b16 %v6484
        %v9728 = vunpack.c.l.b16 %v6485
        %v9729 = vunpack.c.h.b16 %v6485
        %v9730 = vunpack.c.l.b16 %v6486
        %v9731 = vunpack.c.h.b16 %v6486
        %v9732 = vunpack.c.l.b16 %v6487
        %v9733 = vunpack.c.h.b16 %v6487
        %v9734 = vunpack.c.l.b16 %v6488
        %v9735 = vunpack.c.h.b16 %v6488
        %v9736 = vunpack.c.l.b16 %v6489
        %v9737 = vunpack.c.h.b16 %v6489
        %v9738 = vunpack.c.l.b16 %v6490
        %v9739 = vunpack.c.h.b16 %v6490
        %v9740 = vunpack.c.l.b16 %v6491
        %v9741 = vunpack.c.h.b16 %v6491
        %v9742 = vunpack.c.l.b16 %v6492
        %v9743 = vunpack.c.h.b16 %v6492
        %v9744 = vunpack.c.l.b16 %v6493
        %v9745 = vunpack.c.h.b16 %v6493
        %v9746 = vunpack.c.l.b16 %v6494
        %v9747 = vunpack.c.h.b16 %v6494
        %v9748 = vunpack.c.l.b16 %v6495
        %v9749 = vunpack.c.h.b16 %v6495
        %v9750 = vunpack.c.l.b16 %v6496
        %v9751 = vunpack.c.h.b16 %v6496
        %v9752 = vunpack.c.l.b16 %v6497
        %v9753 = vunpack.c.h.b16 %v6497
        %v9754 = vunpack.c.l.b16 %v6498
        %v9755 = vunpack.c.h.b16 %v6498
        %v9756 = vunpack.c.l.b16 %v6499
        %v9757 = vunpack.c.h.b16 %v6499
        %v9758 = vunpack.c.l.b16 %v6500
        %v9759 = vunpack.c.h.b16 %v6500
        %v9760 = vunpack.c.l.b16 %v6501
        %v9761 = vunpack.c.h.b16 %v6501
        %v9762 = vunpack.c.l.b16 %v6502
        %v9763 = vunpack.c.h.b16 %v6502
        %v9764 = vunpack.c.l.b16 %v6503
        %v9765 = vunpack.c.h.b16 %v6503
        %v9766 = vunpack.c.l.b16 %v6504
        %v9767 = vunpack.c.h.b16 %v6504
        %v9768 = vunpack.c.l.b16 %v6505
        %v9769 = vunpack.c.h.b16 %v6505
        %v9770 = vunpack.c.l.b16 %v6506
        %v9771 = vunpack.c.h.b16 %v6506
        %v9772 = vunpack.c.l.b16 %v6507
        %v9773 = vunpack.c.h.b16 %v6507
        %v9774 = vunpack.c.l.b16 %v6508
        %v9775 = vunpack.c.h.b16 %v6508
        %v9776 = vunpack.c.l.b16 %v6509
        %v9777 = vunpack.c.h.b16 %v6509
        %v9778 = vunpack.c.l.b16 %v6510
        %v9779 = vunpack.c.h.b16 %v6510
        %v9780 = vunpack.c.l.b16 %v6511
        %v9781 = vunpack.c.h.b16 %v6511
        %v9782 = vunpack.c.l.b16 %v6512
        %v9783 = vunpack.c.h.b16 %v6512
        %v9784 = vunpack.c.l.b16 %v6513
        %v9785 = vunpack.c.h.b16 %v6513
        %v9786 = vunpack.c.l.b16 %v6514
        %v9787 = vunpack.c.h.b16 %v6514
        %v9788 = vunpack.c.l.b16 %v6515
        %v9789 = vunpack.c.h.b16 %v6515
        %v9790 = vunpack.c.l.b16 %v6516
        %v9791 = vunpack.c.h.b16 %v6516
        %v9792 = vunpack.c.l.b16 %v6517
        %v9793 = vunpack.c.h.b16 %v6517
        %v9794 = vunpack.c.l.b16 %v6518
        %v9795 = vunpack.c.h.b16 %v6518
        %v9796 = vunpack.c.l.b16 %v6519
        %v9797 = vunpack.c.h.b16 %v6519
        %v9798 = vunpack.c.l.b16 %v6520
        %v9799 = vunpack.c.h.b16 %v6520
        %v9800 = vunpack.c.l.b16 %v6521
        %v9801 = vunpack.c.h.b16 %v6521
        %v9802 = vunpack.c.l.b16 %v6522
        %v9803 = vunpack.c.h.b16 %v6522
        %v9804 = vunpack.c.l.b16 %v6523
        %v9805 = vunpack.c.h.b16 %v6523
        %v9806 = vunpack.c.l.b16 %v6524
        %v9807 = vunpack.c.h.b16 %v6524
        %v9808 = vunpack.c.l.b16 %v6525
        %v9809 = vunpack.c.h.b16 %v6525
        %v9810 = vunpack.c.l.b16 %v6526
        %v9811 = vunpack.c.h.b16 %v6526
        %v9812 = vunpack.c.l.b16 %v6527
        %v9813 = vunpack.c.h.b16 %v6527
        %v9814 = vunpack.c.l.b16 %v6528
        %v9815 = vunpack.c.h.b16 %v6528
        %v9816 = vunpack.c.l.b16 %v6529
        %v9817 = vunpack.c.h.b16 %v6529
        %v9818 = vunpack.c.l.b16 %v6530
        %v9819 = vunpack.c.h.b16 %v6530
        %v9820 = vunpack.c.l.b16 %v6531
        %v9821 = vunpack.c.h.b16 %v6531
        %v9822 = vunpack.c.l.b16 %v6532
        %v9823 = vunpack.c.h.b16 %v6532
        %v9824 = vunpack.c.l.b16 %v6533
        %v9825 = vunpack.c.h.b16 %v6533
        %v9826 = vunpack.c.l.b16 %v6534
        %v9827 = vunpack.c.h.b16 %v6534
        %v9828 = vunpack.c.l.b16 %v6535
        %v9829 = vunpack.c.h.b16 %v6535
        %v9830 = vunpack.c.l.b16 %v6536
        %v9831 = vunpack.c.h.b16 %v6536
        %v9832 = vunpack.c.l.b16 %v6537
        %v9833 = vunpack.c.h.b16 %v6537
        %v9834 = vunpack.c.l.b16 %v6538
        %v9835 = vunpack.c.h.b16 %v6538
        %v9836 = vunpack.c.l.b16 %v6539
        %v9837 = vunpack.c.h.b16 %v6539
        %v9838 = vunpack.c.l.b16 %v6540
        %v9839 = vunpack.c.h.b16 %v6540
        %v9840 = vunpack.c.l.b16 %v6541
        %v9841 = vunpack.c.h.b16 %v6541
        %v9842 = vunpack.c.l.b16 %v6542
        %v9843 = vunpack.c.h.b16 %v6542
        %v9844 = vunpack.c.l.b16 %v6543
        %v9845 = vunpack.c.h.b16 %v6543
        %v9846 = vunpack.c.l.b16 %v6544
        %v9847 = vunpack.c.h.b16 %v6544
        %v9848 = vunpack.c.l.b16 %v6545
        %v9849 = vunpack.c.h.b16 %v6545
        %v9850 = vunpack.c.l.b16 %v6546
        %v9851 = vunpack.c.h.b16 %v6546
        %v9852 = vunpack.c.l.b16 %v6547
        %v9853 = vunpack.c.h.b16 %v6547
        %v9854 = vunpack.c.l.b16 %v6548
        %v9855 = vunpack.c.h.b16 %v6548
        %v9856 = vunpack.c.l.b16 %v6549
        %v9857 = vunpack.c.h.b16 %v6549
        %v9858 = vunpack.c.l.b16 %v6550
        %v9859 = vunpack.c.h.b16 %v6550
        %v9860 = vunpack.c.l.b16 %v6551
        %v9861 = vunpack.c.h.b16 %v6551
        %v9862 = vunpack.c.l.b16 %v6552
        %v9863 = vunpack.c.h.b16 %v6552
        %v9864 = vunpack.c.l.b16 %v6553
        %v9865 = vunpack.c.h.b16 %v6553
        %v9866 = vunpack.c.l.b16 %v6554
        %v9867 = vunpack.c.h.b16 %v6554
        %v9868 = vunpack.c.l.b16 %v6555
        %v9869 = vunpack.c.h.b16 %v6555
        %v9870 = vunpack.c.l.b16 %v6556
        %v9871 = vunpack.c.h.b16 %v6556
        %v9872 = vunpack.c.l.b16 %v6557
        %v9873 = vunpack.c.h.b16 %v6557
        %v9874 = vunpack.c.l.b16 %v6558
        %v9875 = vunpack.c.h.b16 %v6558
        %v9876 = vunpack.c.l.b16 %v6559
        %v9877 = vunpack.c.h.b16 %v6559
        %v9878 = vunpack.c.l.b16 %v6560
        %v9879 = vunpack.c.h.b16 %v6560
        %v9880 = vunpack.c.l.b16 %v6561
        %v9881 = vunpack.c.h.b16 %v6561
        %v9882 = vunpack.c.l.b16 %v6562
        %v9883 = vunpack.c.h.b16 %v6562
        %v9884 = vunpack.c.l.b16 %v6563
        %v9885 = vunpack.c.h.b16 %v6563
        %v9886 = vunpack.c.l.b16 %v6564
        %v9887 = vunpack.c.h.b16 %v6564
        %v9888 = vunpack.c.l.b16 %v6565
        %v9889 = vunpack.c.h.b16 %v6565
        %v9890 = vunpack.c.l.b16 %v6566
        %v9891 = vunpack.c.h.b16 %v6566
        %v9892 = vunpack.c.l.b16 %v6567
        %v9893 = vunpack.c.h.b16 %v6567
        %v9894 = vunpack.c.l.b16 %v6568
        %v9895 = vunpack.c.h.b16 %v6568
        %v9896 = vunpack.c.l.b16 %v6569
        %v9897 = vunpack.c.h.b16 %v6569
        %v9898 = vunpack.c.l.b16 %v6570
        %v9899 = vunpack.c.h.b16 %v6570
        %v9900 = vunpack.c.l.b16 %v6571
        %v9901 = vunpack.c.h.b16 %v6571
        %v9902 = vunpack.c.l.b16 %v6572
        %v9903 = vunpack.c.h.b16 %v6572
        %v9904 = vunpack.c.l.b16 %v6573
        %v9905 = vunpack.c.h.b16 %v6573
        %v9906 = vunpack.c.l.b16 %v6574
        %v9907 = vunpack.c.h.b16 %v6574
        %v9908 = vunpack.c.l.b16 %v6575
        %v9909 = vunpack.c.h.b16 %v6575
        %v9910 = vunpack.c.l.b16 %v6576
        %v9911 = vunpack.c.h.b16 %v6576
        %v9912 = vunpack.c.l.b16 %v6577
        %v9913 = vunpack.c.h.b16 %v6577
        %v9914 = vunpack.c.l.b16 %v6578
        %v9915 = vunpack.c.h.b16 %v6578
        %v9916 = vunpack.c.l.b16 %v6579
        %v9917 = vunpack.c.h.b16 %v6579
        %v9918 = vunpack.c.l.b16 %v6580
        %v9919 = vunpack.c.h.b16 %v6580
        %v9920 = vunpack.c.l.b16 %v6581
        %v9921 = vunpack.c.h.b16 %v6581
        %v9922 = vunpack.c.l.b16 %v6582
        %v9923 = vunpack.c.h.b16 %v6582
        %v9924 = vunpack.c.l.b16 %v6583
        %v9925 = vunpack.c.h.b16 %v6583
        %v9926 = vunpack.c.l.b16 %v6584
        %v9927 = vunpack.c.h.b16 %v6584
        %v9928 = vunpack.c.l.b16 %v6585
        %v9929 = vunpack.c.h.b16 %v6585
        %v9930 = vunpack.c.l.b16 %v6586
        %v9931 = vunpack.c.h.b16 %v6586
        %v9932 = vunpack.c.l.b16 %v6587
        %v9933 = vunpack.c.h.b16 %v6587
        %v9934 = vunpack.c.l.b16 %v6588
        %v9935 = vunpack.c.h.b16 %v6588
        %v9936 = vunpack.c.l.b16 %v6589
        %v9937 = vunpack.c.h.b16 %v6589
        %v9938 = vunpack.c.l.b16 %v6590
        %v9939 = vunpack.c.h.b16 %v6590
        %v9940 = vunpack.c.l.b16 %v6591
        %v9941 = vunpack.c.h.b16 %v6591
        %v9942 = vunpack.c.l.b16 %v6592
        %v9943 = vunpack.c.h.b16 %v6592
        %v9944 = vunpack.c.l.b16 %v6593
        %v9945 = vunpack.c.h.b16 %v6593
        %v9946 = vunpack.c.l.b16 %v6594
        %v9947 = vunpack.c.h.b16 %v6594
        %v9948 = vunpack.c.l.b16 %v6595
        %v9949 = vunpack.c.h.b16 %v6595
        %v9950 = vunpack.c.l.b16 %v6596
        %v9951 = vunpack.c.h.b16 %v6596
        %v9952 = vunpack.c.l.b16 %v6597
        %v9953 = vunpack.c.h.b16 %v6597
        %v9954 = vunpack.c.l.b16 %v6598
        %v9955 = vunpack.c.h.b16 %v6598
        %v9956 = vunpack.c.l.b16 %v6599
        %v9957 = vunpack.c.h.b16 %v6599
        %v9958 = vunpack.c.l.b16 %v6600
        %v9959 = vunpack.c.h.b16 %v6600
        %v9960 = vunpack.c.l.b16 %v6601
        %v9961 = vunpack.c.h.b16 %v6601
        %v9962 = vunpack.c.l.b16 %v6602
        %v9963 = vunpack.c.h.b16 %v6602
        %v9964 = vunpack.c.l.b16 %v6603
        %v9965 = vunpack.c.h.b16 %v6603
        %v9966 = vunpack.c.l.b16 %v6604
        %v9967 = vunpack.c.h.b16 %v6604
        %v9968 = vunpack.c.l.b16 %v6605
        %v9969 = vunpack.c.h.b16 %v6605
        %v9970 = vpack.c.b16 %v9688, %v9682
        %v9971 = vpack.c.b16 %v9689, %v9683
        %v9972 = vpack.c.b16 %v9690, %v9684
        %v9973 = vpack.c.b16 %v9691, %v9685
        %v9974 = vpack.c.b16 %v9692, %v9686
        %v9975 = vpack.c.b16 %v9693, %v9687
        %v9976 = vpack.c.b16 %v9700, %v9694
        %v9977 = vpack.c.b16 %v9701, %v9695
        %v9978 = vpack.c.b16 %v9702, %v9696
        %v9979 = vpack.c.b16 %v9703, %v9697
        %v9980 = vpack.c.b16 %v9704, %v9698
        %v9981 = vpack.c.b16 %v9705, %v9699
        %v9982 = vpack.c.b16 %v9712, %v9706
        %v9983 = vpack.c.b16 %v9713, %v9707
        %v9984 = vpack.c.b16 %v9714, %v9708
        %v9985 = vpack.c.b16 %v9715, %v9709
        %v9986 = vpack.c.b16 %v9716, %v9710
        %v9987 = vpack.c.b16 %v9717, %v9711
        %v9988 = vpack.c.b16 %v9724, %v9718
        %v9989 = vpack.c.b16 %v9725, %v9719
        %v9990 = vpack.c.b16 %v9726, %v9720
        %v9991 = vpack.c.b16 %v9727, %v9721
        %v9992 = vpack.c.b16 %v9728, %v9722
        %v9993 = vpack.c.b16 %v9729, %v9723
        %v9994 = vpack.c.b16 %v9736, %v9730
        %v9995 = vpack.c.b16 %v9737, %v9731
        %v9996 = vpack.c.b16 %v9738, %v9732
        %v9997 = vpack.c.b16 %v9739, %v9733
        %v9998 = vpack.c.b16 %v9740, %v9734
        %v9999 = vpack.c.b16 %v9741, %v9735
        %v10000 = vpack.c.b16 %v9748, %v9742
        %v10001 = vpack.c.b16 %v9749, %v9743
        %v10002 = vpack.c.b16 %v9750, %v9744
        %v10003 = vpack.c.b16 %v9751, %v9745
        %v10004 = vpack.c.b16 %v9752, %v9746
        %v10005 = vpack.c.b16 %v9753, %v9747
        %v10006 = vpack.c.b16 %v9760, %v9754
        %v10007 = vpack.c.b16 %v9761, %v9755
        %v10008 = vpack.c.b16 %v9762, %v9756
        %v10009 = vpack.c.b16 %v9763, %v9757
        %v10010 = vpack.c.b16 %v9764, %v9758
        %v10011 = vpack.c.b16 %v9765, %v9759
        %v10012 = vpack.c.b16 %v9772, %v9766
        %v10013 = vpack.c.b16 %v9773, %v9767
        %v10014 = vpack.c.b16 %v9774, %v9768
        %v10015 = vpack.c.b16 %v9775, %v9769
        %v10016 = vpack.c.b16 %v9776, %v9770
        %v10017 = vpack.c.b16 %v9777, %v9771
        %v10018 = vpack.c.b16 %v9784, %v9778
        %v10019 = vpack.c.b16 %v9785, %v9779
        %v10020 = vpack.c.b16 %v9786, %v9780
        %v10021 = vpack.c.b16 %v9787, %v9781
        %v10022 = vpack.c.b16 %v9788, %v9782
        %v10023 = vpack.c.b16 %v9789, %v9783
        %v10024 = vpack.c.b16 %v9796, %v9790
        %v10025 = vpack.c.b16 %v9797, %v9791
        %v10026 = vpack.c.b16 %v9798, %v9792
        %v10027 = vpack.c.b16 %v9799, %v9793
        %v10028 = vpack.c.b16 %v9800, %v9794
        %v10029 = vpack.c.b16 %v9801, %v9795
        %v10030 = vpack.c.b16 %v9808, %v9802
        %v10031 = vpack.c.b16 %v9809, %v9803
        %v10032 = vpack.c.b16 %v9810, %v9804
        %v10033 = vpack.c.b16 %v9811, %v9805
        %v10034 = vpack.c.b16 %v9812, %v9806
        %v10035 = vpack.c.b16 %v9813, %v9807
        %v10036 = vpack.c.b16 %v9820, %v9814
        %v10037 = vpack.c.b16 %v9821, %v9815
        %v10038 = vpack.c.b16 %v9822, %v9816
        %v10039 = vpack.c.b16 %v9823, %v9817
        %v10040 = vpack.c.b16 %v9824, %v9818
        %v10041 = vpack.c.b16 %v9825, %v9819
        %v10042 = vpack.c.b16 %v9832, %v9826
        %v10043 = vpack.c.b16 %v9833, %v9827
        %v10044 = vpack.c.b16 %v9834, %v9828
        %v10045 = vpack.c.b16 %v9835, %v9829
        %v10046 = vpack.c.b16 %v9836, %v9830
        %v10047 = vpack.c.b16 %v9837, %v9831
        %v10048 = vpack.c.b16 %v9844, %v9838
        %v10049 = vpack.c.b16 %v9845, %v9839
        %v10050 = vpack.c.b16 %v9846, %v9840
        %v10051 = vpack.c.b16 %v9847, %v9841
        %v10052 = vpack.c.b16 %v9848, %v9842
        %v10053 = vpack.c.b16 %v9849, %v9843
        %v10054 = vpack.c.b16 %v9856, %v9850
        %v10055 = vpack.c.b16 %v9857, %v9851
        %v10056 = vpack.c.b16 %v9858, %v9852
        %v10057 = vpack.c.b16 %v9859, %v9853
        %v10058 = vpack.c.b16 %v9860, %v9854
        %v10059 = vpack.c.b16 %v9861, %v9855
        %v10060 = vpack.c.b16 %v9868, %v9862
        %v10061 = vpack.c.b16 %v9869, %v9863
        %v10062 = vpack.c.b16 %v9870, %v9864
        %v10063 = vpack.c.b16 %v9871, %v9865
        %v10064 = vpack.c.b16 %v9872, %v9866
        %v10065 = vpack.c.b16 %v9873, %v9867
        %v10066 = vpack.c.b16 %v9880, %v9874
        %v10067 = vpack.c.b16 %v9881, %v9875
        %v10068 = vpack.c.b16 %v9882, %v9876
        %v10069 = vpack.c.b16 %v9883, %v9877
        %v10070 = vpack.c.b16 %v9884, %v9878
        %v10071 = vpack.c.b16 %v9885, %v9879
        %v10072 = vpack.c.b16 %v9892, %v9886
        %v10073 = vpack.c.b16 %v9893, %v9887
        %v10074 = vpack.c.b16 %v9894, %v9888
        %v10075 = vpack.c.b16 %v9895, %v9889
        %v10076 = vpack.c.b16 %v9896, %v9890
        %v10077 = vpack.c.b16 %v9897, %v9891
        %v10078 = vpack.c.b16 %v9904, %v9898
        %v10079 = vpack.c.b16 %v9905, %v9899
        %v10080 = vpack.c.b16 %v9906, %v9900
        %v10081 = vpack.c.b16 %v9907, %v9901
        %v10082 = vpack.c.b16 %v9908, %v9902
        %v10083 = vpack.c.b16 %v9909, %v9903
        %v10084 = vpack.c.b16 %v9916, %v9910
        %v10085 = vpack.c.b16 %v9917, %v9911
        %v10086 = vpack.c.b16 %v9918, %v9912
        %v10087 = vpack.c.b16 %v9919, %v9913
        %v10088 = vpack.c.b16 %v9920, %v9914
        %v10089 = vpack.c.b16 %v9921, %v9915
        %v10090 = vpack.c.b16 %v9928, %v9922
        %v10091 = vpack.c.b16 %v9929, %v9923
        %v10092 = vpack.c.b16 %v9930, %v9924
        %v10093 = vpack.c.b16 %v9931, %v9925
        %v10094 = vpack.c.b16 %v9932, %v9926
        %v10095 = vpack.c.b16 %v9933, %v9927
        %v10096 = vpack.c.b16 %v9940, %v9934
        %v10097 = vpack.c.b16 %v9941, %v9935
        %v10098 = vpack.c.b16 %v9942, %v9936
        %v10099 = vpack.c.b16 %v9943, %v9937
        %v10100 = vpack.c.b16 %v9944, %v9938
        %v10101 = vpack.c.b16 %v9945, %v9939
        %v10102 = vpack.c.b16 %v9952, %v9946
        %v10103 = vpack.c.b16 %v9953, %v9947
        %v10104 = vpack.c.b16 %v9954, %v9948
        %v10105 = vpack.c.b16 %v9955, %v9949
        %v10106 = vpack.c.b16 %v9956, %v9950
        %v10107 = vpack.c.b16 %v9957, %v9951
        %v10108 = vpack.c.b16 %v9964, %v9958
        %v10109 = vpack.c.b16 %v9965, %v9959
        %v10110 = vpack.c.b16 %v9966, %v9960
        %v10111 = vpack.c.b16 %v9967, %v9961
        %v10112 = vpack.c.b16 %v9968, %v9962
        %v10113 = vpack.c.b16 %v9969, %v9963
        %10258 = vmatprep.subr.bf16.mxu0 %v9971
        %10259 = vmatpush1.bf16.msra.mxu0 %v9970
        %10260 = vmatprep.subr.bf16.mxu0 %v9977
        %10261 = vmatpush1.bf16.msra.mxu0 %v9976
        %10262 = vmatprep.subr.bf16.mxu0 %v9983
        %10263 = vmatpush1.bf16.msra.mxu0 %v9982
        %10264 = vmatprep.subr.bf16.mxu0 %v9989
        %10265 = vmatpush1.bf16.msra.mxu0 %v9988
        %10266 = vmatprep.subr.bf16.mxu0 %v9995
        %10267 = vmatpush1.bf16.msra.mxu0 %v9994
        %10268 = vmatprep.subr.bf16.mxu0 %v10001
        %10269 = vmatpush1.bf16.msra.mxu0 %v10000
        %10270 = vmatprep.subr.bf16.mxu0 %v10007
        %10271 = vmatpush1.bf16.msra.mxu0 %v10006
        %10272 = vmatprep.subr.bf16.mxu0 %v10013
        %10273 = vmatpush1.bf16.msra.mxu0 %v10012
        %10274 = vmatprep.subr.bf16.mxu0 %v10019
        %10275 = vmatpush1.bf16.msra.mxu0 %v10018
        %10276 = vmatprep.subr.bf16.mxu0 %v10025
        %10277 = vmatpush1.bf16.msra.mxu0 %v10024
        %10278 = vmatprep.subr.bf16.mxu0 %v10031
        %10279 = vmatpush1.bf16.msra.mxu0 %v10030
        %10280 = vmatprep.subr.bf16.mxu0 %v10037
        %10281 = vmatpush1.bf16.msra.mxu0 %v10036
        %10282 = vmatprep.subr.bf16.mxu0 %v10043
        %10283 = vmatpush1.bf16.msra.mxu0 %v10042
        %10284 = vmatprep.subr.bf16.mxu0 %v10049
        %10285 = vmatpush1.bf16.msra.mxu0 %v10048
        %10286 = vmatprep.subr.bf16.mxu0 %v10055
        %10287 = vmatpush1.bf16.msra.mxu0 %v10054
        %10288 = vmatprep.subr.bf16.mxu0 %v10061
        %10289 = vmatpush1.bf16.msra.mxu0 %v10060
        %10290 = vmatprep.mubr.bf16.mxu0 %v9501
        %10291 = vmatmul.mubr.bf16.gmra.mrb[0].mxu0 %v9500
        %v10292 = vpop.f32.mrb[0].mxu0
        %v10293 = vadd.f32 %v9511, %v10292
        %v10294 = vpop.f32.mrb[0].mxu0
        %v10295 = vadd.f32 %v9515, %v10294
        %v10296 = vpop.f32.mrb[0].mxu0
        %v10297 = vpop.f32.mrb[0].mxu0
        %10298 = vdwg.mxu0
        %10299 = vmatprep.subr.bf16.mxu0 %v10067
        %10300 = vmatpush1.bf16.msra.mxu0 %v10066
        %10301 = vmatprep.subr.bf16.mxu0 %v10073
        %10302 = vmatpush1.bf16.msra.mxu0 %v10072
        %10303 = vmatprep.subr.bf16.mxu0 %v10079
        %10304 = vmatpush1.bf16.msra.mxu0 %v10078
        %10305 = vmatprep.subr.bf16.mxu0 %v10085
        %10306 = vmatpush1.bf16.msra.mxu0 %v10084
        %10307 = vmatprep.subr.bf16.mxu0 %v10091
        %10308 = vmatpush1.bf16.msra.mxu0 %v10090
        %10309 = vmatprep.subr.bf16.mxu0 %v10097
        %10310 = vmatpush1.bf16.msra.mxu0 %v10096
        %10311 = vmatprep.subr.bf16.mxu0 %v10103
        %10312 = vmatpush1.bf16.msra.mxu0 %v10102
        %10313 = vmatprep.subr.bf16.mxu0 %v10109
        %10314 = vmatpush1.bf16.msra.mxu0 %v10108
        %10315 = vmatprep.subr.bf16.mxu0 0
        %10316 = vmatpush1.bf16.msra.mxu0 0
        %10317 = vmatprep.subr.bf16.mxu0 0
        %10318 = vmatpush1.bf16.msra.mxu0 0
        %10319 = vmatprep.subr.bf16.mxu0 0
        %10320 = vmatpush1.bf16.msra.mxu0 0
        %10321 = vmatprep.subr.bf16.mxu0 0
        %10322 = vmatpush1.bf16.msra.mxu0 0
        %10323 = vmatprep.subr.bf16.mxu0 0
        %10324 = vmatpush1.bf16.msra.mxu0 0
        %10325 = vmatprep.subr.bf16.mxu0 0
        %10326 = vmatpush1.bf16.msra.mxu0 0
        %10327 = vmatprep.subr.bf16.mxu0 0
        %10328 = vmatpush1.bf16.msra.mxu0 0
        %10329 = vmatprep.subr.bf16.mxu0 0
        %10330 = vmatpush1.bf16.msra.mxu0 0
        %10331 = vmatprep.mubr.bf16.mxu0 0
        %10332 = vmatmul.mubr.bf16.gmra.mrb[0].mxu0 %v9502
        %v10333 = vpop.f32.mrb[0].mxu0
        %v10334 = vadd.f32 %v10293, %v10333
        %v10335 = vpop.f32.mrb[0].mxu0
        %v10336 = vadd.f32 %v10295, %v10335
        %v10337 = vpop.f32.mrb[0].mxu0
        %v10338 = vpop.f32.mrb[0].mxu0
        %10339 = vdwg.mxu0
        %10340 = vmatprep.subr.bf16.mxu0 %v9973
        %10341 = vmatpush1.bf16.msra.mxu0 %v9972
        %10342 = vmatprep.subr.bf16.mxu0 %v9979
        %10343 = vmatpush1.bf16.msra.mxu0 %v9978
        %10344 = vmatprep.subr.bf16.mxu0 %v9985
        %10345 = vmatpush1.bf16.msra.mxu0 %v9984
        %10346 = vmatprep.subr.bf16.mxu0 %v9991
        %10347 = vmatpush1.bf16.msra.mxu0 %v9990
        %10348 = vmatprep.subr.bf16.mxu0 %v9997
        %10349 = vmatpush1.bf16.msra.mxu0 %v9996
        %10350 = vmatprep.subr.bf16.mxu0 %v10003
        %10351 = vmatpush1.bf16.msra.mxu0 %v10002
        %10352 = vmatprep.subr.bf16.mxu0 %v10009
        %10353 = vmatpush1.bf16.msra.mxu0 %v10008
        %10354 = vmatprep.subr.bf16.mxu0 %v10015
        %10355 = vmatpush1.bf16.msra.mxu0 %v10014
        %10356 = vmatprep.subr.bf16.mxu0 %v10021
        %10357 = vmatpush1.bf16.msra.mxu0 %v10020
        %10358 = vmatprep.subr.bf16.mxu0 %v10027
        %10359 = vmatpush1.bf16.msra.mxu0 %v10026
        %10360 = vmatprep.subr.bf16.mxu0 %v10033
        %10361 = vmatpush1.bf16.msra.mxu0 %v10032
        %10362 = vmatprep.subr.bf16.mxu0 %v10039
        %10363 = vmatpush1.bf16.msra.mxu0 %v10038
        %10364 = vmatprep.subr.bf16.mxu0 %v10045
        %10365 = vmatpush1.bf16.msra.mxu0 %v10044
        %10366 = vmatprep.subr.bf16.mxu0 %v10051
        %10367 = vmatpush1.bf16.msra.mxu0 %v10050
        %10368 = vmatprep.subr.bf16.mxu0 %v10057
        %10369 = vmatpush1.bf16.msra.mxu0 %v10056
        %10370 = vmatprep.subr.bf16.mxu0 %v10063
        %10371 = vmatpush1.bf16.msra.mxu0 %v10062
        %10372 = vmatprep.mubr.bf16.mxu0 %v9501
        %10373 = vmatmul.mubr.bf16.gmra.mrb[0].mxu0 %v9500
        %v10374 = vpop.f32.mrb[0].mxu0
        %v10375 = vadd.f32 %v9519, %v10374
        %v10376 = vpop.f32.mrb[0].mxu0
        %v10377 = vadd.f32 %v9523, %v10376
        %v10378 = vpop.f32.mrb[0].mxu0
        %v10379 = vpop.f32.mrb[0].mxu0
        %10380 = vdwg.mxu0
        %10381 = vmatprep.subr.bf16.mxu0 %v10069
        %10382 = vmatpush1.bf16.msra.mxu0 %v10068
        %10383 = vmatprep.subr.bf16.mxu0 %v10075
        %10384 = vmatpush1.bf16.msra.mxu0 %v10074
        %10385 = vmatprep.subr.bf16.mxu0 %v10081
        %10386 = vmatpush1.bf16.msra.mxu0 %v10080
        %10387 = vmatprep.subr.bf16.mxu0 %v10087
        %10388 = vmatpush1.bf16.msra.mxu0 %v10086
        %10389 = vmatprep.subr.bf16.mxu0 %v10093
        %10390 = vmatpush1.bf16.msra.mxu0 %v10092
        %10391 = vmatprep.subr.bf16.mxu0 %v10099
        %10392 = vmatpush1.bf16.msra.mxu0 %v10098
        %10393 = vmatprep.subr.bf16.mxu0 %v10105
        %10394 = vmatpush1.bf16.msra.mxu0 %v10104
        %10395 = vmatprep.subr.bf16.mxu0 %v10111
        %10396 = vmatpush1.bf16.msra.mxu0 %v10110
        %10397 = vmatprep.subr.bf16.mxu0 0
        %10398 = vmatpush1.bf16.msra.mxu0 0
        %10399 = vmatprep.subr.bf16.mxu0 0
        %10400 = vmatpush1.bf16.msra.mxu0 0
        %10401 = vmatprep.subr.bf16.mxu0 0
        %10402 = vmatpush1.bf16.msra.mxu0 0
        %10403 = vmatprep.subr.bf16.mxu0 0
        %10404 = vmatpush1.bf16.msra.mxu0 0
        %10405 = vmatprep.subr.bf16.mxu0 0
        %10406 = vmatpush1.bf16.msra.mxu0 0
        %10407 = vmatprep.subr.bf16.mxu0 0
        %10408 = vmatpush1.bf16.msra.mxu0 0
        %10409 = vmatprep.subr.bf16.mxu0 0
        %10410 = vmatpush1.bf16.msra.mxu0 0
        %10411 = vmatprep.subr.bf16.mxu0 0
        %10412 = vmatpush1.bf16.msra.mxu0 0
        %10413 = vmatprep.mubr.bf16.mxu0 0
        %10414 = vmatmul.mubr.bf16.gmra.mrb[0].mxu0 %v9502
        %v10415 = vpop.f32.mrb[0].mxu0
        %v10416 = vadd.f32 %v10375, %v10415
        %v10417 = vpop.f32.mrb[0].mxu0
        %v10418 = vadd.f32 %v10377, %v10417
        %v10419 = vpop.f32.mrb[0].mxu0
        %v10420 = vpop.f32.mrb[0].mxu0
        %10421 = vdwg.mxu0
        %10422 = vmatprep.subr.bf16.mxu0 %v9975
        %10423 = vmatpush1.bf16.msra.mxu0 %v9974
        %10424 = vmatprep.subr.bf16.mxu0 %v9981
        %10425 = vmatpush1.bf16.msra.mxu0 %v9980
        %10426 = vmatprep.subr.bf16.mxu0 %v9987
        %10427 = vmatpush1.bf16.msra.mxu0 %v9986
        %10428 = vmatprep.subr.bf16.mxu0 %v9993
        %10429 = vmatpush1.bf16.msra.mxu0 %v9992
        %10430 = vmatprep.subr.bf16.mxu0 %v9999
        %10431 = vmatpush1.bf16.msra.mxu0 %v9998
        %10432 = vmatprep.subr.bf16.mxu0 %v10005
        %10433 = vmatpush1.bf16.msra.mxu0 %v10004
        %10434 = vmatprep.subr.bf16.mxu0 %v10011
        %10435 = vmatpush1.bf16.msra.mxu0 %v10010
        %10436 = vmatprep.subr.bf16.mxu0 %v10017
        %10437 = vmatpush1.bf16.msra.mxu0 %v10016
        %10438 = vmatprep.subr.bf16.mxu0 %v10023
        %10439 = vmatpush1.bf16.msra.mxu0 %v10022
        %10440 = vmatprep.subr.bf16.mxu0 %v10029
        %10441 = vmatpush1.bf16.msra.mxu0 %v10028
        %10442 = vmatprep.subr.bf16.mxu0 %v10035
        %10443 = vmatpush1.bf16.msra.mxu0 %v10034
        %10444 = vmatprep.subr.bf16.mxu0 %v10041
        %10445 = vmatpush1.bf16.msra.mxu0 %v10040
        %10446 = vmatprep.subr.bf16.mxu0 %v10047
        %10447 = vmatpush1.bf16.msra.mxu0 %v10046
        %10448 = vmatprep.subr.bf16.mxu0 %v10053
        %10449 = vmatpush1.bf16.msra.mxu0 %v10052
        %10450 = vmatprep.subr.bf16.mxu0 %v10059
        %10451 = vmatpush1.bf16.msra.mxu0 %v10058
        %10452 = vmatprep.subr.bf16.mxu0 %v10065
        %10453 = vmatpush1.bf16.msra.mxu0 %v10064
        %10454 = vmatprep.mubr.bf16.mxu0 %v9501
        %10455 = vmatmul.mubr.bf16.gmra.mrb[0].mxu0 %v9500
        %v10456 = vpop.f32.mrb[0].mxu0
        %v10457 = vadd.f32 %v9527, %v10456
        %v10458 = vpop.f32.mrb[0].mxu0
        %v10459 = vadd.f32 %v9531, %v10458
        %v10460 = vpop.f32.mrb[0].mxu0
        %v10461 = vpop.f32.mrb[0].mxu0
        %10462 = vdwg.mxu0
        %10463 = vmatprep.subr.bf16.mxu0 %v10071
        %10464 = vmatpush1.bf16.msra.mxu0 %v10070
        %10465 = vmatprep.subr.bf16.mxu0 %v10077
        %10466 = vmatpush1.bf16.msra.mxu0 %v10076
        %10467 = vmatprep.subr.bf16.mxu0 %v10083
        %10468 = vmatpush1.bf16.msra.mxu0 %v10082
        %10469 = vmatprep.subr.bf16.mxu0 %v10089
        %10470 = vmatpush1.bf16.msra.mxu0 %v10088
        %10471 = vmatprep.subr.bf16.mxu0 %v10095
        %10472 = vmatpush1.bf16.msra.mxu0 %v10094
        %10473 = vmatprep.subr.bf16.mxu0 %v10101
        %10474 = vmatpush1.bf16.msra.mxu0 %v10100
        %10475 = vmatprep.subr.bf16.mxu0 %v10107
        %10476 = vmatpush1.bf16.msra.mxu0 %v10106
        %10477 = vmatprep.subr.bf16.mxu0 %v10113
        %10478 = vmatpush1.bf16.msra.mxu0 %v10112
        %10479 = vmatprep.subr.bf16.mxu0 0
        %10480 = vmatpush1.bf16.msra.mxu0 0
        %10481 = vmatprep.subr.bf16.mxu0 0
        %10482 = vmatpush1.bf16.msra.mxu0 0
        %10483 = vmatprep.subr.bf16.mxu0 0
        %10484 = vmatpush1.bf16.msra.mxu0 0
        %10485 = vmatprep.subr.bf16.mxu0 0
        %10486 = vmatpush1.bf16.msra.mxu0 0
        %10487 = vmatprep.subr.bf16.mxu0 0
        %10488 = vmatpush1.bf16.msra.mxu0 0
        %10489 = vmatprep.subr.bf16.mxu0 0
        %10490 = vmatpush1.bf16.msra.mxu0 0
        %10491 = vmatprep.subr.bf16.mxu0 0
        %10492 = vmatpush1.bf16.msra.mxu0 0
        %10493 = vmatprep.subr.bf16.mxu0 0
        %10494 = vmatpush1.bf16.msra.mxu0 0
        %10495 = vmatprep.mubr.bf16.mxu0 0
        %10496 = vmatmul.mubr.bf16.gmra.mrb[0].mxu0 %v9502
        %v10497 = vpop.f32.mrb[0].mxu0
        %v10498 = vadd.f32 %v10457, %v10497
        %v10499 = vpop.f32.mrb[0].mxu0
        %v10500 = vadd.f32 %v10459, %v10499
        %v10501 = vpop.f32.mrb[0].mxu0
        %v10502 = vpop.f32.mrb[0].mxu0
        %10503 = vdwg.mxu0
        %v10504 = vmul.f32 %v10334, %v10334
        %v10505 = vmul.f32 %v10336, %v10336
        %v10506 = vmul.f32 %v10416, %v10416
        %v10507 = vmul.f32 %v10418, %v10418
        %v10508 = vmul.f32 %v10498, %v10498
        %v10509 = vmul.f32 %v10500, %v10500
        %v10510 = vmul.f32 %v10334, %v10504
        %v10511 = vmul.f32 %v10336, %v10505
        %v10512 = vmul.f32 %v10416, %v10506
        %v10513 = vmul.f32 %v10418, %v10507
        %v10514 = vmul.f32 %v10498, %v10508
        %v10515 = vmul.f32 %v10500, %v10509
        %v10516 = vmul.f32 %v10510, 0.044715
        %v10517 = vmul.f32 %v10511, 0.044715
        %v10518 = vmul.f32 %v10512, 0.044715
        %v10519 = vmul.f32 %v10513, 0.044715
        %v10520 = vmul.f32 %v10514, 0.044715
        %v10521 = vmul.f32 %v10515, 0.044715
        %v10522 = vadd.f32 %v10334, %v10516
        %v10523 = vadd.f32 %v10336, %v10517
        %v10524 = vadd.f32 %v10416, %v10518
        %v10525 = vadd.f32 %v10418, %v10519
        %v10526 = vadd.f32 %v10498, %v10520
        %v10527 = vadd.f32 %v10500, %v10521
        %v10528 = vmul.f32 %v10522, 0.7978846
        %v10529 = vmul.f32 %v10523, 0.7978846
        %v10530 = vmul.f32 %v10524, 0.7978846
        %v10531 = vmul.f32 %v10525, 0.7978846
        %v10532 = vmul.f32 %v10526, 0.7978846
        %v10533 = vmul.f32 %v10527, 0.7978846
        %v10534 = vtanh.pop %v10528
        %v10535 = vtanh.pop %v10529
        %v10536 = vtanh.pop %v10530
        %v10537 = vtanh.pop %v10531
        %v10538 = vtanh.pop %v10532
        %v10539 = vtanh.pop %v10533
        %v10540 = vadd.f32 %v10534, 1.0
        %v10541 = vadd.f32 %v10535, 1.0
        %v10542 = vadd.f32 %v10536, 1.0
        %v10543 = vadd.f32 %v10537, 1.0
        %v10544 = vadd.f32 %v10538, 1.0
        %v10545 = vadd.f32 %v10539, 1.0
        %v10546 = vmul.f32 %v10540, 0.5
        %v10547 = vmul.f32 %v10541, 0.5
        %v10548 = vmul.f32 %v10542, 0.5
        %v10549 = vmul.f32 %v10543, 0.5
        %v10550 = vmul.f32 %v10544, 0.5
        %v10551 = vmul.f32 %v10545, 0.5
        %v10552 = vmul.f32 %v10334, %v10546
        %v10553 = vmul.f32 %v10336, %v10547
        %v10554 = vmul.f32 %v10416, %v10548
        %v10555 = vmul.f32 %v10418, %v10549
        %v10556 = vmul.f32 %v10498, %v10550
        %v10557 = vmul.f32 %v10500, %v10551
        %s10558 = scalar_lea.vmem [#allocation8], 1152
        %v10559 = vld [vmem:[%s10558] sm:$0xff]
        %v10560 = vld [vmem:[%s10558 + $0x8] sm:$0xf]
        %v10561 = vld [vmem:[%s10558 + $0xc] sm:$0xff]
        %v10562 = vld [vmem:[%s10558 + $0x14] sm:$0xf]
        %v10563 = vld [vmem:[%s10558 + $0x18] sm:$0xff]
        %v10564 = vld [vmem:[%s10558 + $0x20] sm:$0xf]
        %v10565 = vld [vmem:[%s10558 + $0x24] sm:$0xff]
        %v10566 = vld [vmem:[%s10558 + $0x2c] sm:$0xf]
        %v10567 = vld [vmem:[%s10558 + $0x30] sm:$0xff]
        %v10568 = vld [vmem:[%s10558 + $0x38] sm:$0xf]
        %v10569 = vld [vmem:[%s10558 + $0x3c] sm:$0xff]
        %v10570 = vld [vmem:[%s10558 + $0x44] sm:$0xf]
        %v10571 = vld [vmem:[%s10558 + $0x48] sm:$0xff]
        %v10572 = vld [vmem:[%s10558 + $0x50] sm:$0xf]
        %v10573 = vld [vmem:[%s10558 + $0x54] sm:$0xff]
        %v10574 = vld [vmem:[%s10558 + $0x5c] sm:$0xf]
        %v10575 = vld [vmem:[%s10558 + $0x60] sm:$0xff]
        %v10576 = vld [vmem:[%s10558 + $0x68] sm:$0xf]
        %v10577 = vld [vmem:[%s10558 + $0x6c] sm:$0xff]
        %v10578 = vld [vmem:[%s10558 + $0x74] sm:$0xf]
        %v10579 = vld [vmem:[%s10558 + $0x78] sm:$0xff]
        %v10580 = vld [vmem:[%s10558 + $0x80] sm:$0xf]
        %v10581 = vld [vmem:[%s10558 + $0x84] sm:$0xff]
        %v10582 = vld [vmem:[%s10558 + $0x8c] sm:$0xf]
        %v10583 = vld [vmem:[%s10558 + $0x90] sm:$0xff]
        %v10584 = vld [vmem:[%s10558 + $0x98] sm:$0xf]
        %v10585 = vld [vmem:[%s10558 + $0x9c] sm:$0xff]
        %v10586 = vld [vmem:[%s10558 + $0xa4] sm:$0xf]
        %v10587 = vld [vmem:[%s10558 + $0xa8] sm:$0xff]
        %v10588 = vld [vmem:[%s10558 + $0xb0] sm:$0xf]
        %v10589 = vld [vmem:[%s10558 + $0xb4] sm:$0xff]
        %v10590 = vld [vmem:[%s10558 + $0xbc] sm:$0xf]
        %v10591 = vld [vmem:[%s10558 + $0xc0] sm:$0xff]
        %v10592 = vld [vmem:[%s10558 + $0xc8] sm:$0xf]
        %v10593 = vld [vmem:[%s10558 + $0xcc] sm:$0xff]
        %v10594 = vld [vmem:[%s10558 + $0xd4] sm:$0xf]
        %v10595 = vld [vmem:[%s10558 + $0xd8] sm:$0xff]
        %v10596 = vld [vmem:[%s10558 + $0xe0] sm:$0xf]
        %v10597 = vld [vmem:[%s10558 + $0xe4] sm:$0xff]
        %v10598 = vld [vmem:[%s10558 + $0xec] sm:$0xf]
        %v10599 = vld [vmem:[%s10558 + $0xf0] sm:$0xff]
        %v10600 = vld [vmem:[%s10558 + $0xf8] sm:$0xf]
        %v10601 = vld [vmem:[%s10558 + $0xfc] sm:$0xff]
        %v10602 = vld [vmem:[%s10558 + $0x104] sm:$0xf]
        %v10603 = vld [vmem:[%s10558 + $0x108] sm:$0xff]
        %v10604 = vld [vmem:[%s10558 + $0x110] sm:$0xf]
        %v10605 = vld [vmem:[%s10558 + $0x114] sm:$0xff]
        %v10606 = vld [vmem:[%s10558 + $0x11c] sm:$0xf]
        %v10607 = vld [vmem:[%s10558 + $0x120] sm:$0xff]
        %v10608 = vld [vmem:[%s10558 + $0x128] sm:$0xf]
        %v10609 = vld [vmem:[%s10558 + $0x12c] sm:$0xff]
        %v10610 = vld [vmem:[%s10558 + $0x134] sm:$0xf]
        %v10611 = vld [vmem:[%s10558 + $0x138] sm:$0xff]
        %v10612 = vld [vmem:[%s10558 + $0x140] sm:$0xf]
        %v10613 = vld [vmem:[%s10558 + $0x144] sm:$0xff]
        %v10614 = vld [vmem:[%s10558 + $0x14c] sm:$0xf]
        %v10615 = vld [vmem:[%s10558 + $0x150] sm:$0xff]
        %v10616 = vld [vmem:[%s10558 + $0x158] sm:$0xf]
        %v10617 = vld [vmem:[%s10558 + $0x15c] sm:$0xff]
        %v10618 = vld [vmem:[%s10558 + $0x164] sm:$0xf]
        %v10619 = vld [vmem:[%s10558 + $0x168] sm:$0xff]
        %v10620 = vld [vmem:[%s10558 + $0x170] sm:$0xf]
        %v10621 = vld [vmem:[%s10558 + $0x174] sm:$0xff]
        %v10622 = vld [vmem:[%s10558 + $0x17c] sm:$0xf]
        %v10623 = vld [vmem:[%s10558 + $0x180] sm:$0xff]
        %v10624 = vld [vmem:[%s10558 + $0x188] sm:$0xf]
        %v10625 = vld [vmem:[%s10558 + $0x18c] sm:$0xff]
        %v10626 = vld [vmem:[%s10558 + $0x194] sm:$0xf]
        %v10627 = vld [vmem:[%s10558 + $0x198] sm:$0xff]
        %v10628 = vld [vmem:[%s10558 + $0x1a0] sm:$0xf]
        %v10629 = vld [vmem:[%s10558 + $0x1a4] sm:$0xff]
        %v10630 = vld [vmem:[%s10558 + $0x1ac] sm:$0xf]
        %v10631 = vld [vmem:[%s10558 + $0x1b0] sm:$0xff]
        %v10632 = vld [vmem:[%s10558 + $0x1b8] sm:$0xf]
        %v10633 = vld [vmem:[%s10558 + $0x1bc] sm:$0xff]
        %v10634 = vld [vmem:[%s10558 + $0x1c4] sm:$0xf]
        %v10635 = vld [vmem:[%s10558 + $0x1c8] sm:$0xff]
        %v10636 = vld [vmem:[%s10558 + $0x1d0] sm:$0xf]
        %v10637 = vld [vmem:[%s10558 + $0x1d4] sm:$0xff]
        %v10638 = vld [vmem:[%s10558 + $0x1dc] sm:$0xf]
        %v10639 = vld [vmem:[%s10558 + $0x1e0] sm:$0xff]
        %v10640 = vld [vmem:[%s10558 + $0x1e8] sm:$0xf]
        %v10641 = vld [vmem:[%s10558 + $0x1ec] sm:$0xff]
        %v10642 = vld [vmem:[%s10558 + $0x1f4] sm:$0xf]
        %v10643 = vld [vmem:[%s10558 + $0x1f8] sm:$0xff]
        %v10644 = vld [vmem:[%s10558 + $0x200] sm:$0xf]
        %v10645 = vld [vmem:[%s10558 + $0x204] sm:$0xff]
        %v10646 = vld [vmem:[%s10558 + $0x20c] sm:$0xf]
        %v10647 = vld [vmem:[%s10558 + $0x210] sm:$0xff]
        %v10648 = vld [vmem:[%s10558 + $0x218] sm:$0xf]
        %v10649 = vld [vmem:[%s10558 + $0x21c] sm:$0xff]
        %v10650 = vld [vmem:[%s10558 + $0x224] sm:$0xf]
        %v10651 = vld [vmem:[%s10558 + $0x228] sm:$0xff]
        %v10652 = vld [vmem:[%s10558 + $0x230] sm:$0xf]
        %v10653 = vld [vmem:[%s10558 + $0x234] sm:$0xff]
        %v10654 = vld [vmem:[%s10558 + $0x23c] sm:$0xf]
        %v10655 = vld [vmem:[%s10558 + $0x240] sm:$0xff]
        %v10656 = vld [vmem:[%s10558 + $0x248] sm:$0xf]
        %v10657 = vld [vmem:[%s10558 + $0x24c] sm:$0xff]
        %v10658 = vld [vmem:[%s10558 + $0x254] sm:$0xf]
        %v10659 = vld [vmem:[%s10558 + $0x258] sm:$0xff]
        %v10660 = vld [vmem:[%s10558 + $0x260] sm:$0xf]
        %v10661 = vld [vmem:[%s10558 + $0x264] sm:$0xff]
        %v10662 = vld [vmem:[%s10558 + $0x26c] sm:$0xf]
        %v10663 = vld [vmem:[%s10558 + $0x270] sm:$0xff]
        %v10664 = vld [vmem:[%s10558 + $0x278] sm:$0xf]
        %v10665 = vld [vmem:[%s10558 + $0x27c] sm:$0xff]
        %v10666 = vld [vmem:[%s10558 + $0x284] sm:$0xf]
        %v10667 = vld [vmem:[%s10558 + $0x288] sm:$0xff]
        %v10668 = vld [vmem:[%s10558 + $0x290] sm:$0xf]
        %v10669 = vld [vmem:[%s10558 + $0x294] sm:$0xff]
        %v10670 = vld [vmem:[%s10558 + $0x29c] sm:$0xf]
        %v10671 = vld [vmem:[%s10558 + $0x2a0] sm:$0xff]
        %v10672 = vld [vmem:[%s10558 + $0x2a8] sm:$0xf]
        %v10673 = vld [vmem:[%s10558 + $0x2ac] sm:$0xff]
        %v10674 = vld [vmem:[%s10558 + $0x2b4] sm:$0xf]
        %v10675 = vld [vmem:[%s10558 + $0x2b8] sm:$0xff]
        %v10676 = vld [vmem:[%s10558 + $0x2c0] sm:$0xf]
        %v10677 = vld [vmem:[%s10558 + $0x2c4] sm:$0xff]
        %v10678 = vld [vmem:[%s10558 + $0x2cc] sm:$0xf]
        %v10679 = vld [vmem:[%s10558 + $0x2d0] sm:$0xff]
        %v10680 = vld [vmem:[%s10558 + $0x2d8] sm:$0xf]
        %v10681 = vld [vmem:[%s10558 + $0x2dc] sm:$0xff]
        %v10682 = vld [vmem:[%s10558 + $0x2e4] sm:$0xf]
        %v10683 = vld [vmem:[%s10558 + $0x2e8] sm:$0xff]
        %v10684 = vld [vmem:[%s10558 + $0x2f0] sm:$0xf]
        %v10685 = vld [vmem:[%s10558 + $0x2f4] sm:$0xff]
        %v10686 = vld [vmem:[%s10558 + $0x2fc] sm:$0xf]
        %v10687 = vld [vmem:[%s10558 + $0x300] sm:$0xff]
        %v10688 = vld [vmem:[%s10558 + $0x308] sm:$0xf]
        %v10689 = vld [vmem:[%s10558 + $0x30c] sm:$0xff]
        %v10690 = vld [vmem:[%s10558 + $0x314] sm:$0xf]
        %v10691 = vld [vmem:[%s10558 + $0x318] sm:$0xff]
        %v10692 = vld [vmem:[%s10558 + $0x320] sm:$0xf]
        %v10693 = vld [vmem:[%s10558 + $0x324] sm:$0xff]
        %v10694 = vld [vmem:[%s10558 + $0x32c] sm:$0xf]
        %v10695 = vld [vmem:[%s10558 + $0x330] sm:$0xff]
        %v10696 = vld [vmem:[%s10558 + $0x338] sm:$0xf]
        %v10697 = vld [vmem:[%s10558 + $0x33c] sm:$0xff]
        %v10698 = vld [vmem:[%s10558 + $0x344] sm:$0xf]
        %v10699 = vld [vmem:[%s10558 + $0x348] sm:$0xff]
        %v10700 = vld [vmem:[%s10558 + $0x350] sm:$0xf]
        %v10701 = vld [vmem:[%s10558 + $0x354] sm:$0xff]
        %v10702 = vld [vmem:[%s10558 + $0x35c] sm:$0xf]
        %v10703 = vld [vmem:[%s10558 + $0x360] sm:$0xff]
        %v10704 = vld [vmem:[%s10558 + $0x368] sm:$0xf]
        %v10705 = vld [vmem:[%s10558 + $0x36c] sm:$0xff]
        %v10706 = vld [vmem:[%s10558 + $0x374] sm:$0xf]
        %v10707 = vld [vmem:[%s10558 + $0x378] sm:$0xff]
        %v10708 = vld [vmem:[%s10558 + $0x380] sm:$0xf]
        %v10709 = vld [vmem:[%s10558 + $0x384] sm:$0xff]
        %v10710 = vld [vmem:[%s10558 + $0x38c] sm:$0xf]
        %v10711 = vld [vmem:[%s10558 + $0x390] sm:$0xff]
        %v10712 = vld [vmem:[%s10558 + $0x398] sm:$0xf]
        %v10713 = vld [vmem:[%s10558 + $0x39c] sm:$0xff]
        %v10714 = vld [vmem:[%s10558 + $0x3a4] sm:$0xf]
        %v10715 = vld [vmem:[%s10558 + $0x3a8] sm:$0xff]
        %v10716 = vld [vmem:[%s10558 + $0x3b0] sm:$0xf]
        %v10717 = vld [vmem:[%s10558 + $0x3b4] sm:$0xff]
        %v10718 = vld [vmem:[%s10558 + $0x3bc] sm:$0xf]
        %v10719 = vld [vmem:[%s10558 + $0x3c0] sm:$0xff]
        %v10720 = vld [vmem:[%s10558 + $0x3c8] sm:$0xf]
        %v10721 = vld [vmem:[%s10558 + $0x3cc] sm:$0xff]
        %v10722 = vld [vmem:[%s10558 + $0x3d4] sm:$0xf]
        %v10723 = vld [vmem:[%s10558 + $0x3d8] sm:$0xff]
        %v10724 = vld [vmem:[%s10558 + $0x3e0] sm:$0xf]
        %v10725 = vld [vmem:[%s10558 + $0x3e4] sm:$0xff]
        %v10726 = vld [vmem:[%s10558 + $0x3ec] sm:$0xf]
        %v10727 = vld [vmem:[%s10558 + $0x3f0] sm:$0xff]
        %v10728 = vld [vmem:[%s10558 + $0x3f8] sm:$0xf]
        %v10729 = vld [vmem:[%s10558 + $0x3fc] sm:$0xff]
        %v10730 = vld [vmem:[%s10558 + $0x404] sm:$0xf]
        %v10731 = vld [vmem:[%s10558 + $0x408] sm:$0xff]
        %v10732 = vld [vmem:[%s10558 + $0x410] sm:$0xf]
        %v10733 = vld [vmem:[%s10558 + $0x414] sm:$0xff]
        %v10734 = vld [vmem:[%s10558 + $0x41c] sm:$0xf]
        %v10735 = vld [vmem:[%s10558 + $0x420] sm:$0xff]
        %v10736 = vld [vmem:[%s10558 + $0x428] sm:$0xf]
        %v10737 = vld [vmem:[%s10558 + $0x42c] sm:$0xff]
        %v10738 = vld [vmem:[%s10558 + $0x434] sm:$0xf]
        %v10739 = vld [vmem:[%s10558 + $0x438] sm:$0xff]
        %v10740 = vld [vmem:[%s10558 + $0x440] sm:$0xf]
        %v10741 = vld [vmem:[%s10558 + $0x444] sm:$0xff]
        %v10742 = vld [vmem:[%s10558 + $0x44c] sm:$0xf]
        %v10743 = vld [vmem:[%s10558 + $0x450] sm:$0xff]
        %v10744 = vld [vmem:[%s10558 + $0x458] sm:$0xf]
        %v10745 = vld [vmem:[%s10558 + $0x45c] sm:$0xff]
        %v10746 = vld [vmem:[%s10558 + $0x464] sm:$0xf]
        %v10747 = vld [vmem:[%s10558 + $0x468] sm:$0xff]
        %v10748 = vld [vmem:[%s10558 + $0x470] sm:$0xf]
        %v10749 = vld [vmem:[%s10558 + $0x474] sm:$0xff]
        %v10750 = vld [vmem:[%s10558 + $0x47c] sm:$0xf]
        %v10751 = vpack.c.bf16 %v10552, %v10552
        %v10752 = vpack.c.bf16 %v10553, %v10553
        %v10753 = vpack.c.bf16 %v10554, %v10554
        %v10754 = vpack.c.bf16 %v10555, %v10555
        %v10755 = vpack.c.bf16 %v10556, %v10556
        %v10756 = vpack.c.bf16 %v10557, %v10557
        %s10757 = scalar_lea.vmem [#allocation3], 79
        %v10758 = vld [vmem:[%s10757] ss:$8 sm:$0x7]
        %v10760 = vlaneseq
        %v10761 = vshrl.u32 %v10760, 7
        %v10762 = vsub.s32 0, %v10761
        %v10763 = vrot.slane %v10758, %v10762
        %v10764 = vlaneseq
        %v10765 = vshrl.u32 %v10764, 7
        %v10766 = vsub.s32 1, %v10765
        %v10767 = vrot.slane %v10758, %v10766
        %v10768 = vlaneseq
        %v10769 = vshrl.u32 %v10768, 7
        %v10770 = vsub.s32 2, %v10769
        %v10771 = vrot.slane %v10758, %v10770
        %v10967 = vunpack.c.l.b16 %v10559
        %v10968 = vunpack.c.h.b16 %v10559
        %v10969 = vunpack.c.l.b16 %v10560
        %v10970 = vunpack.c.l.b16 %v10561
        %v10971 = vunpack.c.h.b16 %v10561
        %v10972 = vunpack.c.l.b16 %v10562
        %v10973 = vunpack.c.l.b16 %v10563
        %v10974 = vunpack.c.h.b16 %v10563
        %v10975 = vunpack.c.l.b16 %v10564
        %v10976 = vunpack.c.l.b16 %v10565
        %v10977 = vunpack.c.h.b16 %v10565
        %v10978 = vunpack.c.l.b16 %v10566
        %v10979 = vunpack.c.l.b16 %v10567
        %v10980 = vunpack.c.h.b16 %v10567
        %v10981 = vunpack.c.l.b16 %v10568
        %v10982 = vunpack.c.l.b16 %v10569
        %v10983 = vunpack.c.h.b16 %v10569
        %v10984 = vunpack.c.l.b16 %v10570
        %v10985 = vunpack.c.l.b16 %v10571
        %v10986 = vunpack.c.h.b16 %v10571
        %v10987 = vunpack.c.l.b16 %v10572
        %v10988 = vunpack.c.l.b16 %v10573
        %v10989 = vunpack.c.h.b16 %v10573
        %v10990 = vunpack.c.l.b16 %v10574
        %v10991 = vunpack.c.l.b16 %v10575
        %v10992 = vunpack.c.h.b16 %v10575
        %v10993 = vunpack.c.l.b16 %v10576
        %v10994 = vunpack.c.l.b16 %v10577
        %v10995 = vunpack.c.h.b16 %v10577
        %v10996 = vunpack.c.l.b16 %v10578
        %v10997 = vunpack.c.l.b16 %v10579
        %v10998 = vunpack.c.h.b16 %v10579
        %v10999 = vunpack.c.l.b16 %v10580
        %v11000 = vunpack.c.l.b16 %v10581
        %v11001 = vunpack.c.h.b16 %v10581
        %v11002 = vunpack.c.l.b16 %v10582
        %v11003 = vunpack.c.l.b16 %v10583
        %v11004 = vunpack.c.h.b16 %v10583
        %v11005 = vunpack.c.l.b16 %v10584
        %v11006 = vunpack.c.l.b16 %v10585
        %v11007 = vunpack.c.h.b16 %v10585
        %v11008 = vunpack.c.l.b16 %v10586
        %v11009 = vunpack.c.l.b16 %v10587
        %v11010 = vunpack.c.h.b16 %v10587
        %v11011 = vunpack.c.l.b16 %v10588
        %v11012 = vunpack.c.l.b16 %v10589
        %v11013 = vunpack.c.h.b16 %v10589
        %v11014 = vunpack.c.l.b16 %v10590
        %v11015 = vunpack.c.l.b16 %v10591
        %v11016 = vunpack.c.h.b16 %v10591
        %v11017 = vunpack.c.l.b16 %v10592
        %v11018 = vunpack.c.l.b16 %v10593
        %v11019 = vunpack.c.h.b16 %v10593
        %v11020 = vunpack.c.l.b16 %v10594
        %v11021 = vunpack.c.l.b16 %v10595
        %v11022 = vunpack.c.h.b16 %v10595
        %v11023 = vunpack.c.l.b16 %v10596
        %v11024 = vunpack.c.l.b16 %v10597
        %v11025 = vunpack.c.h.b16 %v10597
        %v11026 = vunpack.c.l.b16 %v10598
        %v11027 = vunpack.c.l.b16 %v10599
        %v11028 = vunpack.c.h.b16 %v10599
        %v11029 = vunpack.c.l.b16 %v10600
        %v11030 = vunpack.c.l.b16 %v10601
        %v11031 = vunpack.c.h.b16 %v10601
        %v11032 = vunpack.c.l.b16 %v10602
        %v11033 = vunpack.c.l.b16 %v10603
        %v11034 = vunpack.c.h.b16 %v10603
        %v11035 = vunpack.c.l.b16 %v10604
        %v11036 = vunpack.c.l.b16 %v10605
        %v11037 = vunpack.c.h.b16 %v10605
        %v11038 = vunpack.c.l.b16 %v10606
        %v11039 = vunpack.c.l.b16 %v10607
        %v11040 = vunpack.c.h.b16 %v10607
        %v11041 = vunpack.c.l.b16 %v10608
        %v11042 = vunpack.c.l.b16 %v10609
        %v11043 = vunpack.c.h.b16 %v10609
        %v11044 = vunpack.c.l.b16 %v10610
        %v11045 = vunpack.c.l.b16 %v10611
        %v11046 = vunpack.c.h.b16 %v10611
        %v11047 = vunpack.c.l.b16 %v10612
        %v11048 = vunpack.c.l.b16 %v10613
        %v11049 = vunpack.c.h.b16 %v10613
        %v11050 = vunpack.c.l.b16 %v10614
        %v11051 = vunpack.c.l.b16 %v10615
        %v11052 = vunpack.c.h.b16 %v10615
        %v11053 = vunpack.c.l.b16 %v10616
        %v11054 = vunpack.c.l.b16 %v10617
        %v11055 = vunpack.c.h.b16 %v10617
        %v11056 = vunpack.c.l.b16 %v10618
        %v11057 = vunpack.c.l.b16 %v10619
        %v11058 = vunpack.c.h.b16 %v10619
        %v11059 = vunpack.c.l.b16 %v10620
        %v11060 = vunpack.c.l.b16 %v10621
        %v11061 = vunpack.c.h.b16 %v10621
        %v11062 = vunpack.c.l.b16 %v10622
        %v11063 = vunpack.c.l.b16 %v10623
        %v11064 = vunpack.c.h.b16 %v10623
        %v11065 = vunpack.c.l.b16 %v10624
        %v11066 = vunpack.c.l.b16 %v10625
        %v11067 = vunpack.c.h.b16 %v10625
        %v11068 = vunpack.c.l.b16 %v10626
        %v11069 = vunpack.c.l.b16 %v10627
        %v11070 = vunpack.c.h.b16 %v10627
        %v11071 = vunpack.c.l.b16 %v10628
        %v11072 = vunpack.c.l.b16 %v10629
        %v11073 = vunpack.c.h.b16 %v10629
        %v11074 = vunpack.c.l.b16 %v10630
        %v11075 = vunpack.c.l.b16 %v10631
        %v11076 = vunpack.c.h.b16 %v10631
        %v11077 = vunpack.c.l.b16 %v10632
        %v11078 = vunpack.c.l.b16 %v10633
        %v11079 = vunpack.c.h.b16 %v10633
        %v11080 = vunpack.c.l.b16 %v10634
        %v11081 = vunpack.c.l.b16 %v10635
        %v11082 = vunpack.c.h.b16 %v10635
        %v11083 = vunpack.c.l.b16 %v10636
        %v11084 = vunpack.c.l.b16 %v10637
        %v11085 = vunpack.c.h.b16 %v10637
        %v11086 = vunpack.c.l.b16 %v10638
        %v11087 = vunpack.c.l.b16 %v10639
        %v11088 = vunpack.c.h.b16 %v10639
        %v11089 = vunpack.c.l.b16 %v10640
        %v11090 = vunpack.c.l.b16 %v10641
        %v11091 = vunpack.c.h.b16 %v10641
        %v11092 = vunpack.c.l.b16 %v10642
        %v11093 = vunpack.c.l.b16 %v10643
        %v11094 = vunpack.c.h.b16 %v10643
        %v11095 = vunpack.c.l.b16 %v10644
        %v11096 = vunpack.c.l.b16 %v10645
        %v11097 = vunpack.c.h.b16 %v10645
        %v11098 = vunpack.c.l.b16 %v10646
        %v11099 = vunpack.c.l.b16 %v10647
        %v11100 = vunpack.c.h.b16 %v10647
        %v11101 = vunpack.c.l.b16 %v10648
        %v11102 = vunpack.c.l.b16 %v10649
        %v11103 = vunpack.c.h.b16 %v10649
        %v11104 = vunpack.c.l.b16 %v10650
        %v11105 = vunpack.c.l.b16 %v10651
        %v11106 = vunpack.c.h.b16 %v10651
        %v11107 = vunpack.c.l.b16 %v10652
        %v11108 = vunpack.c.l.b16 %v10653
        %v11109 = vunpack.c.h.b16 %v10653
        %v11110 = vunpack.c.l.b16 %v10654
        %v11111 = vunpack.c.l.b16 %v10655
        %v11112 = vunpack.c.h.b16 %v10655
        %v11113 = vunpack.c.l.b16 %v10656
        %v11114 = vunpack.c.l.b16 %v10657
        %v11115 = vunpack.c.h.b16 %v10657
        %v11116 = vunpack.c.l.b16 %v10658
        %v11117 = vunpack.c.l.b16 %v10659
        %v11118 = vunpack.c.h.b16 %v10659
        %v11119 = vunpack.c.l.b16 %v10660
        %v11120 = vunpack.c.l.b16 %v10661
        %v11121 = vunpack.c.h.b16 %v10661
        %v11122 = vunpack.c.l.b16 %v10662
        %v11123 = vunpack.c.l.b16 %v10663
        %v11124 = vunpack.c.h.b16 %v10663
        %v11125 = vunpack.c.l.b16 %v10664
        %v11126 = vunpack.c.l.b16 %v10665
        %v11127 = vunpack.c.h.b16 %v10665
        %v11128 = vunpack.c.l.b16 %v10666
        %v11129 = vunpack.c.l.b16 %v10667
        %v11130 = vunpack.c.h.b16 %v10667
        %v11131 = vunpack.c.l.b16 %v10668
        %v11132 = vunpack.c.l.b16 %v10669
        %v11133 = vunpack.c.h.b16 %v10669
        %v11134 = vunpack.c.l.b16 %v10670
        %v11135 = vunpack.c.l.b16 %v10671
        %v11136 = vunpack.c.h.b16 %v10671
        %v11137 = vunpack.c.l.b16 %v10672
        %v11138 = vunpack.c.l.b16 %v10673
        %v11139 = vunpack.c.h.b16 %v10673
        %v11140 = vunpack.c.l.b16 %v10674
        %v11141 = vunpack.c.l.b16 %v10675
        %v11142 = vunpack.c.h.b16 %v10675
        %v11143 = vunpack.c.l.b16 %v10676
        %v11144 = vunpack.c.l.b16 %v10677
        %v11145 = vunpack.c.h.b16 %v10677
        %v11146 = vunpack.c.l.b16 %v10678
        %v11147 = vunpack.c.l.b16 %v10679
        %v11148 = vunpack.c.h.b16 %v10679
        %v11149 = vunpack.c.l.b16 %v10680
        %v11150 = vunpack.c.l.b16 %v10681
        %v11151 = vunpack.c.h.b16 %v10681
        %v11152 = vunpack.c.l.b16 %v10682
        %v11153 = vunpack.c.l.b16 %v10683
        %v11154 = vunpack.c.h.b16 %v10683
        %v11155 = vunpack.c.l.b16 %v10684
        %v11156 = vunpack.c.l.b16 %v10685
        %v11157 = vunpack.c.h.b16 %v10685
        %v11158 = vunpack.c.l.b16 %v10686
        %v11159 = vunpack.c.l.b16 %v10687
        %v11160 = vunpack.c.h.b16 %v10687
        %v11161 = vunpack.c.l.b16 %v10688
        %v11162 = vunpack.c.l.b16 %v10689
        %v11163 = vunpack.c.h.b16 %v10689
        %v11164 = vunpack.c.l.b16 %v10690
        %v11165 = vunpack.c.l.b16 %v10691
        %v11166 = vunpack.c.h.b16 %v10691
        %v11167 = vunpack.c.l.b16 %v10692
        %v11168 = vunpack.c.l.b16 %v10693
        %v11169 = vunpack.c.h.b16 %v10693
        %v11170 = vunpack.c.l.b16 %v10694
        %v11171 = vunpack.c.l.b16 %v10695
        %v11172 = vunpack.c.h.b16 %v10695
        %v11173 = vunpack.c.l.b16 %v10696
        %v11174 = vunpack.c.l.b16 %v10697
        %v11175 = vunpack.c.h.b16 %v10697
        %v11176 = vunpack.c.l.b16 %v10698
        %v11177 = vunpack.c.l.b16 %v10699
        %v11178 = vunpack.c.h.b16 %v10699
        %v11179 = vunpack.c.l.b16 %v10700
        %v11180 = vunpack.c.l.b16 %v10701
        %v11181 = vunpack.c.h.b16 %v10701
        %v11182 = vunpack.c.l.b16 %v10702
        %v11183 = vunpack.c.l.b16 %v10703
        %v11184 = vunpack.c.h.b16 %v10703
        %v11185 = vunpack.c.l.b16 %v10704
        %v11186 = vunpack.c.l.b16 %v10705
        %v11187 = vunpack.c.h.b16 %v10705
        %v11188 = vunpack.c.l.b16 %v10706
        %v11189 = vunpack.c.l.b16 %v10707
        %v11190 = vunpack.c.h.b16 %v10707
        %v11191 = vunpack.c.l.b16 %v10708
        %v11192 = vunpack.c.l.b16 %v10709
        %v11193 = vunpack.c.h.b16 %v10709
        %v11194 = vunpack.c.l.b16 %v10710
        %v11195 = vunpack.c.l.b16 %v10711
        %v11196 = vunpack.c.h.b16 %v10711
        %v11197 = vunpack.c.l.b16 %v10712
        %v11198 = vunpack.c.l.b16 %v10713
        %v11199 = vunpack.c.h.b16 %v10713
        %v11200 = vunpack.c.l.b16 %v10714
        %v11201 = vunpack.c.l.b16 %v10715
        %v11202 = vunpack.c.h.b16 %v10715
        %v11203 = vunpack.c.l.b16 %v10716
        %v11204 = vunpack.c.l.b16 %v10717
        %v11205 = vunpack.c.h.b16 %v10717
        %v11206 = vunpack.c.l.b16 %v10718
        %v11207 = vunpack.c.l.b16 %v10719
        %v11208 = vunpack.c.h.b16 %v10719
        %v11209 = vunpack.c.l.b16 %v10720
        %v11210 = vunpack.c.l.b16 %v10721
        %v11211 = vunpack.c.h.b16 %v10721
        %v11212 = vunpack.c.l.b16 %v10722
        %v11213 = vunpack.c.l.b16 %v10723
        %v11214 = vunpack.c.h.b16 %v10723
        %v11215 = vunpack.c.l.b16 %v10724
        %v11216 = vunpack.c.l.b16 %v10725
        %v11217 = vunpack.c.h.b16 %v10725
        %v11218 = vunpack.c.l.b16 %v10726
        %v11219 = vunpack.c.l.b16 %v10727
        %v11220 = vunpack.c.h.b16 %v10727
        %v11221 = vunpack.c.l.b16 %v10728
        %v11222 = vunpack.c.l.b16 %v10729
        %v11223 = vunpack.c.h.b16 %v10729
        %v11224 = vunpack.c.l.b16 %v10730
        %v11225 = vunpack.c.l.b16 %v10731
        %v11226 = vunpack.c.h.b16 %v10731
        %v11227 = vunpack.c.l.b16 %v10732
        %v11228 = vunpack.c.l.b16 %v10733
        %v11229 = vunpack.c.h.b16 %v10733
        %v11230 = vunpack.c.l.b16 %v10734
        %v11231 = vunpack.c.l.b16 %v10735
        %v11232 = vunpack.c.h.b16 %v10735
        %v11233 = vunpack.c.l.b16 %v10736
        %v11234 = vunpack.c.l.b16 %v10737
        %v11235 = vunpack.c.h.b16 %v10737
        %v11236 = vunpack.c.l.b16 %v10738
        %v11237 = vunpack.c.l.b16 %v10739
        %v11238 = vunpack.c.h.b16 %v10739
        %v11239 = vunpack.c.l.b16 %v10740
        %v11240 = vunpack.c.l.b16 %v10741
        %v11241 = vunpack.c.h.b16 %v10741
        %v11242 = vunpack.c.l.b16 %v10742
        %v11243 = vunpack.c.l.b16 %v10743
        %v11244 = vunpack.c.h.b16 %v10743
        %v11245 = vunpack.c.l.b16 %v10744
        %v11246 = vunpack.c.l.b16 %v10745
        %v11247 = vunpack.c.h.b16 %v10745
        %v11248 = vunpack.c.l.b16 %v10746
        %v11249 = vunpack.c.l.b16 %v10747
        %v11250 = vunpack.c.h.b16 %v10747
        %v11251 = vunpack.c.l.b16 %v10748
        %v11252 = vunpack.c.l.b16 %v10749
        %v11253 = vunpack.c.h.b16 %v10749
        %v11254 = vunpack.c.l.b16 %v10750
        %v11255 = vpack.c.b16 %v10970, %v10967
        %v11256 = vpack.c.b16 %v10971, %v10968
        %v11257 = vpack.c.b16 %v10972, %v10969
        %v11258 = vpack.c.b16 %v10976, %v10973
        %v11259 = vpack.c.b16 %v10977, %v10974
        %v11260 = vpack.c.b16 %v10978, %v10975
        %v11261 = vpack.c.b16 %v10982, %v10979
        %v11262 = vpack.c.b16 %v10983, %v10980
        %v11263 = vpack.c.b16 %v10984, %v10981
        %v11264 = vpack.c.b16 %v10988, %v10985
        %v11265 = vpack.c.b16 %v10989, %v10986
        %v11266 = vpack.c.b16 %v10990, %v10987
        %v11267 = vpack.c.b16 %v10994, %v10991
        %v11268 = vpack.c.b16 %v10995, %v10992
        %v11269 = vpack.c.b16 %v10996, %v10993
        %v11270 = vpack.c.b16 %v11000, %v10997
        %v11271 = vpack.c.b16 %v11001, %v10998
        %v11272 = vpack.c.b16 %v11002, %v10999
        %v11273 = vpack.c.b16 %v11006, %v11003
        %v11274 = vpack.c.b16 %v11007, %v11004
        %v11275 = vpack.c.b16 %v11008, %v11005
        %v11276 = vpack.c.b16 %v11012, %v11009
        %v11277 = vpack.c.b16 %v11013, %v11010
        %v11278 = vpack.c.b16 %v11014, %v11011
        %v11279 = vpack.c.b16 %v11018, %v11015
        %v11280 = vpack.c.b16 %v11019, %v11016
        %v11281 = vpack.c.b16 %v11020, %v11017
        %v11282 = vpack.c.b16 %v11024, %v11021
        %v11283 = vpack.c.b16 %v11025, %v11022
        %v11284 = vpack.c.b16 %v11026, %v11023
        %v11285 = vpack.c.b16 %v11030, %v11027
        %v11286 = vpack.c.b16 %v11031, %v11028
        %v11287 = vpack.c.b16 %v11032, %v11029
        %v11288 = vpack.c.b16 %v11036, %v11033
        %v11289 = vpack.c.b16 %v11037, %v11034
        %v11290 = vpack.c.b16 %v11038, %v11035
        %v11291 = vpack.c.b16 %v11042, %v11039
        %v11292 = vpack.c.b16 %v11043, %v11040
        %v11293 = vpack.c.b16 %v11044, %v11041
        %v11294 = vpack.c.b16 %v11048, %v11045
        %v11295 = vpack.c.b16 %v11049, %v11046
        %v11296 = vpack.c.b16 %v11050, %v11047
        %v11297 = vpack.c.b16 %v11054, %v11051
        %v11298 = vpack.c.b16 %v11055, %v11052
        %v11299 = vpack.c.b16 %v11056, %v11053
        %v11300 = vpack.c.b16 %v11060, %v11057
        %v11301 = vpack.c.b16 %v11061, %v11058
        %v11302 = vpack.c.b16 %v11062, %v11059
        %v11303 = vpack.c.b16 %v11066, %v11063
        %v11304 = vpack.c.b16 %v11067, %v11064
        %v11305 = vpack.c.b16 %v11068, %v11065
        %v11306 = vpack.c.b16 %v11072, %v11069
        %v11307 = vpack.c.b16 %v11073, %v11070
        %v11308 = vpack.c.b16 %v11074, %v11071
        %v11309 = vpack.c.b16 %v11078, %v11075
        %v11310 = vpack.c.b16 %v11079, %v11076
        %v11311 = vpack.c.b16 %v11080, %v11077
        %v11312 = vpack.c.b16 %v11084, %v11081
        %v11313 = vpack.c.b16 %v11085, %v11082
        %v11314 = vpack.c.b16 %v11086, %v11083
        %v11315 = vpack.c.b16 %v11090, %v11087
        %v11316 = vpack.c.b16 %v11091, %v11088
        %v11317 = vpack.c.b16 %v11092, %v11089
        %v11318 = vpack.c.b16 %v11096, %v11093
        %v11319 = vpack.c.b16 %v11097, %v11094
        %v11320 = vpack.c.b16 %v11098, %v11095
        %v11321 = vpack.c.b16 %v11102, %v11099
        %v11322 = vpack.c.b16 %v11103, %v11100
        %v11323 = vpack.c.b16 %v11104, %v11101
        %v11324 = vpack.c.b16 %v11108, %v11105
        %v11325 = vpack.c.b16 %v11109, %v11106
        %v11326 = vpack.c.b16 %v11110, %v11107
        %v11327 = vpack.c.b16 %v11114, %v11111
        %v11328 = vpack.c.b16 %v11115, %v11112
        %v11329 = vpack.c.b16 %v11116, %v11113
        %v11330 = vpack.c.b16 %v11120, %v11117
        %v11331 = vpack.c.b16 %v11121, %v11118
        %v11332 = vpack.c.b16 %v11122, %v11119
        %v11333 = vpack.c.b16 %v11126, %v11123
        %v11334 = vpack.c.b16 %v11127, %v11124
        %v11335 = vpack.c.b16 %v11128, %v11125
        %v11336 = vpack.c.b16 %v11132, %v11129
        %v11337 = vpack.c.b16 %v11133, %v11130
        %v11338 = vpack.c.b16 %v11134, %v11131
        %v11339 = vpack.c.b16 %v11138, %v11135
        %v11340 = vpack.c.b16 %v11139, %v11136
        %v11341 = vpack.c.b16 %v11140, %v11137
        %v11342 = vpack.c.b16 %v11144, %v11141
        %v11343 = vpack.c.b16 %v11145, %v11142
        %v11344 = vpack.c.b16 %v11146, %v11143
        %v11345 = vpack.c.b16 %v11150, %v11147
        %v11346 = vpack.c.b16 %v11151, %v11148
        %v11347 = vpack.c.b16 %v11152, %v11149
        %v11348 = vpack.c.b16 %v11156, %v11153
        %v11349 = vpack.c.b16 %v11157, %v11154
        %v11350 = vpack.c.b16 %v11158, %v11155
        %v11351 = vpack.c.b16 %v11162, %v11159
        %v11352 = vpack.c.b16 %v11163, %v11160
        %v11353 = vpack.c.b16 %v11164, %v11161
        %v11354 = vpack.c.b16 %v11168, %v11165
        %v11355 = vpack.c.b16 %v11169, %v11166
        %v11356 = vpack.c.b16 %v11170, %v11167
        %v11357 = vpack.c.b16 %v11174, %v11171
        %v11358 = vpack.c.b16 %v11175, %v11172
        %v11359 = vpack.c.b16 %v11176, %v11173
        %v11360 = vpack.c.b16 %v11180, %v11177
        %v11361 = vpack.c.b16 %v11181, %v11178
        %v11362 = vpack.c.b16 %v11182, %v11179
        %v11363 = vpack.c.b16 %v11186, %v11183
        %v11364 = vpack.c.b16 %v11187, %v11184
        %v11365 = vpack.c.b16 %v11188, %v11185
        %v11366 = vpack.c.b16 %v11192, %v11189
        %v11367 = vpack.c.b16 %v11193, %v11190
        %v11368 = vpack.c.b16 %v11194, %v11191
        %v11369 = vpack.c.b16 %v11198, %v11195
        %v11370 = vpack.c.b16 %v11199, %v11196
        %v11371 = vpack.c.b16 %v11200, %v11197
        %v11372 = vpack.c.b16 %v11204, %v11201
        %v11373 = vpack.c.b16 %v11205, %v11202
        %v11374 = vpack.c.b16 %v11206, %v11203
        %v11375 = vpack.c.b16 %v11210, %v11207
        %v11376 = vpack.c.b16 %v11211, %v11208
        %v11377 = vpack.c.b16 %v11212, %v11209
        %v11378 = vpack.c.b16 %v11216, %v11213
        %v11379 = vpack.c.b16 %v11217, %v11214
        %v11380 = vpack.c.b16 %v11218, %v11215
        %v11381 = vpack.c.b16 %v11222, %v11219
        %v11382 = vpack.c.b16 %v11223, %v11220
        %v11383 = vpack.c.b16 %v11224, %v11221
        %v11384 = vpack.c.b16 %v11228, %v11225
        %v11385 = vpack.c.b16 %v11229, %v11226
        %v11386 = vpack.c.b16 %v11230, %v11227
        %v11387 = vpack.c.b16 %v11234, %v11231
        %v11388 = vpack.c.b16 %v11235, %v11232
        %v11389 = vpack.c.b16 %v11236, %v11233
        %v11390 = vpack.c.b16 %v11240, %v11237
        %v11391 = vpack.c.b16 %v11241, %v11238
        %v11392 = vpack.c.b16 %v11242, %v11239
        %v11393 = vpack.c.b16 %v11246, %v11243
        %v11394 = vpack.c.b16 %v11247, %v11244
        %v11395 = vpack.c.b16 %v11248, %v11245
        %v11396 = vpack.c.b16 %v11252, %v11249
        %v11397 = vpack.c.b16 %v11253, %v11250
        %v11398 = vpack.c.b16 %v11254, %v11251
        %11543 = vmatprep.subr.bf16.mxu0 %v11256
        %11544 = vmatpush1.bf16.msra.mxu0 %v11255
        %11545 = vmatprep.subr.bf16.mxu0 %v11259
        %11546 = vmatpush1.bf16.msra.mxu0 %v11258
        %11547 = vmatprep.subr.bf16.mxu0 %v11262
        %11548 = vmatpush1.bf16.msra.mxu0 %v11261
        %11549 = vmatprep.subr.bf16.mxu0 %v11265
        %11550 = vmatpush1.bf16.msra.mxu0 %v11264
        %11551 = vmatprep.subr.bf16.mxu0 %v11268
        %11552 = vmatpush1.bf16.msra.mxu0 %v11267
        %11553 = vmatprep.subr.bf16.mxu0 %v11271
        %11554 = vmatpush1.bf16.msra.mxu0 %v11270
        %11555 = vmatprep.subr.bf16.mxu0 %v11274
        %11556 = vmatpush1.bf16.msra.mxu0 %v11273
        %11557 = vmatprep.subr.bf16.mxu0 %v11277
        %11558 = vmatpush1.bf16.msra.mxu0 %v11276
        %11559 = vmatprep.subr.bf16.mxu0 %v11280
        %11560 = vmatpush1.bf16.msra.mxu0 %v11279
        %11561 = vmatprep.subr.bf16.mxu0 %v11283
        %11562 = vmatpush1.bf16.msra.mxu0 %v11282
        %11563 = vmatprep.subr.bf16.mxu0 %v11286
        %11564 = vmatpush1.bf16.msra.mxu0 %v11285
        %11565 = vmatprep.subr.bf16.mxu0 %v11289
        %11566 = vmatpush1.bf16.msra.mxu0 %v11288
        %11567 = vmatprep.subr.bf16.mxu0 %v11292
        %11568 = vmatpush1.bf16.msra.mxu0 %v11291
        %11569 = vmatprep.subr.bf16.mxu0 %v11295
        %11570 = vmatpush1.bf16.msra.mxu0 %v11294
        %11571 = vmatprep.subr.bf16.mxu0 %v11298
        %11572 = vmatpush1.bf16.msra.mxu0 %v11297
        %11573 = vmatprep.subr.bf16.mxu0 %v11301
        %11574 = vmatpush1.bf16.msra.mxu0 %v11300
        %11575 = vmatprep.mubr.bf16.mxu0 %v10752
        %11576 = vmatmul.mubr.bf16.gmra.mrb[0].mxu0 %v10751
        %v11577 = vpop.f32.mrb[0].mxu0
        %v11578 = vadd.f32 %v10763, %v11577
        %v11579 = vpop.f32.mrb[0].mxu0
        %v11580 = vadd.f32 %v10767, %v11579
        %v11581 = vpop.f32.mrb[0].mxu0
        %v11582 = vpop.f32.mrb[0].mxu0
        %11583 = vdwg.mxu0
        %11584 = vmatprep.subr.bf16.mxu0 %v11304
        %11585 = vmatpush1.bf16.msra.mxu0 %v11303
        %11586 = vmatprep.subr.bf16.mxu0 %v11307
        %11587 = vmatpush1.bf16.msra.mxu0 %v11306
        %11588 = vmatprep.subr.bf16.mxu0 %v11310
        %11589 = vmatpush1.bf16.msra.mxu0 %v11309
        %11590 = vmatprep.subr.bf16.mxu0 %v11313
        %11591 = vmatpush1.bf16.msra.mxu0 %v11312
        %11592 = vmatprep.subr.bf16.mxu0 %v11316
        %11593 = vmatpush1.bf16.msra.mxu0 %v11315
        %11594 = vmatprep.subr.bf16.mxu0 %v11319
        %11595 = vmatpush1.bf16.msra.mxu0 %v11318
        %11596 = vmatprep.subr.bf16.mxu0 %v11322
        %11597 = vmatpush1.bf16.msra.mxu0 %v11321
        %11598 = vmatprep.subr.bf16.mxu0 %v11325
        %11599 = vmatpush1.bf16.msra.mxu0 %v11324
        %11600 = vmatprep.subr.bf16.mxu0 %v11328
        %11601 = vmatpush1.bf16.msra.mxu0 %v11327
        %11602 = vmatprep.subr.bf16.mxu0 %v11331
        %11603 = vmatpush1.bf16.msra.mxu0 %v11330
        %11604 = vmatprep.subr.bf16.mxu0 %v11334
        %11605 = vmatpush1.bf16.msra.mxu0 %v11333
        %11606 = vmatprep.subr.bf16.mxu0 %v11337
        %11607 = vmatpush1.bf16.msra.mxu0 %v11336
        %11608 = vmatprep.subr.bf16.mxu0 %v11340
        %11609 = vmatpush1.bf16.msra.mxu0 %v11339
        %11610 = vmatprep.subr.bf16.mxu0 %v11343
        %11611 = vmatpush1.bf16.msra.mxu0 %v11342
        %11612 = vmatprep.subr.bf16.mxu0 %v11346
        %11613 = vmatpush1.bf16.msra.mxu0 %v11345
        %11614 = vmatprep.subr.bf16.mxu0 %v11349
        %11615 = vmatpush1.bf16.msra.mxu0 %v11348
        %11616 = vmatprep.mubr.bf16.mxu0 %v10754
        %11617 = vmatmul.mubr.bf16.gmra.mrb[0].mxu0 %v10753
        %v11618 = vpop.f32.mrb[0].mxu0
        %v11619 = vadd.f32 %v11578, %v11618
        %v11620 = vpop.f32.mrb[0].mxu0
        %v11621 = vadd.f32 %v11580, %v11620
        %v11622 = vpop.f32.mrb[0].mxu0
        %v11623 = vpop.f32.mrb[0].mxu0
        %11624 = vdwg.mxu0
        %11625 = vmatprep.subr.bf16.mxu0 %v11352
        %11626 = vmatpush1.bf16.msra.mxu0 %v11351
        %11627 = vmatprep.subr.bf16.mxu0 %v11355
        %11628 = vmatpush1.bf16.msra.mxu0 %v11354
        %11629 = vmatprep.subr.bf16.mxu0 %v11358
        %11630 = vmatpush1.bf16.msra.mxu0 %v11357
        %11631 = vmatprep.subr.bf16.mxu0 %v11361
        %11632 = vmatpush1.bf16.msra.mxu0 %v11360
        %11633 = vmatprep.subr.bf16.mxu0 %v11364
        %11634 = vmatpush1.bf16.msra.mxu0 %v11363
        %11635 = vmatprep.subr.bf16.mxu0 %v11367
        %11636 = vmatpush1.bf16.msra.mxu0 %v11366
        %11637 = vmatprep.subr.bf16.mxu0 %v11370
        %11638 = vmatpush1.bf16.msra.mxu0 %v11369
        %11639 = vmatprep.subr.bf16.mxu0 %v11373
        %11640 = vmatpush1.bf16.msra.mxu0 %v11372
        %11641 = vmatprep.subr.bf16.mxu0 %v11376
        %11642 = vmatpush1.bf16.msra.mxu0 %v11375
        %11643 = vmatprep.subr.bf16.mxu0 %v11379
        %11644 = vmatpush1.bf16.msra.mxu0 %v11378
        %11645 = vmatprep.subr.bf16.mxu0 %v11382
        %11646 = vmatpush1.bf16.msra.mxu0 %v11381
        %11647 = vmatprep.subr.bf16.mxu0 %v11385
        %11648 = vmatpush1.bf16.msra.mxu0 %v11384
        %11649 = vmatprep.subr.bf16.mxu0 %v11388
        %11650 = vmatpush1.bf16.msra.mxu0 %v11387
        %11651 = vmatprep.subr.bf16.mxu0 %v11391
        %11652 = vmatpush1.bf16.msra.mxu0 %v11390
        %11653 = vmatprep.subr.bf16.mxu0 %v11394
        %11654 = vmatpush1.bf16.msra.mxu0 %v11393
        %11655 = vmatprep.subr.bf16.mxu0 %v11397
        %11656 = vmatpush1.bf16.msra.mxu0 %v11396
        %11657 = vmatprep.mubr.bf16.mxu0 %v10756
        %11658 = vmatmul.mubr.bf16.gmra.mrb[0].mxu0 %v10755
        %v11659 = vpop.f32.mrb[0].mxu0
        %v11660 = vadd.f32 %v11619, %v11659
        %v11661 = vpop.f32.mrb[0].mxu0
        %v11662 = vadd.f32 %v11621, %v11661
        %v11663 = vpop.f32.mrb[0].mxu0
        %v11664 = vpop.f32.mrb[0].mxu0
        %11665 = vdwg.mxu0
        %11666 = vmatprep.subr.bf16.mxu0 0
        %11667 = vmatpush1.bf16.msra.mxu0 %v11257
        %11668 = vmatprep.subr.bf16.mxu0 0
        %11669 = vmatpush1.bf16.msra.mxu0 %v11260
        %11670 = vmatprep.subr.bf16.mxu0 0
        %11671 = vmatpush1.bf16.msra.mxu0 %v11263
        %11672 = vmatprep.subr.bf16.mxu0 0
        %11673 = vmatpush1.bf16.msra.mxu0 %v11266
        %11674 = vmatprep.subr.bf16.mxu0 0
        %11675 = vmatpush1.bf16.msra.mxu0 %v11269
        %11676 = vmatprep.subr.bf16.mxu0 0
        %11677 = vmatpush1.bf16.msra.mxu0 %v11272
        %11678 = vmatprep.subr.bf16.mxu0 0
        %11679 = vmatpush1.bf16.msra.mxu0 %v11275
        %11680 = vmatprep.subr.bf16.mxu0 0
        %11681 = vmatpush1.bf16.msra.mxu0 %v11278
        %11682 = vmatprep.subr.bf16.mxu0 0
        %11683 = vmatpush1.bf16.msra.mxu0 %v11281
        %11684 = vmatprep.subr.bf16.mxu0 0
        %11685 = vmatpush1.bf16.msra.mxu0 %v11284
        %11686 = vmatprep.subr.bf16.mxu0 0
        %11687 = vmatpush1.bf16.msra.mxu0 %v11287
        %11688 = vmatprep.subr.bf16.mxu0 0
        %11689 = vmatpush1.bf16.msra.mxu0 %v11290
        %11690 = vmatprep.subr.bf16.mxu0 0
        %11691 = vmatpush1.bf16.msra.mxu0 %v11293
        %11692 = vmatprep.subr.bf16.mxu0 0
        %11693 = vmatpush1.bf16.msra.mxu0 %v11296
        %11694 = vmatprep.subr.bf16.mxu0 0
        %11695 = vmatpush1.bf16.msra.mxu0 %v11299
        %11696 = vmatprep.subr.bf16.mxu0 0
        %11697 = vmatpush1.bf16.msra.mxu0 %v11302
        %11698 = vmatprep.mubr.bf16.mxu0 %v10752
        %11699 = vmatmul.mubr.bf16.gmra.mrb[0].mxu0 %v10751
        %v11700 = vpop.f32.mrb[0].mxu0
        %v11701 = vadd.f32 %v10771, %v11700
        %v11702 = vpop.f32.mrb[0].mxu0
        %v11703 = vpop.f32.mrb[0].mxu0
        %v11704 = vpop.f32.mrb[0].mxu0
        %11705 = vdwg.mxu0
        %11706 = vmatprep.subr.bf16.mxu0 0
        %11707 = vmatpush1.bf16.msra.mxu0 %v11305
        %11708 = vmatprep.subr.bf16.mxu0 0
        %11709 = vmatpush1.bf16.msra.mxu0 %v11308
        %11710 = vmatprep.subr.bf16.mxu0 0
        %11711 = vmatpush1.bf16.msra.mxu0 %v11311
        %11712 = vmatprep.subr.bf16.mxu0 0
        %11713 = vmatpush1.bf16.msra.mxu0 %v11314
        %11714 = vmatprep.subr.bf16.mxu0 0
        %11715 = vmatpush1.bf16.msra.mxu0 %v11317
        %11716 = vmatprep.subr.bf16.mxu0 0
        %11717 = vmatpush1.bf16.msra.mxu0 %v11320
        %11718 = vmatprep.subr.bf16.mxu0 0
        %11719 = vmatpush1.bf16.msra.mxu0 %v11323
        %11720 = vmatprep.subr.bf16.mxu0 0
        %11721 = vmatpush1.bf16.msra.mxu0 %v11326
        %11722 = vmatprep.subr.bf16.mxu0 0
        %11723 = vmatpush1.bf16.msra.mxu0 %v11329
        %11724 = vmatprep.subr.bf16.mxu0 0
        %11725 = vmatpush1.bf16.msra.mxu0 %v11332
        %11726 = vmatprep.subr.bf16.mxu0 0
        %11727 = vmatpush1.bf16.msra.mxu0 %v11335
        %11728 = vmatprep.subr.bf16.mxu0 0
        %11729 = vmatpush1.bf16.msra.mxu0 %v11338
        %11730 = vmatprep.subr.bf16.mxu0 0
        %11731 = vmatpush1.bf16.msra.mxu0 %v11341
        %11732 = vmatprep.subr.bf16.mxu0 0
        %11733 = vmatpush1.bf16.msra.mxu0 %v11344
        %11734 = vmatprep.subr.bf16.mxu0 0
        %11735 = vmatpush1.bf16.msra.mxu0 %v11347
        %11736 = vmatprep.subr.bf16.mxu0 0
        %11737 = vmatpush1.bf16.msra.mxu0 %v11350
        %11738 = vmatprep.mubr.bf16.mxu0 %v10754
        %11739 = vmatmul.mubr.bf16.gmra.mrb[0].mxu0 %v10753
        %v11740 = vpop.f32.mrb[0].mxu0
        %v11741 = vadd.f32 %v11701, %v11740
        %v11742 = vpop.f32.mrb[0].mxu0
        %v11743 = vpop.f32.mrb[0].mxu0
        %v11744 = vpop.f32.mrb[0].mxu0
        %11745 = vdwg.mxu0
        %11746 = vmatprep.subr.bf16.mxu0 0
        %11747 = vmatpush1.bf16.msra.mxu0 %v11353
        %11748 = vmatprep.subr.bf16.mxu0 0
        %11749 = vmatpush1.bf16.msra.mxu0 %v11356
        %11750 = vmatprep.subr.bf16.mxu0 0
        %11751 = vmatpush1.bf16.msra.mxu0 %v11359
        %11752 = vmatprep.subr.bf16.mxu0 0
        %11753 = vmatpush1.bf16.msra.mxu0 %v11362
        %11754 = vmatprep.subr.bf16.mxu0 0
        %11755 = vmatpush1.bf16.msra.mxu0 %v11365
        %11756 = vmatprep.subr.bf16.mxu0 0
        %11757 = vmatpush1.bf16.msra.mxu0 %v11368
        %11758 = vmatprep.subr.bf16.mxu0 0
        %11759 = vmatpush1.bf16.msra.mxu0 %v11371
        %11760 = vmatprep.subr.bf16.mxu0 0
        %11761 = vmatpush1.bf16.msra.mxu0 %v11374
        %11762 = vmatprep.subr.bf16.mxu0 0
        %11763 = vmatpush1.bf16.msra.mxu0 %v11377
        %11764 = vmatprep.subr.bf16.mxu0 0
        %11765 = vmatpush1.bf16.msra.mxu0 %v11380
        %11766 = vmatprep.subr.bf16.mxu0 0
        %11767 = vmatpush1.bf16.msra.mxu0 %v11383
        %11768 = vmatprep.subr.bf16.mxu0 0
        %11769 = vmatpush1.bf16.msra.mxu0 %v11386
        %11770 = vmatprep.subr.bf16.mxu0 0
        %11771 = vmatpush1.bf16.msra.mxu0 %v11389
        %11772 = vmatprep.subr.bf16.mxu0 0
        %11773 = vmatpush1.bf16.msra.mxu0 %v11392
        %11774 = vmatprep.subr.bf16.mxu0 0
        %11775 = vmatpush1.bf16.msra.mxu0 %v11395
        %11776 = vmatprep.subr.bf16.mxu0 0
        %11777 = vmatpush1.bf16.msra.mxu0 %v11398
        %11778 = vmatprep.mubr.bf16.mxu0 %v10756
        %11779 = vmatmul.mubr.bf16.gmra.mrb[0].mxu0 %v10755
        %v11780 = vpop.f32.mrb[0].mxu0
        %v11781 = vadd.f32 %v11741, %v11780
        %v11782 = vpop.f32.mrb[0].mxu0
        %v11783 = vpop.f32.mrb[0].mxu0
        %v11784 = vpop.f32.mrb[0].mxu0
        %11785 = vdwg.mxu0
        %v11786 = vadd.f32 %v11660, %v9497
        %v11787 = vadd.f32 %v11662, %v9498
        %v11788 = vadd.f32 %v11781, %v9499
        %s11789 = scalar_lea.vmem [#allocation3], 144
        %v11790 = vld [vmem:[%s11789] ss:$8 sm:$0x7]
        %s11791 = scalar_lea.vmem [#allocation3], 145
        %v11792 = vld [vmem:[%s11791] ss:$8 sm:$0x7]
        %v11793 = vadd.f32 %v11786, %v11787
        %v11794 = vadd.f32 %v11793, %v11788
        %11795 = vadd.xlane.f32.xlu0 %v11794
        %v11796 = vpop.xlane.xlu0 %11795
        %v11797 = vmul.f32 %v11796, %v333
        %v11798 = vsub.f32 %v11786, %v11797
        %v11799 = vsub.f32 %v11787, %v11797
        %v11800 = vsub.f32 %v11788, %v11797
        %v11801 = vmul.f32 %v11798, %v11798
        %v11802 = vmul.f32 %v11799, %v11799
        %v11803 = vmul.f32 %v11800, %v11800
        %v11804 = vadd.f32 %v11801, %v11802
        %v11805 = vadd.f32 %v11804, %v11803
        %11806 = vadd.xlane.f32.xlu0 %v11805
        %v11807 = vpop.xlane.xlu0 %11806
        %v11808 = vmul.f32 %v11807, %v333
        %v11809 = vadd.f32 %v11808, 1e-12
        %v11810 = vrsqrt.pop %v11809
        %v11811 = vmul.f32 %v11798, %v11810
        %v11812 = vmul.f32 %v11799, %v11810
        %v11813 = vmul.f32 %v11800, %v11810
        %v11815 = vlaneseq
        %v11816 = vshrl.u32 %v11815, 7
        %v11817 = vsub.s32 0, %v11816
        %v11818 = vrot.slane %v11790, %v11817
        %v11819 = vlaneseq
        %v11820 = vshrl.u32 %v11819, 7
        %v11821 = vsub.s32 1, %v11820
        %v11822 = vrot.slane %v11790, %v11821
        %v11823 = vlaneseq
        %v11824 = vshrl.u32 %v11823, 7
        %v11825 = vsub.s32 2, %v11824
        %v11826 = vrot.slane %v11790, %v11825
        %v11830 = vmul.f32 %v11811, %v11818
        %v11831 = vmul.f32 %v11812, %v11822
        %v11832 = vmul.f32 %v11813, %v11826
        %v11834 = vlaneseq
        %v11835 = vshrl.u32 %v11834, 7
        %v11836 = vsub.s32 0, %v11835
        %v11837 = vrot.slane %v11792, %v11836
        %v11838 = vlaneseq
        %v11839 = vshrl.u32 %v11838, 7
        %v11840 = vsub.s32 1, %v11839
        %v11841 = vrot.slane %v11792, %v11840
        %v11842 = vlaneseq
        %v11843 = vshrl.u32 %v11842, 7
        %v11844 = vsub.s32 2, %v11843
        %v11845 = vrot.slane %v11792, %v11844
        %v11849 = vadd.f32 %v11830, %v11837
        %v11850 = vadd.f32 %v11831, %v11841
        %v11851 = vadd.f32 %v11832, %v11845
        %v11852 = vld [vmem:[#allocation9] sm:$0xf]
        %v11853 = vld [vmem:[#allocation9 + $0x4] sm:$0xf]
        %v11854 = vld [vmem:[#allocation9 + $0x8] sm:$0xf]
        %v11855 = vld [vmem:[#allocation9 + $0xc] sm:$0xf]
        %v11856 = vld [vmem:[#allocation9 + $0x10] sm:$0xf]
        %v11857 = vld [vmem:[#allocation9 + $0x14] sm:$0xf]
        %v11858 = vld [vmem:[#allocation9 + $0x18] sm:$0xf]
        %v11859 = vld [vmem:[#allocation9 + $0x1c] sm:$0xf]
        %v11860 = vld [vmem:[#allocation9 + $0x20] sm:$0xf]
        %v11861 = vld [vmem:[#allocation9 + $0x24] sm:$0xf]
        %v11862 = vld [vmem:[#allocation9 + $0x28] sm:$0xf]
        %v11863 = vld [vmem:[#allocation9 + $0x2c] sm:$0xf]
        %v11864 = vld [vmem:[#allocation9 + $0x30] sm:$0xf]
        %v11865 = vld [vmem:[#allocation9 + $0x34] sm:$0xf]
        %v11866 = vld [vmem:[#allocation9 + $0x38] sm:$0xf]
        %v11867 = vld [vmem:[#allocation9 + $0x3c] sm:$0xf]
        %v11868 = vld [vmem:[#allocation9 + $0x40] sm:$0xf]
        %v11869 = vld [vmem:[#allocation9 + $0x44] sm:$0xf]
        %v11870 = vld [vmem:[#allocation9 + $0x48] sm:$0xf]
        %v11871 = vld [vmem:[#allocation9 + $0x4c] sm:$0xf]
        %v11872 = vld [vmem:[#allocation9 + $0x50] sm:$0xf]
        %v11873 = vld [vmem:[#allocation9 + $0x54] sm:$0xf]
        %v11874 = vld [vmem:[#allocation9 + $0x58] sm:$0xf]
        %v11875 = vld [vmem:[#allocation9 + $0x5c] sm:$0xf]
        %v11876 = vld [vmem:[#allocation9 + $0x60] sm:$0xf]
        %v11877 = vld [vmem:[#allocation9 + $0x64] sm:$0xf]
        %v11878 = vld [vmem:[#allocation9 + $0x68] sm:$0xf]
        %v11879 = vld [vmem:[#allocation9 + $0x6c] sm:$0xf]
        %v11880 = vld [vmem:[#allocation9 + $0x70] sm:$0xf]
        %v11881 = vld [vmem:[#allocation9 + $0x74] sm:$0xf]
        %v11882 = vld [vmem:[#allocation9 + $0x78] sm:$0xf]
        %v11883 = vld [vmem:[#allocation9 + $0x7c] sm:$0xf]
        %v11884 = vld [vmem:[#allocation9 + $0x80] sm:$0xf]
        %v11885 = vld [vmem:[#allocation9 + $0x84] sm:$0xf]
        %v11886 = vld [vmem:[#allocation9 + $0x88] sm:$0xf]
        %v11887 = vld [vmem:[#allocation9 + $0x8c] sm:$0xf]
        %v11888 = vld [vmem:[#allocation9 + $0x90] sm:$0xf]
        %v11889 = vld [vmem:[#allocation9 + $0x94] sm:$0xf]
        %v11890 = vld [vmem:[#allocation9 + $0x98] sm:$0xf]
        %v11891 = vld [vmem:[#allocation9 + $0x9c] sm:$0xf]
        %v11892 = vld [vmem:[#allocation9 + $0xa0] sm:$0xf]
        %v11893 = vld [vmem:[#allocation9 + $0xa4] sm:$0xf]
        %v11894 = vld [vmem:[#allocation9 + $0xa8] sm:$0xf]
        %v11895 = vld [vmem:[#allocation9 + $0xac] sm:$0xf]
        %v11896 = vld [vmem:[#allocation9 + $0xb0] sm:$0xf]
        %v11897 = vld [vmem:[#allocation9 + $0xb4] sm:$0xf]
        %v11898 = vld [vmem:[#allocation9 + $0xb8] sm:$0xf]
        %v11899 = vld [vmem:[#allocation9 + $0xbc] sm:$0xf]
        %v11900 = vpack.c.bf16 %v11849, %v11849
        %v11901 = vpack.c.bf16 %v11850, %v11850
        %v11902 = vpack.c.bf16 %v11851, %v11851
        %v11903 = vld [vmem:[#allocation3 + $0x92] ss:$0 sm:$0xff]
        %v11952 = vunpack.c.l.b16 %v11852
        %v11953 = vunpack.c.l.b16 %v11853
        %v11954 = vunpack.c.l.b16 %v11854
        %v11955 = vunpack.c.l.b16 %v11855
        %v11956 = vunpack.c.l.b16 %v11856
        %v11957 = vunpack.c.l.b16 %v11857
        %v11958 = vunpack.c.l.b16 %v11858
        %v11959 = vunpack.c.l.b16 %v11859
        %v11960 = vunpack.c.l.b16 %v11860
        %v11961 = vunpack.c.l.b16 %v11861
        %v11962 = vunpack.c.l.b16 %v11862
        %v11963 = vunpack.c.l.b16 %v11863
        %v11964 = vunpack.c.l.b16 %v11864
        %v11965 = vunpack.c.l.b16 %v11865
        %v11966 = vunpack.c.l.b16 %v11866
        %v11967 = vunpack.c.l.b16 %v11867
        %v11968 = vunpack.c.l.b16 %v11868
        %v11969 = vunpack.c.l.b16 %v11869
        %v11970 = vunpack.c.l.b16 %v11870
        %v11971 = vunpack.c.l.b16 %v11871
        %v11972 = vunpack.c.l.b16 %v11872
        %v11973 = vunpack.c.l.b16 %v11873
        %v11974 = vunpack.c.l.b16 %v11874
        %v11975 = vunpack.c.l.b16 %v11875
        %v11976 = vunpack.c.l.b16 %v11876
        %v11977 = vunpack.c.l.b16 %v11877
        %v11978 = vunpack.c.l.b16 %v11878
        %v11979 = vunpack.c.l.b16 %v11879
        %v11980 = vunpack.c.l.b16 %v11880
        %v11981 = vunpack.c.l.b16 %v11881
        %v11982 = vunpack.c.l.b16 %v11882
        %v11983 = vunpack.c.l.b16 %v11883
        %v11984 = vunpack.c.l.b16 %v11884
        %v11985 = vunpack.c.l.b16 %v11885
        %v11986 = vunpack.c.l.b16 %v11886
        %v11987 = vunpack.c.l.b16 %v11887
        %v11988 = vunpack.c.l.b16 %v11888
        %v11989 = vunpack.c.l.b16 %v11889
        %v11990 = vunpack.c.l.b16 %v11890
        %v11991 = vunpack.c.l.b16 %v11891
        %v11992 = vunpack.c.l.b16 %v11892
        %v11993 = vunpack.c.l.b16 %v11893
        %v11994 = vunpack.c.l.b16 %v11894
        %v11995 = vunpack.c.l.b16 %v11895
        %v11996 = vunpack.c.l.b16 %v11896
        %v11997 = vunpack.c.l.b16 %v11897
        %v11998 = vunpack.c.l.b16 %v11898
        %v11999 = vunpack.c.l.b16 %v11899
        %v12000 = vpack.c.b16 %v11953, %v11952
        %v12001 = vpack.c.b16 %v11955, %v11954
        %v12002 = vpack.c.b16 %v11957, %v11956
        %v12003 = vpack.c.b16 %v11959, %v11958
        %v12004 = vpack.c.b16 %v11961, %v11960
        %v12005 = vpack.c.b16 %v11963, %v11962
        %v12006 = vpack.c.b16 %v11965, %v11964
        %v12007 = vpack.c.b16 %v11967, %v11966
        %v12008 = vpack.c.b16 %v11969, %v11968
        %v12009 = vpack.c.b16 %v11971, %v11970
        %v12010 = vpack.c.b16 %v11973, %v11972
        %v12011 = vpack.c.b16 %v11975, %v11974
        %v12012 = vpack.c.b16 %v11977, %v11976
        %v12013 = vpack.c.b16 %v11979, %v11978
        %v12014 = vpack.c.b16 %v11981, %v11980
        %v12015 = vpack.c.b16 %v11983, %v11982
        %v12016 = vpack.c.b16 %v11985, %v11984
        %v12017 = vpack.c.b16 %v11987, %v11986
        %v12018 = vpack.c.b16 %v11989, %v11988
        %v12019 = vpack.c.b16 %v11991, %v11990
        %v12020 = vpack.c.b16 %v11993, %v11992
        %v12021 = vpack.c.b16 %v11995, %v11994
        %v12022 = vpack.c.b16 %v11997, %v11996
        %v12023 = vpack.c.b16 %v11999, %v11998
        %12048 = vmatprep.subr.bf16.mxu0 0
        %12049 = vmatpush1.bf16.msra.mxu0 %v12000
        %12050 = vmatprep.subr.bf16.mxu0 0
        %12051 = vmatpush1.bf16.msra.mxu0 %v12001
        %12052 = vmatprep.subr.bf16.mxu0 0
        %12053 = vmatpush1.bf16.msra.mxu0 %v12002
        %12054 = vmatprep.subr.bf16.mxu0 0
        %12055 = vmatpush1.bf16.msra.mxu0 %v12003
        %12056 = vmatprep.subr.bf16.mxu0 0
        %12057 = vmatpush1.bf16.msra.mxu0 %v12004
        %12058 = vmatprep.subr.bf16.mxu0 0
        %12059 = vmatpush1.bf16.msra.mxu0 %v12005
        %12060 = vmatprep.subr.bf16.mxu0 0
        %12061 = vmatpush1.bf16.msra.mxu0 %v12006
        %12062 = vmatprep.subr.bf16.mxu0 0
        %12063 = vmatpush1.bf16.msra.mxu0 %v12007
        %12064 = vmatprep.subr.bf16.mxu0 0
        %12065 = vmatpush1.bf16.msra.mxu0 %v12008
        %12066 = vmatprep.subr.bf16.mxu0 0
        %12067 = vmatpush1.bf16.msra.mxu0 %v12009
        %12068 = vmatprep.subr.bf16.mxu0 0
        %12069 = vmatpush1.bf16.msra.mxu0 %v12010
        %12070 = vmatprep.subr.bf16.mxu0 0
        %12071 = vmatpush1.bf16.msra.mxu0 %v12011
        %12072 = vmatprep.subr.bf16.mxu0 0
        %12073 = vmatpush1.bf16.msra.mxu0 %v12012
        %12074 = vmatprep.subr.bf16.mxu0 0
        %12075 = vmatpush1.bf16.msra.mxu0 %v12013
        %12076 = vmatprep.subr.bf16.mxu0 0
        %12077 = vmatpush1.bf16.msra.mxu0 %v12014
        %12078 = vmatprep.subr.bf16.mxu0 0
        %12079 = vmatpush1.bf16.msra.mxu0 %v12015
        %12080 = vmatprep.mubr.bf16.mxu0 %v11901
        %12081 = vmatmul.mubr.bf16.gmra.mrb[0].mxu0 %v11900
        %v12082 = vpop.f32.mrb[0].mxu0
        %v12083 = vadd.f32 %v11903, %v12082
        %v12084 = vpop.f32.mrb[0].mxu0
        %v12085 = vpop.f32.mrb[0].mxu0
        %v12086 = vpop.f32.mrb[0].mxu0
        %12087 = vdwg.mxu0
        %12088 = vmatprep.subr.bf16.mxu0 0
        %12089 = vmatpush1.bf16.msra.mxu0 %v12016
        %12090 = vmatprep.subr.bf16.mxu0 0
        %12091 = vmatpush1.bf16.msra.mxu0 %v12017
        %12092 = vmatprep.subr.bf16.mxu0 0
        %12093 = vmatpush1.bf16.msra.mxu0 %v12018
        %12094 = vmatprep.subr.bf16.mxu0 0
        %12095 = vmatpush1.bf16.msra.mxu0 %v12019
        %12096 = vmatprep.subr.bf16.mxu0 0
        %12097 = vmatpush1.bf16.msra.mxu0 %v12020
        %12098 = vmatprep.subr.bf16.mxu0 0
        %12099 = vmatpush1.bf16.msra.mxu0 %v12021
        %12100 = vmatprep.subr.bf16.mxu0 0
        %12101 = vmatpush1.bf16.msra.mxu0 %v12022
        %12102 = vmatprep.subr.bf16.mxu0 0
        %12103 = vmatpush1.bf16.msra.mxu0 %v12023
        %12104 = vmatprep.subr.bf16.mxu0 0
        %12105 = vmatpush1.bf16.msra.mxu0 0
        %12106 = vmatprep.subr.bf16.mxu0 0
        %12107 = vmatpush1.bf16.msra.mxu0 0
        %12108 = vmatprep.subr.bf16.mxu0 0
        %12109 = vmatpush1.bf16.msra.mxu0 0
        %12110 = vmatprep.subr.bf16.mxu0 0
        %12111 = vmatpush1.bf16.msra.mxu0 0
        %12112 = vmatprep.subr.bf16.mxu0 0
        %12113 = vmatpush1.bf16.msra.mxu0 0
        %12114 = vmatprep.subr.bf16.mxu0 0
        %12115 = vmatpush1.bf16.msra.mxu0 0
        %12116 = vmatprep.subr.bf16.mxu0 0
        %12117 = vmatpush1.bf16.msra.mxu0 0
        %12118 = vmatprep.subr.bf16.mxu0 0
        %12119 = vmatpush1.bf16.msra.mxu0 0
        %12120 = vmatprep.mubr.bf16.mxu0 0
        %12121 = vmatmul.mubr.bf16.gmra.mrb[0].mxu0 %v11902
        %v12122 = vpop.f32.mrb[0].mxu0
        %v12123 = vadd.f32 %v12083, %v12122
        %v12124 = vpop.f32.mrb[0].mxu0
        %v12125 = vpop.f32.mrb[0].mxu0
        %v12126 = vpop.f32.mrb[0].mxu0
        %12127 = vdwg.mxu0
        %v12128 = vxor.u32 %v12123, 2147483648
        %v12129 = vmul.f32 %v12128, 1.442695
        %v12130 = vpow.pop %v12129
        %v12131 = vadd.f32 %v12130, 1.0
        %v12132 = vrcp.pop %v12131
        %v12133 = vmul.f32 1.0, %v12132
        %v12134 = vmax.f32 %v12133, 1e-07
        %v12135 = vmin.f32 %v12134, 0.9999999
        %12136 = vst [vmem:[%s313] sm:$0x1] %v12135
        %s12137 = sand.u32 %s167, 1
        %s12138 = scalar_lea.sflag [#allocation5], %s12137
        %s12139 = sand.u32 %s167, 1
        %s12140 = scalar_lea.vmem [#allocation11], %s12139
        // Predicated region
        $region61: #{linear_bert_pallas.1} parent=43 // pred_check
          %p12141 = pneg %p177
        $region62: #{linear_bert_pallas.1} parent=43 // pred_check_branch
          %12143 = sbr.rel (%p12141) target = $region64
        $region63: #{linear_bert_pallas.1} parent=43 // pred_region
          %s12145 = ssub.s32 16, 16
          %12146 = vsyncadd %s12138, %s12145
          %s12147 = smul.addr %s23, 16
          %s12148 = scalar_lea.hbm %s6, %s12147
          %s12150 = sshll.u32 %s12140, 4
          %s12151 = int_to_ptr.vmem [resolvable:$true] %s12150
          %12153 = dma.vmem_to_hbm [thread:$0]  %s12151, 16, %s12148, %s12138
        $region64: #{linear_bert_pallas.1} parent=43 // pred_fallthru
          _
      $region44: #{linear_bert_pallas.1} parent=5 // pred_fallthru
        _
      %p12154 = scmp.le.s32.totalorder 2, %s18
      // Predicated region
      $region65: #{linear_bert_pallas.1} parent=5 // pred_check
        %p12155 = pneg %p12154
      $region66: #{linear_bert_pallas.1} parent=5 // pred_check_branch
        %12157 = sbr.rel (%p12155) target = $region68
      $region67: #{linear_bert_pallas.1} parent=5 // pred_region
        %s12158 = ssub.s32 %s18, 2
        // Predicated region
        $region69: #{linear_bert_pallas.1} parent=67 // pred_check
          %p12159 = pneg %p183
        $region70: #{linear_bert_pallas.1} parent=67 // pred_check_branch
          %12161 = sbr.rel (%p12159) target = $region72
        $region71: #{linear_bert_pallas.1} parent=67 // pred_region
          %s12162 = sand.u32 %s168, 1
          %s12163 = scalar_lea.sflag [#allocation5], %s12162
          %s12164 = sand.u32 %s168, 1
          %s12165 = scalar_lea.vmem [#allocation11], %s12164
          %12166 = dma.done %s12163, 16
        $region72: #{linear_bert_pallas.1} parent=67 // pred_fallthru
          _
      $region68: #{linear_bert_pallas.1} parent=5 // pred_fallthru
        _
    $region6: #{linear_bert_pallas.1} parent=1 // loop_footer
      %s22 = sadd.s32 1, %s18
    $region7: #{linear_bert_pallas.1} parent=1 // loop_footer_branch
      %17 = sbr.rel target = $region3
    $region8: #{linear_bert_pallas.1} parent=1 // loop_exit
      _
    %12167 = vsyncpa [#allocation4], 1
    %s12168 = scalar_lea.sflag [#allocation4], 1
    %12169 = vsyncpa %s12168, 1
    %12170 = vsyncpa [#allocation7], 1
    %12171 = vsyncpa [#allocation10], 1
    %12172 = vsyncpa [#allocation5], 1
    %s12173 = scalar_lea.sflag [#allocation5], 1
    %12174 = vsyncpa %s12173, 1

</llo_original>
